<compile_context>
chip_gen: v7x
topology: tpu7x:2x2x1
jax: 0.10.0
libtpu: 0.0.40
codegen_flags: <defaults>
</compile_context>

<pallas_src>
import functools

import jax
import jax.numpy as jnp
from jax import lax
from jax.experimental import pallas as pl
from jax.experimental.pallas import tpu as pltpu

_INV_SQRT2 = 0.7071067811865476
_EPS = 1e-5

# Review: raised from 128 (v2) to 192 for v6e/v7x now that pass 1 is a single
# matmul per chunk; drop back to 128 on v5e if the bundle dump shows spills.
_SUBLANE_CAP = 192


def _round_up(x, m):
    return (x + m - 1) // m * m


def _gelu_exact(x):
    # torch.nn.functional.gelu default (erf formulation).
    return 0.5 * x * (1.0 + lax.erf(x * _INV_SQRT2))


def _pick_chunk_h(H, WP):
    """Largest divisor of H whose chunk (rows * WP) stays <= _SUBLANE_CAP."""
    best = 1
    for d in range(1, H + 1):
        if H % d == 0 and d * WP <= _SUBLANE_CAP:
            best = d
    return best


def _conv_block_kernel(x9_ref, w1_ref, p1_ref, w2_ref, p2_ref,
                       o_ref, mid_ref, *, H, W, WP, CHUNK_H):
    """Fused conv1+bn1+gelu+conv2+bn2+gelu for one batch element.

    x9_ref  : (M, K1P)           im2col'd input: row p holds the 9 conv taps
                                 (kh*3+kw major, ci minor) for output position
                                 p = h*WP + w; K1P = round_up(9*Cin, 8).
    w1_ref  : (K1P, CoutP)       conv1 weights with taps folded into K.
    p1_ref  : (2, CoutP)         row0 = bn1 scale, row1 = bn1 shift (bias folded)
    w2_ref  : (9, CoutP, CoutP)  conv2 taps (kh*3+kw, ci, co)
    p2_ref  : (2, CoutP)
    o_ref   : (M, CoutP)         extended output plane (junk cols stripped in glue)
    mid_ref : (M + 2*WP + 16, CoutP)  VMEM scratch; padded-plane flat index q of
                                 the conv1 activation lives at row q + 7 so all
                                 per-chunk stores / slab loads are sublane aligned.
    """
    CM = CHUNK_H * WP                    # rows per chunk (multiple of 8 and of WP)
    NCHUNK = H // CHUNK_H
    M = H * WP
    coutp = o_ref.shape[-1]
    unroll = min(NCHUNK, 4)

    # ---- zero only the never-written border slabs of the scratch ------------
    zl = WP + 8
    mid_ref[pl.ds(0, zl), :] = jnp.zeros((zl, coutp), jnp.float32)
    mid_ref[pl.ds(M + WP + 8, zl), :] = jnp.zeros((zl, coutp), jnp.float32)

    # ---- loop invariants for pass 1 ------------------------------------------
    scale1 = p1_ref[0:1, :]
    shift1 = p1_ref[1:2, :]
    w1m = w1_ref[...]                                     # (K1P, CoutP)

    # junk-column mask (cols W..WP-1 of every extended row), built in-kernel.
    col = lax.broadcasted_iota(jnp.int32, (CM, 1), 0) % WP
    mask = (col < W).astype(jnp.float32)                  # (CM, 1)

    # -------- pass 1: conv1 + bn1 + gelu, ONE matmul per chunk (K = 9*Cin) ----
    def pass1(c, carry):
        base = pl.multiple_of(c * CM, 8)
        lhs = x9_ref[pl.ds(base, CM), :]                  # aligned, (CM, K1P)
        acc = jnp.dot(lhs, w1m, preferred_element_type=jnp.float32)
        h1 = _gelu_exact(acc * scale1 + shift1) * mask
        dst = pl.multiple_of(base + WP + 8, 8)            # aligned store
        mid_ref[pl.ds(dst, CM), :] = h1
        return carry

    lax.fori_loop(0, NCHUNK, pass1, 0, unroll=unroll)

    # ---- loop invariants for pass 2 (hoisted only now: shorter live ranges) --
    scale2 = p2_ref[0:1, :]
    shift2 = p2_ref[1:2, :]
    w2t = [w2_ref[t] for t in range(9)]                   # 9 x (CoutP, CoutP)

    # -------- pass 2: conv2 + bn2 + gelu ---------------------------------------
    # One aligned slab load per kh; the kw taps are in-register sublane slices.
    def pass2(c, carry):
        base = pl.multiple_of(c * CM, 8)
        acc = None
        for kh in range(3):
            lo = pl.multiple_of(base + kh * WP, 8)
            slab = mid_ref[pl.ds(lo, CM + 16), :]         # aligned, (CM+16, CoutP)
            for kw in range(3):
                lhs = slab[7 + kw: 7 + kw + CM, :]
                d = jnp.dot(lhs, w2t[kh * 3 + kw],
                            preferred_element_type=jnp.float32)
                acc = d if acc is None else acc + d
        h2 = _gelu_exact(acc * scale2 + shift2)
        o_ref[pl.ds(base, CM), :] = h2.astype(o_ref.dtype)
        return carry

    lax.fori_loop(0, NCHUNK, pass2, 0, unroll=unroll)


def conv_block_forward(x_nchw, params):
    N, Cin, H, W = x_nchw.shape
    Cout = params["w1"].shape[-1]

    WP = _round_up(W + 2, 8)          # sublane-aligned row stride of padded plane
    M = H * WP                        # extended output plane size (multiple of 8)
    K1 = 9 * Cin
    K1P = _round_up(K1, 8)            # conv1 contraction dim (taps folded in)
    CoutP = _round_up(Cout, 8)
    MIDLEN = M + 2 * WP + 16

    # NCHW -> NHWC, spatial zero-pad (1 top/bottom, 1 left, WP-W-1 right),
    # flatten spatially, zero-pad the flat tail for the tap slices below.
    x = jnp.transpose(x_nchw, (0, 2, 3, 1)).astype(jnp.float32)
    xp = jnp.pad(x, ((0, 0), (1, 1), (1, WP - W - 1), (0, 0)))
    xf = jnp.pad(xp.reshape(N, (H + 2) * WP, Cin), ((0, 0), (0, 8), (0, 0)))

    # im2col over the 9 taps into the channel (contraction) axis:
    # x9[:, p, (kh*3+kw)*Cin + ci] = xpad[:, p + kh*WP + kw, ci].
    cols = [xf[:, kh * WP + kw: kh * WP + kw + M, :]
            for kh in range(3) for kw in range(3)]
    x9 = jnp.concatenate(cols, axis=-1)
    if K1P != K1:
        x9 = jnp.pad(x9, ((0, 0), (0, 0), (0, K1P - K1)))

    # conv1 weights (HWIO) with taps folded into K; conv2 taps kept separate.
    w1m = jnp.pad(params["w1"].reshape(K1, Cout).astype(jnp.float32),
                  ((0, K1P - K1), (0, CoutP - Cout)))
    w2f = jnp.pad(params["w2"].astype(jnp.float32),
                  ((0, 0), (0, 0), (0, CoutP - Cout), (0, CoutP - Cout))
                  ).reshape(9, CoutP, CoutP)

    # Fold conv bias + BatchNorm (running stats, eval mode) into scale/shift.
    scale1 = params["g1"] / jnp.sqrt(params["rv1"] + _EPS)
    shift1 = params["beta1"] + (params["b1"] - params["rm1"]) * scale1
    scale2 = params["g2"] / jnp.sqrt(params["rv2"] + _EPS)
    shift2 = params["beta2"] + (params["b2"] - params["rm2"]) * scale2
    p1 = jnp.pad(jnp.stack([scale1, shift1]).astype(jnp.float32),
                 ((0, 0), (0, CoutP - Cout)))
    p2 = jnp.pad(jnp.stack([scale2, shift2]).astype(jnp.float32),
                 ((0, 0), (0, CoutP - Cout)))

    CHUNK_H = _pick_chunk_h(H, WP)

    kernel = functools.partial(_conv_block_kernel, H=H, W=W, WP=WP,
                               CHUNK_H=CHUNK_H)

    # Advisory cost: count the lane-padded work the MXU actually executes
    # (1 matmul per output row for pass 1, 9 small ones for pass 2).
    cost = pl.CostEstimate(
        flops=2 * N * M * 128 * 128 * (1 + 9),
        transcendentals=2 * N * M * CoutP,
        bytes_accessed=4 * (x9.size + w1m.size + w2f.size + p1.size + p2.size
                            + N * M * CoutP),
    )

    # TODO(synk): for large H/W add a row-tile grid axis with 2-row halos (marked "parallel") so the plane is not VMEM-resident per batch element and both v7x cores stay busy at small N.
    out_flat = pl.pallas_call(
        kernel,
        out_shape=jax.ShapeDtypeStruct((N, M, CoutP), jnp.float32),
        grid_spec=pltpu.PrefetchScalarGridSpec(
            num_scalar_prefetch=0,
            grid=(N,),
            in_specs=[
                pl.BlockSpec((None, M, K1P), lambda n: (n, 0, 0)),
                pl.BlockSpec((K1P, CoutP), lambda n: (0, 0)),
                pl.BlockSpec((2, CoutP), lambda n: (0, 0)),
                pl.BlockSpec((9, CoutP, CoutP), lambda n: (0, 0, 0)),
                pl.BlockSpec((2, CoutP), lambda n: (0, 0)),
            ],
            out_specs=pl.BlockSpec((None, M, CoutP), lambda n: (n, 0, 0)),
            scratch_shapes=[pltpu.VMEM((MIDLEN, CoutP), jnp.float32)],
        ),
        compiler_params=pltpu.CompilerParams(
            dimension_semantics=("parallel",),
            vmem_limit_bytes=32 * 1024 * 1024,
        ),
        cost_estimate=cost,
    )(x9, w1m, p1, w2f, p2)

    # Strip the alignment columns / padded channels, back to NCHW.
    out = out_flat.reshape(N, H, WP, CoutP)[:, :, :W, :Cout]
    return jnp.transpose(out, (0, 3, 1, 2))


def ref_forward(x_nchw, params):
    """Plain-JAX reference of the PyTorch ConvBlock.forward (eval mode)."""
    x = jnp.transpose(x_nchw, (0, 2, 3, 1)).astype(jnp.float32)

    def conv(h, w, b):
        y = lax.conv_general_dilated(h, w, (1, 1), "SAME",
                                     dimension_numbers=("NHWC", "HWIO", "NHWC"))
        return y + b

    def bn(h, g, beta, rm, rv):
        return (h - rm) / jnp.sqrt(rv + _EPS) * g + beta

    h = conv(x, params["w1"], params["b1"])
    h = _gelu_exact(bn(h, params["g1"], params["beta1"], params["rm1"], params["rv1"]))
    # Dropout2d: identity in eval mode.
    h = conv(h, params["w2"], params["b2"])
    h = _gelu_exact(bn(h, params["g2"], params["beta2"], params["rm2"], params["rv2"]))
    return jnp.transpose(h, (0, 3, 1, 2))


def make_params(key, cin, cout):
    ks = jax.random.split(key, 12)
    f32 = jnp.float32
    return {
        # conv1 / conv2 weights in HWIO (== torch OIHW weight transposed to (kh,kw,ci,co))
        "w1": 0.2 * jax.random.normal(ks[0], (3, 3, cin, cout), f32),
        "b1": 0.1 * jax.random.normal(ks[1], (cout,), f32),
        "w2": 0.2 * jax.random.normal(ks[2], (3, 3, cout, cout), f32),
        "b2": 0.1 * jax.random.normal(ks[3], (cout,), f32),
        # BatchNorm1 (gamma, beta, running_mean, running_var)
        "g1": 1.0 + 0.1 * jax.random.normal(ks[4], (cout,), f32),
        "beta1": 0.1 * jax.random.normal(ks[5], (cout,), f32),
        "rm1": 0.1 * jax.random.normal(ks[6], (cout,), f32),
        "rv1": 1.0 + 0.2 * jax.random.uniform(ks[7], (cout,), f32),
        # BatchNorm2
        "g2": 1.0 + 0.1 * jax.random.normal(ks[8], (cout,), f32),
        "beta2": 0.1 * jax.random.normal(ks[9], (cout,), f32),
        "rm2": 0.1 * jax.random.normal(ks[10], (cout,), f32),
        "rv2": 1.0 + 0.2 * jax.random.uniform(ks[11], (cout,), f32),
    }


if __name__ == "__main__":
    key = jax.random.PRNGKey(0)
    kx, kp = jax.random.split(key)

    N, Cin, Cout, H, W = 2, 4, 8, 16, 16
    x = jax.random.normal(kx, (N, Cin, H, W), jnp.float32)
    params = make_params(kp, Cin, Cout)

    out = conv_block_forward(x, params)
    out = jax.block_until_ready(out)

    assert out.shape == (N, Cout, H, W), out.shape

    ref = ref_forward(x, params)
    if not bool(jnp.allclose(out, ref, atol=2e-3, rtol=2e-3)):
        err = float(jnp.max(jnp.abs(out - ref)))
        raise AssertionError(f"Pallas output mismatch vs reference, max abs err = {err:e}")

    print("KERNEL_OK")
</pallas_src>

<mosaic_0001>
module attributes {stable_mosaic.version = 11 : i64} {
  func.func @_conv_block_kernel(%arg0: i32, %arg1: memref<1x384x40xf32, #tpu.memory_space<vmem>>, %arg2: memref<40x8xf32, #tpu.memory_space<vmem>>, %arg3: memref<2x8xf32, #tpu.memory_space<vmem>>, %arg4: memref<9x8x8xf32, #tpu.memory_space<vmem>>, %arg5: memref<2x8xf32, #tpu.memory_space<vmem>>, %arg6: memref<1x384x8xf32, #tpu.memory_space<vmem>>, %arg7: memref<448x8xf32, #tpu.memory_space<vmem>>) attributes {dimension_semantics = [#tpu.dimension_semantics<parallel>], iteration_bounds = array<i64: 2>, scalar_prefetch = 0 : i64, scratch_operands = 1 : i64, tpu.core_type = #tpu.core_type<tc>, window_params = [{transform_indices = @transform_0, window_bounds = array<i64: 1, 384, 40>}, {pipeline_mode = #tpu.pipeline_mode<synchronous>, transform_indices = @transform_1, window_bounds = array<i64: 40, 8>}, {pipeline_mode = #tpu.pipeline_mode<synchronous>, transform_indices = @transform_2, window_bounds = array<i64: 2, 8>}, {pipeline_mode = #tpu.pipeline_mode<synchronous>, transform_indices = @transform_3, window_bounds = array<i64: 9, 8, 8>}, {pipeline_mode = #tpu.pipeline_mode<synchronous>, transform_indices = @transform_4, window_bounds = array<i64: 2, 8>}, {transform_indices = @transform_5, window_bounds = array<i64: 1, 384, 8>}]} {
    %cst = arith.constant 0.000000e+00 : f32
    %0 = vector.broadcast %cst : f32 to vector<32x8xf32>
    %c0 = arith.constant 0 : index
    %c0_0 = arith.constant 0 : index
    %1 = vector.load %arg7[%c0, %c0_0] : memref<448x8xf32, #tpu.memory_space<vmem>>, vector<32x8xf32>
    tpu.vector_store %arg7[%c0, %c0_0], %0 {strides = array<i32>} : memref<448x8xf32, #tpu.memory_space<vmem>>, vector<32x8xf32>,
    %cst_1 = arith.constant 0.000000e+00 : f32
    %2 = vector.broadcast %cst_1 : f32 to vector<32x8xf32>
    %c416 = arith.constant 416 : index
    %c0_2 = arith.constant 0 : index
    %3 = vector.load %arg7[%c416, %c0_2] : memref<448x8xf32, #tpu.memory_space<vmem>>, vector<32x8xf32>
    tpu.vector_store %arg7[%c416, %c0_2], %2 {strides = array<i32>} : memref<448x8xf32, #tpu.memory_space<vmem>>, vector<32x8xf32>,
    %c0_3 = arith.constant 0 : index
    %c0_4 = arith.constant 0 : index
    %4 = vector.load %arg3[%c0_3, %c0_4] : memref<2x8xf32, #tpu.memory_space<vmem>>, vector<1x8xf32>
    %c1 = arith.constant 1 : index
    %c0_5 = arith.constant 0 : index
    %5 = vector.load %arg3[%c1, %c0_5] : memref<2x8xf32, #tpu.memory_space<vmem>>, vector<1x8xf32>
    %c0_6 = arith.constant 0 : index
    %c0_7 = arith.constant 0 : index
    %6 = vector.load %arg2[%c0_6, %c0_7] : memref<40x8xf32, #tpu.memory_space<vmem>>, vector<40x8xf32>
    %7 = tpu.iota {dimensions = array<i32: 0>} : vector<192x1xi32>
    %c24_i32 = arith.constant 24 : i32
    %c0_i32 = arith.constant 0 : i32
    %8 = arith.cmpi eq, %c24_i32, %c0_i32 : i32
    %c1_i32 = arith.constant 1 : i32
    %9 = arith.select %8, %c1_i32, %c24_i32 : i32
    %10 = vector.broadcast %9 : i32 to vector<192x1xi32>
    %11 = arith.remsi %7, %10 : vector<192x1xi32>
    %c0_i32_8 = arith.constant 0 : i32
    %12 = vector.broadcast %c0_i32_8 : i32 to vector<192x1xi32>
    %13 = arith.cmpi ne, %11, %12 : vector<192x1xi32>
    %c0_i32_9 = arith.constant 0 : i32
    %14 = vector.broadcast %c0_i32_9 : i32 to vector<192x1xi32>
    %15 = arith.cmpi slt, %11, %14 : vector<192x1xi32>
    %c0_i32_10 = arith.constant 0 : i32
    %16 = arith.cmpi slt, %9, %c0_i32_10 : i32
    %17 = vector.broadcast %16 : i1 to vector<192x1xi1>
    %18 = vector.broadcast %17 : vector<192x1xi1> to vector<192x1xi1>
    %19 = arith.xori %15, %18 : vector<192x1xi1>
    %20 = arith.andi %19, %13 : vector<192x1xi1>
    %21 = vector.broadcast %9 : i32 to vector<192x1xi32>
    %22 = arith.addi %11, %21 : vector<192x1xi32>
    %23 = arith.select %20, %22, %11 : vector<192x1xi1>, vector<192x1xi32>
    %c16_i32 = arith.constant 16 : i32
    %24 = vector.broadcast %c16_i32 : i32 to vector<192x1xi32>
    %25 = arith.cmpi slt, %23, %24 : vector<192x1xi32>
    %26 = arith.extui %25 : vector<192x1xi1> to vector<192x1xi32>
    %27 = arith.sitofp %26 : vector<192x1xi32> to vector<192x1xf32>
    %c0_i32_11 = arith.constant 0 : i32
    %c192_i32 = arith.constant 192 : i32
    %28 = arith.muli %c0_i32_11, %c192_i32 : i32
    %29 = tpu.assume_multiple %28, 8 : i32
    %c0_12 = arith.constant 0 : index
    %30 = arith.index_cast %29 : i32 to index
    %c0_13 = arith.constant 0 : index
    %31 = vector.load %arg1[%c0_12, %30, %c0_13] : memref<1x384x40xf32, #tpu.memory_space<vmem>>, vector<1x192x40xf32>
    %32 = vector.shape_cast %31 : vector<1x192x40xf32> to vector<192x40xf32>
    %cst_14 = arith.constant dense<0.000000e+00> : vector<192x8xf32>
    %33 = tpu.matmul %32, %6, %cst_14 {dimension_numbers = #tpu.dot_dimension_numbers<[1], [0], [0], [1], [0, 0, 1, 1], [], []>} : vector<192x40xf32>, vector<40x8xf32>, vector<192x8xf32> -> vector<192x8xf32>
    %34 = vector.broadcast %4 : vector<1x8xf32> to vector<192x8xf32>
    %35 = arith.mulf %33, %34 : vector<192x8xf32>
    %36 = vector.broadcast %5 : vector<1x8xf32> to vector<192x8xf32>
    %37 = arith.addf %35, %36 : vector<192x8xf32>
    %cst_15 = arith.constant 5.000000e-01 : f32
    %38 = vector.broadcast %cst_15 : f32 to vector<192x8xf32>
    %39 = arith.mulf %38, %37 : vector<192x8xf32>
    %cst_16 = arith.constant 0.707106769 : f32
    %40 = vector.broadcast %cst_16 : f32 to vector<192x8xf32>
    %41 = arith.mulf %37, %40 : vector<192x8xf32>
    %42 = math.erf %41 : vector<192x8xf32>
    %cst_17 = arith.constant 1.000000e+00 : f32
    %43 = vector.broadcast %cst_17 : f32 to vector<192x8xf32>
    %44 = arith.addf %43, %42 : vector<192x8xf32>
    %45 = arith.mulf %39, %44 : vector<192x8xf32>
    %46 = vector.broadcast %27 : vector<192x1xf32> to vector<192x8xf32>
    %47 = arith.mulf %45, %46 : vector<192x8xf32>
    %c24_i32_18 = arith.constant 24 : i32
    %48 = arith.addi %29, %c24_i32_18 : i32
    %c8_i32 = arith.constant 8 : i32
    %49 = arith.addi %48, %c8_i32 : i32
    %50 = tpu.assume_multiple %49, 8 : i32
    %51 = arith.index_cast %50 : i32 to index
    %c0_19 = arith.constant 0 : index
    %52 = vector.load %arg7[%51, %c0_19] : memref<448x8xf32, #tpu.memory_space<vmem>>, vector<192x8xf32>
    tpu.vector_store %arg7[%51, %c0_19], %47 {strides = array<i32>} : memref<448x8xf32, #tpu.memory_space<vmem>>, vector<192x8xf32>,
    %c1_i32_20 = arith.constant 1 : i32
    %c192_i32_21 = arith.constant 192 : i32
    %53 = arith.muli %c1_i32_20, %c192_i32_21 : i32
    %54 = tpu.assume_multiple %53, 8 : i32
    %c0_22 = arith.constant 0 : index
    %55 = arith.index_cast %54 : i32 to index
    %c0_23 = arith.constant 0 : index
    %56 = vector.load %arg1[%c0_22, %55, %c0_23] : memref<1x384x40xf32, #tpu.memory_space<vmem>>, vector<1x192x40xf32>
    %57 = vector.shape_cast %56 : vector<1x192x40xf32> to vector<192x40xf32>
    %cst_24 = arith.constant dense<0.000000e+00> : vector<192x8xf32>
    %58 = tpu.matmul %57, %6, %cst_24 {dimension_numbers = #tpu.dot_dimension_numbers<[1], [0], [0], [1], [0, 0, 1, 1], [], []>} : vector<192x40xf32>, vector<40x8xf32>, vector<192x8xf32> -> vector<192x8xf32>
    %59 = vector.broadcast %4 : vector<1x8xf32> to vector<192x8xf32>
    %60 = arith.mulf %58, %59 : vector<192x8xf32>
    %61 = vector.broadcast %5 : vector<1x8xf32> to vector<192x8xf32>
    %62 = arith.addf %60, %61 : vector<192x8xf32>
    %cst_25 = arith.constant 5.000000e-01 : f32
    %63 = vector.broadcast %cst_25 : f32 to vector<192x8xf32>
    %64 = arith.mulf %63, %62 : vector<192x8xf32>
    %cst_26 = arith.constant 0.707106769 : f32
    %65 = vector.broadcast %cst_26 : f32 to vector<192x8xf32>
    %66 = arith.mulf %62, %65 : vector<192x8xf32>
    %67 = math.erf %66 : vector<192x8xf32>
    %cst_27 = arith.constant 1.000000e+00 : f32
    %68 = vector.broadcast %cst_27 : f32 to vector<192x8xf32>
    %69 = arith.addf %68, %67 : vector<192x8xf32>
    %70 = arith.mulf %64, %69 : vector<192x8xf32>
    %71 = vector.broadcast %27 : vector<192x1xf32> to vector<192x8xf32>
    %72 = arith.mulf %70, %71 : vector<192x8xf32>
    %c24_i32_28 = arith.constant 24 : i32
    %73 = arith.addi %54, %c24_i32_28 : i32
    %c8_i32_29 = arith.constant 8 : i32
    %74 = arith.addi %73, %c8_i32_29 : i32
    %75 = tpu.assume_multiple %74, 8 : i32
    %76 = arith.index_cast %75 : i32 to index
    %c0_30 = arith.constant 0 : index
    %77 = vector.load %arg7[%76, %c0_30] : memref<448x8xf32, #tpu.memory_space<vmem>>, vector<192x8xf32>
    tpu.vector_store %arg7[%76, %c0_30], %72 {strides = array<i32>} : memref<448x8xf32, #tpu.memory_space<vmem>>, vector<192x8xf32>,
    %c2_i32 = arith.constant 2 : i32
    %c0_31 = arith.constant 0 : index
    %c0_32 = arith.constant 0 : index
    %78 = vector.load %arg5[%c0_31, %c0_32] : memref<2x8xf32, #tpu.memory_space<vmem>>, vector<1x8xf32>
    %c1_33 = arith.constant 1 : index
    %c0_34 = arith.constant 0 : index
    %79 = vector.load %arg5[%c1_33, %c0_34] : memref<2x8xf32, #tpu.memory_space<vmem>>, vector<1x8xf32>
    %c0_35 = arith.constant 0 : index
    %c0_36 = arith.constant 0 : index
    %c0_37 = arith.constant 0 : index
    %80 = vector.load %arg4[%c0_35, %c0_36, %c0_37] : memref<9x8x8xf32, #tpu.memory_space<vmem>>, vector<1x8x8xf32>
    %81 = vector.shape_cast %80 : vector<1x8x8xf32> to vector<8x8xf32>
    %c1_38 = arith.constant 1 : index
    %c0_39 = arith.constant 0 : index
    %c0_40 = arith.constant 0 : index
    %82 = vector.load %arg4[%c1_38, %c0_39, %c0_40] : memref<9x8x8xf32, #tpu.memory_space<vmem>>, vector<1x8x8xf32>
    %83 = vector.shape_cast %82 : vector<1x8x8xf32> to vector<8x8xf32>
    %c2 = arith.constant 2 : index
    %c0_41 = arith.constant 0 : index
    %c0_42 = arith.constant 0 : index
    %84 = vector.load %arg4[%c2, %c0_41, %c0_42] : memref<9x8x8xf32, #tpu.memory_space<vmem>>, vector<1x8x8xf32>
    %85 = vector.shape_cast %84 : vector<1x8x8xf32> to vector<8x8xf32>
    %c3 = arith.constant 3 : index
    %c0_43 = arith.constant 0 : index
    %c0_44 = arith.constant 0 : index
    %86 = vector.load %arg4[%c3, %c0_43, %c0_44] : memref<9x8x8xf32, #tpu.memory_space<vmem>>, vector<1x8x8xf32>
    %87 = vector.shape_cast %86 : vector<1x8x8xf32> to vector<8x8xf32>
    %c4 = arith.constant 4 : index
    %c0_45 = arith.constant 0 : index
    %c0_46 = arith.constant 0 : index
    %88 = vector.load %arg4[%c4, %c0_45, %c0_46] : memref<9x8x8xf32, #tpu.memory_space<vmem>>, vector<1x8x8xf32>
    %89 = vector.shape_cast %88 : vector<1x8x8xf32> to vector<8x8xf32>
    %c5 = arith.constant 5 : index
    %c0_47 = arith.constant 0 : index
    %c0_48 = arith.constant 0 : index
    %90 = vector.load %arg4[%c5, %c0_47, %c0_48] : memref<9x8x8xf32, #tpu.memory_space<vmem>>, vector<1x8x8xf32>
    %91 = vector.shape_cast %90 : vector<1x8x8xf32> to vector<8x8xf32>
    %c6 = arith.constant 6 : index
    %c0_49 = arith.constant 0 : index
    %c0_50 = arith.constant 0 : index
    %92 = vector.load %arg4[%c6, %c0_49, %c0_50] : memref<9x8x8xf32, #tpu.memory_space<vmem>>, vector<1x8x8xf32>
    %93 = vector.shape_cast %92 : vector<1x8x8xf32> to vector<8x8xf32>
    %c7 = arith.constant 7 : index
    %c0_51 = arith.constant 0 : index
    %c0_52 = arith.constant 0 : index
    %94 = vector.load %arg4[%c7, %c0_51, %c0_52] : memref<9x8x8xf32, #tpu.memory_space<vmem>>, vector<1x8x8xf32>
    %95 = vector.shape_cast %94 : vector<1x8x8xf32> to vector<8x8xf32>
    %c8 = arith.constant 8 : index
    %c0_53 = arith.constant 0 : index
    %c0_54 = arith.constant 0 : index
    %96 = vector.load %arg4[%c8, %c0_53, %c0_54] : memref<9x8x8xf32, #tpu.memory_space<vmem>>, vector<1x8x8xf32>
    %97 = vector.shape_cast %96 : vector<1x8x8xf32> to vector<8x8xf32>
    %c0_i32_55 = arith.constant 0 : i32
    %c192_i32_56 = arith.constant 192 : i32
    %98 = arith.muli %c0_i32_55, %c192_i32_56 : i32
    %99 = tpu.assume_multiple %98, 8 : i32
    %c0_i32_57 = arith.constant 0 : i32
    %100 = arith.addi %99, %c0_i32_57 : i32
    %101 = tpu.assume_multiple %100, 8 : i32
    %102 = arith.index_cast %101 : i32 to index
    %c0_58 = arith.constant 0 : index
    %103 = vector.load %arg7[%102, %c0_58] : memref<448x8xf32, #tpu.memory_space<vmem>>, vector<208x8xf32>
    %104 = vector.extract_strided_slice %103 {offsets = [7, 0], sizes = [192, 8], strides = [1, 1]} : vector<208x8xf32> to vector<192x8xf32>
    %cst_59 = arith.constant dense<0.000000e+00> : vector<192x8xf32>
    %105 = tpu.matmul %104, %81, %cst_59 {dimension_numbers = #tpu.dot_dimension_numbers<[1], [0], [0], [1], [0, 0, 1, 1], [], []>} : vector<192x8xf32>, vector<8x8xf32>, vector<192x8xf32> -> vector<192x8xf32>
    %106 = vector.extract_strided_slice %103 {offsets = [8, 0], sizes = [192, 8], strides = [1, 1]} : vector<208x8xf32> to vector<192x8xf32>
    %cst_60 = arith.constant dense<0.000000e+00> : vector<192x8xf32>
    %107 = tpu.matmul %106, %83, %cst_60 {dimension_numbers = #tpu.dot_dimension_numbers<[1], [0], [0], [1], [0, 0, 1, 1], [], []>} : vector<192x8xf32>, vector<8x8xf32>, vector<192x8xf32> -> vector<192x8xf32>
    %108 = arith.addf %105, %107 : vector<192x8xf32>
    %109 = vector.extract_strided_slice %103 {offsets = [9, 0], sizes = [192, 8], strides = [1, 1]} : vector<208x8xf32> to vector<192x8xf32>
    %cst_61 = arith.constant dense<0.000000e+00> : vector<192x8xf32>
    %110 = tpu.matmul %109, %85, %cst_61 {dimension_numbers = #tpu.dot_dimension_numbers<[1], [0], [0], [1], [0, 0, 1, 1], [], []>} : vector<192x8xf32>, vector<8x8xf32>, vector<192x8xf32> -> vector<192x8xf32>
    %111 = arith.addf %108, %110 : vector<192x8xf32>
    %c24_i32_62 = arith.constant 24 : i32
    %112 = arith.addi %99, %c24_i32_62 : i32
    %113 = tpu.assume_multiple %112, 8 : i32
    %114 = arith.index_cast %113 : i32 to index
    %c0_63 = arith.constant 0 : index
    %115 = vector.load %arg7[%114, %c0_63] : memref<448x8xf32, #tpu.memory_space<vmem>>, vector<208x8xf32>
    %116 = vector.extract_strided_slice %115 {offsets = [7, 0], sizes = [192, 8], strides = [1, 1]} : vector<208x8xf32> to vector<192x8xf32>
    %cst_64 = arith.constant dense<0.000000e+00> : vector<192x8xf32>
    %117 = tpu.matmul %116, %87, %cst_64 {dimension_numbers = #tpu.dot_dimension_numbers<[1], [0], [0], [1], [0, 0, 1, 1], [], []>} : vector<192x8xf32>, vector<8x8xf32>, vector<192x8xf32> -> vector<192x8xf32>
    %118 = arith.addf %111, %117 : vector<192x8xf32>
    %119 = vector.extract_strided_slice %115 {offsets = [8, 0], sizes = [192, 8], strides = [1, 1]} : vector<208x8xf32> to vector<192x8xf32>
    %cst_65 = arith.constant dense<0.000000e+00> : vector<192x8xf32>
    %120 = tpu.matmul %119, %89, %cst_65 {dimension_numbers = #tpu.dot_dimension_numbers<[1], [0], [0], [1], [0, 0, 1, 1], [], []>} : vector<192x8xf32>, vector<8x8xf32>, vector<192x8xf32> -> vector<192x8xf32>
    %121 = arith.addf %118, %120 : vector<192x8xf32>
    %122 = vector.extract_strided_slice %115 {offsets = [9, 0], sizes = [192, 8], strides = [1, 1]} : vector<208x8xf32> to vector<192x8xf32>
    %cst_66 = arith.constant dense<0.000000e+00> : vector<192x8xf32>
    %123 = tpu.matmul %122, %91, %cst_66 {dimension_numbers = #tpu.dot_dimension_numbers<[1], [0], [0], [1], [0, 0, 1, 1], [], []>} : vector<192x8xf32>, vector<8x8xf32>, vector<192x8xf32> -> vector<192x8xf32>
    %124 = arith.addf %121, %123 : vector<192x8xf32>
    %c48_i32 = arith.constant 48 : i32
    %125 = arith.addi %99, %c48_i32 : i32
    %126 = tpu.assume_multiple %125, 8 : i32
    %127 = arith.index_cast %126 : i32 to index
    %c0_67 = arith.constant 0 : index
    %128 = vector.load %arg7[%127, %c0_67] : memref<448x8xf32, #tpu.memory_space<vmem>>, vector<208x8xf32>
    %129 = vector.extract_strided_slice %128 {offsets = [7, 0], sizes = [192, 8], strides = [1, 1]} : vector<208x8xf32> to vector<192x8xf32>
    %cst_68 = arith.constant dense<0.000000e+00> : vector<192x8xf32>
    %130 = tpu.matmul %129, %93, %cst_68 {dimension_numbers = #tpu.dot_dimension_numbers<[1], [0], [0], [1], [0, 0, 1, 1], [], []>} : vector<192x8xf32>, vector<8x8xf32>, vector<192x8xf32> -> vector<192x8xf32>
    %131 = arith.addf %124, %130 : vector<192x8xf32>
    %132 = vector.extract_strided_slice %128 {offsets = [8, 0], sizes = [192, 8], strides = [1, 1]} : vector<208x8xf32> to vector<192x8xf32>
    %cst_69 = arith.constant dense<0.000000e+00> : vector<192x8xf32>
    %133 = tpu.matmul %132, %95, %cst_69 {dimension_numbers = #tpu.dot_dimension_numbers<[1], [0], [0], [1], [0, 0, 1, 1], [], []>} : vector<192x8xf32>, vector<8x8xf32>, vector<192x8xf32> -> vector<192x8xf32>
    %134 = arith.addf %131, %133 : vector<192x8xf32>
    %135 = vector.extract_strided_slice %128 {offsets = [9, 0], sizes = [192, 8], strides = [1, 1]} : vector<208x8xf32> to vector<192x8xf32>
    %cst_70 = arith.constant dense<0.000000e+00> : vector<192x8xf32>
    %136 = tpu.matmul %135, %97, %cst_70 {dimension_numbers = #tpu.dot_dimension_numbers<[1], [0], [0], [1], [0, 0, 1, 1], [], []>} : vector<192x8xf32>, vector<8x8xf32>, vector<192x8xf32> -> vector<192x8xf32>
    %137 = arith.addf %134, %136 : vector<192x8xf32>
    %138 = vector.broadcast %78 : vector<1x8xf32> to vector<192x8xf32>
    %139 = arith.mulf %137, %138 : vector<192x8xf32>
    %140 = vector.broadcast %79 : vector<1x8xf32> to vector<192x8xf32>
    %141 = arith.addf %139, %140 : vector<192x8xf32>
    %cst_71 = arith.constant 5.000000e-01 : f32
    %142 = vector.broadcast %cst_71 : f32 to vector<192x8xf32>
    %143 = arith.mulf %142, %141 : vector<192x8xf32>
    %cst_72 = arith.constant 0.707106769 : f32
    %144 = vector.broadcast %cst_72 : f32 to vector<192x8xf32>
    %145 = arith.mulf %141, %144 : vector<192x8xf32>
    %146 = math.erf %145 : vector<192x8xf32>
    %cst_73 = arith.constant 1.000000e+00 : f32
    %147 = vector.broadcast %cst_73 : f32 to vector<192x8xf32>
    %148 = arith.addf %147, %146 : vector<192x8xf32>
    %149 = arith.mulf %143, %148 : vector<192x8xf32>
    %c0_74 = arith.constant 0 : index
    %150 = arith.index_cast %99 : i32 to index
    %c0_75 = arith.constant 0 : index
    %151 = vector.load %arg6[%c0_74, %150, %c0_75] : memref<1x384x8xf32, #tpu.memory_space<vmem>>, vector<1x192x8xf32>
    %152 = vector.shape_cast %151 : vector<1x192x8xf32> to vector<192x8xf32>
    %153 = vector.shape_cast %149 : vector<192x8xf32> to vector<1x192x8xf32>
    tpu.vector_store %arg6[%c0_74, %150, %c0_75], %153 {strides = array<i32>} : memref<1x384x8xf32, #tpu.memory_space<vmem>>, vector<1x192x8xf32>,
    %c1_i32_76 = arith.constant 1 : i32
    %c192_i32_77 = arith.constant 192 : i32
    %154 = arith.muli %c1_i32_76, %c192_i32_77 : i32
    %155 = tpu.assume_multiple %154, 8 : i32
    %c0_i32_78 = arith.constant 0 : i32
    %156 = arith.addi %155, %c0_i32_78 : i32
    %157 = tpu.assume_multiple %156, 8 : i32
    %158 = arith.index_cast %157 : i32 to index
    %c0_79 = arith.constant 0 : index
    %159 = vector.load %arg7[%158, %c0_79] : memref<448x8xf32, #tpu.memory_space<vmem>>, vector<208x8xf32>
    %160 = vector.extract_strided_slice %159 {offsets = [7, 0], sizes = [192, 8], strides = [1, 1]} : vector<208x8xf32> to vector<192x8xf32>
    %cst_80 = arith.constant dense<0.000000e+00> : vector<192x8xf32>
    %161 = tpu.matmul %160, %81, %cst_80 {dimension_numbers = #tpu.dot_dimension_numbers<[1], [0], [0], [1], [0, 0, 1, 1], [], []>} : vector<192x8xf32>, vector<8x8xf32>, vector<192x8xf32> -> vector<192x8xf32>
    %162 = vector.extract_strided_slice %159 {offsets = [8, 0], sizes = [192, 8], strides = [1, 1]} : vector<208x8xf32> to vector<192x8xf32>
    %cst_81 = arith.constant dense<0.000000e+00> : vector<192x8xf32>
    %163 = tpu.matmul %162, %83, %cst_81 {dimension_numbers = #tpu.dot_dimension_numbers<[1], [0], [0], [1], [0, 0, 1, 1], [], []>} : vector<192x8xf32>, vector<8x8xf32>, vector<192x8xf32> -> vector<192x8xf32>
    %164 = arith.addf %161, %163 : vector<192x8xf32>
    %165 = vector.extract_strided_slice %159 {offsets = [9, 0], sizes = [192, 8], strides = [1, 1]} : vector<208x8xf32> to vector<192x8xf32>
    %cst_82 = arith.constant dense<0.000000e+00> : vector<192x8xf32>
    %166 = tpu.matmul %165, %85, %cst_82 {dimension_numbers = #tpu.dot_dimension_numbers<[1], [0], [0], [1], [0, 0, 1, 1], [], []>} : vector<192x8xf32>, vector<8x8xf32>, vector<192x8xf32> -> vector<192x8xf32>
    %167 = arith.addf %164, %166 : vector<192x8xf32>
    %c24_i32_83 = arith.constant 24 : i32
    %168 = arith.addi %155, %c24_i32_83 : i32
    %169 = tpu.assume_multiple %168, 8 : i32
    %170 = arith.index_cast %169 : i32 to index
    %c0_84 = arith.constant 0 : index
    %171 = vector.load %arg7[%170, %c0_84] : memref<448x8xf32, #tpu.memory_space<vmem>>, vector<208x8xf32>
    %172 = vector.extract_strided_slice %171 {offsets = [7, 0], sizes = [192, 8], strides = [1, 1]} : vector<208x8xf32> to vector<192x8xf32>
    %cst_85 = arith.constant dense<0.000000e+00> : vector<192x8xf32>
    %173 = tpu.matmul %172, %87, %cst_85 {dimension_numbers = #tpu.dot_dimension_numbers<[1], [0], [0], [1], [0, 0, 1, 1], [], []>} : vector<192x8xf32>, vector<8x8xf32>, vector<192x8xf32> -> vector<192x8xf32>
    %174 = arith.addf %167, %173 : vector<192x8xf32>
    %175 = vector.extract_strided_slice %171 {offsets = [8, 0], sizes = [192, 8], strides = [1, 1]} : vector<208x8xf32> to vector<192x8xf32>
    %cst_86 = arith.constant dense<0.000000e+00> : vector<192x8xf32>
    %176 = tpu.matmul %175, %89, %cst_86 {dimension_numbers = #tpu.dot_dimension_numbers<[1], [0], [0], [1], [0, 0, 1, 1], [], []>} : vector<192x8xf32>, vector<8x8xf32>, vector<192x8xf32> -> vector<192x8xf32>
    %177 = arith.addf %174, %176 : vector<192x8xf32>
    %178 = vector.extract_strided_slice %171 {offsets = [9, 0], sizes = [192, 8], strides = [1, 1]} : vector<208x8xf32> to vector<192x8xf32>
    %cst_87 = arith.constant dense<0.000000e+00> : vector<192x8xf32>
    %179 = tpu.matmul %178, %91, %cst_87 {dimension_numbers = #tpu.dot_dimension_numbers<[1], [0], [0], [1], [0, 0, 1, 1], [], []>} : vector<192x8xf32>, vector<8x8xf32>, vector<192x8xf32> -> vector<192x8xf32>
    %180 = arith.addf %177, %179 : vector<192x8xf32>
    %c48_i32_88 = arith.constant 48 : i32
    %181 = arith.addi %155, %c48_i32_88 : i32
    %182 = tpu.assume_multiple %181, 8 : i32
    %183 = arith.index_cast %182 : i32 to index
    %c0_89 = arith.constant 0 : index
    %184 = vector.load %arg7[%183, %c0_89] : memref<448x8xf32, #tpu.memory_space<vmem>>, vector<208x8xf32>
    %185 = vector.extract_strided_slice %184 {offsets = [7, 0], sizes = [192, 8], strides = [1, 1]} : vector<208x8xf32> to vector<192x8xf32>
    %cst_90 = arith.constant dense<0.000000e+00> : vector<192x8xf32>
    %186 = tpu.matmul %185, %93, %cst_90 {dimension_numbers = #tpu.dot_dimension_numbers<[1], [0], [0], [1], [0, 0, 1, 1], [], []>} : vector<192x8xf32>, vector<8x8xf32>, vector<192x8xf32> -> vector<192x8xf32>
    %187 = arith.addf %180, %186 : vector<192x8xf32>
    %188 = vector.extract_strided_slice %184 {offsets = [8, 0], sizes = [192, 8], strides = [1, 1]} : vector<208x8xf32> to vector<192x8xf32>
    %cst_91 = arith.constant dense<0.000000e+00> : vector<192x8xf32>
    %189 = tpu.matmul %188, %95, %cst_91 {dimension_numbers = #tpu.dot_dimension_numbers<[1], [0], [0], [1], [0, 0, 1, 1], [], []>} : vector<192x8xf32>, vector<8x8xf32>, vector<192x8xf32> -> vector<192x8xf32>
    %190 = arith.addf %187, %189 : vector<192x8xf32>
    %191 = vector.extract_strided_slice %184 {offsets = [9, 0], sizes = [192, 8], strides = [1, 1]} : vector<208x8xf32> to vector<192x8xf32>
    %cst_92 = arith.constant dense<0.000000e+00> : vector<192x8xf32>
    %192 = tpu.matmul %191, %97, %cst_92 {dimension_numbers = #tpu.dot_dimension_numbers<[1], [0], [0], [1], [0, 0, 1, 1], [], []>} : vector<192x8xf32>, vector<8x8xf32>, vector<192x8xf32> -> vector<192x8xf32>
    %193 = arith.addf %190, %192 : vector<192x8xf32>
    %194 = vector.broadcast %78 : vector<1x8xf32> to vector<192x8xf32>
    %195 = arith.mulf %193, %194 : vector<192x8xf32>
    %196 = vector.broadcast %79 : vector<1x8xf32> to vector<192x8xf32>
    %197 = arith.addf %195, %196 : vector<192x8xf32>
    %cst_93 = arith.constant 5.000000e-01 : f32
    %198 = vector.broadcast %cst_93 : f32 to vector<192x8xf32>
    %199 = arith.mulf %198, %197 : vector<192x8xf32>
    %cst_94 = arith.constant 0.707106769 : f32
    %200 = vector.broadcast %cst_94 : f32 to vector<192x8xf32>
    %201 = arith.mulf %197, %200 : vector<192x8xf32>
    %202 = math.erf %201 : vector<192x8xf32>
    %cst_95 = arith.constant 1.000000e+00 : f32
    %203 = vector.broadcast %cst_95 : f32 to vector<192x8xf32>
    %204 = arith.addf %203, %202 : vector<192x8xf32>
    %205 = arith.mulf %199, %204 : vector<192x8xf32>
    %c0_96 = arith.constant 0 : index
    %206 = arith.index_cast %155 : i32 to index
    %c0_97 = arith.constant 0 : index
    %207 = vector.load %arg6[%c0_96, %206, %c0_97] : memref<1x384x8xf32, #tpu.memory_space<vmem>>, vector<1x192x8xf32>
    %208 = vector.shape_cast %207 : vector<1x192x8xf32> to vector<192x8xf32>
    %209 = vector.shape_cast %205 : vector<192x8xf32> to vector<1x192x8xf32>
    tpu.vector_store %arg6[%c0_96, %206, %c0_97], %209 {strides = array<i32>} : memref<1x384x8xf32, #tpu.memory_space<vmem>>, vector<1x192x8xf32>,
    %c2_i32_98 = arith.constant 2 : i32
    return
  }
  func.func @transform_0(%arg0: i32) -> (i32, i32, i32) {
    %c0_i32 = arith.constant 0 : i32
    %c0_i32_0 = arith.constant 0 : i32
    %c0_i32_1 = arith.constant 0 : i32
    return %arg0, %c0_i32, %c0_i32_0 : i32, i32, i32
  }
  func.func @transform_1(%arg0: i32) -> (i32, i32) {
    %c0_i32 = arith.constant 0 : i32
    %c0_i32_0 = arith.constant 0 : i32
    %c0_i32_1 = arith.constant 0 : i32
    return %c0_i32, %c0_i32_0 : i32, i32
  }
  func.func @transform_2(%arg0: i32) -> (i32, i32) {
    %c0_i32 = arith.constant 0 : i32
    %c0_i32_0 = arith.constant 0 : i32
    %c0_i32_1 = arith.constant 0 : i32
    return %c0_i32, %c0_i32_0 : i32, i32
  }
  func.func @transform_3(%arg0: i32) -> (i32, i32, i32) {
    %c0_i32 = arith.constant 0 : i32
    %c0_i32_0 = arith.constant 0 : i32
    %c0_i32_1 = arith.constant 0 : i32
    %c0_i32_2 = arith.constant 0 : i32
    return %c0_i32, %c0_i32_0, %c0_i32_1 : i32, i32, i32
  }
  func.func @transform_4(%arg0: i32) -> (i32, i32) {
    %c0_i32 = arith.constant 0 : i32
    %c0_i32_0 = arith.constant 0 : i32
    %c0_i32_1 = arith.constant 0 : i32
    return %c0_i32, %c0_i32_0 : i32, i32
  }
  func.func @transform_5(%arg0: i32) -> (i32, i32, i32) {
    %c0_i32 = arith.constant 0 : i32
    %c0_i32_0 = arith.constant 0 : i32
    %c0_i32_1 = arith.constant 0 : i32
    return %arg0, %c0_i32, %c0_i32_0 : i32, i32, i32
  }
}

</mosaic_0001>

<llo_original>
// kernel: tpu_custom_call.1
$region0: #{tpu_custom_call.1}
  #allocation0 [shape = 'u32[]', space=smem, size = 0x4, offset = 0x4, fixed_abs, tag = 'smem constant byte address 0x4 - core index']
  #allocation1 [shape = 'u32[144,128]{1,0:T(1,128)}', space=vmem, size = 0x12000, scoped, tag = 'internal scratch']
  #allocation2 [shape = 'f32[448,8]{1,0:T(8,128)}', space=vmem, size = 0x38000, scoped, tag = 'scratch operand']
  %s0 = inlined_call_operand.vmem [shape: f32[2,384,40], index: 0, kind: input, shape index: {}]
  %s1 = inlined_call_operand.vmem [shape: f32[40,8], index: 1, kind: input, shape index: {}]
  %s2 = inlined_call_operand.vmem [shape: f32[2,8], index: 2, kind: input, shape index: {}]
  %s3 = inlined_call_operand.vmem [shape: f32[9,8,8], index: 3, kind: input, shape index: {}]
  %s4 = inlined_call_operand.vmem [shape: f32[2,8], index: 4, kind: input, shape index: {}]
  %s5 = inlined_call_operand.vmem [shape: f32[2,384,8], index: 5, kind: output, shape index: {}]
  %s6 = sld [smem:[#allocation0]]
  $region53: #{tpu_custom_call.1} parent=0
    _
  %s8 = ssub.s32 1, %s6
  %s9 = scalar_select 0, %s8, %s6
  loop: start=0, step=1, limit=4
  $region2: #{tpu_custom_call.1} parent=0 // loop_pre_header
    _
  $region3: #{tpu_custom_call.1} parent=0 // loop_header
    %s11 = sphi 0, %s15
    %p12 = scmp.ge.s32.totalorder %s11, 4
    %s21 = sphi 0, %s23
    %s24 = sphi 0, %s21
    %s25 = sphi 0, %s24
    %s41 = sphi 0, %s25
    %s45 = sphi 0, %s45
    %s47 = sphi 0, %s45
    %s48 = sphi 0, %s47
    %s62 = sphi 0, %s48
    %s66 = sphi 0, %s66
    %s68 = sphi 0, %s66
    %s69 = sphi 0, %s68
    %s83 = sphi 0, %s69
    %s87 = sphi 0, %s87
    %s89 = sphi 0, %s87
    %s90 = sphi 0, %s89
    %s104 = sphi 0, %s90
    %s108 = sphi 0, %s108
    %s110 = sphi 0, %s108
    %s111 = sphi 0, %s110
    %s125 = sphi 0, %s111
    %s131 = sphi 0, %s133
    %s134 = sphi 0, %s131
    %s135 = sphi 0, %s134
    %s151 = sphi 0, %s135
  $region4: #{tpu_custom_call.1} parent=0 // loop_header_branch
    %14 = sbr.rel (%p12) target = $region8
  $region5: #{tpu_custom_call.1} parent=0 // loop_body
    %s16 = ssub.s32 %s11, 1
    %s17 = ssub.s32 %s11, 2
    %s18 = sadd.s32 %s11, 1
    %s19 = ssub.s32 %s11, %s18
    %p20 = scmp.eq.s32.totalorder %s19, 0
    %s22 = sadd.s32 %s21, 1
    %s23 = scalar_select %p20, %s21, %s22
    %p26 = pneg %p20
    %p27 = scmp.eq.s32.totalorder %s11, 1
    %p28 = por %p26, %p27
    %p29 = scmp.ne.s32.totalorder %s21, %s24
    %p30 = scmp.eq.s32.totalorder %s11, 0
    %p31 = por %p29, %p30
    %p32 = scmp.ne.s32.totalorder %s21, %s24
    %p33 = scmp.eq.s32.totalorder %s16, 1
    %p34 = por %p32, %p33
    %p35 = scmp.ne.s32.totalorder %s24, %s25
    %p36 = scmp.eq.s32.totalorder %s16, 0
    %p37 = por %p35, %p36
    %p38 = scmp.ne.s32.totalorder %s24, %s25
    %p39 = scmp.eq.s32.totalorder %s17, 1
    %p40 = por %p38, %p39
    %p42 = scmp.ne.s32.totalorder %s25, %s41
    %p43 = scmp.eq.s32.totalorder %s17, 0
    %p44 = por %p42, %p43
    %s46 = sadd.s32 %s45, 1
    %p49 = scmp.eq.s32.totalorder %s11, 1
    %p50 = scmp.ne.s32.totalorder %s45, %s47
    %p51 = scmp.eq.s32.totalorder %s11, 0
    %p52 = por %p50, %p51
    %p53 = scmp.ne.s32.totalorder %s45, %s47
    %p54 = scmp.eq.s32.totalorder %s16, 1
    %p55 = por %p53, %p54
    %p56 = scmp.ne.s32.totalorder %s47, %s48
    %p57 = scmp.eq.s32.totalorder %s16, 0
    %p58 = por %p56, %p57
    %p59 = scmp.ne.s32.totalorder %s47, %s48
    %p60 = scmp.eq.s32.totalorder %s17, 1
    %p61 = por %p59, %p60
    %p63 = scmp.ne.s32.totalorder %s48, %s62
    %p64 = scmp.eq.s32.totalorder %s17, 0
    %p65 = por %p63, %p64
    %s67 = sadd.s32 %s66, 1
    %p70 = scmp.eq.s32.totalorder %s11, 1
    %p71 = scmp.ne.s32.totalorder %s66, %s68
    %p72 = scmp.eq.s32.totalorder %s11, 0
    %p73 = por %p71, %p72
    %p74 = scmp.ne.s32.totalorder %s66, %s68
    %p75 = scmp.eq.s32.totalorder %s16, 1
    %p76 = por %p74, %p75
    %p77 = scmp.ne.s32.totalorder %s68, %s69
    %p78 = scmp.eq.s32.totalorder %s16, 0
    %p79 = por %p77, %p78
    %p80 = scmp.ne.s32.totalorder %s68, %s69
    %p81 = scmp.eq.s32.totalorder %s17, 1
    %p82 = por %p80, %p81
    %p84 = scmp.ne.s32.totalorder %s69, %s83
    %p85 = scmp.eq.s32.totalorder %s17, 0
    %p86 = por %p84, %p85
    %s88 = sadd.s32 %s87, 1
    %p91 = scmp.eq.s32.totalorder %s11, 1
    %p92 = scmp.ne.s32.totalorder %s87, %s89
    %p93 = scmp.eq.s32.totalorder %s11, 0
    %p94 = por %p92, %p93
    %p95 = scmp.ne.s32.totalorder %s87, %s89
    %p96 = scmp.eq.s32.totalorder %s16, 1
    %p97 = por %p95, %p96
    %p98 = scmp.ne.s32.totalorder %s89, %s90
    %p99 = scmp.eq.s32.totalorder %s16, 0
    %p100 = por %p98, %p99
    %p101 = scmp.ne.s32.totalorder %s89, %s90
    %p102 = scmp.eq.s32.totalorder %s17, 1
    %p103 = por %p101, %p102
    %p105 = scmp.ne.s32.totalorder %s90, %s104
    %p106 = scmp.eq.s32.totalorder %s17, 0
    %p107 = por %p105, %p106
    %s109 = sadd.s32 %s108, 1
    %p112 = scmp.eq.s32.totalorder %s11, 1
    %p113 = scmp.ne.s32.totalorder %s108, %s110
    %p114 = scmp.eq.s32.totalorder %s11, 0
    %p115 = por %p113, %p114
    %p116 = scmp.ne.s32.totalorder %s108, %s110
    %p117 = scmp.eq.s32.totalorder %s16, 1
    %p118 = por %p116, %p117
    %p119 = scmp.ne.s32.totalorder %s110, %s111
    %p120 = scmp.eq.s32.totalorder %s16, 0
    %p121 = por %p119, %p120
    %p122 = scmp.ne.s32.totalorder %s110, %s111
    %p123 = scmp.eq.s32.totalorder %s17, 1
    %p124 = por %p122, %p123
    %p126 = scmp.ne.s32.totalorder %s111, %s125
    %p127 = scmp.eq.s32.totalorder %s17, 0
    %p128 = por %p126, %p127
    %s129 = ssub.s32 %s11, %s18
    %p130 = scmp.eq.s32.totalorder %s129, 0
    %s132 = sadd.s32 %s131, 1
    %s133 = scalar_select %p130, %s131, %s132
    %p136 = pneg %p130
    %p137 = scmp.eq.s32.totalorder %s11, 1
    %p138 = por %p136, %p137
    %p139 = scmp.ne.s32.totalorder %s131, %s134
    %p140 = scmp.eq.s32.totalorder %s11, 0
    %p141 = por %p139, %p140
    %p142 = scmp.ne.s32.totalorder %s131, %s134
    %p143 = scmp.eq.s32.totalorder %s16, 1
    %p144 = por %p142, %p143
    %p145 = scmp.ne.s32.totalorder %s134, %s135
    %p146 = scmp.eq.s32.totalorder %s16, 0
    %p147 = por %p145, %p146
    %p148 = scmp.ne.s32.totalorder %s134, %s135
    %p149 = scmp.eq.s32.totalorder %s17, 1
    %p150 = por %p148, %p149
    %p152 = scmp.ne.s32.totalorder %s135, %s151
    %p153 = scmp.eq.s32.totalorder %s17, 0
    %p154 = por %p152, %p153
    %p155 = scmp.le.s32.totalorder 1, %s11
    %p156 = scmp.lt.s32.totalorder %s11, 3
    %p157 = pnand %p155, %p156
    %p158 = pneg %p157
    // Predicated region
    $region9: #{tpu_custom_call.1} parent=5 // pred_check
      _
    $region10: #{tpu_custom_call.1} parent=5 // pred_check_branch
      %160 = sbr.rel (%p157) target = $region12
    $region11: #{tpu_custom_call.1} parent=5 // pred_region
      %s161 = ssub.s32 %s11, 1
      // Predicated region
      $region13: #{tpu_custom_call.1} parent=11 // pred_check
        %p162 = pneg %p58
      $region14: #{tpu_custom_call.1} parent=11 // pred_check_branch
        %164 = sbr.rel (%p162) target = $region16
      $region15: #{tpu_custom_call.1} parent=11 // pred_region
        _
      $region16: #{tpu_custom_call.1} parent=11 // pred_fallthru
        _
      // Predicated region
      $region17: #{tpu_custom_call.1} parent=11 // pred_check
        %p165 = pneg %p79
      $region18: #{tpu_custom_call.1} parent=11 // pred_check_branch
        %167 = sbr.rel (%p165) target = $region20
      $region19: #{tpu_custom_call.1} parent=11 // pred_region
        _
      $region20: #{tpu_custom_call.1} parent=11 // pred_fallthru
        _
      // Predicated region
      $region21: #{tpu_custom_call.1} parent=11 // pred_check
        %p168 = pneg %p100
      $region22: #{tpu_custom_call.1} parent=11 // pred_check_branch
        %170 = sbr.rel (%p168) target = $region24
      $region23: #{tpu_custom_call.1} parent=11 // pred_region
        _
      $region24: #{tpu_custom_call.1} parent=11 // pred_fallthru
        _
      // Predicated region
      $region25: #{tpu_custom_call.1} parent=11 // pred_check
        %p171 = pneg %p121
      $region26: #{tpu_custom_call.1} parent=11 // pred_check_branch
        %173 = sbr.rel (%p171) target = $region28
      $region27: #{tpu_custom_call.1} parent=11 // pred_region
        _
      $region28: #{tpu_custom_call.1} parent=11 // pred_fallthru
        _
    $region12: #{tpu_custom_call.1} parent=5 // pred_fallthru
      _
    %p174 = scmp.lt.s32.totalorder %s11, 2
    // Predicated region
    $region29: #{tpu_custom_call.1} parent=5 // pred_check
      %p175 = pneg %p174
    $region30: #{tpu_custom_call.1} parent=5 // pred_check_branch
      %177 = sbr.rel (%p175) target = $region32
    $region31: #{tpu_custom_call.1} parent=5 // pred_region
      // Predicated region
      $region33: #{tpu_custom_call.1} parent=31 // pred_check
        %p178 = pneg %p31
      $region34: #{tpu_custom_call.1} parent=31 // pred_check_branch
        %180 = sbr.rel (%p178) target = $region36
      $region35: #{tpu_custom_call.1} parent=31 // pred_region
        %p181 = scmp.lt.s32.totalorder %s11, 1
        %s182 = scalar_select %p181, %s11, 1
        %s183 = smul.addr %s182, 48
        %s184 = smul.addr %s183, 8
        %s185 = scalar_lea.vmem %s0, %s184
      $region36: #{tpu_custom_call.1} parent=31 // pred_fallthru
        _
    $region32: #{tpu_custom_call.1} parent=5 // pred_fallthru
      _
    %p186 = scmp.le.s32.totalorder 1, %s11
    %p187 = scmp.lt.s32.totalorder %s11, 3
    %p188 = pnand %p186, %p187
    %p189 = pneg %p188
    // Predicated region
    $region37: #{tpu_custom_call.1} parent=5 // pred_check
      _
    $region38: #{tpu_custom_call.1} parent=5 // pred_check_branch
      %191 = sbr.rel (%p188) target = $region40
    $region39: #{tpu_custom_call.1} parent=5 // pred_region
      %s192 = ssub.s32 %s11, 1
      %p193 = scmp.lt.s32.totalorder %s16, 1
      %s194 = scalar_select %p193, %s16, 1
      %s195 = smul.addr %s194, 48
      %s196 = smul.addr %s195, 8
      %s197 = scalar_lea.vmem %s0, %s196
      %p198 = pneg %p37
      %p199 = pneg %p34
      %p200 = pneg %p58
      %p201 = pneg %p55
      %p202 = pneg %p79
      %p203 = pneg %p76
      %p204 = pneg %p100
      %p205 = pneg %p97
      %p206 = pneg %p121
      %p207 = pneg %p118
      %p208 = pneg %p147
      %p209 = pneg %p144
      %p210 = scmp.lt.s32.totalorder %s16, 1
      %s211 = scalar_select %p210, %s16, 1
      %s212 = smul.addr %s211, 48
      %s213 = smul.addr %s212, 8
      %s214 = scalar_lea.vmem %s5, %s213
      %p215 = scmp.lt.s32.totalorder %s16, 1
      %s216 = scalar_select %p215, %s16, 1
      %s217 = smul.addr %s216, 48
      %s218 = smul.addr %s217, 8
      %s219 = scalar_lea.vmem %s0, %s218
      %p220 = scmp.lt.s32.totalorder %s16, 1
      %s221 = scalar_select %p220, %s16, 1
      %s222 = smul.addr %s221, 48
      %s223 = smul.addr %s222, 8
      %s224 = scalar_lea.vmem %s5, %s223
      %vm225 = vcmask 64512
      %226 = vst.msk [vmem:[#allocation2] sm:$0xff] %vm225, 0.0
      %227 = vst.msk [vmem:[#allocation2 + $0x8] sm:$0xff] %vm225, 0.0
      %228 = vst.msk [vmem:[#allocation2 + $0x10] sm:$0xff] %vm225, 0.0
      %229 = vst.msk [vmem:[#allocation2 + $0x18] sm:$0xff] %vm225, 0.0
      %230 = vst.msk [vmem:[#allocation2 + $0x1a0] sm:$0xff] %vm225, 0.0
      %231 = vst.msk [vmem:[#allocation2 + $0x1a8] sm:$0xff] %vm225, 0.0
      %232 = vst.msk [vmem:[#allocation2 + $0x1b0] sm:$0xff] %vm225, 0.0
      %233 = vst.msk [vmem:[#allocation2 + $0x1b8] sm:$0xff] %vm225, 0.0
      %v234 = vld [vmem:[%s2] sm:$0x1]
      %v235 = vld [vmem:[%s2 + $0x1] sm:$0x1]
      %v236 = vld [vmem:[%s1] sm:$0xff]
      %v237 = vld [vmem:[%s1 + $0x8] sm:$0xff]
      %v238 = vld [vmem:[%s1 + $0x10] sm:$0xff]
      %v239 = vld [vmem:[%s1 + $0x18] sm:$0xff]
      %v240 = vld [vmem:[%s1 + $0x20] sm:$0xff]
      %v241 = vlaneseq
      %v242 = vshrl.u32 %v241, 7
      %v243 = vadd.s32 %v242, 8
      %v244 = vadd.s32 %v242, 16
      %v245 = vadd.s32 %v242, 24
      %v246 = vadd.s32 %v242, 32
      %v247 = vadd.s32 %v242, 40
      %v248 = vadd.s32 %v242, 48
      %v249 = vadd.s32 %v242, 56
      %v250 = vadd.s32 %v242, 64
      %v251 = vadd.s32 %v242, 72
      %v252 = vadd.s32 %v242, 80
      %v253 = vadd.s32 %v242, 88
      %v254 = vadd.s32 %v242, 96
      %v255 = vadd.s32 %v242, 104
      %v256 = vadd.s32 %v242, 112
      %v257 = vadd.s32 %v242, 120
      %v258 = vadd.s32 %v242, 128
      %v259 = vadd.s32 %v242, 136
      %v260 = vadd.s32 %v242, 144
      %v261 = vadd.s32 %v242, 152
      %v262 = vadd.s32 %v242, 160
      %v263 = vadd.s32 %v242, 168
      %v264 = vadd.s32 %v242, 176
      %v265 = vadd.s32 %v242, 184
      %vm266 = vcmp.lt.s32.totalorder %v242, 0
      %v267 = vsub.s32 0, %v242
      %v268 = vsel %vm266, %v267, %v242
      %v269 = vmul.u32.u64.compose %v268, 2863311531
      %v270 = vextract.low.u32 %v269
      %v271 = vextract.high.u32 %v269
      %v272 = vshrl.u32 %v271, 4
      %v273 = vmul.u32 %v272, 24
      %v274 = vsub.s32 %v268, %v273
      %v275 = vsub.s32 0, %v274
      %v276 = vsel %vm266, %v275, %v274
      %vm277 = vcmp.lt.s32.totalorder %v243, 0
      %v278 = vsub.s32 0, %v243
      %v279 = vsel %vm277, %v278, %v243
      %v280 = vmul.u32.u64.compose %v279, 2863311531
      %v281 = vextract.low.u32 %v280
      %v282 = vextract.high.u32 %v280
      %v283 = vshrl.u32 %v282, 4
      %v284 = vmul.u32 %v283, 24
      %v285 = vsub.s32 %v279, %v284
      %v286 = vsub.s32 0, %v285
      %v287 = vsel %vm277, %v286, %v285
      %vm288 = vcmp.lt.s32.totalorder %v244, 0
      %v289 = vsub.s32 0, %v244
      %v290 = vsel %vm288, %v289, %v244
      %v291 = vmul.u32.u64.compose %v290, 2863311531
      %v292 = vextract.low.u32 %v291
      %v293 = vextract.high.u32 %v291
      %v294 = vshrl.u32 %v293, 4
      %v295 = vmul.u32 %v294, 24
      %v296 = vsub.s32 %v290, %v295
      %v297 = vsub.s32 0, %v296
      %v298 = vsel %vm288, %v297, %v296
      %vm299 = vcmp.lt.s32.totalorder %v245, 0
      %v300 = vsub.s32 0, %v245
      %v301 = vsel %vm299, %v300, %v245
      %v302 = vmul.u32.u64.compose %v301, 2863311531
      %v303 = vextract.low.u32 %v302
      %v304 = vextract.high.u32 %v302
      %v305 = vshrl.u32 %v304, 4
      %v306 = vmul.u32 %v305, 24
      %v307 = vsub.s32 %v301, %v306
      %v308 = vsub.s32 0, %v307
      %v309 = vsel %vm299, %v308, %v307
      %vm310 = vcmp.lt.s32.totalorder %v246, 0
      %v311 = vsub.s32 0, %v246
      %v312 = vsel %vm310, %v311, %v246
      %v313 = vmul.u32.u64.compose %v312, 2863311531
      %v314 = vextract.low.u32 %v313
      %v315 = vextract.high.u32 %v313
      %v316 = vshrl.u32 %v315, 4
      %v317 = vmul.u32 %v316, 24
      %v318 = vsub.s32 %v312, %v317
      %v319 = vsub.s32 0, %v318
      %v320 = vsel %vm310, %v319, %v318
      %vm321 = vcmp.lt.s32.totalorder %v247, 0
      %v322 = vsub.s32 0, %v247
      %v323 = vsel %vm321, %v322, %v247
      %v324 = vmul.u32.u64.compose %v323, 2863311531
      %v325 = vextract.low.u32 %v324
      %v326 = vextract.high.u32 %v324
      %v327 = vshrl.u32 %v326, 4
      %v328 = vmul.u32 %v327, 24
      %v329 = vsub.s32 %v323, %v328
      %v330 = vsub.s32 0, %v329
      %v331 = vsel %vm321, %v330, %v329
      %vm332 = vcmp.lt.s32.totalorder %v248, 0
      %v333 = vsub.s32 0, %v248
      %v334 = vsel %vm332, %v333, %v248
      %v335 = vmul.u32.u64.compose %v334, 2863311531
      %v336 = vextract.low.u32 %v335
      %v337 = vextract.high.u32 %v335
      %v338 = vshrl.u32 %v337, 4
      %v339 = vmul.u32 %v338, 24
      %v340 = vsub.s32 %v334, %v339
      %v341 = vsub.s32 0, %v340
      %v342 = vsel %vm332, %v341, %v340
      %vm343 = vcmp.lt.s32.totalorder %v249, 0
      %v344 = vsub.s32 0, %v249
      %v345 = vsel %vm343, %v344, %v249
      %v346 = vmul.u32.u64.compose %v345, 2863311531
      %v347 = vextract.low.u32 %v346
      %v348 = vextract.high.u32 %v346
      %v349 = vshrl.u32 %v348, 4
      %v350 = vmul.u32 %v349, 24
      %v351 = vsub.s32 %v345, %v350
      %v352 = vsub.s32 0, %v351
      %v353 = vsel %vm343, %v352, %v351
      %vm354 = vcmp.lt.s32.totalorder %v250, 0
      %v355 = vsub.s32 0, %v250
      %v356 = vsel %vm354, %v355, %v250
      %v357 = vmul.u32.u64.compose %v356, 2863311531
      %v358 = vextract.low.u32 %v357
      %v359 = vextract.high.u32 %v357
      %v360 = vshrl.u32 %v359, 4
      %v361 = vmul.u32 %v360, 24
      %v362 = vsub.s32 %v356, %v361
      %v363 = vsub.s32 0, %v362
      %v364 = vsel %vm354, %v363, %v362
      %vm365 = vcmp.lt.s32.totalorder %v251, 0
      %v366 = vsub.s32 0, %v251
      %v367 = vsel %vm365, %v366, %v251
      %v368 = vmul.u32.u64.compose %v367, 2863311531
      %v369 = vextract.low.u32 %v368
      %v370 = vextract.high.u32 %v368
      %v371 = vshrl.u32 %v370, 4
      %v372 = vmul.u32 %v371, 24
      %v373 = vsub.s32 %v367, %v372
      %v374 = vsub.s32 0, %v373
      %v375 = vsel %vm365, %v374, %v373
      %vm376 = vcmp.lt.s32.totalorder %v252, 0
      %v377 = vsub.s32 0, %v252
      %v378 = vsel %vm376, %v377, %v252
      %v379 = vmul.u32.u64.compose %v378, 2863311531
      %v380 = vextract.low.u32 %v379
      %v381 = vextract.high.u32 %v379
      %v382 = vshrl.u32 %v381, 4
      %v383 = vmul.u32 %v382, 24
      %v384 = vsub.s32 %v378, %v383
      %v385 = vsub.s32 0, %v384
      %v386 = vsel %vm376, %v385, %v384
      %vm387 = vcmp.lt.s32.totalorder %v253, 0
      %v388 = vsub.s32 0, %v253
      %v389 = vsel %vm387, %v388, %v253
      %v390 = vmul.u32.u64.compose %v389, 2863311531
      %v391 = vextract.low.u32 %v390
      %v392 = vextract.high.u32 %v390
      %v393 = vshrl.u32 %v392, 4
      %v394 = vmul.u32 %v393, 24
      %v395 = vsub.s32 %v389, %v394
      %v396 = vsub.s32 0, %v395
      %v397 = vsel %vm387, %v396, %v395
      %vm398 = vcmp.lt.s32.totalorder %v254, 0
      %v399 = vsub.s32 0, %v254
      %v400 = vsel %vm398, %v399, %v254
      %v401 = vmul.u32.u64.compose %v400, 2863311531
      %v402 = vextract.low.u32 %v401
      %v403 = vextract.high.u32 %v401
      %v404 = vshrl.u32 %v403, 4
      %v405 = vmul.u32 %v404, 24
      %v406 = vsub.s32 %v400, %v405
      %v407 = vsub.s32 0, %v406
      %v408 = vsel %vm398, %v407, %v406
      %vm409 = vcmp.lt.s32.totalorder %v255, 0
      %v410 = vsub.s32 0, %v255
      %v411 = vsel %vm409, %v410, %v255
      %v412 = vmul.u32.u64.compose %v411, 2863311531
      %v413 = vextract.low.u32 %v412
      %v414 = vextract.high.u32 %v412
      %v415 = vshrl.u32 %v414, 4
      %v416 = vmul.u32 %v415, 24
      %v417 = vsub.s32 %v411, %v416
      %v418 = vsub.s32 0, %v417
      %v419 = vsel %vm409, %v418, %v417
      %vm420 = vcmp.lt.s32.totalorder %v256, 0
      %v421 = vsub.s32 0, %v256
      %v422 = vsel %vm420, %v421, %v256
      %v423 = vmul.u32.u64.compose %v422, 2863311531
      %v424 = vextract.low.u32 %v423
      %v425 = vextract.high.u32 %v423
      %v426 = vshrl.u32 %v425, 4
      %v427 = vmul.u32 %v426, 24
      %v428 = vsub.s32 %v422, %v427
      %v429 = vsub.s32 0, %v428
      %v430 = vsel %vm420, %v429, %v428
      %vm431 = vcmp.lt.s32.totalorder %v257, 0
      %v432 = vsub.s32 0, %v257
      %v433 = vsel %vm431, %v432, %v257
      %v434 = vmul.u32.u64.compose %v433, 2863311531
      %v435 = vextract.low.u32 %v434
      %v436 = vextract.high.u32 %v434
      %v437 = vshrl.u32 %v436, 4
      %v438 = vmul.u32 %v437, 24
      %v439 = vsub.s32 %v433, %v438
      %v440 = vsub.s32 0, %v439
      %v441 = vsel %vm431, %v440, %v439
      %vm442 = vcmp.lt.s32.totalorder %v258, 0
      %v443 = vsub.s32 0, %v258
      %v444 = vsel %vm442, %v443, %v258
      %v445 = vmul.u32.u64.compose %v444, 2863311531
      %v446 = vextract.low.u32 %v445
      %v447 = vextract.high.u32 %v445
      %v448 = vshrl.u32 %v447, 4
      %v449 = vmul.u32 %v448, 24
      %v450 = vsub.s32 %v444, %v449
      %v451 = vsub.s32 0, %v450
      %v452 = vsel %vm442, %v451, %v450
      %vm453 = vcmp.lt.s32.totalorder %v259, 0
      %v454 = vsub.s32 0, %v259
      %v455 = vsel %vm453, %v454, %v259
      %v456 = vmul.u32.u64.compose %v455, 2863311531
      %v457 = vextract.low.u32 %v456
      %v458 = vextract.high.u32 %v456
      %v459 = vshrl.u32 %v458, 4
      %v460 = vmul.u32 %v459, 24
      %v461 = vsub.s32 %v455, %v460
      %v462 = vsub.s32 0, %v461
      %v463 = vsel %vm453, %v462, %v461
      %vm464 = vcmp.lt.s32.totalorder %v260, 0
      %v465 = vsub.s32 0, %v260
      %v466 = vsel %vm464, %v465, %v260
      %v467 = vmul.u32.u64.compose %v466, 2863311531
      %v468 = vextract.low.u32 %v467
      %v469 = vextract.high.u32 %v467
      %v470 = vshrl.u32 %v469, 4
      %v471 = vmul.u32 %v470, 24
      %v472 = vsub.s32 %v466, %v471
      %v473 = vsub.s32 0, %v472
      %v474 = vsel %vm464, %v473, %v472
      %vm475 = vcmp.lt.s32.totalorder %v261, 0
      %v476 = vsub.s32 0, %v261
      %v477 = vsel %vm475, %v476, %v261
      %v478 = vmul.u32.u64.compose %v477, 2863311531
      %v479 = vextract.low.u32 %v478
      %v480 = vextract.high.u32 %v478
      %v481 = vshrl.u32 %v480, 4
      %v482 = vmul.u32 %v481, 24
      %v483 = vsub.s32 %v477, %v482
      %v484 = vsub.s32 0, %v483
      %v485 = vsel %vm475, %v484, %v483
      %vm486 = vcmp.lt.s32.totalorder %v262, 0
      %v487 = vsub.s32 0, %v262
      %v488 = vsel %vm486, %v487, %v262
      %v489 = vmul.u32.u64.compose %v488, 2863311531
      %v490 = vextract.low.u32 %v489
      %v491 = vextract.high.u32 %v489
      %v492 = vshrl.u32 %v491, 4
      %v493 = vmul.u32 %v492, 24
      %v494 = vsub.s32 %v488, %v493
      %v495 = vsub.s32 0, %v494
      %v496 = vsel %vm486, %v495, %v494
      %vm497 = vcmp.lt.s32.totalorder %v263, 0
      %v498 = vsub.s32 0, %v263
      %v499 = vsel %vm497, %v498, %v263
      %v500 = vmul.u32.u64.compose %v499, 2863311531
      %v501 = vextract.low.u32 %v500
      %v502 = vextract.high.u32 %v500
      %v503 = vshrl.u32 %v502, 4
      %v504 = vmul.u32 %v503, 24
      %v505 = vsub.s32 %v499, %v504
      %v506 = vsub.s32 0, %v505
      %v507 = vsel %vm497, %v506, %v505
      %vm508 = vcmp.lt.s32.totalorder %v264, 0
      %v509 = vsub.s32 0, %v264
      %v510 = vsel %vm508, %v509, %v264
      %v511 = vmul.u32.u64.compose %v510, 2863311531
      %v512 = vextract.low.u32 %v511
      %v513 = vextract.high.u32 %v511
      %v514 = vshrl.u32 %v513, 4
      %v515 = vmul.u32 %v514, 24
      %v516 = vsub.s32 %v510, %v515
      %v517 = vsub.s32 0, %v516
      %v518 = vsel %vm508, %v517, %v516
      %vm519 = vcmp.lt.s32.totalorder %v265, 0
      %v520 = vsub.s32 0, %v265
      %v521 = vsel %vm519, %v520, %v265
      %v522 = vmul.u32.u64.compose %v521, 2863311531
      %v523 = vextract.low.u32 %v522
      %v524 = vextract.high.u32 %v522
      %v525 = vshrl.u32 %v524, 4
      %v526 = vmul.u32 %v525, 24
      %v527 = vsub.s32 %v521, %v526
      %v528 = vsub.s32 0, %v527
      %v529 = vsel %vm519, %v528, %v527
      %vm530 = vcmp.ne.s32.totalorder %v276, 0
      %vm531 = vcmp.ne.s32.totalorder %v287, 0
      %vm532 = vcmp.ne.s32.totalorder %v298, 0
      %vm533 = vcmp.ne.s32.totalorder %v309, 0
      %vm534 = vcmp.ne.s32.totalorder %v320, 0
      %vm535 = vcmp.ne.s32.totalorder %v331, 0
      %vm536 = vcmp.ne.s32.totalorder %v342, 0
      %vm537 = vcmp.ne.s32.totalorder %v353, 0
      %vm538 = vcmp.ne.s32.totalorder %v364, 0
      %vm539 = vcmp.ne.s32.totalorder %v375, 0
      %vm540 = vcmp.ne.s32.totalorder %v386, 0
      %vm541 = vcmp.ne.s32.totalorder %v397, 0
      %vm542 = vcmp.ne.s32.totalorder %v408, 0
      %vm543 = vcmp.ne.s32.totalorder %v419, 0
      %vm544 = vcmp.ne.s32.totalorder %v430, 0
      %vm545 = vcmp.ne.s32.totalorder %v441, 0
      %vm546 = vcmp.ne.s32.totalorder %v452, 0
      %vm547 = vcmp.ne.s32.totalorder %v463, 0
      %vm548 = vcmp.ne.s32.totalorder %v474, 0
      %vm549 = vcmp.ne.s32.totalorder %v485, 0
      %vm550 = vcmp.ne.s32.totalorder %v496, 0
      %vm551 = vcmp.ne.s32.totalorder %v507, 0
      %vm552 = vcmp.ne.s32.totalorder %v518, 0
      %vm553 = vcmp.ne.s32.totalorder %v529, 0
      %vm554 = vcmp.lt.s32.totalorder %v276, 0
      %vm555 = vcmp.lt.s32.totalorder %v287, 0
      %vm556 = vcmp.lt.s32.totalorder %v298, 0
      %vm557 = vcmp.lt.s32.totalorder %v309, 0
      %vm558 = vcmp.lt.s32.totalorder %v320, 0
      %vm559 = vcmp.lt.s32.totalorder %v331, 0
      %vm560 = vcmp.lt.s32.totalorder %v342, 0
      %vm561 = vcmp.lt.s32.totalorder %v353, 0
      %vm562 = vcmp.lt.s32.totalorder %v364, 0
      %vm563 = vcmp.lt.s32.totalorder %v375, 0
      %vm564 = vcmp.lt.s32.totalorder %v386, 0
      %vm565 = vcmp.lt.s32.totalorder %v397, 0
      %vm566 = vcmp.lt.s32.totalorder %v408, 0
      %vm567 = vcmp.lt.s32.totalorder %v419, 0
      %vm568 = vcmp.lt.s32.totalorder %v430, 0
      %vm569 = vcmp.lt.s32.totalorder %v441, 0
      %vm570 = vcmp.lt.s32.totalorder %v452, 0
      %vm571 = vcmp.lt.s32.totalorder %v463, 0
      %vm572 = vcmp.lt.s32.totalorder %v474, 0
      %vm573 = vcmp.lt.s32.totalorder %v485, 0
      %vm574 = vcmp.lt.s32.totalorder %v496, 0
      %vm575 = vcmp.lt.s32.totalorder %v507, 0
      %vm576 = vcmp.lt.s32.totalorder %v518, 0
      %vm577 = vcmp.lt.s32.totalorder %v529, 0
      %vm578 = vmand %vm554, %vm530
      %vm579 = vmand %vm555, %vm531
      %vm580 = vmand %vm556, %vm532
      %vm581 = vmand %vm557, %vm533
      %vm582 = vmand %vm558, %vm534
      %vm583 = vmand %vm559, %vm535
      %vm584 = vmand %vm560, %vm536
      %vm585 = vmand %vm561, %vm537
      %vm586 = vmand %vm562, %vm538
      %vm587 = vmand %vm563, %vm539
      %vm588 = vmand %vm564, %vm540
      %vm589 = vmand %vm565, %vm541
      %vm590 = vmand %vm566, %vm542
      %vm591 = vmand %vm567, %vm543
      %vm592 = vmand %vm568, %vm544
      %vm593 = vmand %vm569, %vm545
      %vm594 = vmand %vm570, %vm546
      %vm595 = vmand %vm571, %vm547
      %vm596 = vmand %vm572, %vm548
      %vm597 = vmand %vm573, %vm549
      %vm598 = vmand %vm574, %vm550
      %vm599 = vmand %vm575, %vm551
      %vm600 = vmand %vm576, %vm552
      %vm601 = vmand %vm577, %vm553
      %v602 = vadd.s32 %v276, 24
      %v603 = vadd.s32 %v287, 24
      %v604 = vadd.s32 %v298, 24
      %v605 = vadd.s32 %v309, 24
      %v606 = vadd.s32 %v320, 24
      %v607 = vadd.s32 %v331, 24
      %v608 = vadd.s32 %v342, 24
      %v609 = vadd.s32 %v353, 24
      %v610 = vadd.s32 %v364, 24
      %v611 = vadd.s32 %v375, 24
      %v612 = vadd.s32 %v386, 24
      %v613 = vadd.s32 %v397, 24
      %v614 = vadd.s32 %v408, 24
      %v615 = vadd.s32 %v419, 24
      %v616 = vadd.s32 %v430, 24
      %v617 = vadd.s32 %v441, 24
      %v618 = vadd.s32 %v452, 24
      %v619 = vadd.s32 %v463, 24
      %v620 = vadd.s32 %v474, 24
      %v621 = vadd.s32 %v485, 24
      %v622 = vadd.s32 %v496, 24
      %v623 = vadd.s32 %v507, 24
      %v624 = vadd.s32 %v518, 24
      %v625 = vadd.s32 %v529, 24
      %v626 = vsel %vm578, %v602, %v276
      %v627 = vsel %vm579, %v603, %v287
      %v628 = vsel %vm580, %v604, %v298
      %v629 = vsel %vm581, %v605, %v309
      %v630 = vsel %vm582, %v606, %v320
      %v631 = vsel %vm583, %v607, %v331
      %v632 = vsel %vm584, %v608, %v342
      %v633 = vsel %vm585, %v609, %v353
      %v634 = vsel %vm586, %v610, %v364
      %v635 = vsel %vm587, %v611, %v375
      %v636 = vsel %vm588, %v612, %v386
      %v637 = vsel %vm589, %v613, %v397
      %v638 = vsel %vm590, %v614, %v408
      %v639 = vsel %vm591, %v615, %v419
      %v640 = vsel %vm592, %v616, %v430
      %v641 = vsel %vm593, %v617, %v441
      %v642 = vsel %vm594, %v618, %v452
      %v643 = vsel %vm595, %v619, %v463
      %v644 = vsel %vm596, %v620, %v474
      %v645 = vsel %vm597, %v621, %v485
      %v646 = vsel %vm598, %v622, %v496
      %v647 = vsel %vm599, %v623, %v507
      %v648 = vsel %vm600, %v624, %v518
      %v649 = vsel %vm601, %v625, %v529
      %vm650 = vcmp.lt.s32.totalorder %v626, 16
      %vm651 = vcmp.lt.s32.totalorder %v627, 16
      %vm652 = vcmp.lt.s32.totalorder %v628, 16
      %vm653 = vcmp.lt.s32.totalorder %v629, 16
      %vm654 = vcmp.lt.s32.totalorder %v630, 16
      %vm655 = vcmp.lt.s32.totalorder %v631, 16
      %vm656 = vcmp.lt.s32.totalorder %v632, 16
      %vm657 = vcmp.lt.s32.totalorder %v633, 16
      %vm658 = vcmp.lt.s32.totalorder %v634, 16
      %vm659 = vcmp.lt.s32.totalorder %v635, 16
      %vm660 = vcmp.lt.s32.totalorder %v636, 16
      %vm661 = vcmp.lt.s32.totalorder %v637, 16
      %vm662 = vcmp.lt.s32.totalorder %v638, 16
      %vm663 = vcmp.lt.s32.totalorder %v639, 16
      %vm664 = vcmp.lt.s32.totalorder %v640, 16
      %vm665 = vcmp.lt.s32.totalorder %v641, 16
      %vm666 = vcmp.lt.s32.totalorder %v642, 16
      %vm667 = vcmp.lt.s32.totalorder %v643, 16
      %vm668 = vcmp.lt.s32.totalorder %v644, 16
      %vm669 = vcmp.lt.s32.totalorder %v645, 16
      %vm670 = vcmp.lt.s32.totalorder %v646, 16
      %vm671 = vcmp.lt.s32.totalorder %v647, 16
      %vm672 = vcmp.lt.s32.totalorder %v648, 16
      %vm673 = vcmp.lt.s32.totalorder %v649, 16
      %v674 = vsel %vm650, 1, 0
      %v675 = vsel %vm651, 1, 0
      %v676 = vsel %vm652, 1, 0
      %v677 = vsel %vm653, 1, 0
      %v678 = vsel %vm654, 1, 0
      %v679 = vsel %vm655, 1, 0
      %v680 = vsel %vm656, 1, 0
      %v681 = vsel %vm657, 1, 0
      %v682 = vsel %vm658, 1, 0
      %v683 = vsel %vm659, 1, 0
      %v684 = vsel %vm660, 1, 0
      %v685 = vsel %vm661, 1, 0
      %v686 = vsel %vm662, 1, 0
      %v687 = vsel %vm663, 1, 0
      %v688 = vsel %vm664, 1, 0
      %v689 = vsel %vm665, 1, 0
      %v690 = vsel %vm666, 1, 0
      %v691 = vsel %vm667, 1, 0
      %v692 = vsel %vm668, 1, 0
      %v693 = vsel %vm669, 1, 0
      %v694 = vsel %vm670, 1, 0
      %v695 = vsel %vm671, 1, 0
      %v696 = vsel %vm672, 1, 0
      %v697 = vsel %vm673, 1, 0
      %v698 = vcvt.s32.f32 %v674
      %v699 = vcvt.s32.f32 %v675
      %v700 = vcvt.s32.f32 %v676
      %v701 = vcvt.s32.f32 %v677
      %v702 = vcvt.s32.f32 %v678
      %v703 = vcvt.s32.f32 %v679
      %v704 = vcvt.s32.f32 %v680
      %v705 = vcvt.s32.f32 %v681
      %v706 = vcvt.s32.f32 %v682
      %v707 = vcvt.s32.f32 %v683
      %v708 = vcvt.s32.f32 %v684
      %v709 = vcvt.s32.f32 %v685
      %v710 = vcvt.s32.f32 %v686
      %v711 = vcvt.s32.f32 %v687
      %v712 = vcvt.s32.f32 %v688
      %v713 = vcvt.s32.f32 %v689
      %v714 = vcvt.s32.f32 %v690
      %v715 = vcvt.s32.f32 %v691
      %v716 = vcvt.s32.f32 %v692
      %v717 = vcvt.s32.f32 %v693
      %v718 = vcvt.s32.f32 %v694
      %v719 = vcvt.s32.f32 %v695
      %v720 = vcvt.s32.f32 %v696
      %v721 = vcvt.s32.f32 %v697
      %v722 = vld [vmem:[%s219] sm:$0xff]
      %v723 = vld [vmem:[%s219 + $0x8] sm:$0xff]
      %v724 = vld [vmem:[%s219 + $0x10] sm:$0xff]
      %v725 = vld [vmem:[%s219 + $0x18] sm:$0xff]
      %v726 = vld [vmem:[%s219 + $0x20] sm:$0xff]
      %v727 = vld [vmem:[%s219 + $0x28] sm:$0xff]
      %v728 = vld [vmem:[%s219 + $0x30] sm:$0xff]
      %v729 = vld [vmem:[%s219 + $0x38] sm:$0xff]
      %v730 = vld [vmem:[%s219 + $0x40] sm:$0xff]
      %v731 = vld [vmem:[%s219 + $0x48] sm:$0xff]
      %v732 = vld [vmem:[%s219 + $0x50] sm:$0xff]
      %v733 = vld [vmem:[%s219 + $0x58] sm:$0xff]
      %v734 = vld [vmem:[%s219 + $0x60] sm:$0xff]
      %v735 = vld [vmem:[%s219 + $0x68] sm:$0xff]
      %v736 = vld [vmem:[%s219 + $0x70] sm:$0xff]
      %v737 = vld [vmem:[%s219 + $0x78] sm:$0xff]
      %v738 = vld [vmem:[%s219 + $0x80] sm:$0xff]
      %v739 = vld [vmem:[%s219 + $0x88] sm:$0xff]
      %v740 = vld [vmem:[%s219 + $0x90] sm:$0xff]
      %v741 = vld [vmem:[%s219 + $0x98] sm:$0xff]
      %v742 = vld [vmem:[%s219 + $0xa0] sm:$0xff]
      %v743 = vld [vmem:[%s219 + $0xa8] sm:$0xff]
      %v744 = vld [vmem:[%s219 + $0xb0] sm:$0xff]
      %v745 = vld [vmem:[%s219 + $0xb8] sm:$0xff]
      %vm746 = vcmask 326656
      %v748 = vsel %vm746, %v722, 0
      %v751 = vsel %vm746, %v723, 0
      %v754 = vsel %vm746, %v724, 0
      %v757 = vsel %vm746, %v725, 0
      %v760 = vsel %vm746, %v726, 0
      %v763 = vsel %vm746, %v727, 0
      %v766 = vsel %vm746, %v728, 0
      %v769 = vsel %vm746, %v729, 0
      %v772 = vsel %vm746, %v730, 0
      %v775 = vsel %vm746, %v731, 0
      %v778 = vsel %vm746, %v732, 0
      %v781 = vsel %vm746, %v733, 0
      %v784 = vsel %vm746, %v734, 0
      %v787 = vsel %vm746, %v735, 0
      %v790 = vsel %vm746, %v736, 0
      %v793 = vsel %vm746, %v737, 0
      %v796 = vsel %vm746, %v738, 0
      %v799 = vsel %vm746, %v739, 0
      %v802 = vsel %vm746, %v740, 0
      %v805 = vsel %vm746, %v741, 0
      %v808 = vsel %vm746, %v742, 0
      %v811 = vsel %vm746, %v743, 0
      %v814 = vsel %vm746, %v744, 0
      %v817 = vsel %vm746, %v745, 0
      %819 = vmatprep.subr.mxu0 0.0
      %820 = vmatpush1.msra.mxu0 %v236
      %821 = vmatprep.subr.mxu0 0.0
      %822 = vmatpush1.msra.mxu0 %v237
      %823 = vmatprep.subr.mxu0 0.0
      %824 = vmatpush1.msra.mxu0 %v238
      %825 = vmatprep.subr.mxu0 0.0
      %826 = vmatpush1.msra.mxu0 %v239
      %827 = vmatprep.subr.mxu0 0.0
      %828 = vmatpush1.msra.mxu0 %v240
      %829 = vmatprep.subr.mxu0 0.0
      %830 = vmatpush1.msra.mxu0 0.0
      %831 = vmatprep.subr.mxu0 0.0
      %832 = vmatpush1.msra.mxu0 0.0
      %833 = vmatprep.subr.mxu0 0.0
      %834 = vmatpush1.msra.mxu0 0.0
      %835 = vmatprep.subr.mxu0 0.0
      %836 = vmatpush1.msra.mxu0 0.0
      %837 = vmatprep.subr.mxu0 0.0
      %838 = vmatpush1.msra.mxu0 0.0
      %839 = vmatprep.subr.mxu0 0.0
      %840 = vmatpush1.msra.mxu0 0.0
      %841 = vmatprep.subr.mxu0 0.0
      %842 = vmatpush1.msra.mxu0 0.0
      %843 = vmatprep.subr.mxu0 0.0
      %844 = vmatpush1.msra.mxu0 0.0
      %845 = vmatprep.subr.mxu0 0.0
      %846 = vmatpush1.msra.mxu0 0.0
      %847 = vmatprep.subr.mxu0 0.0
      %848 = vmatpush1.msra.mxu0 0.0
      %849 = vmatprep.subr.mxu0 0.0
      %850 = vmatpush1.msra.mxu0 0.0
      %851 = vmatprep.subr.mxu0 0.0
      %852 = vmatpush1.msra.mxu0 0.0
      %853 = vmatprep.subr.mxu0 0.0
      %854 = vmatpush1.msra.mxu0 0.0
      %855 = vmatprep.subr.mxu0 0.0
      %856 = vmatpush1.msra.mxu0 0.0
      %857 = vmatprep.subr.mxu0 0.0
      %858 = vmatpush1.msra.mxu0 0.0
      %859 = vmatprep.subr.mxu0 0.0
      %860 = vmatpush1.msra.mxu0 0.0
      %861 = vmatprep.subr.mxu0 0.0
      %862 = vmatpush1.msra.mxu0 0.0
      %863 = vmatprep.subr.mxu0 0.0
      %864 = vmatpush1.msra.mxu0 0.0
      %865 = vmatprep.subr.mxu0 0.0
      %866 = vmatpush1.msra.mxu0 0.0
      %867 = vmatprep.subr.mxu0 0.0
      %868 = vmatpush1.msra.mxu0 0.0
      %869 = vmatprep.subr.mxu0 0.0
      %870 = vmatpush1.msra.mxu0 0.0
      %871 = vmatprep.subr.mxu0 0.0
      %872 = vmatpush1.msra.mxu0 0.0
      %873 = vmatprep.subr.mxu0 0.0
      %874 = vmatpush1.msra.mxu0 0.0
      %875 = vmatprep.subr.mxu0 0.0
      %876 = vmatpush1.msra.mxu0 0.0
      %877 = vmatprep.subr.mxu0 0.0
      %878 = vmatpush1.msra.mxu0 0.0
      %879 = vmatprep.subr.mxu0 0.0
      %880 = vmatpush1.msra.mxu0 0.0
      %881 = vmatprep.subr.mxu0 0.0
      %882 = vmatpush1.msra.mxu0 0.0
      %883 = vmatprep.mubr.f32.mxu0 0.0
      %884 = vmatmul.mubr.f32.gmra.mrb[0].mxu0 %v748
      %v885 = vpop.f32.mrb[0].mxu0
      %v886 = vadd.f32 0.0, %v885
      %v887 = vpop.f32.mrb[0].mxu0
      %888 = vmatprep.mubr.f32.mxu0 0.0
      %889 = vmatmul.mubr.f32.gmra.mrb[0].mxu0 %v751
      %v890 = vpop.f32.mrb[0].mxu0
      %v891 = vadd.f32 0.0, %v890
      %v892 = vpop.f32.mrb[0].mxu0
      %893 = vmatprep.mubr.f32.mxu0 0.0
      %894 = vmatmul.mubr.f32.gmra.mrb[0].mxu0 %v754
      %v895 = vpop.f32.mrb[0].mxu0
      %v896 = vadd.f32 0.0, %v895
      %v897 = vpop.f32.mrb[0].mxu0
      %898 = vmatprep.mubr.f32.mxu0 0.0
      %899 = vmatmul.mubr.f32.gmra.mrb[0].mxu0 %v757
      %v900 = vpop.f32.mrb[0].mxu0
      %v901 = vadd.f32 0.0, %v900
      %v902 = vpop.f32.mrb[0].mxu0
      %903 = vmatprep.mubr.f32.mxu0 0.0
      %904 = vmatmul.mubr.f32.gmra.mrb[0].mxu0 %v760
      %v905 = vpop.f32.mrb[0].mxu0
      %v906 = vadd.f32 0.0, %v905
      %v907 = vpop.f32.mrb[0].mxu0
      %908 = vmatprep.mubr.f32.mxu0 0.0
      %909 = vmatmul.mubr.f32.gmra.mrb[0].mxu0 %v763
      %v910 = vpop.f32.mrb[0].mxu0
      %v911 = vadd.f32 0.0, %v910
      %v912 = vpop.f32.mrb[0].mxu0
      %913 = vmatprep.mubr.f32.mxu0 0.0
      %914 = vmatmul.mubr.f32.gmra.mrb[0].mxu0 %v766
      %v915 = vpop.f32.mrb[0].mxu0
      %v916 = vadd.f32 0.0, %v915
      %v917 = vpop.f32.mrb[0].mxu0
      %918 = vmatprep.mubr.f32.mxu0 0.0
      %919 = vmatmul.mubr.f32.gmra.mrb[0].mxu0 %v769
      %v920 = vpop.f32.mrb[0].mxu0
      %v921 = vadd.f32 0.0, %v920
      %v922 = vpop.f32.mrb[0].mxu0
      %923 = vmatprep.mubr.f32.mxu0 0.0
      %924 = vmatmul.mubr.f32.gmra.mrb[0].mxu0 %v772
      %v925 = vpop.f32.mrb[0].mxu0
      %v926 = vadd.f32 0.0, %v925
      %v927 = vpop.f32.mrb[0].mxu0
      %928 = vmatprep.mubr.f32.mxu0 0.0
      %929 = vmatmul.mubr.f32.gmra.mrb[0].mxu0 %v775
      %v930 = vpop.f32.mrb[0].mxu0
      %v931 = vadd.f32 0.0, %v930
      %v932 = vpop.f32.mrb[0].mxu0
      %933 = vmatprep.mubr.f32.mxu0 0.0
      %934 = vmatmul.mubr.f32.gmra.mrb[0].mxu0 %v778
      %v935 = vpop.f32.mrb[0].mxu0
      %v936 = vadd.f32 0.0, %v935
      %v937 = vpop.f32.mrb[0].mxu0
      %938 = vmatprep.mubr.f32.mxu0 0.0
      %939 = vmatmul.mubr.f32.gmra.mrb[0].mxu0 %v781
      %v940 = vpop.f32.mrb[0].mxu0
      %v941 = vadd.f32 0.0, %v940
      %v942 = vpop.f32.mrb[0].mxu0
      %943 = vmatprep.mubr.f32.mxu0 0.0
      %944 = vmatmul.mubr.f32.gmra.mrb[0].mxu0 %v784
      %v945 = vpop.f32.mrb[0].mxu0
      %v946 = vadd.f32 0.0, %v945
      %v947 = vpop.f32.mrb[0].mxu0
      %948 = vmatprep.mubr.f32.mxu0 0.0
      %949 = vmatmul.mubr.f32.gmra.mrb[0].mxu0 %v787
      %v950 = vpop.f32.mrb[0].mxu0
      %v951 = vadd.f32 0.0, %v950
      %v952 = vpop.f32.mrb[0].mxu0
      %953 = vmatprep.mubr.f32.mxu0 0.0
      %954 = vmatmul.mubr.f32.gmra.mrb[0].mxu0 %v790
      %v955 = vpop.f32.mrb[0].mxu0
      %v956 = vadd.f32 0.0, %v955
      %v957 = vpop.f32.mrb[0].mxu0
      %958 = vmatprep.mubr.f32.mxu0 0.0
      %959 = vmatmul.mubr.f32.gmra.mrb[0].mxu0 %v793
      %v960 = vpop.f32.mrb[0].mxu0
      %v961 = vadd.f32 0.0, %v960
      %v962 = vpop.f32.mrb[0].mxu0
      %963 = vmatprep.mubr.f32.mxu0 0.0
      %964 = vmatmul.mubr.f32.gmra.mrb[0].mxu0 %v796
      %v965 = vpop.f32.mrb[0].mxu0
      %v966 = vadd.f32 0.0, %v965
      %v967 = vpop.f32.mrb[0].mxu0
      %968 = vmatprep.mubr.f32.mxu0 0.0
      %969 = vmatmul.mubr.f32.gmra.mrb[0].mxu0 %v799
      %v970 = vpop.f32.mrb[0].mxu0
      %v971 = vadd.f32 0.0, %v970
      %v972 = vpop.f32.mrb[0].mxu0
      %973 = vmatprep.mubr.f32.mxu0 0.0
      %974 = vmatmul.mubr.f32.gmra.mrb[0].mxu0 %v802
      %v975 = vpop.f32.mrb[0].mxu0
      %v976 = vadd.f32 0.0, %v975
      %v977 = vpop.f32.mrb[0].mxu0
      %978 = vmatprep.mubr.f32.mxu0 0.0
      %979 = vmatmul.mubr.f32.gmra.mrb[0].mxu0 %v805
      %v980 = vpop.f32.mrb[0].mxu0
      %v981 = vadd.f32 0.0, %v980
      %v982 = vpop.f32.mrb[0].mxu0
      %983 = vmatprep.mubr.f32.mxu0 0.0
      %984 = vmatmul.mubr.f32.gmra.mrb[0].mxu0 %v808
      %v985 = vpop.f32.mrb[0].mxu0
      %v986 = vadd.f32 0.0, %v985
      %v987 = vpop.f32.mrb[0].mxu0
      %988 = vmatprep.mubr.f32.mxu0 0.0
      %989 = vmatmul.mubr.f32.gmra.mrb[0].mxu0 %v811
      %v990 = vpop.f32.mrb[0].mxu0
      %v991 = vadd.f32 0.0, %v990
      %v992 = vpop.f32.mrb[0].mxu0
      %993 = vmatprep.mubr.f32.mxu0 0.0
      %994 = vmatmul.mubr.f32.gmra.mrb[0].mxu0 %v814
      %v995 = vpop.f32.mrb[0].mxu0
      %v996 = vadd.f32 0.0, %v995
      %v997 = vpop.f32.mrb[0].mxu0
      %998 = vmatprep.mubr.f32.mxu0 0.0
      %999 = vmatmul.mubr.f32.gmra.mrb[0].mxu0 %v817
      %v1000 = vpop.f32.mrb[0].mxu0
      %v1001 = vadd.f32 0.0, %v1000
      %v1002 = vpop.f32.mrb[0].mxu0
      %1003 = vdwg.mxu0
      %v1004 = vlaneseq
      %v1005 = vshrl.u32 %v1004, 7
      %v1006 = vsub.s32 0, %v1005
      %v1007 = vrot.slane %v234, %v1006
      %v1008 = vmul.f32 %v886, %v1007
      %v1009 = vmul.f32 %v891, %v1007
      %v1010 = vmul.f32 %v896, %v1007
      %v1011 = vmul.f32 %v901, %v1007
      %v1012 = vmul.f32 %v906, %v1007
      %v1013 = vmul.f32 %v911, %v1007
      %v1014 = vmul.f32 %v916, %v1007
      %v1015 = vmul.f32 %v921, %v1007
      %v1016 = vmul.f32 %v926, %v1007
      %v1017 = vmul.f32 %v931, %v1007
      %v1018 = vmul.f32 %v936, %v1007
      %v1019 = vmul.f32 %v941, %v1007
      %v1020 = vmul.f32 %v946, %v1007
      %v1021 = vmul.f32 %v951, %v1007
      %v1022 = vmul.f32 %v956, %v1007
      %v1023 = vmul.f32 %v961, %v1007
      %v1024 = vmul.f32 %v966, %v1007
      %v1025 = vmul.f32 %v971, %v1007
      %v1026 = vmul.f32 %v976, %v1007
      %v1027 = vmul.f32 %v981, %v1007
      %v1028 = vmul.f32 %v986, %v1007
      %v1029 = vmul.f32 %v991, %v1007
      %v1030 = vmul.f32 %v996, %v1007
      %v1031 = vmul.f32 %v1001, %v1007
      %v1032 = vlaneseq
      %v1033 = vshrl.u32 %v1032, 7
      %v1034 = vsub.s32 0, %v1033
      %v1035 = vrot.slane %v235, %v1034
      %v1036 = vadd.f32 %v1008, %v1035
      %v1037 = vadd.f32 %v1009, %v1035
      %v1038 = vadd.f32 %v1010, %v1035
      %v1039 = vadd.f32 %v1011, %v1035
      %v1040 = vadd.f32 %v1012, %v1035
      %v1041 = vadd.f32 %v1013, %v1035
      %v1042 = vadd.f32 %v1014, %v1035
      %v1043 = vadd.f32 %v1015, %v1035
      %v1044 = vadd.f32 %v1016, %v1035
      %v1045 = vadd.f32 %v1017, %v1035
      %v1046 = vadd.f32 %v1018, %v1035
      %v1047 = vadd.f32 %v1019, %v1035
      %v1048 = vadd.f32 %v1020, %v1035
      %v1049 = vadd.f32 %v1021, %v1035
      %v1050 = vadd.f32 %v1022, %v1035
      %v1051 = vadd.f32 %v1023, %v1035
      %v1052 = vadd.f32 %v1024, %v1035
      %v1053 = vadd.f32 %v1025, %v1035
      %v1054 = vadd.f32 %v1026, %v1035
      %v1055 = vadd.f32 %v1027, %v1035
      %v1056 = vadd.f32 %v1028, %v1035
      %v1057 = vadd.f32 %v1029, %v1035
      %v1058 = vadd.f32 %v1030, %v1035
      %v1059 = vadd.f32 %v1031, %v1035
      %v1060 = vmul.f32 %v1036, 0.5
      %v1061 = vmul.f32 %v1037, 0.5
      %v1062 = vmul.f32 %v1038, 0.5
      %v1063 = vmul.f32 %v1039, 0.5
      %v1064 = vmul.f32 %v1040, 0.5
      %v1065 = vmul.f32 %v1041, 0.5
      %v1066 = vmul.f32 %v1042, 0.5
      %v1067 = vmul.f32 %v1043, 0.5
      %v1068 = vmul.f32 %v1044, 0.5
      %v1069 = vmul.f32 %v1045, 0.5
      %v1070 = vmul.f32 %v1046, 0.5
      %v1071 = vmul.f32 %v1047, 0.5
      %v1072 = vmul.f32 %v1048, 0.5
      %v1073 = vmul.f32 %v1049, 0.5
      %v1074 = vmul.f32 %v1050, 0.5
      %v1075 = vmul.f32 %v1051, 0.5
      %v1076 = vmul.f32 %v1052, 0.5
      %v1077 = vmul.f32 %v1053, 0.5
      %v1078 = vmul.f32 %v1054, 0.5
      %v1079 = vmul.f32 %v1055, 0.5
      %v1080 = vmul.f32 %v1056, 0.5
      %v1081 = vmul.f32 %v1057, 0.5
      %v1082 = vmul.f32 %v1058, 0.5
      %v1083 = vmul.f32 %v1059, 0.5
      %v1084 = vmul.f32 %v1036, 0.70710677
      %v1085 = vmul.f32 %v1037, 0.70710677
      %v1086 = vmul.f32 %v1038, 0.70710677
      %v1087 = vmul.f32 %v1039, 0.70710677
      %v1088 = vmul.f32 %v1040, 0.70710677
      %v1089 = vmul.f32 %v1041, 0.70710677
      %v1090 = vmul.f32 %v1042, 0.70710677
      %v1091 = vmul.f32 %v1043, 0.70710677
      %v1092 = vmul.f32 %v1044, 0.70710677
      %v1093 = vmul.f32 %v1045, 0.70710677
      %v1094 = vmul.f32 %v1046, 0.70710677
      %v1095 = vmul.f32 %v1047, 0.70710677
      %v1096 = vmul.f32 %v1048, 0.70710677
      %v1097 = vmul.f32 %v1049, 0.70710677
      %v1098 = vmul.f32 %v1050, 0.70710677
      %v1099 = vmul.f32 %v1051, 0.70710677
      %v1100 = vmul.f32 %v1052, 0.70710677
      %v1101 = vmul.f32 %v1053, 0.70710677
      %v1102 = vmul.f32 %v1054, 0.70710677
      %v1103 = vmul.f32 %v1055, 0.70710677
      %v1104 = vmul.f32 %v1056, 0.70710677
      %v1105 = vmul.f32 %v1057, 0.70710677
      %v1106 = vmul.f32 %v1058, 0.70710677
      %v1107 = vmul.f32 %v1059, 0.70710677
      %v1108 = verf.f32.pop %v1084
      %v1109 = verf.f32.pop %v1085
      %v1110 = verf.f32.pop %v1086
      %v1111 = verf.f32.pop %v1087
      %v1112 = verf.f32.pop %v1088
      %v1113 = verf.f32.pop %v1089
      %v1114 = verf.f32.pop %v1090
      %v1115 = verf.f32.pop %v1091
      %v1116 = verf.f32.pop %v1092
      %v1117 = verf.f32.pop %v1093
      %v1118 = verf.f32.pop %v1094
      %v1119 = verf.f32.pop %v1095
      %v1120 = verf.f32.pop %v1096
      %v1121 = verf.f32.pop %v1097
      %v1122 = verf.f32.pop %v1098
      %v1123 = verf.f32.pop %v1099
      %v1124 = verf.f32.pop %v1100
      %v1125 = verf.f32.pop %v1101
      %v1126 = verf.f32.pop %v1102
      %v1127 = verf.f32.pop %v1103
      %v1128 = verf.f32.pop %v1104
      %v1129 = verf.f32.pop %v1105
      %v1130 = verf.f32.pop %v1106
      %v1131 = verf.f32.pop %v1107
      %v1132 = vadd.f32 %v1108, 1.0
      %v1133 = vadd.f32 %v1109, 1.0
      %v1134 = vadd.f32 %v1110, 1.0
      %v1135 = vadd.f32 %v1111, 1.0
      %v1136 = vadd.f32 %v1112, 1.0
      %v1137 = vadd.f32 %v1113, 1.0
      %v1138 = vadd.f32 %v1114, 1.0
      %v1139 = vadd.f32 %v1115, 1.0
      %v1140 = vadd.f32 %v1116, 1.0
      %v1141 = vadd.f32 %v1117, 1.0
      %v1142 = vadd.f32 %v1118, 1.0
      %v1143 = vadd.f32 %v1119, 1.0
      %v1144 = vadd.f32 %v1120, 1.0
      %v1145 = vadd.f32 %v1121, 1.0
      %v1146 = vadd.f32 %v1122, 1.0
      %v1147 = vadd.f32 %v1123, 1.0
      %v1148 = vadd.f32 %v1124, 1.0
      %v1149 = vadd.f32 %v1125, 1.0
      %v1150 = vadd.f32 %v1126, 1.0
      %v1151 = vadd.f32 %v1127, 1.0
      %v1152 = vadd.f32 %v1128, 1.0
      %v1153 = vadd.f32 %v1129, 1.0
      %v1154 = vadd.f32 %v1130, 1.0
      %v1155 = vadd.f32 %v1131, 1.0
      %v1156 = vmul.f32 %v1060, %v1132
      %v1157 = vmul.f32 %v1061, %v1133
      %v1158 = vmul.f32 %v1062, %v1134
      %v1159 = vmul.f32 %v1063, %v1135
      %v1160 = vmul.f32 %v1064, %v1136
      %v1161 = vmul.f32 %v1065, %v1137
      %v1162 = vmul.f32 %v1066, %v1138
      %v1163 = vmul.f32 %v1067, %v1139
      %v1164 = vmul.f32 %v1068, %v1140
      %v1165 = vmul.f32 %v1069, %v1141
      %v1166 = vmul.f32 %v1070, %v1142
      %v1167 = vmul.f32 %v1071, %v1143
      %v1168 = vmul.f32 %v1072, %v1144
      %v1169 = vmul.f32 %v1073, %v1145
      %v1170 = vmul.f32 %v1074, %v1146
      %v1171 = vmul.f32 %v1075, %v1147
      %v1172 = vmul.f32 %v1076, %v1148
      %v1173 = vmul.f32 %v1077, %v1149
      %v1174 = vmul.f32 %v1078, %v1150
      %v1175 = vmul.f32 %v1079, %v1151
      %v1176 = vmul.f32 %v1080, %v1152
      %v1177 = vmul.f32 %v1081, %v1153
      %v1178 = vmul.f32 %v1082, %v1154
      %v1179 = vmul.f32 %v1083, %v1155
      %v1180 = vmul.f32 %v1156, %v698
      %v1181 = vmul.f32 %v1157, %v699
      %v1182 = vmul.f32 %v1158, %v700
      %v1183 = vmul.f32 %v1159, %v701
      %v1184 = vmul.f32 %v1160, %v702
      %v1185 = vmul.f32 %v1161, %v703
      %v1186 = vmul.f32 %v1162, %v704
      %v1187 = vmul.f32 %v1163, %v705
      %v1188 = vmul.f32 %v1164, %v706
      %v1189 = vmul.f32 %v1165, %v707
      %v1190 = vmul.f32 %v1166, %v708
      %v1191 = vmul.f32 %v1167, %v709
      %v1192 = vmul.f32 %v1168, %v710
      %v1193 = vmul.f32 %v1169, %v711
      %v1194 = vmul.f32 %v1170, %v712
      %v1195 = vmul.f32 %v1171, %v713
      %v1196 = vmul.f32 %v1172, %v714
      %v1197 = vmul.f32 %v1173, %v715
      %v1198 = vmul.f32 %v1174, %v716
      %v1199 = vmul.f32 %v1175, %v717
      %v1200 = vmul.f32 %v1176, %v718
      %v1201 = vmul.f32 %v1177, %v719
      %v1202 = vmul.f32 %v1178, %v720
      %v1203 = vmul.f32 %v1179, %v721
      %s1204 = sadd.s32 0, 32
      %s1205 = scalar_lea.vmem [#allocation2], %s1204
      %1206 = vst.msk [vmem:[%s1205] sm:$0xff] %vm225, %v1180
      %1207 = vst.msk [vmem:[%s1205 + $0x8] sm:$0xff] %vm225, %v1181
      %1208 = vst.msk [vmem:[%s1205 + $0x10] sm:$0xff] %vm225, %v1182
      %1209 = vst.msk [vmem:[%s1205 + $0x18] sm:$0xff] %vm225, %v1183
      %1210 = vst.msk [vmem:[%s1205 + $0x20] sm:$0xff] %vm225, %v1184
      %1211 = vst.msk [vmem:[%s1205 + $0x28] sm:$0xff] %vm225, %v1185
      %1212 = vst.msk [vmem:[%s1205 + $0x30] sm:$0xff] %vm225, %v1186
      %1213 = vst.msk [vmem:[%s1205 + $0x38] sm:$0xff] %vm225, %v1187
      %1214 = vst.msk [vmem:[%s1205 + $0x40] sm:$0xff] %vm225, %v1188
      %1215 = vst.msk [vmem:[%s1205 + $0x48] sm:$0xff] %vm225, %v1189
      %1216 = vst.msk [vmem:[%s1205 + $0x50] sm:$0xff] %vm225, %v1190
      %1217 = vst.msk [vmem:[%s1205 + $0x58] sm:$0xff] %vm225, %v1191
      %1218 = vst.msk [vmem:[%s1205 + $0x60] sm:$0xff] %vm225, %v1192
      %1219 = vst.msk [vmem:[%s1205 + $0x68] sm:$0xff] %vm225, %v1193
      %1220 = vst.msk [vmem:[%s1205 + $0x70] sm:$0xff] %vm225, %v1194
      %1221 = vst.msk [vmem:[%s1205 + $0x78] sm:$0xff] %vm225, %v1195
      %1222 = vst.msk [vmem:[%s1205 + $0x80] sm:$0xff] %vm225, %v1196
      %1223 = vst.msk [vmem:[%s1205 + $0x88] sm:$0xff] %vm225, %v1197
      %1224 = vst.msk [vmem:[%s1205 + $0x90] sm:$0xff] %vm225, %v1198
      %1225 = vst.msk [vmem:[%s1205 + $0x98] sm:$0xff] %vm225, %v1199
      %1226 = vst.msk [vmem:[%s1205 + $0xa0] sm:$0xff] %vm225, %v1200
      %1227 = vst.msk [vmem:[%s1205 + $0xa8] sm:$0xff] %vm225, %v1201
      %1228 = vst.msk [vmem:[%s1205 + $0xb0] sm:$0xff] %vm225, %v1202
      %1229 = vst.msk [vmem:[%s1205 + $0xb8] sm:$0xff] %vm225, %v1203
      %s1230 = scalar_lea.vmem %s219, 192
      %v1231 = vld [vmem:[%s1230] sm:$0xff]
      %v1232 = vld [vmem:[%s1230 + $0x8] sm:$0xff]
      %v1233 = vld [vmem:[%s1230 + $0x10] sm:$0xff]
      %v1234 = vld [vmem:[%s1230 + $0x18] sm:$0xff]
      %v1235 = vld [vmem:[%s1230 + $0x20] sm:$0xff]
      %v1236 = vld [vmem:[%s1230 + $0x28] sm:$0xff]
      %v1237 = vld [vmem:[%s1230 + $0x30] sm:$0xff]
      %v1238 = vld [vmem:[%s1230 + $0x38] sm:$0xff]
      %v1239 = vld [vmem:[%s1230 + $0x40] sm:$0xff]
      %v1240 = vld [vmem:[%s1230 + $0x48] sm:$0xff]
      %v1241 = vld [vmem:[%s1230 + $0x50] sm:$0xff]
      %v1242 = vld [vmem:[%s1230 + $0x58] sm:$0xff]
      %v1243 = vld [vmem:[%s1230 + $0x60] sm:$0xff]
      %v1244 = vld [vmem:[%s1230 + $0x68] sm:$0xff]
      %v1245 = vld [vmem:[%s1230 + $0x70] sm:$0xff]
      %v1246 = vld [vmem:[%s1230 + $0x78] sm:$0xff]
      %v1247 = vld [vmem:[%s1230 + $0x80] sm:$0xff]
      %v1248 = vld [vmem:[%s1230 + $0x88] sm:$0xff]
      %v1249 = vld [vmem:[%s1230 + $0x90] sm:$0xff]
      %v1250 = vld [vmem:[%s1230 + $0x98] sm:$0xff]
      %v1251 = vld [vmem:[%s1230 + $0xa0] sm:$0xff]
      %v1252 = vld [vmem:[%s1230 + $0xa8] sm:$0xff]
      %v1253 = vld [vmem:[%s1230 + $0xb0] sm:$0xff]
      %v1254 = vld [vmem:[%s1230 + $0xb8] sm:$0xff]
      %v1256 = vsel %vm746, %v1231, 0
      %v1259 = vsel %vm746, %v1232, 0
      %v1262 = vsel %vm746, %v1233, 0
      %v1265 = vsel %vm746, %v1234, 0
      %v1268 = vsel %vm746, %v1235, 0
      %v1271 = vsel %vm746, %v1236, 0
      %v1274 = vsel %vm746, %v1237, 0
      %v1277 = vsel %vm746, %v1238, 0
      %v1280 = vsel %vm746, %v1239, 0
      %v1283 = vsel %vm746, %v1240, 0
      %v1286 = vsel %vm746, %v1241, 0
      %v1289 = vsel %vm746, %v1242, 0
      %v1292 = vsel %vm746, %v1243, 0
      %v1295 = vsel %vm746, %v1244, 0
      %v1298 = vsel %vm746, %v1245, 0
      %v1301 = vsel %vm746, %v1246, 0
      %v1304 = vsel %vm746, %v1247, 0
      %v1307 = vsel %vm746, %v1248, 0
      %v1310 = vsel %vm746, %v1249, 0
      %v1313 = vsel %vm746, %v1250, 0
      %v1316 = vsel %vm746, %v1251, 0
      %v1319 = vsel %vm746, %v1252, 0
      %v1322 = vsel %vm746, %v1253, 0
      %v1325 = vsel %vm746, %v1254, 0
      %1327 = vmatprep.subr.mxu0 0.0
      %1328 = vmatpush1.msra.mxu0 %v236
      %1329 = vmatprep.subr.mxu0 0.0
      %1330 = vmatpush1.msra.mxu0 %v237
      %1331 = vmatprep.subr.mxu0 0.0
      %1332 = vmatpush1.msra.mxu0 %v238
      %1333 = vmatprep.subr.mxu0 0.0
      %1334 = vmatpush1.msra.mxu0 %v239
      %1335 = vmatprep.subr.mxu0 0.0
      %1336 = vmatpush1.msra.mxu0 %v240
      %1337 = vmatprep.subr.mxu0 0.0
      %1338 = vmatpush1.msra.mxu0 0.0
      %1339 = vmatprep.subr.mxu0 0.0
      %1340 = vmatpush1.msra.mxu0 0.0
      %1341 = vmatprep.subr.mxu0 0.0
      %1342 = vmatpush1.msra.mxu0 0.0
      %1343 = vmatprep.subr.mxu0 0.0
      %1344 = vmatpush1.msra.mxu0 0.0
      %1345 = vmatprep.subr.mxu0 0.0
      %1346 = vmatpush1.msra.mxu0 0.0
      %1347 = vmatprep.subr.mxu0 0.0
      %1348 = vmatpush1.msra.mxu0 0.0
      %1349 = vmatprep.subr.mxu0 0.0
      %1350 = vmatpush1.msra.mxu0 0.0
      %1351 = vmatprep.subr.mxu0 0.0
      %1352 = vmatpush1.msra.mxu0 0.0
      %1353 = vmatprep.subr.mxu0 0.0
      %1354 = vmatpush1.msra.mxu0 0.0
      %1355 = vmatprep.subr.mxu0 0.0
      %1356 = vmatpush1.msra.mxu0 0.0
      %1357 = vmatprep.subr.mxu0 0.0
      %1358 = vmatpush1.msra.mxu0 0.0
      %1359 = vmatprep.subr.mxu0 0.0
      %1360 = vmatpush1.msra.mxu0 0.0
      %1361 = vmatprep.subr.mxu0 0.0
      %1362 = vmatpush1.msra.mxu0 0.0
      %1363 = vmatprep.subr.mxu0 0.0
      %1364 = vmatpush1.msra.mxu0 0.0
      %1365 = vmatprep.subr.mxu0 0.0
      %1366 = vmatpush1.msra.mxu0 0.0
      %1367 = vmatprep.subr.mxu0 0.0
      %1368 = vmatpush1.msra.mxu0 0.0
      %1369 = vmatprep.subr.mxu0 0.0
      %1370 = vmatpush1.msra.mxu0 0.0
      %1371 = vmatprep.subr.mxu0 0.0
      %1372 = vmatpush1.msra.mxu0 0.0
      %1373 = vmatprep.subr.mxu0 0.0
      %1374 = vmatpush1.msra.mxu0 0.0
      %1375 = vmatprep.subr.mxu0 0.0
      %1376 = vmatpush1.msra.mxu0 0.0
      %1377 = vmatprep.subr.mxu0 0.0
      %1378 = vmatpush1.msra.mxu0 0.0
      %1379 = vmatprep.subr.mxu0 0.0
      %1380 = vmatpush1.msra.mxu0 0.0
      %1381 = vmatprep.subr.mxu0 0.0
      %1382 = vmatpush1.msra.mxu0 0.0
      %1383 = vmatprep.subr.mxu0 0.0
      %1384 = vmatpush1.msra.mxu0 0.0
      %1385 = vmatprep.subr.mxu0 0.0
      %1386 = vmatpush1.msra.mxu0 0.0
      %1387 = vmatprep.subr.mxu0 0.0
      %1388 = vmatpush1.msra.mxu0 0.0
      %1389 = vmatprep.subr.mxu0 0.0
      %1390 = vmatpush1.msra.mxu0 0.0
      %1391 = vmatprep.mubr.f32.mxu0 0.0
      %1392 = vmatmul.mubr.f32.gmra.mrb[0].mxu0 %v1256
      %v1393 = vpop.f32.mrb[0].mxu0
      %v1394 = vadd.f32 0.0, %v1393
      %v1395 = vpop.f32.mrb[0].mxu0
      %1396 = vmatprep.mubr.f32.mxu0 0.0
      %1397 = vmatmul.mubr.f32.gmra.mrb[0].mxu0 %v1259
      %v1398 = vpop.f32.mrb[0].mxu0
      %v1399 = vadd.f32 0.0, %v1398
      %v1400 = vpop.f32.mrb[0].mxu0
      %1401 = vmatprep.mubr.f32.mxu0 0.0
      %1402 = vmatmul.mubr.f32.gmra.mrb[0].mxu0 %v1262
      %v1403 = vpop.f32.mrb[0].mxu0
      %v1404 = vadd.f32 0.0, %v1403
      %v1405 = vpop.f32.mrb[0].mxu0
      %1406 = vmatprep.mubr.f32.mxu0 0.0
      %1407 = vmatmul.mubr.f32.gmra.mrb[0].mxu0 %v1265
      %v1408 = vpop.f32.mrb[0].mxu0
      %v1409 = vadd.f32 0.0, %v1408
      %v1410 = vpop.f32.mrb[0].mxu0
      %1411 = vmatprep.mubr.f32.mxu0 0.0
      %1412 = vmatmul.mubr.f32.gmra.mrb[0].mxu0 %v1268
      %v1413 = vpop.f32.mrb[0].mxu0
      %v1414 = vadd.f32 0.0, %v1413
      %v1415 = vpop.f32.mrb[0].mxu0
      %1416 = vmatprep.mubr.f32.mxu0 0.0
      %1417 = vmatmul.mubr.f32.gmra.mrb[0].mxu0 %v1271
      %v1418 = vpop.f32.mrb[0].mxu0
      %v1419 = vadd.f32 0.0, %v1418
      %v1420 = vpop.f32.mrb[0].mxu0
      %1421 = vmatprep.mubr.f32.mxu0 0.0
      %1422 = vmatmul.mubr.f32.gmra.mrb[0].mxu0 %v1274
      %v1423 = vpop.f32.mrb[0].mxu0
      %v1424 = vadd.f32 0.0, %v1423
      %v1425 = vpop.f32.mrb[0].mxu0
      %1426 = vmatprep.mubr.f32.mxu0 0.0
      %1427 = vmatmul.mubr.f32.gmra.mrb[0].mxu0 %v1277
      %v1428 = vpop.f32.mrb[0].mxu0
      %v1429 = vadd.f32 0.0, %v1428
      %v1430 = vpop.f32.mrb[0].mxu0
      %1431 = vmatprep.mubr.f32.mxu0 0.0
      %1432 = vmatmul.mubr.f32.gmra.mrb[0].mxu0 %v1280
      %v1433 = vpop.f32.mrb[0].mxu0
      %v1434 = vadd.f32 0.0, %v1433
      %v1435 = vpop.f32.mrb[0].mxu0
      %1436 = vmatprep.mubr.f32.mxu0 0.0
      %1437 = vmatmul.mubr.f32.gmra.mrb[0].mxu0 %v1283
      %v1438 = vpop.f32.mrb[0].mxu0
      %v1439 = vadd.f32 0.0, %v1438
      %v1440 = vpop.f32.mrb[0].mxu0
      %1441 = vmatprep.mubr.f32.mxu0 0.0
      %1442 = vmatmul.mubr.f32.gmra.mrb[0].mxu0 %v1286
      %v1443 = vpop.f32.mrb[0].mxu0
      %v1444 = vadd.f32 0.0, %v1443
      %v1445 = vpop.f32.mrb[0].mxu0
      %1446 = vmatprep.mubr.f32.mxu0 0.0
      %1447 = vmatmul.mubr.f32.gmra.mrb[0].mxu0 %v1289
      %v1448 = vpop.f32.mrb[0].mxu0
      %v1449 = vadd.f32 0.0, %v1448
      %v1450 = vpop.f32.mrb[0].mxu0
      %1451 = vmatprep.mubr.f32.mxu0 0.0
      %1452 = vmatmul.mubr.f32.gmra.mrb[0].mxu0 %v1292
      %v1453 = vpop.f32.mrb[0].mxu0
      %v1454 = vadd.f32 0.0, %v1453
      %v1455 = vpop.f32.mrb[0].mxu0
      %1456 = vmatprep.mubr.f32.mxu0 0.0
      %1457 = vmatmul.mubr.f32.gmra.mrb[0].mxu0 %v1295
      %v1458 = vpop.f32.mrb[0].mxu0
      %v1459 = vadd.f32 0.0, %v1458
      %v1460 = vpop.f32.mrb[0].mxu0
      %1461 = vmatprep.mubr.f32.mxu0 0.0
      %1462 = vmatmul.mubr.f32.gmra.mrb[0].mxu0 %v1298
      %v1463 = vpop.f32.mrb[0].mxu0
      %v1464 = vadd.f32 0.0, %v1463
      %v1465 = vpop.f32.mrb[0].mxu0
      %1466 = vmatprep.mubr.f32.mxu0 0.0
      %1467 = vmatmul.mubr.f32.gmra.mrb[0].mxu0 %v1301
      %v1468 = vpop.f32.mrb[0].mxu0
      %v1469 = vadd.f32 0.0, %v1468
      %v1470 = vpop.f32.mrb[0].mxu0
      %1471 = vmatprep.mubr.f32.mxu0 0.0
      %1472 = vmatmul.mubr.f32.gmra.mrb[0].mxu0 %v1304
      %v1473 = vpop.f32.mrb[0].mxu0
      %v1474 = vadd.f32 0.0, %v1473
      %v1475 = vpop.f32.mrb[0].mxu0
      %1476 = vmatprep.mubr.f32.mxu0 0.0
      %1477 = vmatmul.mubr.f32.gmra.mrb[0].mxu0 %v1307
      %v1478 = vpop.f32.mrb[0].mxu0
      %v1479 = vadd.f32 0.0, %v1478
      %v1480 = vpop.f32.mrb[0].mxu0
      %1481 = vmatprep.mubr.f32.mxu0 0.0
      %1482 = vmatmul.mubr.f32.gmra.mrb[0].mxu0 %v1310
      %v1483 = vpop.f32.mrb[0].mxu0
      %v1484 = vadd.f32 0.0, %v1483
      %v1485 = vpop.f32.mrb[0].mxu0
      %1486 = vmatprep.mubr.f32.mxu0 0.0
      %1487 = vmatmul.mubr.f32.gmra.mrb[0].mxu0 %v1313
      %v1488 = vpop.f32.mrb[0].mxu0
      %v1489 = vadd.f32 0.0, %v1488
      %v1490 = vpop.f32.mrb[0].mxu0
      %1491 = vmatprep.mubr.f32.mxu0 0.0
      %1492 = vmatmul.mubr.f32.gmra.mrb[0].mxu0 %v1316
      %v1493 = vpop.f32.mrb[0].mxu0
      %v1494 = vadd.f32 0.0, %v1493
      %v1495 = vpop.f32.mrb[0].mxu0
      %1496 = vmatprep.mubr.f32.mxu0 0.0
      %1497 = vmatmul.mubr.f32.gmra.mrb[0].mxu0 %v1319
      %v1498 = vpop.f32.mrb[0].mxu0
      %v1499 = vadd.f32 0.0, %v1498
      %v1500 = vpop.f32.mrb[0].mxu0
      %1501 = vmatprep.mubr.f32.mxu0 0.0
      %1502 = vmatmul.mubr.f32.gmra.mrb[0].mxu0 %v1322
      %v1503 = vpop.f32.mrb[0].mxu0
      %v1504 = vadd.f32 0.0, %v1503
      %v1505 = vpop.f32.mrb[0].mxu0
      %1506 = vmatprep.mubr.f32.mxu0 0.0
      %1507 = vmatmul.mubr.f32.gmra.mrb[0].mxu0 %v1325
      %v1508 = vpop.f32.mrb[0].mxu0
      %v1509 = vadd.f32 0.0, %v1508
      %v1510 = vpop.f32.mrb[0].mxu0
      %1511 = vdwg.mxu0
      %v1512 = vmul.f32 %v1394, %v1007
      %v1513 = vmul.f32 %v1399, %v1007
      %v1514 = vmul.f32 %v1404, %v1007
      %v1515 = vmul.f32 %v1409, %v1007
      %v1516 = vmul.f32 %v1414, %v1007
      %v1517 = vmul.f32 %v1419, %v1007
      %v1518 = vmul.f32 %v1424, %v1007
      %v1519 = vmul.f32 %v1429, %v1007
      %v1520 = vmul.f32 %v1434, %v1007
      %v1521 = vmul.f32 %v1439, %v1007
      %v1522 = vmul.f32 %v1444, %v1007
      %v1523 = vmul.f32 %v1449, %v1007
      %v1524 = vmul.f32 %v1454, %v1007
      %v1525 = vmul.f32 %v1459, %v1007
      %v1526 = vmul.f32 %v1464, %v1007
      %v1527 = vmul.f32 %v1469, %v1007
      %v1528 = vmul.f32 %v1474, %v1007
      %v1529 = vmul.f32 %v1479, %v1007
      %v1530 = vmul.f32 %v1484, %v1007
      %v1531 = vmul.f32 %v1489, %v1007
      %v1532 = vmul.f32 %v1494, %v1007
      %v1533 = vmul.f32 %v1499, %v1007
      %v1534 = vmul.f32 %v1504, %v1007
      %v1535 = vmul.f32 %v1509, %v1007
      %v1536 = vadd.f32 %v1512, %v1035
      %v1537 = vadd.f32 %v1513, %v1035
      %v1538 = vadd.f32 %v1514, %v1035
      %v1539 = vadd.f32 %v1515, %v1035
      %v1540 = vadd.f32 %v1516, %v1035
      %v1541 = vadd.f32 %v1517, %v1035
      %v1542 = vadd.f32 %v1518, %v1035
      %v1543 = vadd.f32 %v1519, %v1035
      %v1544 = vadd.f32 %v1520, %v1035
      %v1545 = vadd.f32 %v1521, %v1035
      %v1546 = vadd.f32 %v1522, %v1035
      %v1547 = vadd.f32 %v1523, %v1035
      %v1548 = vadd.f32 %v1524, %v1035
      %v1549 = vadd.f32 %v1525, %v1035
      %v1550 = vadd.f32 %v1526, %v1035
      %v1551 = vadd.f32 %v1527, %v1035
      %v1552 = vadd.f32 %v1528, %v1035
      %v1553 = vadd.f32 %v1529, %v1035
      %v1554 = vadd.f32 %v1530, %v1035
      %v1555 = vadd.f32 %v1531, %v1035
      %v1556 = vadd.f32 %v1532, %v1035
      %v1557 = vadd.f32 %v1533, %v1035
      %v1558 = vadd.f32 %v1534, %v1035
      %v1559 = vadd.f32 %v1535, %v1035
      %v1560 = vmul.f32 %v1536, 0.5
      %v1561 = vmul.f32 %v1537, 0.5
      %v1562 = vmul.f32 %v1538, 0.5
      %v1563 = vmul.f32 %v1539, 0.5
      %v1564 = vmul.f32 %v1540, 0.5
      %v1565 = vmul.f32 %v1541, 0.5
      %v1566 = vmul.f32 %v1542, 0.5
      %v1567 = vmul.f32 %v1543, 0.5
      %v1568 = vmul.f32 %v1544, 0.5
      %v1569 = vmul.f32 %v1545, 0.5
      %v1570 = vmul.f32 %v1546, 0.5
      %v1571 = vmul.f32 %v1547, 0.5
      %v1572 = vmul.f32 %v1548, 0.5
      %v1573 = vmul.f32 %v1549, 0.5
      %v1574 = vmul.f32 %v1550, 0.5
      %v1575 = vmul.f32 %v1551, 0.5
      %v1576 = vmul.f32 %v1552, 0.5
      %v1577 = vmul.f32 %v1553, 0.5
      %v1578 = vmul.f32 %v1554, 0.5
      %v1579 = vmul.f32 %v1555, 0.5
      %v1580 = vmul.f32 %v1556, 0.5
      %v1581 = vmul.f32 %v1557, 0.5
      %v1582 = vmul.f32 %v1558, 0.5
      %v1583 = vmul.f32 %v1559, 0.5
      %v1584 = vmul.f32 %v1536, 0.70710677
      %v1585 = vmul.f32 %v1537, 0.70710677
      %v1586 = vmul.f32 %v1538, 0.70710677
      %v1587 = vmul.f32 %v1539, 0.70710677
      %v1588 = vmul.f32 %v1540, 0.70710677
      %v1589 = vmul.f32 %v1541, 0.70710677
      %v1590 = vmul.f32 %v1542, 0.70710677
      %v1591 = vmul.f32 %v1543, 0.70710677
      %v1592 = vmul.f32 %v1544, 0.70710677
      %v1593 = vmul.f32 %v1545, 0.70710677
      %v1594 = vmul.f32 %v1546, 0.70710677
      %v1595 = vmul.f32 %v1547, 0.70710677
      %v1596 = vmul.f32 %v1548, 0.70710677
      %v1597 = vmul.f32 %v1549, 0.70710677
      %v1598 = vmul.f32 %v1550, 0.70710677
      %v1599 = vmul.f32 %v1551, 0.70710677
      %v1600 = vmul.f32 %v1552, 0.70710677
      %v1601 = vmul.f32 %v1553, 0.70710677
      %v1602 = vmul.f32 %v1554, 0.70710677
      %v1603 = vmul.f32 %v1555, 0.70710677
      %v1604 = vmul.f32 %v1556, 0.70710677
      %v1605 = vmul.f32 %v1557, 0.70710677
      %v1606 = vmul.f32 %v1558, 0.70710677
      %v1607 = vmul.f32 %v1559, 0.70710677
      %v1608 = verf.f32.pop %v1584
      %v1609 = verf.f32.pop %v1585
      %v1610 = verf.f32.pop %v1586
      %v1611 = verf.f32.pop %v1587
      %v1612 = verf.f32.pop %v1588
      %v1613 = verf.f32.pop %v1589
      %v1614 = verf.f32.pop %v1590
      %v1615 = verf.f32.pop %v1591
      %v1616 = verf.f32.pop %v1592
      %v1617 = verf.f32.pop %v1593
      %v1618 = verf.f32.pop %v1594
      %v1619 = verf.f32.pop %v1595
      %v1620 = verf.f32.pop %v1596
      %v1621 = verf.f32.pop %v1597
      %v1622 = verf.f32.pop %v1598
      %v1623 = verf.f32.pop %v1599
      %v1624 = verf.f32.pop %v1600
      %v1625 = verf.f32.pop %v1601
      %v1626 = verf.f32.pop %v1602
      %v1627 = verf.f32.pop %v1603
      %v1628 = verf.f32.pop %v1604
      %v1629 = verf.f32.pop %v1605
      %v1630 = verf.f32.pop %v1606
      %v1631 = verf.f32.pop %v1607
      %v1632 = vadd.f32 %v1608, 1.0
      %v1633 = vadd.f32 %v1609, 1.0
      %v1634 = vadd.f32 %v1610, 1.0
      %v1635 = vadd.f32 %v1611, 1.0
      %v1636 = vadd.f32 %v1612, 1.0
      %v1637 = vadd.f32 %v1613, 1.0
      %v1638 = vadd.f32 %v1614, 1.0
      %v1639 = vadd.f32 %v1615, 1.0
      %v1640 = vadd.f32 %v1616, 1.0
      %v1641 = vadd.f32 %v1617, 1.0
      %v1642 = vadd.f32 %v1618, 1.0
      %v1643 = vadd.f32 %v1619, 1.0
      %v1644 = vadd.f32 %v1620, 1.0
      %v1645 = vadd.f32 %v1621, 1.0
      %v1646 = vadd.f32 %v1622, 1.0
      %v1647 = vadd.f32 %v1623, 1.0
      %v1648 = vadd.f32 %v1624, 1.0
      %v1649 = vadd.f32 %v1625, 1.0
      %v1650 = vadd.f32 %v1626, 1.0
      %v1651 = vadd.f32 %v1627, 1.0
      %v1652 = vadd.f32 %v1628, 1.0
      %v1653 = vadd.f32 %v1629, 1.0
      %v1654 = vadd.f32 %v1630, 1.0
      %v1655 = vadd.f32 %v1631, 1.0
      %v1656 = vmul.f32 %v1560, %v1632
      %v1657 = vmul.f32 %v1561, %v1633
      %v1658 = vmul.f32 %v1562, %v1634
      %v1659 = vmul.f32 %v1563, %v1635
      %v1660 = vmul.f32 %v1564, %v1636
      %v1661 = vmul.f32 %v1565, %v1637
      %v1662 = vmul.f32 %v1566, %v1638
      %v1663 = vmul.f32 %v1567, %v1639
      %v1664 = vmul.f32 %v1568, %v1640
      %v1665 = vmul.f32 %v1569, %v1641
      %v1666 = vmul.f32 %v1570, %v1642
      %v1667 = vmul.f32 %v1571, %v1643
      %v1668 = vmul.f32 %v1572, %v1644
      %v1669 = vmul.f32 %v1573, %v1645
      %v1670 = vmul.f32 %v1574, %v1646
      %v1671 = vmul.f32 %v1575, %v1647
      %v1672 = vmul.f32 %v1576, %v1648
      %v1673 = vmul.f32 %v1577, %v1649
      %v1674 = vmul.f32 %v1578, %v1650
      %v1675 = vmul.f32 %v1579, %v1651
      %v1676 = vmul.f32 %v1580, %v1652
      %v1677 = vmul.f32 %v1581, %v1653
      %v1678 = vmul.f32 %v1582, %v1654
      %v1679 = vmul.f32 %v1583, %v1655
      %v1680 = vmul.f32 %v1656, %v698
      %v1681 = vmul.f32 %v1657, %v699
      %v1682 = vmul.f32 %v1658, %v700
      %v1683 = vmul.f32 %v1659, %v701
      %v1684 = vmul.f32 %v1660, %v702
      %v1685 = vmul.f32 %v1661, %v703
      %v1686 = vmul.f32 %v1662, %v704
      %v1687 = vmul.f32 %v1663, %v705
      %v1688 = vmul.f32 %v1664, %v706
      %v1689 = vmul.f32 %v1665, %v707
      %v1690 = vmul.f32 %v1666, %v708
      %v1691 = vmul.f32 %v1667, %v709
      %v1692 = vmul.f32 %v1668, %v710
      %v1693 = vmul.f32 %v1669, %v711
      %v1694 = vmul.f32 %v1670, %v712
      %v1695 = vmul.f32 %v1671, %v713
      %v1696 = vmul.f32 %v1672, %v714
      %v1697 = vmul.f32 %v1673, %v715
      %v1698 = vmul.f32 %v1674, %v716
      %v1699 = vmul.f32 %v1675, %v717
      %v1700 = vmul.f32 %v1676, %v718
      %v1701 = vmul.f32 %v1677, %v719
      %v1702 = vmul.f32 %v1678, %v720
      %v1703 = vmul.f32 %v1679, %v721
      %s1704 = sadd.s32 192, 32
      %s1705 = scalar_lea.vmem [#allocation2], %s1704
      %1706 = vst.msk [vmem:[%s1705] sm:$0xff] %vm225, %v1680
      %1707 = vst.msk [vmem:[%s1705 + $0x8] sm:$0xff] %vm225, %v1681
      %1708 = vst.msk [vmem:[%s1705 + $0x10] sm:$0xff] %vm225, %v1682
      %1709 = vst.msk [vmem:[%s1705 + $0x18] sm:$0xff] %vm225, %v1683
      %1710 = vst.msk [vmem:[%s1705 + $0x20] sm:$0xff] %vm225, %v1684
      %1711 = vst.msk [vmem:[%s1705 + $0x28] sm:$0xff] %vm225, %v1685
      %1712 = vst.msk [vmem:[%s1705 + $0x30] sm:$0xff] %vm225, %v1686
      %1713 = vst.msk [vmem:[%s1705 + $0x38] sm:$0xff] %vm225, %v1687
      %1714 = vst.msk [vmem:[%s1705 + $0x40] sm:$0xff] %vm225, %v1688
      %1715 = vst.msk [vmem:[%s1705 + $0x48] sm:$0xff] %vm225, %v1689
      %1716 = vst.msk [vmem:[%s1705 + $0x50] sm:$0xff] %vm225, %v1690
      %1717 = vst.msk [vmem:[%s1705 + $0x58] sm:$0xff] %vm225, %v1691
      %1718 = vst.msk [vmem:[%s1705 + $0x60] sm:$0xff] %vm225, %v1692
      %1719 = vst.msk [vmem:[%s1705 + $0x68] sm:$0xff] %vm225, %v1693
      %1720 = vst.msk [vmem:[%s1705 + $0x70] sm:$0xff] %vm225, %v1694
      %1721 = vst.msk [vmem:[%s1705 + $0x78] sm:$0xff] %vm225, %v1695
      %1722 = vst.msk [vmem:[%s1705 + $0x80] sm:$0xff] %vm225, %v1696
      %1723 = vst.msk [vmem:[%s1705 + $0x88] sm:$0xff] %vm225, %v1697
      %1724 = vst.msk [vmem:[%s1705 + $0x90] sm:$0xff] %vm225, %v1698
      %1725 = vst.msk [vmem:[%s1705 + $0x98] sm:$0xff] %vm225, %v1699
      %1726 = vst.msk [vmem:[%s1705 + $0xa0] sm:$0xff] %vm225, %v1700
      %1727 = vst.msk [vmem:[%s1705 + $0xa8] sm:$0xff] %vm225, %v1701
      %1728 = vst.msk [vmem:[%s1705 + $0xb0] sm:$0xff] %vm225, %v1702
      %1729 = vst.msk [vmem:[%s1705 + $0xb8] sm:$0xff] %vm225, %v1703
      %v1730 = vld [vmem:[%s4] sm:$0x1]
      %v1731 = vld [vmem:[%s4 + $0x1] sm:$0x1]
      %v1732 = vld [vmem:[%s3] sm:$0xff]
      %s1733 = scalar_lea.vmem %s3, 8
      %v1734 = vld [vmem:[%s1733] sm:$0xff]
      %s1735 = scalar_lea.vmem %s3, 16
      %v1736 = vld [vmem:[%s1735] sm:$0xff]
      %s1737 = scalar_lea.vmem %s3, 24
      %v1738 = vld [vmem:[%s1737] sm:$0xff]
      %s1739 = scalar_lea.vmem %s3, 32
      %v1740 = vld [vmem:[%s1739] sm:$0xff]
      %s1741 = scalar_lea.vmem %s3, 40
      %v1742 = vld [vmem:[%s1741] sm:$0xff]
      %s1743 = scalar_lea.vmem %s3, 48
      %v1744 = vld [vmem:[%s1743] sm:$0xff]
      %s1745 = scalar_lea.vmem %s3, 56
      %v1746 = vld [vmem:[%s1745] sm:$0xff]
      %s1747 = scalar_lea.vmem %s3, 64
      %v1748 = vld [vmem:[%s1747] sm:$0xff]
      %v1749 = vld [vmem:[#allocation2] sm:$0xff]
      %v1750 = vld [vmem:[#allocation2 + $0x8] sm:$0xff]
      %v1751 = vld [vmem:[#allocation2 + $0x10] sm:$0xff]
      %v1752 = vld [vmem:[#allocation2 + $0x18] sm:$0xff]
      %v1753 = vld [vmem:[#allocation2 + $0x20] sm:$0xff]
      %v1754 = vld [vmem:[#allocation2 + $0x28] sm:$0xff]
      %v1755 = vld [vmem:[#allocation2 + $0x30] sm:$0xff]
      %v1756 = vld [vmem:[#allocation2 + $0x38] sm:$0xff]
      %v1757 = vld [vmem:[#allocation2 + $0x40] sm:$0xff]
      %v1758 = vld [vmem:[#allocation2 + $0x48] sm:$0xff]
      %v1759 = vld [vmem:[#allocation2 + $0x50] sm:$0xff]
      %v1760 = vld [vmem:[#allocation2 + $0x58] sm:$0xff]
      %v1761 = vld [vmem:[#allocation2 + $0x60] sm:$0xff]
      %v1762 = vld [vmem:[#allocation2 + $0x68] sm:$0xff]
      %v1763 = vld [vmem:[#allocation2 + $0x70] sm:$0xff]
      %v1764 = vld [vmem:[#allocation2 + $0x78] sm:$0xff]
      %v1765 = vld [vmem:[#allocation2 + $0x80] sm:$0xff]
      %v1766 = vld [vmem:[#allocation2 + $0x88] sm:$0xff]
      %v1767 = vld [vmem:[#allocation2 + $0x90] sm:$0xff]
      %v1768 = vld [vmem:[#allocation2 + $0x98] sm:$0xff]
      %v1769 = vld [vmem:[#allocation2 + $0xa0] sm:$0xff]
      %v1770 = vld [vmem:[#allocation2 + $0xa8] sm:$0xff]
      %v1771 = vld [vmem:[#allocation2 + $0xb0] sm:$0xff]
      %v1772 = vld [vmem:[#allocation2 + $0xb8] sm:$0xff]
      %v1773 = vld [vmem:[#allocation2 + $0xc0] sm:$0xff]
      %v1774 = vld [vmem:[#allocation2 + $0xc8] sm:$0xff]
      %v1776 = vsel %vm225, %v1750, 0
      %v1779 = vsel %vm225, %v1751, 0
      %v1782 = vsel %vm225, %v1752, 0
      %v1785 = vsel %vm225, %v1753, 0
      %v1788 = vsel %vm225, %v1754, 0
      %v1791 = vsel %vm225, %v1755, 0
      %v1794 = vsel %vm225, %v1756, 0
      %v1797 = vsel %vm225, %v1757, 0
      %v1800 = vsel %vm225, %v1758, 0
      %v1803 = vsel %vm225, %v1759, 0
      %v1806 = vsel %vm225, %v1760, 0
      %v1809 = vsel %vm225, %v1761, 0
      %v1812 = vsel %vm225, %v1762, 0
      %v1815 = vsel %vm225, %v1763, 0
      %v1818 = vsel %vm225, %v1764, 0
      %v1821 = vsel %vm225, %v1765, 0
      %v1824 = vsel %vm225, %v1766, 0
      %v1827 = vsel %vm225, %v1767, 0
      %v1830 = vsel %vm225, %v1768, 0
      %v1833 = vsel %vm225, %v1769, 0
      %v1836 = vsel %vm225, %v1770, 0
      %v1839 = vsel %vm225, %v1771, 0
      %v1842 = vsel %vm225, %v1772, 0
      %v1845 = vsel %vm225, %v1773, 0
      %1847 = vmatprep.subr.mxu0 0.0
      %1848 = vmatpush1.msra.mxu0 %v1734
      %1849 = vmatprep.subr.mxu0 0.0
      %1850 = vmatpush1.msra.mxu0 0.0
      %1851 = vmatprep.subr.mxu0 0.0
      %1852 = vmatpush1.msra.mxu0 0.0
      %1853 = vmatprep.subr.mxu0 0.0
      %1854 = vmatpush1.msra.mxu0 0.0
      %1855 = vmatprep.subr.mxu0 0.0
      %1856 = vmatpush1.msra.mxu0 0.0
      %1857 = vmatprep.subr.mxu0 0.0
      %1858 = vmatpush1.msra.mxu0 0.0
      %1859 = vmatprep.subr.mxu0 0.0
      %1860 = vmatpush1.msra.mxu0 0.0
      %1861 = vmatprep.subr.mxu0 0.0
      %1862 = vmatpush1.msra.mxu0 0.0
      %1863 = vmatprep.subr.mxu0 0.0
      %1864 = vmatpush1.msra.mxu0 0.0
      %1865 = vmatprep.subr.mxu0 0.0
      %1866 = vmatpush1.msra.mxu0 0.0
      %1867 = vmatprep.subr.mxu0 0.0
      %1868 = vmatpush1.msra.mxu0 0.0
      %1869 = vmatprep.subr.mxu0 0.0
      %1870 = vmatpush1.msra.mxu0 0.0
      %1871 = vmatprep.subr.mxu0 0.0
      %1872 = vmatpush1.msra.mxu0 0.0
      %1873 = vmatprep.subr.mxu0 0.0
      %1874 = vmatpush1.msra.mxu0 0.0
      %1875 = vmatprep.subr.mxu0 0.0
      %1876 = vmatpush1.msra.mxu0 0.0
      %1877 = vmatprep.subr.mxu0 0.0
      %1878 = vmatpush1.msra.mxu0 0.0
      %1879 = vmatprep.subr.mxu0 0.0
      %1880 = vmatpush1.msra.mxu0 0.0
      %1881 = vmatprep.subr.mxu0 0.0
      %1882 = vmatpush1.msra.mxu0 0.0
      %1883 = vmatprep.subr.mxu0 0.0
      %1884 = vmatpush1.msra.mxu0 0.0
      %1885 = vmatprep.subr.mxu0 0.0
      %1886 = vmatpush1.msra.mxu0 0.0
      %1887 = vmatprep.subr.mxu0 0.0
      %1888 = vmatpush1.msra.mxu0 0.0
      %1889 = vmatprep.subr.mxu0 0.0
      %1890 = vmatpush1.msra.mxu0 0.0
      %1891 = vmatprep.subr.mxu0 0.0
      %1892 = vmatpush1.msra.mxu0 0.0
      %1893 = vmatprep.subr.mxu0 0.0
      %1894 = vmatpush1.msra.mxu0 0.0
      %1895 = vmatprep.subr.mxu0 0.0
      %1896 = vmatpush1.msra.mxu0 0.0
      %1897 = vmatprep.subr.mxu0 0.0
      %1898 = vmatpush1.msra.mxu0 0.0
      %1899 = vmatprep.subr.mxu0 0.0
      %1900 = vmatpush1.msra.mxu0 0.0
      %1901 = vmatprep.subr.mxu0 0.0
      %1902 = vmatpush1.msra.mxu0 0.0
      %1903 = vmatprep.subr.mxu0 0.0
      %1904 = vmatpush1.msra.mxu0 0.0
      %1905 = vmatprep.subr.mxu0 0.0
      %1906 = vmatpush1.msra.mxu0 0.0
      %1907 = vmatprep.subr.mxu0 0.0
      %1908 = vmatpush1.msra.mxu0 0.0
      %1909 = vmatprep.subr.mxu0 0.0
      %1910 = vmatpush1.msra.mxu0 0.0
      %1911 = vmatprep.mubr.f32.mxu0 0.0
      %1912 = vmatmul.mubr.f32.gmra.mrb[0].mxu0 %v1776
      %v1913 = vpop.f32.mrb[0].mxu0
      %v1914 = vadd.f32 0.0, %v1913
      %v1915 = vpop.f32.mrb[0].mxu0
      %1916 = vmatprep.mubr.f32.mxu0 0.0
      %1917 = vmatmul.mubr.f32.gmra.mrb[0].mxu0 %v1779
      %v1918 = vpop.f32.mrb[0].mxu0
      %v1919 = vadd.f32 0.0, %v1918
      %v1920 = vpop.f32.mrb[0].mxu0
      %1921 = vmatprep.mubr.f32.mxu0 0.0
      %1922 = vmatmul.mubr.f32.gmra.mrb[0].mxu0 %v1782
      %v1923 = vpop.f32.mrb[0].mxu0
      %v1924 = vadd.f32 0.0, %v1923
      %v1925 = vpop.f32.mrb[0].mxu0
      %1926 = vmatprep.mubr.f32.mxu0 0.0
      %1927 = vmatmul.mubr.f32.gmra.mrb[0].mxu0 %v1785
      %v1928 = vpop.f32.mrb[0].mxu0
      %v1929 = vadd.f32 0.0, %v1928
      %v1930 = vpop.f32.mrb[0].mxu0
      %1931 = vmatprep.mubr.f32.mxu0 0.0
      %1932 = vmatmul.mubr.f32.gmra.mrb[0].mxu0 %v1788
      %v1933 = vpop.f32.mrb[0].mxu0
      %v1934 = vadd.f32 0.0, %v1933
      %v1935 = vpop.f32.mrb[0].mxu0
      %1936 = vmatprep.mubr.f32.mxu0 0.0
      %1937 = vmatmul.mubr.f32.gmra.mrb[0].mxu0 %v1791
      %v1938 = vpop.f32.mrb[0].mxu0
      %v1939 = vadd.f32 0.0, %v1938
      %v1940 = vpop.f32.mrb[0].mxu0
      %1941 = vmatprep.mubr.f32.mxu0 0.0
      %1942 = vmatmul.mubr.f32.gmra.mrb[0].mxu0 %v1794
      %v1943 = vpop.f32.mrb[0].mxu0
      %v1944 = vadd.f32 0.0, %v1943
      %v1945 = vpop.f32.mrb[0].mxu0
      %1946 = vmatprep.mubr.f32.mxu0 0.0
      %1947 = vmatmul.mubr.f32.gmra.mrb[0].mxu0 %v1797
      %v1948 = vpop.f32.mrb[0].mxu0
      %v1949 = vadd.f32 0.0, %v1948
      %v1950 = vpop.f32.mrb[0].mxu0
      %1951 = vmatprep.mubr.f32.mxu0 0.0
      %1952 = vmatmul.mubr.f32.gmra.mrb[0].mxu0 %v1800
      %v1953 = vpop.f32.mrb[0].mxu0
      %v1954 = vadd.f32 0.0, %v1953
      %v1955 = vpop.f32.mrb[0].mxu0
      %1956 = vmatprep.mubr.f32.mxu0 0.0
      %1957 = vmatmul.mubr.f32.gmra.mrb[0].mxu0 %v1803
      %v1958 = vpop.f32.mrb[0].mxu0
      %v1959 = vadd.f32 0.0, %v1958
      %v1960 = vpop.f32.mrb[0].mxu0
      %1961 = vmatprep.mubr.f32.mxu0 0.0
      %1962 = vmatmul.mubr.f32.gmra.mrb[0].mxu0 %v1806
      %v1963 = vpop.f32.mrb[0].mxu0
      %v1964 = vadd.f32 0.0, %v1963
      %v1965 = vpop.f32.mrb[0].mxu0
      %1966 = vmatprep.mubr.f32.mxu0 0.0
      %1967 = vmatmul.mubr.f32.gmra.mrb[0].mxu0 %v1809
      %v1968 = vpop.f32.mrb[0].mxu0
      %v1969 = vadd.f32 0.0, %v1968
      %v1970 = vpop.f32.mrb[0].mxu0
      %1971 = vmatprep.mubr.f32.mxu0 0.0
      %1972 = vmatmul.mubr.f32.gmra.mrb[0].mxu0 %v1812
      %v1973 = vpop.f32.mrb[0].mxu0
      %v1974 = vadd.f32 0.0, %v1973
      %v1975 = vpop.f32.mrb[0].mxu0
      %1976 = vmatprep.mubr.f32.mxu0 0.0
      %1977 = vmatmul.mubr.f32.gmra.mrb[0].mxu0 %v1815
      %v1978 = vpop.f32.mrb[0].mxu0
      %v1979 = vadd.f32 0.0, %v1978
      %v1980 = vpop.f32.mrb[0].mxu0
      %1981 = vmatprep.mubr.f32.mxu0 0.0
      %1982 = vmatmul.mubr.f32.gmra.mrb[0].mxu0 %v1818
      %v1983 = vpop.f32.mrb[0].mxu0
      %v1984 = vadd.f32 0.0, %v1983
      %v1985 = vpop.f32.mrb[0].mxu0
      %1986 = vmatprep.mubr.f32.mxu0 0.0
      %1987 = vmatmul.mubr.f32.gmra.mrb[0].mxu0 %v1821
      %v1988 = vpop.f32.mrb[0].mxu0
      %v1989 = vadd.f32 0.0, %v1988
      %v1990 = vpop.f32.mrb[0].mxu0
      %1991 = vmatprep.mubr.f32.mxu0 0.0
      %1992 = vmatmul.mubr.f32.gmra.mrb[0].mxu0 %v1824
      %v1993 = vpop.f32.mrb[0].mxu0
      %v1994 = vadd.f32 0.0, %v1993
      %v1995 = vpop.f32.mrb[0].mxu0
      %1996 = vmatprep.mubr.f32.mxu0 0.0
      %1997 = vmatmul.mubr.f32.gmra.mrb[0].mxu0 %v1827
      %v1998 = vpop.f32.mrb[0].mxu0
      %v1999 = vadd.f32 0.0, %v1998
      %v2000 = vpop.f32.mrb[0].mxu0
      %2001 = vmatprep.mubr.f32.mxu0 0.0
      %2002 = vmatmul.mubr.f32.gmra.mrb[0].mxu0 %v1830
      %v2003 = vpop.f32.mrb[0].mxu0
      %v2004 = vadd.f32 0.0, %v2003
      %v2005 = vpop.f32.mrb[0].mxu0
      %2006 = vmatprep.mubr.f32.mxu0 0.0
      %2007 = vmatmul.mubr.f32.gmra.mrb[0].mxu0 %v1833
      %v2008 = vpop.f32.mrb[0].mxu0
      %v2009 = vadd.f32 0.0, %v2008
      %v2010 = vpop.f32.mrb[0].mxu0
      %2011 = vmatprep.mubr.f32.mxu0 0.0
      %2012 = vmatmul.mubr.f32.gmra.mrb[0].mxu0 %v1836
      %v2013 = vpop.f32.mrb[0].mxu0
      %v2014 = vadd.f32 0.0, %v2013
      %v2015 = vpop.f32.mrb[0].mxu0
      %2016 = vmatprep.mubr.f32.mxu0 0.0
      %2017 = vmatmul.mubr.f32.gmra.mrb[0].mxu0 %v1839
      %v2018 = vpop.f32.mrb[0].mxu0
      %v2019 = vadd.f32 0.0, %v2018
      %v2020 = vpop.f32.mrb[0].mxu0
      %2021 = vmatprep.mubr.f32.mxu0 0.0
      %2022 = vmatmul.mubr.f32.gmra.mrb[0].mxu0 %v1842
      %v2023 = vpop.f32.mrb[0].mxu0
      %v2024 = vadd.f32 0.0, %v2023
      %v2025 = vpop.f32.mrb[0].mxu0
      %2026 = vmatprep.mubr.f32.mxu0 0.0
      %2027 = vmatmul.mubr.f32.gmra.mrb[0].mxu0 %v1845
      %v2028 = vpop.f32.mrb[0].mxu0
      %v2029 = vadd.f32 0.0, %v2028
      %v2030 = vpop.f32.mrb[0].mxu0
      %2031 = vdwg.mxu0
      %vm2033 = vcmask 1040384
      %v2034 = vrot.slane %v1749, 7
      %v2035 = vrot.slane %v1750, 7
      %v2036 = vsel %vm2033, %v2034, %v2035
      %v2037 = vrot.slane %v1751, 7
      %v2038 = vsel %vm2033, %v2035, %v2037
      %v2039 = vrot.slane %v1752, 7
      %v2040 = vsel %vm2033, %v2037, %v2039
      %v2041 = vrot.slane %v1753, 7
      %v2042 = vsel %vm2033, %v2039, %v2041
      %v2043 = vrot.slane %v1754, 7
      %v2044 = vsel %vm2033, %v2041, %v2043
      %v2045 = vrot.slane %v1755, 7
      %v2046 = vsel %vm2033, %v2043, %v2045
      %v2047 = vrot.slane %v1756, 7
      %v2048 = vsel %vm2033, %v2045, %v2047
      %v2049 = vrot.slane %v1757, 7
      %v2050 = vsel %vm2033, %v2047, %v2049
      %v2051 = vrot.slane %v1758, 7
      %v2052 = vsel %vm2033, %v2049, %v2051
      %v2053 = vrot.slane %v1759, 7
      %v2054 = vsel %vm2033, %v2051, %v2053
      %v2055 = vrot.slane %v1760, 7
      %v2056 = vsel %vm2033, %v2053, %v2055
      %v2057 = vrot.slane %v1761, 7
      %v2058 = vsel %vm2033, %v2055, %v2057
      %v2059 = vrot.slane %v1762, 7
      %v2060 = vsel %vm2033, %v2057, %v2059
      %v2061 = vrot.slane %v1763, 7
      %v2062 = vsel %vm2033, %v2059, %v2061
      %v2063 = vrot.slane %v1764, 7
      %v2064 = vsel %vm2033, %v2061, %v2063
      %v2065 = vrot.slane %v1765, 7
      %v2066 = vsel %vm2033, %v2063, %v2065
      %v2067 = vrot.slane %v1766, 7
      %v2068 = vsel %vm2033, %v2065, %v2067
      %v2069 = vrot.slane %v1767, 7
      %v2070 = vsel %vm2033, %v2067, %v2069
      %v2071 = vrot.slane %v1768, 7
      %v2072 = vsel %vm2033, %v2069, %v2071
      %v2073 = vrot.slane %v1769, 7
      %v2074 = vsel %vm2033, %v2071, %v2073
      %v2075 = vrot.slane %v1770, 7
      %v2076 = vsel %vm2033, %v2073, %v2075
      %v2077 = vrot.slane %v1771, 7
      %v2078 = vsel %vm2033, %v2075, %v2077
      %v2079 = vrot.slane %v1772, 7
      %v2080 = vsel %vm2033, %v2077, %v2079
      %v2081 = vrot.slane %v1773, 7
      %v2082 = vsel %vm2033, %v2079, %v2081
      %v2083 = vsel %vm225, %v2036, 0
      %v2085 = vsel %vm225, %v2038, 0
      %v2087 = vsel %vm225, %v2040, 0
      %v2089 = vsel %vm225, %v2042, 0
      %v2091 = vsel %vm225, %v2044, 0
      %v2093 = vsel %vm225, %v2046, 0
      %v2095 = vsel %vm225, %v2048, 0
      %v2097 = vsel %vm225, %v2050, 0
      %v2099 = vsel %vm225, %v2052, 0
      %v2101 = vsel %vm225, %v2054, 0
      %v2103 = vsel %vm225, %v2056, 0
      %v2105 = vsel %vm225, %v2058, 0
      %v2107 = vsel %vm225, %v2060, 0
      %v2109 = vsel %vm225, %v2062, 0
      %v2111 = vsel %vm225, %v2064, 0
      %v2113 = vsel %vm225, %v2066, 0
      %v2115 = vsel %vm225, %v2068, 0
      %v2117 = vsel %vm225, %v2070, 0
      %v2119 = vsel %vm225, %v2072, 0
      %v2121 = vsel %vm225, %v2074, 0
      %v2123 = vsel %vm225, %v2076, 0
      %v2125 = vsel %vm225, %v2078, 0
      %v2127 = vsel %vm225, %v2080, 0
      %v2129 = vsel %vm225, %v2082, 0
      %2131 = vmatprep.subr.mxu0 0.0
      %2132 = vmatpush1.msra.mxu0 %v1732
      %2133 = vmatprep.subr.mxu0 0.0
      %2134 = vmatpush1.msra.mxu0 0.0
      %2135 = vmatprep.subr.mxu0 0.0
      %2136 = vmatpush1.msra.mxu0 0.0
      %2137 = vmatprep.subr.mxu0 0.0
      %2138 = vmatpush1.msra.mxu0 0.0
      %2139 = vmatprep.subr.mxu0 0.0
      %2140 = vmatpush1.msra.mxu0 0.0
      %2141 = vmatprep.subr.mxu0 0.0
      %2142 = vmatpush1.msra.mxu0 0.0
      %2143 = vmatprep.subr.mxu0 0.0
      %2144 = vmatpush1.msra.mxu0 0.0
      %2145 = vmatprep.subr.mxu0 0.0
      %2146 = vmatpush1.msra.mxu0 0.0
      %2147 = vmatprep.subr.mxu0 0.0
      %2148 = vmatpush1.msra.mxu0 0.0
      %2149 = vmatprep.subr.mxu0 0.0
      %2150 = vmatpush1.msra.mxu0 0.0
      %2151 = vmatprep.subr.mxu0 0.0
      %2152 = vmatpush1.msra.mxu0 0.0
      %2153 = vmatprep.subr.mxu0 0.0
      %2154 = vmatpush1.msra.mxu0 0.0
      %2155 = vmatprep.subr.mxu0 0.0
      %2156 = vmatpush1.msra.mxu0 0.0
      %2157 = vmatprep.subr.mxu0 0.0
      %2158 = vmatpush1.msra.mxu0 0.0
      %2159 = vmatprep.subr.mxu0 0.0
      %2160 = vmatpush1.msra.mxu0 0.0
      %2161 = vmatprep.subr.mxu0 0.0
      %2162 = vmatpush1.msra.mxu0 0.0
      %2163 = vmatprep.subr.mxu0 0.0
      %2164 = vmatpush1.msra.mxu0 0.0
      %2165 = vmatprep.subr.mxu0 0.0
      %2166 = vmatpush1.msra.mxu0 0.0
      %2167 = vmatprep.subr.mxu0 0.0
      %2168 = vmatpush1.msra.mxu0 0.0
      %2169 = vmatprep.subr.mxu0 0.0
      %2170 = vmatpush1.msra.mxu0 0.0
      %2171 = vmatprep.subr.mxu0 0.0
      %2172 = vmatpush1.msra.mxu0 0.0
      %2173 = vmatprep.subr.mxu0 0.0
      %2174 = vmatpush1.msra.mxu0 0.0
      %2175 = vmatprep.subr.mxu0 0.0
      %2176 = vmatpush1.msra.mxu0 0.0
      %2177 = vmatprep.subr.mxu0 0.0
      %2178 = vmatpush1.msra.mxu0 0.0
      %2179 = vmatprep.subr.mxu0 0.0
      %2180 = vmatpush1.msra.mxu0 0.0
      %2181 = vmatprep.subr.mxu0 0.0
      %2182 = vmatpush1.msra.mxu0 0.0
      %2183 = vmatprep.subr.mxu0 0.0
      %2184 = vmatpush1.msra.mxu0 0.0
      %2185 = vmatprep.subr.mxu0 0.0
      %2186 = vmatpush1.msra.mxu0 0.0
      %2187 = vmatprep.subr.mxu0 0.0
      %2188 = vmatpush1.msra.mxu0 0.0
      %2189 = vmatprep.subr.mxu0 0.0
      %2190 = vmatpush1.msra.mxu0 0.0
      %2191 = vmatprep.subr.mxu0 0.0
      %2192 = vmatpush1.msra.mxu0 0.0
      %2193 = vmatprep.subr.mxu0 0.0
      %2194 = vmatpush1.msra.mxu0 0.0
      %2195 = vmatprep.mubr.f32.mxu0 0.0
      %2196 = vmatmul.mubr.f32.gmra.mrb[0].mxu0 %v2083
      %v2197 = vpop.f32.mrb[0].mxu0
      %v2198 = vadd.f32 %v1914, %v2197
      %v2199 = vpop.f32.mrb[0].mxu0
      %2200 = vmatprep.mubr.f32.mxu0 0.0
      %2201 = vmatmul.mubr.f32.gmra.mrb[0].mxu0 %v2085
      %v2202 = vpop.f32.mrb[0].mxu0
      %v2203 = vadd.f32 %v1919, %v2202
      %v2204 = vpop.f32.mrb[0].mxu0
      %2205 = vmatprep.mubr.f32.mxu0 0.0
      %2206 = vmatmul.mubr.f32.gmra.mrb[0].mxu0 %v2087
      %v2207 = vpop.f32.mrb[0].mxu0
      %v2208 = vadd.f32 %v1924, %v2207
      %v2209 = vpop.f32.mrb[0].mxu0
      %2210 = vmatprep.mubr.f32.mxu0 0.0
      %2211 = vmatmul.mubr.f32.gmra.mrb[0].mxu0 %v2089
      %v2212 = vpop.f32.mrb[0].mxu0
      %v2213 = vadd.f32 %v1929, %v2212
      %v2214 = vpop.f32.mrb[0].mxu0
      %2215 = vmatprep.mubr.f32.mxu0 0.0
      %2216 = vmatmul.mubr.f32.gmra.mrb[0].mxu0 %v2091
      %v2217 = vpop.f32.mrb[0].mxu0
      %v2218 = vadd.f32 %v1934, %v2217
      %v2219 = vpop.f32.mrb[0].mxu0
      %2220 = vmatprep.mubr.f32.mxu0 0.0
      %2221 = vmatmul.mubr.f32.gmra.mrb[0].mxu0 %v2093
      %v2222 = vpop.f32.mrb[0].mxu0
      %v2223 = vadd.f32 %v1939, %v2222
      %v2224 = vpop.f32.mrb[0].mxu0
      %2225 = vmatprep.mubr.f32.mxu0 0.0
      %2226 = vmatmul.mubr.f32.gmra.mrb[0].mxu0 %v2095
      %v2227 = vpop.f32.mrb[0].mxu0
      %v2228 = vadd.f32 %v1944, %v2227
      %v2229 = vpop.f32.mrb[0].mxu0
      %2230 = vmatprep.mubr.f32.mxu0 0.0
      %2231 = vmatmul.mubr.f32.gmra.mrb[0].mxu0 %v2097
      %v2232 = vpop.f32.mrb[0].mxu0
      %v2233 = vadd.f32 %v1949, %v2232
      %v2234 = vpop.f32.mrb[0].mxu0
      %2235 = vmatprep.mubr.f32.mxu0 0.0
      %2236 = vmatmul.mubr.f32.gmra.mrb[0].mxu0 %v2099
      %v2237 = vpop.f32.mrb[0].mxu0
      %v2238 = vadd.f32 %v1954, %v2237
      %v2239 = vpop.f32.mrb[0].mxu0
      %2240 = vmatprep.mubr.f32.mxu0 0.0
      %2241 = vmatmul.mubr.f32.gmra.mrb[0].mxu0 %v2101
      %v2242 = vpop.f32.mrb[0].mxu0
      %v2243 = vadd.f32 %v1959, %v2242
      %v2244 = vpop.f32.mrb[0].mxu0
      %2245 = vmatprep.mubr.f32.mxu0 0.0
      %2246 = vmatmul.mubr.f32.gmra.mrb[0].mxu0 %v2103
      %v2247 = vpop.f32.mrb[0].mxu0
      %v2248 = vadd.f32 %v1964, %v2247
      %v2249 = vpop.f32.mrb[0].mxu0
      %2250 = vmatprep.mubr.f32.mxu0 0.0
      %2251 = vmatmul.mubr.f32.gmra.mrb[0].mxu0 %v2105
      %v2252 = vpop.f32.mrb[0].mxu0
      %v2253 = vadd.f32 %v1969, %v2252
      %v2254 = vpop.f32.mrb[0].mxu0
      %2255 = vmatprep.mubr.f32.mxu0 0.0
      %2256 = vmatmul.mubr.f32.gmra.mrb[0].mxu0 %v2107
      %v2257 = vpop.f32.mrb[0].mxu0
      %v2258 = vadd.f32 %v1974, %v2257
      %v2259 = vpop.f32.mrb[0].mxu0
      %2260 = vmatprep.mubr.f32.mxu0 0.0
      %2261 = vmatmul.mubr.f32.gmra.mrb[0].mxu0 %v2109
      %v2262 = vpop.f32.mrb[0].mxu0
      %v2263 = vadd.f32 %v1979, %v2262
      %v2264 = vpop.f32.mrb[0].mxu0
      %2265 = vmatprep.mubr.f32.mxu0 0.0
      %2266 = vmatmul.mubr.f32.gmra.mrb[0].mxu0 %v2111
      %v2267 = vpop.f32.mrb[0].mxu0
      %v2268 = vadd.f32 %v1984, %v2267
      %v2269 = vpop.f32.mrb[0].mxu0
      %2270 = vmatprep.mubr.f32.mxu0 0.0
      %2271 = vmatmul.mubr.f32.gmra.mrb[0].mxu0 %v2113
      %v2272 = vpop.f32.mrb[0].mxu0
      %v2273 = vadd.f32 %v1989, %v2272
      %v2274 = vpop.f32.mrb[0].mxu0
      %2275 = vmatprep.mubr.f32.mxu0 0.0
      %2276 = vmatmul.mubr.f32.gmra.mrb[0].mxu0 %v2115
      %v2277 = vpop.f32.mrb[0].mxu0
      %v2278 = vadd.f32 %v1994, %v2277
      %v2279 = vpop.f32.mrb[0].mxu0
      %2280 = vmatprep.mubr.f32.mxu0 0.0
      %2281 = vmatmul.mubr.f32.gmra.mrb[0].mxu0 %v2117
      %v2282 = vpop.f32.mrb[0].mxu0
      %v2283 = vadd.f32 %v1999, %v2282
      %v2284 = vpop.f32.mrb[0].mxu0
      %2285 = vmatprep.mubr.f32.mxu0 0.0
      %2286 = vmatmul.mubr.f32.gmra.mrb[0].mxu0 %v2119
      %v2287 = vpop.f32.mrb[0].mxu0
      %v2288 = vadd.f32 %v2004, %v2287
      %v2289 = vpop.f32.mrb[0].mxu0
      %2290 = vmatprep.mubr.f32.mxu0 0.0
      %2291 = vmatmul.mubr.f32.gmra.mrb[0].mxu0 %v2121
      %v2292 = vpop.f32.mrb[0].mxu0
      %v2293 = vadd.f32 %v2009, %v2292
      %v2294 = vpop.f32.mrb[0].mxu0
      %2295 = vmatprep.mubr.f32.mxu0 0.0
      %2296 = vmatmul.mubr.f32.gmra.mrb[0].mxu0 %v2123
      %v2297 = vpop.f32.mrb[0].mxu0
      %v2298 = vadd.f32 %v2014, %v2297
      %v2299 = vpop.f32.mrb[0].mxu0
      %2300 = vmatprep.mubr.f32.mxu0 0.0
      %2301 = vmatmul.mubr.f32.gmra.mrb[0].mxu0 %v2125
      %v2302 = vpop.f32.mrb[0].mxu0
      %v2303 = vadd.f32 %v2019, %v2302
      %v2304 = vpop.f32.mrb[0].mxu0
      %2305 = vmatprep.mubr.f32.mxu0 0.0
      %2306 = vmatmul.mubr.f32.gmra.mrb[0].mxu0 %v2127
      %v2307 = vpop.f32.mrb[0].mxu0
      %v2308 = vadd.f32 %v2024, %v2307
      %v2309 = vpop.f32.mrb[0].mxu0
      %2310 = vmatprep.mubr.f32.mxu0 0.0
      %2311 = vmatmul.mubr.f32.gmra.mrb[0].mxu0 %v2129
      %v2312 = vpop.f32.mrb[0].mxu0
      %v2313 = vadd.f32 %v2029, %v2312
      %v2314 = vpop.f32.mrb[0].mxu0
      %2315 = vdwg.mxu0
      %vm2317 = vcmask 1046528
      %v2318 = vrot.slane %v1750, 1
      %v2319 = vrot.slane %v1751, 1
      %v2320 = vsel %vm2317, %v2318, %v2319
      %v2321 = vrot.slane %v1752, 1
      %v2322 = vsel %vm2317, %v2319, %v2321
      %v2323 = vrot.slane %v1753, 1
      %v2324 = vsel %vm2317, %v2321, %v2323
      %v2325 = vrot.slane %v1754, 1
      %v2326 = vsel %vm2317, %v2323, %v2325
      %v2327 = vrot.slane %v1755, 1
      %v2328 = vsel %vm2317, %v2325, %v2327
      %v2329 = vrot.slane %v1756, 1
      %v2330 = vsel %vm2317, %v2327, %v2329
      %v2331 = vrot.slane %v1757, 1
      %v2332 = vsel %vm2317, %v2329, %v2331
      %v2333 = vrot.slane %v1758, 1
      %v2334 = vsel %vm2317, %v2331, %v2333
      %v2335 = vrot.slane %v1759, 1
      %v2336 = vsel %vm2317, %v2333, %v2335
      %v2337 = vrot.slane %v1760, 1
      %v2338 = vsel %vm2317, %v2335, %v2337
      %v2339 = vrot.slane %v1761, 1
      %v2340 = vsel %vm2317, %v2337, %v2339
      %v2341 = vrot.slane %v1762, 1
      %v2342 = vsel %vm2317, %v2339, %v2341
      %v2343 = vrot.slane %v1763, 1
      %v2344 = vsel %vm2317, %v2341, %v2343
      %v2345 = vrot.slane %v1764, 1
      %v2346 = vsel %vm2317, %v2343, %v2345
      %v2347 = vrot.slane %v1765, 1
      %v2348 = vsel %vm2317, %v2345, %v2347
      %v2349 = vrot.slane %v1766, 1
      %v2350 = vsel %vm2317, %v2347, %v2349
      %v2351 = vrot.slane %v1767, 1
      %v2352 = vsel %vm2317, %v2349, %v2351
      %v2353 = vrot.slane %v1768, 1
      %v2354 = vsel %vm2317, %v2351, %v2353
      %v2355 = vrot.slane %v1769, 1
      %v2356 = vsel %vm2317, %v2353, %v2355
      %v2357 = vrot.slane %v1770, 1
      %v2358 = vsel %vm2317, %v2355, %v2357
      %v2359 = vrot.slane %v1771, 1
      %v2360 = vsel %vm2317, %v2357, %v2359
      %v2361 = vrot.slane %v1772, 1
      %v2362 = vsel %vm2317, %v2359, %v2361
      %v2363 = vrot.slane %v1773, 1
      %v2364 = vsel %vm2317, %v2361, %v2363
      %v2365 = vrot.slane %v1774, 1
      %v2366 = vsel %vm2317, %v2363, %v2365
      %v2367 = vsel %vm225, %v2320, 0
      %v2369 = vsel %vm225, %v2322, 0
      %v2371 = vsel %vm225, %v2324, 0
      %v2373 = vsel %vm225, %v2326, 0
      %v2375 = vsel %vm225, %v2328, 0
      %v2377 = vsel %vm225, %v2330, 0
      %v2379 = vsel %vm225, %v2332, 0
      %v2381 = vsel %vm225, %v2334, 0
      %v2383 = vsel %vm225, %v2336, 0
      %v2385 = vsel %vm225, %v2338, 0
      %v2387 = vsel %vm225, %v2340, 0
      %v2389 = vsel %vm225, %v2342, 0
      %v2391 = vsel %vm225, %v2344, 0
      %v2393 = vsel %vm225, %v2346, 0
      %v2395 = vsel %vm225, %v2348, 0
      %v2397 = vsel %vm225, %v2350, 0
      %v2399 = vsel %vm225, %v2352, 0
      %v2401 = vsel %vm225, %v2354, 0
      %v2403 = vsel %vm225, %v2356, 0
      %v2405 = vsel %vm225, %v2358, 0
      %v2407 = vsel %vm225, %v2360, 0
      %v2409 = vsel %vm225, %v2362, 0
      %v2411 = vsel %vm225, %v2364, 0
      %v2413 = vsel %vm225, %v2366, 0
      %2415 = vmatprep.subr.mxu0 0.0
      %2416 = vmatpush1.msra.mxu0 %v1736
      %2417 = vmatprep.subr.mxu0 0.0
      %2418 = vmatpush1.msra.mxu0 0.0
      %2419 = vmatprep.subr.mxu0 0.0
      %2420 = vmatpush1.msra.mxu0 0.0
      %2421 = vmatprep.subr.mxu0 0.0
      %2422 = vmatpush1.msra.mxu0 0.0
      %2423 = vmatprep.subr.mxu0 0.0
      %2424 = vmatpush1.msra.mxu0 0.0
      %2425 = vmatprep.subr.mxu0 0.0
      %2426 = vmatpush1.msra.mxu0 0.0
      %2427 = vmatprep.subr.mxu0 0.0
      %2428 = vmatpush1.msra.mxu0 0.0
      %2429 = vmatprep.subr.mxu0 0.0
      %2430 = vmatpush1.msra.mxu0 0.0
      %2431 = vmatprep.subr.mxu0 0.0
      %2432 = vmatpush1.msra.mxu0 0.0
      %2433 = vmatprep.subr.mxu0 0.0
      %2434 = vmatpush1.msra.mxu0 0.0
      %2435 = vmatprep.subr.mxu0 0.0
      %2436 = vmatpush1.msra.mxu0 0.0
      %2437 = vmatprep.subr.mxu0 0.0
      %2438 = vmatpush1.msra.mxu0 0.0
      %2439 = vmatprep.subr.mxu0 0.0
      %2440 = vmatpush1.msra.mxu0 0.0
      %2441 = vmatprep.subr.mxu0 0.0
      %2442 = vmatpush1.msra.mxu0 0.0
      %2443 = vmatprep.subr.mxu0 0.0
      %2444 = vmatpush1.msra.mxu0 0.0
      %2445 = vmatprep.subr.mxu0 0.0
      %2446 = vmatpush1.msra.mxu0 0.0
      %2447 = vmatprep.subr.mxu0 0.0
      %2448 = vmatpush1.msra.mxu0 0.0
      %2449 = vmatprep.subr.mxu0 0.0
      %2450 = vmatpush1.msra.mxu0 0.0
      %2451 = vmatprep.subr.mxu0 0.0
      %2452 = vmatpush1.msra.mxu0 0.0
      %2453 = vmatprep.subr.mxu0 0.0
      %2454 = vmatpush1.msra.mxu0 0.0
      %2455 = vmatprep.subr.mxu0 0.0
      %2456 = vmatpush1.msra.mxu0 0.0
      %2457 = vmatprep.subr.mxu0 0.0
      %2458 = vmatpush1.msra.mxu0 0.0
      %2459 = vmatprep.subr.mxu0 0.0
      %2460 = vmatpush1.msra.mxu0 0.0
      %2461 = vmatprep.subr.mxu0 0.0
      %2462 = vmatpush1.msra.mxu0 0.0
      %2463 = vmatprep.subr.mxu0 0.0
      %2464 = vmatpush1.msra.mxu0 0.0
      %2465 = vmatprep.subr.mxu0 0.0
      %2466 = vmatpush1.msra.mxu0 0.0
      %2467 = vmatprep.subr.mxu0 0.0
      %2468 = vmatpush1.msra.mxu0 0.0
      %2469 = vmatprep.subr.mxu0 0.0
      %2470 = vmatpush1.msra.mxu0 0.0
      %2471 = vmatprep.subr.mxu0 0.0
      %2472 = vmatpush1.msra.mxu0 0.0
      %2473 = vmatprep.subr.mxu0 0.0
      %2474 = vmatpush1.msra.mxu0 0.0
      %2475 = vmatprep.subr.mxu0 0.0
      %2476 = vmatpush1.msra.mxu0 0.0
      %2477 = vmatprep.subr.mxu0 0.0
      %2478 = vmatpush1.msra.mxu0 0.0
      %2479 = vmatprep.mubr.f32.mxu0 0.0
      %2480 = vmatmul.mubr.f32.gmra.mrb[0].mxu0 %v2367
      %v2481 = vpop.f32.mrb[0].mxu0
      %v2482 = vadd.f32 0.0, %v2481
      %v2483 = vpop.f32.mrb[0].mxu0
      %2484 = vmatprep.mubr.f32.mxu0 0.0
      %2485 = vmatmul.mubr.f32.gmra.mrb[0].mxu0 %v2369
      %v2486 = vpop.f32.mrb[0].mxu0
      %v2487 = vadd.f32 0.0, %v2486
      %v2488 = vpop.f32.mrb[0].mxu0
      %2489 = vmatprep.mubr.f32.mxu0 0.0
      %2490 = vmatmul.mubr.f32.gmra.mrb[0].mxu0 %v2371
      %v2491 = vpop.f32.mrb[0].mxu0
      %v2492 = vadd.f32 0.0, %v2491
      %v2493 = vpop.f32.mrb[0].mxu0
      %2494 = vmatprep.mubr.f32.mxu0 0.0
      %2495 = vmatmul.mubr.f32.gmra.mrb[0].mxu0 %v2373
      %v2496 = vpop.f32.mrb[0].mxu0
      %v2497 = vadd.f32 0.0, %v2496
      %v2498 = vpop.f32.mrb[0].mxu0
      %2499 = vmatprep.mubr.f32.mxu0 0.0
      %2500 = vmatmul.mubr.f32.gmra.mrb[0].mxu0 %v2375
      %v2501 = vpop.f32.mrb[0].mxu0
      %v2502 = vadd.f32 0.0, %v2501
      %v2503 = vpop.f32.mrb[0].mxu0
      %2504 = vmatprep.mubr.f32.mxu0 0.0
      %2505 = vmatmul.mubr.f32.gmra.mrb[0].mxu0 %v2377
      %v2506 = vpop.f32.mrb[0].mxu0
      %v2507 = vadd.f32 0.0, %v2506
      %v2508 = vpop.f32.mrb[0].mxu0
      %2509 = vmatprep.mubr.f32.mxu0 0.0
      %2510 = vmatmul.mubr.f32.gmra.mrb[0].mxu0 %v2379
      %v2511 = vpop.f32.mrb[0].mxu0
      %v2512 = vadd.f32 0.0, %v2511
      %v2513 = vpop.f32.mrb[0].mxu0
      %2514 = vmatprep.mubr.f32.mxu0 0.0
      %2515 = vmatmul.mubr.f32.gmra.mrb[0].mxu0 %v2381
      %v2516 = vpop.f32.mrb[0].mxu0
      %v2517 = vadd.f32 0.0, %v2516
      %v2518 = vpop.f32.mrb[0].mxu0
      %2519 = vmatprep.mubr.f32.mxu0 0.0
      %2520 = vmatmul.mubr.f32.gmra.mrb[0].mxu0 %v2383
      %v2521 = vpop.f32.mrb[0].mxu0
      %v2522 = vadd.f32 0.0, %v2521
      %v2523 = vpop.f32.mrb[0].mxu0
      %2524 = vmatprep.mubr.f32.mxu0 0.0
      %2525 = vmatmul.mubr.f32.gmra.mrb[0].mxu0 %v2385
      %v2526 = vpop.f32.mrb[0].mxu0
      %v2527 = vadd.f32 0.0, %v2526
      %v2528 = vpop.f32.mrb[0].mxu0
      %2529 = vmatprep.mubr.f32.mxu0 0.0
      %2530 = vmatmul.mubr.f32.gmra.mrb[0].mxu0 %v2387
      %v2531 = vpop.f32.mrb[0].mxu0
      %v2532 = vadd.f32 0.0, %v2531
      %v2533 = vpop.f32.mrb[0].mxu0
      %2534 = vmatprep.mubr.f32.mxu0 0.0
      %2535 = vmatmul.mubr.f32.gmra.mrb[0].mxu0 %v2389
      %v2536 = vpop.f32.mrb[0].mxu0
      %v2537 = vadd.f32 0.0, %v2536
      %v2538 = vpop.f32.mrb[0].mxu0
      %2539 = vmatprep.mubr.f32.mxu0 0.0
      %2540 = vmatmul.mubr.f32.gmra.mrb[0].mxu0 %v2391
      %v2541 = vpop.f32.mrb[0].mxu0
      %v2542 = vadd.f32 0.0, %v2541
      %v2543 = vpop.f32.mrb[0].mxu0
      %2544 = vmatprep.mubr.f32.mxu0 0.0
      %2545 = vmatmul.mubr.f32.gmra.mrb[0].mxu0 %v2393
      %v2546 = vpop.f32.mrb[0].mxu0
      %v2547 = vadd.f32 0.0, %v2546
      %v2548 = vpop.f32.mrb[0].mxu0
      %2549 = vmatprep.mubr.f32.mxu0 0.0
      %2550 = vmatmul.mubr.f32.gmra.mrb[0].mxu0 %v2395
      %v2551 = vpop.f32.mrb[0].mxu0
      %v2552 = vadd.f32 0.0, %v2551
      %v2553 = vpop.f32.mrb[0].mxu0
      %2554 = vmatprep.mubr.f32.mxu0 0.0
      %2555 = vmatmul.mubr.f32.gmra.mrb[0].mxu0 %v2397
      %v2556 = vpop.f32.mrb[0].mxu0
      %v2557 = vadd.f32 0.0, %v2556
      %v2558 = vpop.f32.mrb[0].mxu0
      %2559 = vmatprep.mubr.f32.mxu0 0.0
      %2560 = vmatmul.mubr.f32.gmra.mrb[0].mxu0 %v2399
      %v2561 = vpop.f32.mrb[0].mxu0
      %v2562 = vadd.f32 0.0, %v2561
      %v2563 = vpop.f32.mrb[0].mxu0
      %2564 = vmatprep.mubr.f32.mxu0 0.0
      %2565 = vmatmul.mubr.f32.gmra.mrb[0].mxu0 %v2401
      %v2566 = vpop.f32.mrb[0].mxu0
      %v2567 = vadd.f32 0.0, %v2566
      %v2568 = vpop.f32.mrb[0].mxu0
      %2569 = vmatprep.mubr.f32.mxu0 0.0
      %2570 = vmatmul.mubr.f32.gmra.mrb[0].mxu0 %v2403
      %v2571 = vpop.f32.mrb[0].mxu0
      %v2572 = vadd.f32 0.0, %v2571
      %v2573 = vpop.f32.mrb[0].mxu0
      %2574 = vmatprep.mubr.f32.mxu0 0.0
      %2575 = vmatmul.mubr.f32.gmra.mrb[0].mxu0 %v2405
      %v2576 = vpop.f32.mrb[0].mxu0
      %v2577 = vadd.f32 0.0, %v2576
      %v2578 = vpop.f32.mrb[0].mxu0
      %2579 = vmatprep.mubr.f32.mxu0 0.0
      %2580 = vmatmul.mubr.f32.gmra.mrb[0].mxu0 %v2407
      %v2581 = vpop.f32.mrb[0].mxu0
      %v2582 = vadd.f32 0.0, %v2581
      %v2583 = vpop.f32.mrb[0].mxu0
      %2584 = vmatprep.mubr.f32.mxu0 0.0
      %2585 = vmatmul.mubr.f32.gmra.mrb[0].mxu0 %v2409
      %v2586 = vpop.f32.mrb[0].mxu0
      %v2587 = vadd.f32 0.0, %v2586
      %v2588 = vpop.f32.mrb[0].mxu0
      %2589 = vmatprep.mubr.f32.mxu0 0.0
      %2590 = vmatmul.mubr.f32.gmra.mrb[0].mxu0 %v2411
      %v2591 = vpop.f32.mrb[0].mxu0
      %v2592 = vadd.f32 0.0, %v2591
      %v2593 = vpop.f32.mrb[0].mxu0
      %2594 = vmatprep.mubr.f32.mxu0 0.0
      %2595 = vmatmul.mubr.f32.gmra.mrb[0].mxu0 %v2413
      %v2596 = vpop.f32.mrb[0].mxu0
      %v2597 = vadd.f32 0.0, %v2596
      %v2598 = vpop.f32.mrb[0].mxu0
      %2599 = vdwg.mxu0
      %v2600 = vadd.f32 %v2198, %v2482
      %v2601 = vadd.f32 %v2203, %v2487
      %v2602 = vadd.f32 %v2208, %v2492
      %v2603 = vadd.f32 %v2213, %v2497
      %v2604 = vadd.f32 %v2218, %v2502
      %v2605 = vadd.f32 %v2223, %v2507
      %v2606 = vadd.f32 %v2228, %v2512
      %v2607 = vadd.f32 %v2233, %v2517
      %v2608 = vadd.f32 %v2238, %v2522
      %v2609 = vadd.f32 %v2243, %v2527
      %v2610 = vadd.f32 %v2248, %v2532
      %v2611 = vadd.f32 %v2253, %v2537
      %v2612 = vadd.f32 %v2258, %v2542
      %v2613 = vadd.f32 %v2263, %v2547
      %v2614 = vadd.f32 %v2268, %v2552
      %v2615 = vadd.f32 %v2273, %v2557
      %v2616 = vadd.f32 %v2278, %v2562
      %v2617 = vadd.f32 %v2283, %v2567
      %v2618 = vadd.f32 %v2288, %v2572
      %v2619 = vadd.f32 %v2293, %v2577
      %v2620 = vadd.f32 %v2298, %v2582
      %v2621 = vadd.f32 %v2303, %v2587
      %v2622 = vadd.f32 %v2308, %v2592
      %v2623 = vadd.f32 %v2313, %v2597
      %s2624 = sadd.s32 0, 24
      %s2625 = scalar_lea.vmem [#allocation2], %s2624
      %v2626 = vld [vmem:[%s2625] sm:$0xff]
      %v2627 = vld [vmem:[%s2625 + $0x8] sm:$0xff]
      %v2628 = vld [vmem:[%s2625 + $0x10] sm:$0xff]
      %v2629 = vld [vmem:[%s2625 + $0x18] sm:$0xff]
      %v2630 = vld [vmem:[%s2625 + $0x20] sm:$0xff]
      %v2631 = vld [vmem:[%s2625 + $0x28] sm:$0xff]
      %v2632 = vld [vmem:[%s2625 + $0x30] sm:$0xff]
      %v2633 = vld [vmem:[%s2625 + $0x38] sm:$0xff]
      %v2634 = vld [vmem:[%s2625 + $0x40] sm:$0xff]
      %v2635 = vld [vmem:[%s2625 + $0x48] sm:$0xff]
      %v2636 = vld [vmem:[%s2625 + $0x50] sm:$0xff]
      %v2637 = vld [vmem:[%s2625 + $0x58] sm:$0xff]
      %v2638 = vld [vmem:[%s2625 + $0x60] sm:$0xff]
      %v2639 = vld [vmem:[%s2625 + $0x68] sm:$0xff]
      %v2640 = vld [vmem:[%s2625 + $0x70] sm:$0xff]
      %v2641 = vld [vmem:[%s2625 + $0x78] sm:$0xff]
      %v2642 = vld [vmem:[%s2625 + $0x80] sm:$0xff]
      %v2643 = vld [vmem:[%s2625 + $0x88] sm:$0xff]
      %v2644 = vld [vmem:[%s2625 + $0x90] sm:$0xff]
      %v2645 = vld [vmem:[%s2625 + $0x98] sm:$0xff]
      %v2646 = vld [vmem:[%s2625 + $0xa0] sm:$0xff]
      %v2647 = vld [vmem:[%s2625 + $0xa8] sm:$0xff]
      %v2648 = vld [vmem:[%s2625 + $0xb0] sm:$0xff]
      %v2649 = vld [vmem:[%s2625 + $0xb8] sm:$0xff]
      %v2650 = vld [vmem:[%s2625 + $0xc0] sm:$0xff]
      %v2651 = vld [vmem:[%s2625 + $0xc8] sm:$0xff]
      %v2677 = vrot.slane %v2626, 7
      %v2678 = vrot.slane %v2627, 7
      %v2679 = vsel %vm2033, %v2677, %v2678
      %v2680 = vrot.slane %v2628, 7
      %v2681 = vsel %vm2033, %v2678, %v2680
      %v2682 = vrot.slane %v2629, 7
      %v2683 = vsel %vm2033, %v2680, %v2682
      %v2684 = vrot.slane %v2630, 7
      %v2685 = vsel %vm2033, %v2682, %v2684
      %v2686 = vrot.slane %v2631, 7
      %v2687 = vsel %vm2033, %v2684, %v2686
      %v2688 = vrot.slane %v2632, 7
      %v2689 = vsel %vm2033, %v2686, %v2688
      %v2690 = vrot.slane %v2633, 7
      %v2691 = vsel %vm2033, %v2688, %v2690
      %v2692 = vrot.slane %v2634, 7
      %v2693 = vsel %vm2033, %v2690, %v2692
      %v2694 = vrot.slane %v2635, 7
      %v2695 = vsel %vm2033, %v2692, %v2694
      %v2696 = vrot.slane %v2636, 7
      %v2697 = vsel %vm2033, %v2694, %v2696
      %v2698 = vrot.slane %v2637, 7
      %v2699 = vsel %vm2033, %v2696, %v2698
      %v2700 = vrot.slane %v2638, 7
      %v2701 = vsel %vm2033, %v2698, %v2700
      %v2702 = vrot.slane %v2639, 7
      %v2703 = vsel %vm2033, %v2700, %v2702
      %v2704 = vrot.slane %v2640, 7
      %v2705 = vsel %vm2033, %v2702, %v2704
      %v2706 = vrot.slane %v2641, 7
      %v2707 = vsel %vm2033, %v2704, %v2706
      %v2708 = vrot.slane %v2642, 7
      %v2709 = vsel %vm2033, %v2706, %v2708
      %v2710 = vrot.slane %v2643, 7
      %v2711 = vsel %vm2033, %v2708, %v2710
      %v2712 = vrot.slane %v2644, 7
      %v2713 = vsel %vm2033, %v2710, %v2712
      %v2714 = vrot.slane %v2645, 7
      %v2715 = vsel %vm2033, %v2712, %v2714
      %v2716 = vrot.slane %v2646, 7
      %v2717 = vsel %vm2033, %v2714, %v2716
      %v2718 = vrot.slane %v2647, 7
      %v2719 = vsel %vm2033, %v2716, %v2718
      %v2720 = vrot.slane %v2648, 7
      %v2721 = vsel %vm2033, %v2718, %v2720
      %v2722 = vrot.slane %v2649, 7
      %v2723 = vsel %vm2033, %v2720, %v2722
      %v2724 = vrot.slane %v2650, 7
      %v2725 = vsel %vm2033, %v2722, %v2724
      %v2726 = vsel %vm225, %v2679, 0
      %v2728 = vsel %vm225, %v2681, 0
      %v2730 = vsel %vm225, %v2683, 0
      %v2732 = vsel %vm225, %v2685, 0
      %v2734 = vsel %vm225, %v2687, 0
      %v2736 = vsel %vm225, %v2689, 0
      %v2738 = vsel %vm225, %v2691, 0
      %v2740 = vsel %vm225, %v2693, 0
      %v2742 = vsel %vm225, %v2695, 0
      %v2744 = vsel %vm225, %v2697, 0
      %v2746 = vsel %vm225, %v2699, 0
      %v2748 = vsel %vm225, %v2701, 0
      %v2750 = vsel %vm225, %v2703, 0
      %v2752 = vsel %vm225, %v2705, 0
      %v2754 = vsel %vm225, %v2707, 0
      %v2756 = vsel %vm225, %v2709, 0
      %v2758 = vsel %vm225, %v2711, 0
      %v2760 = vsel %vm225, %v2713, 0
      %v2762 = vsel %vm225, %v2715, 0
      %v2764 = vsel %vm225, %v2717, 0
      %v2766 = vsel %vm225, %v2719, 0
      %v2768 = vsel %vm225, %v2721, 0
      %v2770 = vsel %vm225, %v2723, 0
      %v2772 = vsel %vm225, %v2725, 0
      %2774 = vmatprep.subr.mxu0 0.0
      %2775 = vmatpush1.msra.mxu0 %v1738
      %2776 = vmatprep.subr.mxu0 0.0
      %2777 = vmatpush1.msra.mxu0 0.0
      %2778 = vmatprep.subr.mxu0 0.0
      %2779 = vmatpush1.msra.mxu0 0.0
      %2780 = vmatprep.subr.mxu0 0.0
      %2781 = vmatpush1.msra.mxu0 0.0
      %2782 = vmatprep.subr.mxu0 0.0
      %2783 = vmatpush1.msra.mxu0 0.0
      %2784 = vmatprep.subr.mxu0 0.0
      %2785 = vmatpush1.msra.mxu0 0.0
      %2786 = vmatprep.subr.mxu0 0.0
      %2787 = vmatpush1.msra.mxu0 0.0
      %2788 = vmatprep.subr.mxu0 0.0
      %2789 = vmatpush1.msra.mxu0 0.0
      %2790 = vmatprep.subr.mxu0 0.0
      %2791 = vmatpush1.msra.mxu0 0.0
      %2792 = vmatprep.subr.mxu0 0.0
      %2793 = vmatpush1.msra.mxu0 0.0
      %2794 = vmatprep.subr.mxu0 0.0
      %2795 = vmatpush1.msra.mxu0 0.0
      %2796 = vmatprep.subr.mxu0 0.0
      %2797 = vmatpush1.msra.mxu0 0.0
      %2798 = vmatprep.subr.mxu0 0.0
      %2799 = vmatpush1.msra.mxu0 0.0
      %2800 = vmatprep.subr.mxu0 0.0
      %2801 = vmatpush1.msra.mxu0 0.0
      %2802 = vmatprep.subr.mxu0 0.0
      %2803 = vmatpush1.msra.mxu0 0.0
      %2804 = vmatprep.subr.mxu0 0.0
      %2805 = vmatpush1.msra.mxu0 0.0
      %2806 = vmatprep.subr.mxu0 0.0
      %2807 = vmatpush1.msra.mxu0 0.0
      %2808 = vmatprep.subr.mxu0 0.0
      %2809 = vmatpush1.msra.mxu0 0.0
      %2810 = vmatprep.subr.mxu0 0.0
      %2811 = vmatpush1.msra.mxu0 0.0
      %2812 = vmatprep.subr.mxu0 0.0
      %2813 = vmatpush1.msra.mxu0 0.0
      %2814 = vmatprep.subr.mxu0 0.0
      %2815 = vmatpush1.msra.mxu0 0.0
      %2816 = vmatprep.subr.mxu0 0.0
      %2817 = vmatpush1.msra.mxu0 0.0
      %2818 = vmatprep.subr.mxu0 0.0
      %2819 = vmatpush1.msra.mxu0 0.0
      %2820 = vmatprep.subr.mxu0 0.0
      %2821 = vmatpush1.msra.mxu0 0.0
      %2822 = vmatprep.subr.mxu0 0.0
      %2823 = vmatpush1.msra.mxu0 0.0
      %2824 = vmatprep.subr.mxu0 0.0
      %2825 = vmatpush1.msra.mxu0 0.0
      %2826 = vmatprep.subr.mxu0 0.0
      %2827 = vmatpush1.msra.mxu0 0.0
      %2828 = vmatprep.subr.mxu0 0.0
      %2829 = vmatpush1.msra.mxu0 0.0
      %2830 = vmatprep.subr.mxu0 0.0
      %2831 = vmatpush1.msra.mxu0 0.0
      %2832 = vmatprep.subr.mxu0 0.0
      %2833 = vmatpush1.msra.mxu0 0.0
      %2834 = vmatprep.subr.mxu0 0.0
      %2835 = vmatpush1.msra.mxu0 0.0
      %2836 = vmatprep.subr.mxu0 0.0
      %2837 = vmatpush1.msra.mxu0 0.0
      %2838 = vmatprep.mubr.f32.mxu0 0.0
      %2839 = vmatmul.mubr.f32.gmra.mrb[0].mxu0 %v2726
      %v2840 = vpop.f32.mrb[0].mxu0
      %v2841 = vadd.f32 0.0, %v2840
      %v2842 = vpop.f32.mrb[0].mxu0
      %2843 = vmatprep.mubr.f32.mxu0 0.0
      %2844 = vmatmul.mubr.f32.gmra.mrb[0].mxu0 %v2728
      %v2845 = vpop.f32.mrb[0].mxu0
      %v2846 = vadd.f32 0.0, %v2845
      %v2847 = vpop.f32.mrb[0].mxu0
      %2848 = vmatprep.mubr.f32.mxu0 0.0
      %2849 = vmatmul.mubr.f32.gmra.mrb[0].mxu0 %v2730
      %v2850 = vpop.f32.mrb[0].mxu0
      %v2851 = vadd.f32 0.0, %v2850
      %v2852 = vpop.f32.mrb[0].mxu0
      %2853 = vmatprep.mubr.f32.mxu0 0.0
      %2854 = vmatmul.mubr.f32.gmra.mrb[0].mxu0 %v2732
      %v2855 = vpop.f32.mrb[0].mxu0
      %v2856 = vadd.f32 0.0, %v2855
      %v2857 = vpop.f32.mrb[0].mxu0
      %2858 = vmatprep.mubr.f32.mxu0 0.0
      %2859 = vmatmul.mubr.f32.gmra.mrb[0].mxu0 %v2734
      %v2860 = vpop.f32.mrb[0].mxu0
      %v2861 = vadd.f32 0.0, %v2860
      %v2862 = vpop.f32.mrb[0].mxu0
      %2863 = vmatprep.mubr.f32.mxu0 0.0
      %2864 = vmatmul.mubr.f32.gmra.mrb[0].mxu0 %v2736
      %v2865 = vpop.f32.mrb[0].mxu0
      %v2866 = vadd.f32 0.0, %v2865
      %v2867 = vpop.f32.mrb[0].mxu0
      %2868 = vmatprep.mubr.f32.mxu0 0.0
      %2869 = vmatmul.mubr.f32.gmra.mrb[0].mxu0 %v2738
      %v2870 = vpop.f32.mrb[0].mxu0
      %v2871 = vadd.f32 0.0, %v2870
      %v2872 = vpop.f32.mrb[0].mxu0
      %2873 = vmatprep.mubr.f32.mxu0 0.0
      %2874 = vmatmul.mubr.f32.gmra.mrb[0].mxu0 %v2740
      %v2875 = vpop.f32.mrb[0].mxu0
      %v2876 = vadd.f32 0.0, %v2875
      %v2877 = vpop.f32.mrb[0].mxu0
      %2878 = vmatprep.mubr.f32.mxu0 0.0
      %2879 = vmatmul.mubr.f32.gmra.mrb[0].mxu0 %v2742
      %v2880 = vpop.f32.mrb[0].mxu0
      %v2881 = vadd.f32 0.0, %v2880
      %v2882 = vpop.f32.mrb[0].mxu0
      %2883 = vmatprep.mubr.f32.mxu0 0.0
      %2884 = vmatmul.mubr.f32.gmra.mrb[0].mxu0 %v2744
      %v2885 = vpop.f32.mrb[0].mxu0
      %v2886 = vadd.f32 0.0, %v2885
      %v2887 = vpop.f32.mrb[0].mxu0
      %2888 = vmatprep.mubr.f32.mxu0 0.0
      %2889 = vmatmul.mubr.f32.gmra.mrb[0].mxu0 %v2746
      %v2890 = vpop.f32.mrb[0].mxu0
      %v2891 = vadd.f32 0.0, %v2890
      %v2892 = vpop.f32.mrb[0].mxu0
      %2893 = vmatprep.mubr.f32.mxu0 0.0
      %2894 = vmatmul.mubr.f32.gmra.mrb[0].mxu0 %v2748
      %v2895 = vpop.f32.mrb[0].mxu0
      %v2896 = vadd.f32 0.0, %v2895
      %v2897 = vpop.f32.mrb[0].mxu0
      %2898 = vmatprep.mubr.f32.mxu0 0.0
      %2899 = vmatmul.mubr.f32.gmra.mrb[0].mxu0 %v2750
      %v2900 = vpop.f32.mrb[0].mxu0
      %v2901 = vadd.f32 0.0, %v2900
      %v2902 = vpop.f32.mrb[0].mxu0
      %2903 = vmatprep.mubr.f32.mxu0 0.0
      %2904 = vmatmul.mubr.f32.gmra.mrb[0].mxu0 %v2752
      %v2905 = vpop.f32.mrb[0].mxu0
      %v2906 = vadd.f32 0.0, %v2905
      %v2907 = vpop.f32.mrb[0].mxu0
      %2908 = vmatprep.mubr.f32.mxu0 0.0
      %2909 = vmatmul.mubr.f32.gmra.mrb[0].mxu0 %v2754
      %v2910 = vpop.f32.mrb[0].mxu0
      %v2911 = vadd.f32 0.0, %v2910
      %v2912 = vpop.f32.mrb[0].mxu0
      %2913 = vmatprep.mubr.f32.mxu0 0.0
      %2914 = vmatmul.mubr.f32.gmra.mrb[0].mxu0 %v2756
      %v2915 = vpop.f32.mrb[0].mxu0
      %v2916 = vadd.f32 0.0, %v2915
      %v2917 = vpop.f32.mrb[0].mxu0
      %2918 = vmatprep.mubr.f32.mxu0 0.0
      %2919 = vmatmul.mubr.f32.gmra.mrb[0].mxu0 %v2758
      %v2920 = vpop.f32.mrb[0].mxu0
      %v2921 = vadd.f32 0.0, %v2920
      %v2922 = vpop.f32.mrb[0].mxu0
      %2923 = vmatprep.mubr.f32.mxu0 0.0
      %2924 = vmatmul.mubr.f32.gmra.mrb[0].mxu0 %v2760
      %v2925 = vpop.f32.mrb[0].mxu0
      %v2926 = vadd.f32 0.0, %v2925
      %v2927 = vpop.f32.mrb[0].mxu0
      %2928 = vmatprep.mubr.f32.mxu0 0.0
      %2929 = vmatmul.mubr.f32.gmra.mrb[0].mxu0 %v2762
      %v2930 = vpop.f32.mrb[0].mxu0
      %v2931 = vadd.f32 0.0, %v2930
      %v2932 = vpop.f32.mrb[0].mxu0
      %2933 = vmatprep.mubr.f32.mxu0 0.0
      %2934 = vmatmul.mubr.f32.gmra.mrb[0].mxu0 %v2764
      %v2935 = vpop.f32.mrb[0].mxu0
      %v2936 = vadd.f32 0.0, %v2935
      %v2937 = vpop.f32.mrb[0].mxu0
      %2938 = vmatprep.mubr.f32.mxu0 0.0
      %2939 = vmatmul.mubr.f32.gmra.mrb[0].mxu0 %v2766
      %v2940 = vpop.f32.mrb[0].mxu0
      %v2941 = vadd.f32 0.0, %v2940
      %v2942 = vpop.f32.mrb[0].mxu0
      %2943 = vmatprep.mubr.f32.mxu0 0.0
      %2944 = vmatmul.mubr.f32.gmra.mrb[0].mxu0 %v2768
      %v2945 = vpop.f32.mrb[0].mxu0
      %v2946 = vadd.f32 0.0, %v2945
      %v2947 = vpop.f32.mrb[0].mxu0
      %2948 = vmatprep.mubr.f32.mxu0 0.0
      %2949 = vmatmul.mubr.f32.gmra.mrb[0].mxu0 %v2770
      %v2950 = vpop.f32.mrb[0].mxu0
      %v2951 = vadd.f32 0.0, %v2950
      %v2952 = vpop.f32.mrb[0].mxu0
      %2953 = vmatprep.mubr.f32.mxu0 0.0
      %2954 = vmatmul.mubr.f32.gmra.mrb[0].mxu0 %v2772
      %v2955 = vpop.f32.mrb[0].mxu0
      %v2956 = vadd.f32 0.0, %v2955
      %v2957 = vpop.f32.mrb[0].mxu0
      %2958 = vdwg.mxu0
      %v2959 = vadd.f32 %v2600, %v2841
      %v2960 = vadd.f32 %v2601, %v2846
      %v2961 = vadd.f32 %v2602, %v2851
      %v2962 = vadd.f32 %v2603, %v2856
      %v2963 = vadd.f32 %v2604, %v2861
      %v2964 = vadd.f32 %v2605, %v2866
      %v2965 = vadd.f32 %v2606, %v2871
      %v2966 = vadd.f32 %v2607, %v2876
      %v2967 = vadd.f32 %v2608, %v2881
      %v2968 = vadd.f32 %v2609, %v2886
      %v2969 = vadd.f32 %v2610, %v2891
      %v2970 = vadd.f32 %v2611, %v2896
      %v2971 = vadd.f32 %v2612, %v2901
      %v2972 = vadd.f32 %v2613, %v2906
      %v2973 = vadd.f32 %v2614, %v2911
      %v2974 = vadd.f32 %v2615, %v2916
      %v2975 = vadd.f32 %v2616, %v2921
      %v2976 = vadd.f32 %v2617, %v2926
      %v2977 = vadd.f32 %v2618, %v2931
      %v2978 = vadd.f32 %v2619, %v2936
      %v2979 = vadd.f32 %v2620, %v2941
      %v2980 = vadd.f32 %v2621, %v2946
      %v2981 = vadd.f32 %v2622, %v2951
      %v2982 = vadd.f32 %v2623, %v2956
      %v2983 = vsel %vm225, %v2627, 0
      %v2985 = vsel %vm225, %v2628, 0
      %v2987 = vsel %vm225, %v2629, 0
      %v2989 = vsel %vm225, %v2630, 0
      %v2991 = vsel %vm225, %v2631, 0
      %v2993 = vsel %vm225, %v2632, 0
      %v2995 = vsel %vm225, %v2633, 0
      %v2997 = vsel %vm225, %v2634, 0
      %v2999 = vsel %vm225, %v2635, 0
      %v3001 = vsel %vm225, %v2636, 0
      %v3003 = vsel %vm225, %v2637, 0
      %v3005 = vsel %vm225, %v2638, 0
      %v3007 = vsel %vm225, %v2639, 0
      %v3009 = vsel %vm225, %v2640, 0
      %v3011 = vsel %vm225, %v2641, 0
      %v3013 = vsel %vm225, %v2642, 0
      %v3015 = vsel %vm225, %v2643, 0
      %v3017 = vsel %vm225, %v2644, 0
      %v3019 = vsel %vm225, %v2645, 0
      %v3021 = vsel %vm225, %v2646, 0
      %v3023 = vsel %vm225, %v2647, 0
      %v3025 = vsel %vm225, %v2648, 0
      %v3027 = vsel %vm225, %v2649, 0
      %v3029 = vsel %vm225, %v2650, 0
      %3031 = vmatprep.subr.mxu0 0.0
      %3032 = vmatpush1.msra.mxu0 %v1740
      %3033 = vmatprep.subr.mxu0 0.0
      %3034 = vmatpush1.msra.mxu0 0.0
      %3035 = vmatprep.subr.mxu0 0.0
      %3036 = vmatpush1.msra.mxu0 0.0
      %3037 = vmatprep.subr.mxu0 0.0
      %3038 = vmatpush1.msra.mxu0 0.0
      %3039 = vmatprep.subr.mxu0 0.0
      %3040 = vmatpush1.msra.mxu0 0.0
      %3041 = vmatprep.subr.mxu0 0.0
      %3042 = vmatpush1.msra.mxu0 0.0
      %3043 = vmatprep.subr.mxu0 0.0
      %3044 = vmatpush1.msra.mxu0 0.0
      %3045 = vmatprep.subr.mxu0 0.0
      %3046 = vmatpush1.msra.mxu0 0.0
      %3047 = vmatprep.subr.mxu0 0.0
      %3048 = vmatpush1.msra.mxu0 0.0
      %3049 = vmatprep.subr.mxu0 0.0
      %3050 = vmatpush1.msra.mxu0 0.0
      %3051 = vmatprep.subr.mxu0 0.0
      %3052 = vmatpush1.msra.mxu0 0.0
      %3053 = vmatprep.subr.mxu0 0.0
      %3054 = vmatpush1.msra.mxu0 0.0
      %3055 = vmatprep.subr.mxu0 0.0
      %3056 = vmatpush1.msra.mxu0 0.0
      %3057 = vmatprep.subr.mxu0 0.0
      %3058 = vmatpush1.msra.mxu0 0.0
      %3059 = vmatprep.subr.mxu0 0.0
      %3060 = vmatpush1.msra.mxu0 0.0
      %3061 = vmatprep.subr.mxu0 0.0
      %3062 = vmatpush1.msra.mxu0 0.0
      %3063 = vmatprep.subr.mxu0 0.0
      %3064 = vmatpush1.msra.mxu0 0.0
      %3065 = vmatprep.subr.mxu0 0.0
      %3066 = vmatpush1.msra.mxu0 0.0
      %3067 = vmatprep.subr.mxu0 0.0
      %3068 = vmatpush1.msra.mxu0 0.0
      %3069 = vmatprep.subr.mxu0 0.0
      %3070 = vmatpush1.msra.mxu0 0.0
      %3071 = vmatprep.subr.mxu0 0.0
      %3072 = vmatpush1.msra.mxu0 0.0
      %3073 = vmatprep.subr.mxu0 0.0
      %3074 = vmatpush1.msra.mxu0 0.0
      %3075 = vmatprep.subr.mxu0 0.0
      %3076 = vmatpush1.msra.mxu0 0.0
      %3077 = vmatprep.subr.mxu0 0.0
      %3078 = vmatpush1.msra.mxu0 0.0
      %3079 = vmatprep.subr.mxu0 0.0
      %3080 = vmatpush1.msra.mxu0 0.0
      %3081 = vmatprep.subr.mxu0 0.0
      %3082 = vmatpush1.msra.mxu0 0.0
      %3083 = vmatprep.subr.mxu0 0.0
      %3084 = vmatpush1.msra.mxu0 0.0
      %3085 = vmatprep.subr.mxu0 0.0
      %3086 = vmatpush1.msra.mxu0 0.0
      %3087 = vmatprep.subr.mxu0 0.0
      %3088 = vmatpush1.msra.mxu0 0.0
      %3089 = vmatprep.subr.mxu0 0.0
      %3090 = vmatpush1.msra.mxu0 0.0
      %3091 = vmatprep.subr.mxu0 0.0
      %3092 = vmatpush1.msra.mxu0 0.0
      %3093 = vmatprep.subr.mxu0 0.0
      %3094 = vmatpush1.msra.mxu0 0.0
      %3095 = vmatprep.mubr.f32.mxu0 0.0
      %3096 = vmatmul.mubr.f32.gmra.mrb[0].mxu0 %v2983
      %v3097 = vpop.f32.mrb[0].mxu0
      %v3098 = vadd.f32 0.0, %v3097
      %v3099 = vpop.f32.mrb[0].mxu0
      %3100 = vmatprep.mubr.f32.mxu0 0.0
      %3101 = vmatmul.mubr.f32.gmra.mrb[0].mxu0 %v2985
      %v3102 = vpop.f32.mrb[0].mxu0
      %v3103 = vadd.f32 0.0, %v3102
      %v3104 = vpop.f32.mrb[0].mxu0
      %3105 = vmatprep.mubr.f32.mxu0 0.0
      %3106 = vmatmul.mubr.f32.gmra.mrb[0].mxu0 %v2987
      %v3107 = vpop.f32.mrb[0].mxu0
      %v3108 = vadd.f32 0.0, %v3107
      %v3109 = vpop.f32.mrb[0].mxu0
      %3110 = vmatprep.mubr.f32.mxu0 0.0
      %3111 = vmatmul.mubr.f32.gmra.mrb[0].mxu0 %v2989
      %v3112 = vpop.f32.mrb[0].mxu0
      %v3113 = vadd.f32 0.0, %v3112
      %v3114 = vpop.f32.mrb[0].mxu0
      %3115 = vmatprep.mubr.f32.mxu0 0.0
      %3116 = vmatmul.mubr.f32.gmra.mrb[0].mxu0 %v2991
      %v3117 = vpop.f32.mrb[0].mxu0
      %v3118 = vadd.f32 0.0, %v3117
      %v3119 = vpop.f32.mrb[0].mxu0
      %3120 = vmatprep.mubr.f32.mxu0 0.0
      %3121 = vmatmul.mubr.f32.gmra.mrb[0].mxu0 %v2993
      %v3122 = vpop.f32.mrb[0].mxu0
      %v3123 = vadd.f32 0.0, %v3122
      %v3124 = vpop.f32.mrb[0].mxu0
      %3125 = vmatprep.mubr.f32.mxu0 0.0
      %3126 = vmatmul.mubr.f32.gmra.mrb[0].mxu0 %v2995
      %v3127 = vpop.f32.mrb[0].mxu0
      %v3128 = vadd.f32 0.0, %v3127
      %v3129 = vpop.f32.mrb[0].mxu0
      %3130 = vmatprep.mubr.f32.mxu0 0.0
      %3131 = vmatmul.mubr.f32.gmra.mrb[0].mxu0 %v2997
      %v3132 = vpop.f32.mrb[0].mxu0
      %v3133 = vadd.f32 0.0, %v3132
      %v3134 = vpop.f32.mrb[0].mxu0
      %3135 = vmatprep.mubr.f32.mxu0 0.0
      %3136 = vmatmul.mubr.f32.gmra.mrb[0].mxu0 %v2999
      %v3137 = vpop.f32.mrb[0].mxu0
      %v3138 = vadd.f32 0.0, %v3137
      %v3139 = vpop.f32.mrb[0].mxu0
      %3140 = vmatprep.mubr.f32.mxu0 0.0
      %3141 = vmatmul.mubr.f32.gmra.mrb[0].mxu0 %v3001
      %v3142 = vpop.f32.mrb[0].mxu0
      %v3143 = vadd.f32 0.0, %v3142
      %v3144 = vpop.f32.mrb[0].mxu0
      %3145 = vmatprep.mubr.f32.mxu0 0.0
      %3146 = vmatmul.mubr.f32.gmra.mrb[0].mxu0 %v3003
      %v3147 = vpop.f32.mrb[0].mxu0
      %v3148 = vadd.f32 0.0, %v3147
      %v3149 = vpop.f32.mrb[0].mxu0
      %3150 = vmatprep.mubr.f32.mxu0 0.0
      %3151 = vmatmul.mubr.f32.gmra.mrb[0].mxu0 %v3005
      %v3152 = vpop.f32.mrb[0].mxu0
      %v3153 = vadd.f32 0.0, %v3152
      %v3154 = vpop.f32.mrb[0].mxu0
      %3155 = vmatprep.mubr.f32.mxu0 0.0
      %3156 = vmatmul.mubr.f32.gmra.mrb[0].mxu0 %v3007
      %v3157 = vpop.f32.mrb[0].mxu0
      %v3158 = vadd.f32 0.0, %v3157
      %v3159 = vpop.f32.mrb[0].mxu0
      %3160 = vmatprep.mubr.f32.mxu0 0.0
      %3161 = vmatmul.mubr.f32.gmra.mrb[0].mxu0 %v3009
      %v3162 = vpop.f32.mrb[0].mxu0
      %v3163 = vadd.f32 0.0, %v3162
      %v3164 = vpop.f32.mrb[0].mxu0
      %3165 = vmatprep.mubr.f32.mxu0 0.0
      %3166 = vmatmul.mubr.f32.gmra.mrb[0].mxu0 %v3011
      %v3167 = vpop.f32.mrb[0].mxu0
      %v3168 = vadd.f32 0.0, %v3167
      %v3169 = vpop.f32.mrb[0].mxu0
      %3170 = vmatprep.mubr.f32.mxu0 0.0
      %3171 = vmatmul.mubr.f32.gmra.mrb[0].mxu0 %v3013
      %v3172 = vpop.f32.mrb[0].mxu0
      %v3173 = vadd.f32 0.0, %v3172
      %v3174 = vpop.f32.mrb[0].mxu0
      %3175 = vmatprep.mubr.f32.mxu0 0.0
      %3176 = vmatmul.mubr.f32.gmra.mrb[0].mxu0 %v3015
      %v3177 = vpop.f32.mrb[0].mxu0
      %v3178 = vadd.f32 0.0, %v3177
      %v3179 = vpop.f32.mrb[0].mxu0
      %3180 = vmatprep.mubr.f32.mxu0 0.0
      %3181 = vmatmul.mubr.f32.gmra.mrb[0].mxu0 %v3017
      %v3182 = vpop.f32.mrb[0].mxu0
      %v3183 = vadd.f32 0.0, %v3182
      %v3184 = vpop.f32.mrb[0].mxu0
      %3185 = vmatprep.mubr.f32.mxu0 0.0
      %3186 = vmatmul.mubr.f32.gmra.mrb[0].mxu0 %v3019
      %v3187 = vpop.f32.mrb[0].mxu0
      %v3188 = vadd.f32 0.0, %v3187
      %v3189 = vpop.f32.mrb[0].mxu0
      %3190 = vmatprep.mubr.f32.mxu0 0.0
      %3191 = vmatmul.mubr.f32.gmra.mrb[0].mxu0 %v3021
      %v3192 = vpop.f32.mrb[0].mxu0
      %v3193 = vadd.f32 0.0, %v3192
      %v3194 = vpop.f32.mrb[0].mxu0
      %3195 = vmatprep.mubr.f32.mxu0 0.0
      %3196 = vmatmul.mubr.f32.gmra.mrb[0].mxu0 %v3023
      %v3197 = vpop.f32.mrb[0].mxu0
      %v3198 = vadd.f32 0.0, %v3197
      %v3199 = vpop.f32.mrb[0].mxu0
      %3200 = vmatprep.mubr.f32.mxu0 0.0
      %3201 = vmatmul.mubr.f32.gmra.mrb[0].mxu0 %v3025
      %v3202 = vpop.f32.mrb[0].mxu0
      %v3203 = vadd.f32 0.0, %v3202
      %v3204 = vpop.f32.mrb[0].mxu0
      %3205 = vmatprep.mubr.f32.mxu0 0.0
      %3206 = vmatmul.mubr.f32.gmra.mrb[0].mxu0 %v3027
      %v3207 = vpop.f32.mrb[0].mxu0
      %v3208 = vadd.f32 0.0, %v3207
      %v3209 = vpop.f32.mrb[0].mxu0
      %3210 = vmatprep.mubr.f32.mxu0 0.0
      %3211 = vmatmul.mubr.f32.gmra.mrb[0].mxu0 %v3029
      %v3212 = vpop.f32.mrb[0].mxu0
      %v3213 = vadd.f32 0.0, %v3212
      %v3214 = vpop.f32.mrb[0].mxu0
      %3215 = vdwg.mxu0
      %v3216 = vadd.f32 %v2959, %v3098
      %v3217 = vadd.f32 %v2960, %v3103
      %v3218 = vadd.f32 %v2961, %v3108
      %v3219 = vadd.f32 %v2962, %v3113
      %v3220 = vadd.f32 %v2963, %v3118
      %v3221 = vadd.f32 %v2964, %v3123
      %v3222 = vadd.f32 %v2965, %v3128
      %v3223 = vadd.f32 %v2966, %v3133
      %v3224 = vadd.f32 %v2967, %v3138
      %v3225 = vadd.f32 %v2968, %v3143
      %v3226 = vadd.f32 %v2969, %v3148
      %v3227 = vadd.f32 %v2970, %v3153
      %v3228 = vadd.f32 %v2971, %v3158
      %v3229 = vadd.f32 %v2972, %v3163
      %v3230 = vadd.f32 %v2973, %v3168
      %v3231 = vadd.f32 %v2974, %v3173
      %v3232 = vadd.f32 %v2975, %v3178
      %v3233 = vadd.f32 %v2976, %v3183
      %v3234 = vadd.f32 %v2977, %v3188
      %v3235 = vadd.f32 %v2978, %v3193
      %v3236 = vadd.f32 %v2979, %v3198
      %v3237 = vadd.f32 %v2980, %v3203
      %v3238 = vadd.f32 %v2981, %v3208
      %v3239 = vadd.f32 %v2982, %v3213
      %v3241 = vrot.slane %v2627, 1
      %v3242 = vrot.slane %v2628, 1
      %v3243 = vsel %vm2317, %v3241, %v3242
      %v3244 = vrot.slane %v2629, 1
      %v3245 = vsel %vm2317, %v3242, %v3244
      %v3246 = vrot.slane %v2630, 1
      %v3247 = vsel %vm2317, %v3244, %v3246
      %v3248 = vrot.slane %v2631, 1
      %v3249 = vsel %vm2317, %v3246, %v3248
      %v3250 = vrot.slane %v2632, 1
      %v3251 = vsel %vm2317, %v3248, %v3250
      %v3252 = vrot.slane %v2633, 1
      %v3253 = vsel %vm2317, %v3250, %v3252
      %v3254 = vrot.slane %v2634, 1
      %v3255 = vsel %vm2317, %v3252, %v3254
      %v3256 = vrot.slane %v2635, 1
      %v3257 = vsel %vm2317, %v3254, %v3256
      %v3258 = vrot.slane %v2636, 1
      %v3259 = vsel %vm2317, %v3256, %v3258
      %v3260 = vrot.slane %v2637, 1
      %v3261 = vsel %vm2317, %v3258, %v3260
      %v3262 = vrot.slane %v2638, 1
      %v3263 = vsel %vm2317, %v3260, %v3262
      %v3264 = vrot.slane %v2639, 1
      %v3265 = vsel %vm2317, %v3262, %v3264
      %v3266 = vrot.slane %v2640, 1
      %v3267 = vsel %vm2317, %v3264, %v3266
      %v3268 = vrot.slane %v2641, 1
      %v3269 = vsel %vm2317, %v3266, %v3268
      %v3270 = vrot.slane %v2642, 1
      %v3271 = vsel %vm2317, %v3268, %v3270
      %v3272 = vrot.slane %v2643, 1
      %v3273 = vsel %vm2317, %v3270, %v3272
      %v3274 = vrot.slane %v2644, 1
      %v3275 = vsel %vm2317, %v3272, %v3274
      %v3276 = vrot.slane %v2645, 1
      %v3277 = vsel %vm2317, %v3274, %v3276
      %v3278 = vrot.slane %v2646, 1
      %v3279 = vsel %vm2317, %v3276, %v3278
      %v3280 = vrot.slane %v2647, 1
      %v3281 = vsel %vm2317, %v3278, %v3280
      %v3282 = vrot.slane %v2648, 1
      %v3283 = vsel %vm2317, %v3280, %v3282
      %v3284 = vrot.slane %v2649, 1
      %v3285 = vsel %vm2317, %v3282, %v3284
      %v3286 = vrot.slane %v2650, 1
      %v3287 = vsel %vm2317, %v3284, %v3286
      %v3288 = vrot.slane %v2651, 1
      %v3289 = vsel %vm2317, %v3286, %v3288
      %v3290 = vsel %vm225, %v3243, 0
      %v3292 = vsel %vm225, %v3245, 0
      %v3294 = vsel %vm225, %v3247, 0
      %v3296 = vsel %vm225, %v3249, 0
      %v3298 = vsel %vm225, %v3251, 0
      %v3300 = vsel %vm225, %v3253, 0
      %v3302 = vsel %vm225, %v3255, 0
      %v3304 = vsel %vm225, %v3257, 0
      %v3306 = vsel %vm225, %v3259, 0
      %v3308 = vsel %vm225, %v3261, 0
      %v3310 = vsel %vm225, %v3263, 0
      %v3312 = vsel %vm225, %v3265, 0
      %v3314 = vsel %vm225, %v3267, 0
      %v3316 = vsel %vm225, %v3269, 0
      %v3318 = vsel %vm225, %v3271, 0
      %v3320 = vsel %vm225, %v3273, 0
      %v3322 = vsel %vm225, %v3275, 0
      %v3324 = vsel %vm225, %v3277, 0
      %v3326 = vsel %vm225, %v3279, 0
      %v3328 = vsel %vm225, %v3281, 0
      %v3330 = vsel %vm225, %v3283, 0
      %v3332 = vsel %vm225, %v3285, 0
      %v3334 = vsel %vm225, %v3287, 0
      %v3336 = vsel %vm225, %v3289, 0
      %3338 = vmatprep.subr.mxu0 0.0
      %3339 = vmatpush1.msra.mxu0 %v1742
      %3340 = vmatprep.subr.mxu0 0.0
      %3341 = vmatpush1.msra.mxu0 0.0
      %3342 = vmatprep.subr.mxu0 0.0
      %3343 = vmatpush1.msra.mxu0 0.0
      %3344 = vmatprep.subr.mxu0 0.0
      %3345 = vmatpush1.msra.mxu0 0.0
      %3346 = vmatprep.subr.mxu0 0.0
      %3347 = vmatpush1.msra.mxu0 0.0
      %3348 = vmatprep.subr.mxu0 0.0
      %3349 = vmatpush1.msra.mxu0 0.0
      %3350 = vmatprep.subr.mxu0 0.0
      %3351 = vmatpush1.msra.mxu0 0.0
      %3352 = vmatprep.subr.mxu0 0.0
      %3353 = vmatpush1.msra.mxu0 0.0
      %3354 = vmatprep.subr.mxu0 0.0
      %3355 = vmatpush1.msra.mxu0 0.0
      %3356 = vmatprep.subr.mxu0 0.0
      %3357 = vmatpush1.msra.mxu0 0.0
      %3358 = vmatprep.subr.mxu0 0.0
      %3359 = vmatpush1.msra.mxu0 0.0
      %3360 = vmatprep.subr.mxu0 0.0
      %3361 = vmatpush1.msra.mxu0 0.0
      %3362 = vmatprep.subr.mxu0 0.0
      %3363 = vmatpush1.msra.mxu0 0.0
      %3364 = vmatprep.subr.mxu0 0.0
      %3365 = vmatpush1.msra.mxu0 0.0
      %3366 = vmatprep.subr.mxu0 0.0
      %3367 = vmatpush1.msra.mxu0 0.0
      %3368 = vmatprep.subr.mxu0 0.0
      %3369 = vmatpush1.msra.mxu0 0.0
      %3370 = vmatprep.subr.mxu0 0.0
      %3371 = vmatpush1.msra.mxu0 0.0
      %3372 = vmatprep.subr.mxu0 0.0
      %3373 = vmatpush1.msra.mxu0 0.0
      %3374 = vmatprep.subr.mxu0 0.0
      %3375 = vmatpush1.msra.mxu0 0.0
      %3376 = vmatprep.subr.mxu0 0.0
      %3377 = vmatpush1.msra.mxu0 0.0
      %3378 = vmatprep.subr.mxu0 0.0
      %3379 = vmatpush1.msra.mxu0 0.0
      %3380 = vmatprep.subr.mxu0 0.0
      %3381 = vmatpush1.msra.mxu0 0.0
      %3382 = vmatprep.subr.mxu0 0.0
      %3383 = vmatpush1.msra.mxu0 0.0
      %3384 = vmatprep.subr.mxu0 0.0
      %3385 = vmatpush1.msra.mxu0 0.0
      %3386 = vmatprep.subr.mxu0 0.0
      %3387 = vmatpush1.msra.mxu0 0.0
      %3388 = vmatprep.subr.mxu0 0.0
      %3389 = vmatpush1.msra.mxu0 0.0
      %3390 = vmatprep.subr.mxu0 0.0
      %3391 = vmatpush1.msra.mxu0 0.0
      %3392 = vmatprep.subr.mxu0 0.0
      %3393 = vmatpush1.msra.mxu0 0.0
      %3394 = vmatprep.subr.mxu0 0.0
      %3395 = vmatpush1.msra.mxu0 0.0
      %3396 = vmatprep.subr.mxu0 0.0
      %3397 = vmatpush1.msra.mxu0 0.0
      %3398 = vmatprep.subr.mxu0 0.0
      %3399 = vmatpush1.msra.mxu0 0.0
      %3400 = vmatprep.subr.mxu0 0.0
      %3401 = vmatpush1.msra.mxu0 0.0
      %3402 = vmatprep.mubr.f32.mxu0 0.0
      %3403 = vmatmul.mubr.f32.gmra.mrb[0].mxu0 %v3290
      %v3404 = vpop.f32.mrb[0].mxu0
      %v3405 = vadd.f32 0.0, %v3404
      %v3406 = vpop.f32.mrb[0].mxu0
      %3407 = vmatprep.mubr.f32.mxu0 0.0
      %3408 = vmatmul.mubr.f32.gmra.mrb[0].mxu0 %v3292
      %v3409 = vpop.f32.mrb[0].mxu0
      %v3410 = vadd.f32 0.0, %v3409
      %v3411 = vpop.f32.mrb[0].mxu0
      %3412 = vmatprep.mubr.f32.mxu0 0.0
      %3413 = vmatmul.mubr.f32.gmra.mrb[0].mxu0 %v3294
      %v3414 = vpop.f32.mrb[0].mxu0
      %v3415 = vadd.f32 0.0, %v3414
      %v3416 = vpop.f32.mrb[0].mxu0
      %3417 = vmatprep.mubr.f32.mxu0 0.0
      %3418 = vmatmul.mubr.f32.gmra.mrb[0].mxu0 %v3296
      %v3419 = vpop.f32.mrb[0].mxu0
      %v3420 = vadd.f32 0.0, %v3419
      %v3421 = vpop.f32.mrb[0].mxu0
      %3422 = vmatprep.mubr.f32.mxu0 0.0
      %3423 = vmatmul.mubr.f32.gmra.mrb[0].mxu0 %v3298
      %v3424 = vpop.f32.mrb[0].mxu0
      %v3425 = vadd.f32 0.0, %v3424
      %v3426 = vpop.f32.mrb[0].mxu0
      %3427 = vmatprep.mubr.f32.mxu0 0.0
      %3428 = vmatmul.mubr.f32.gmra.mrb[0].mxu0 %v3300
      %v3429 = vpop.f32.mrb[0].mxu0
      %v3430 = vadd.f32 0.0, %v3429
      %v3431 = vpop.f32.mrb[0].mxu0
      %3432 = vmatprep.mubr.f32.mxu0 0.0
      %3433 = vmatmul.mubr.f32.gmra.mrb[0].mxu0 %v3302
      %v3434 = vpop.f32.mrb[0].mxu0
      %v3435 = vadd.f32 0.0, %v3434
      %v3436 = vpop.f32.mrb[0].mxu0
      %3437 = vmatprep.mubr.f32.mxu0 0.0
      %3438 = vmatmul.mubr.f32.gmra.mrb[0].mxu0 %v3304
      %v3439 = vpop.f32.mrb[0].mxu0
      %v3440 = vadd.f32 0.0, %v3439
      %v3441 = vpop.f32.mrb[0].mxu0
      %3442 = vmatprep.mubr.f32.mxu0 0.0
      %3443 = vmatmul.mubr.f32.gmra.mrb[0].mxu0 %v3306
      %v3444 = vpop.f32.mrb[0].mxu0
      %v3445 = vadd.f32 0.0, %v3444
      %v3446 = vpop.f32.mrb[0].mxu0
      %3447 = vmatprep.mubr.f32.mxu0 0.0
      %3448 = vmatmul.mubr.f32.gmra.mrb[0].mxu0 %v3308
      %v3449 = vpop.f32.mrb[0].mxu0
      %v3450 = vadd.f32 0.0, %v3449
      %v3451 = vpop.f32.mrb[0].mxu0
      %3452 = vmatprep.mubr.f32.mxu0 0.0
      %3453 = vmatmul.mubr.f32.gmra.mrb[0].mxu0 %v3310
      %v3454 = vpop.f32.mrb[0].mxu0
      %v3455 = vadd.f32 0.0, %v3454
      %v3456 = vpop.f32.mrb[0].mxu0
      %3457 = vmatprep.mubr.f32.mxu0 0.0
      %3458 = vmatmul.mubr.f32.gmra.mrb[0].mxu0 %v3312
      %v3459 = vpop.f32.mrb[0].mxu0
      %v3460 = vadd.f32 0.0, %v3459
      %v3461 = vpop.f32.mrb[0].mxu0
      %3462 = vmatprep.mubr.f32.mxu0 0.0
      %3463 = vmatmul.mubr.f32.gmra.mrb[0].mxu0 %v3314
      %v3464 = vpop.f32.mrb[0].mxu0
      %v3465 = vadd.f32 0.0, %v3464
      %v3466 = vpop.f32.mrb[0].mxu0
      %3467 = vmatprep.mubr.f32.mxu0 0.0
      %3468 = vmatmul.mubr.f32.gmra.mrb[0].mxu0 %v3316
      %v3469 = vpop.f32.mrb[0].mxu0
      %v3470 = vadd.f32 0.0, %v3469
      %v3471 = vpop.f32.mrb[0].mxu0
      %3472 = vmatprep.mubr.f32.mxu0 0.0
      %3473 = vmatmul.mubr.f32.gmra.mrb[0].mxu0 %v3318
      %v3474 = vpop.f32.mrb[0].mxu0
      %v3475 = vadd.f32 0.0, %v3474
      %v3476 = vpop.f32.mrb[0].mxu0
      %3477 = vmatprep.mubr.f32.mxu0 0.0
      %3478 = vmatmul.mubr.f32.gmra.mrb[0].mxu0 %v3320
      %v3479 = vpop.f32.mrb[0].mxu0
      %v3480 = vadd.f32 0.0, %v3479
      %v3481 = vpop.f32.mrb[0].mxu0
      %3482 = vmatprep.mubr.f32.mxu0 0.0
      %3483 = vmatmul.mubr.f32.gmra.mrb[0].mxu0 %v3322
      %v3484 = vpop.f32.mrb[0].mxu0
      %v3485 = vadd.f32 0.0, %v3484
      %v3486 = vpop.f32.mrb[0].mxu0
      %3487 = vmatprep.mubr.f32.mxu0 0.0
      %3488 = vmatmul.mubr.f32.gmra.mrb[0].mxu0 %v3324
      %v3489 = vpop.f32.mrb[0].mxu0
      %v3490 = vadd.f32 0.0, %v3489
      %v3491 = vpop.f32.mrb[0].mxu0
      %3492 = vmatprep.mubr.f32.mxu0 0.0
      %3493 = vmatmul.mubr.f32.gmra.mrb[0].mxu0 %v3326
      %v3494 = vpop.f32.mrb[0].mxu0
      %v3495 = vadd.f32 0.0, %v3494
      %v3496 = vpop.f32.mrb[0].mxu0
      %3497 = vmatprep.mubr.f32.mxu0 0.0
      %3498 = vmatmul.mubr.f32.gmra.mrb[0].mxu0 %v3328
      %v3499 = vpop.f32.mrb[0].mxu0
      %v3500 = vadd.f32 0.0, %v3499
      %v3501 = vpop.f32.mrb[0].mxu0
      %3502 = vmatprep.mubr.f32.mxu0 0.0
      %3503 = vmatmul.mubr.f32.gmra.mrb[0].mxu0 %v3330
      %v3504 = vpop.f32.mrb[0].mxu0
      %v3505 = vadd.f32 0.0, %v3504
      %v3506 = vpop.f32.mrb[0].mxu0
      %3507 = vmatprep.mubr.f32.mxu0 0.0
      %3508 = vmatmul.mubr.f32.gmra.mrb[0].mxu0 %v3332
      %v3509 = vpop.f32.mrb[0].mxu0
      %v3510 = vadd.f32 0.0, %v3509
      %v3511 = vpop.f32.mrb[0].mxu0
      %3512 = vmatprep.mubr.f32.mxu0 0.0
      %3513 = vmatmul.mubr.f32.gmra.mrb[0].mxu0 %v3334
      %v3514 = vpop.f32.mrb[0].mxu0
      %v3515 = vadd.f32 0.0, %v3514
      %v3516 = vpop.f32.mrb[0].mxu0
      %3517 = vmatprep.mubr.f32.mxu0 0.0
      %3518 = vmatmul.mubr.f32.gmra.mrb[0].mxu0 %v3336
      %v3519 = vpop.f32.mrb[0].mxu0
      %v3520 = vadd.f32 0.0, %v3519
      %v3521 = vpop.f32.mrb[0].mxu0
      %3522 = vdwg.mxu0
      %v3523 = vadd.f32 %v3216, %v3405
      %v3524 = vadd.f32 %v3217, %v3410
      %v3525 = vadd.f32 %v3218, %v3415
      %v3526 = vadd.f32 %v3219, %v3420
      %v3527 = vadd.f32 %v3220, %v3425
      %v3528 = vadd.f32 %v3221, %v3430
      %v3529 = vadd.f32 %v3222, %v3435
      %v3530 = vadd.f32 %v3223, %v3440
      %v3531 = vadd.f32 %v3224, %v3445
      %v3532 = vadd.f32 %v3225, %v3450
      %v3533 = vadd.f32 %v3226, %v3455
      %v3534 = vadd.f32 %v3227, %v3460
      %v3535 = vadd.f32 %v3228, %v3465
      %v3536 = vadd.f32 %v3229, %v3470
      %v3537 = vadd.f32 %v3230, %v3475
      %v3538 = vadd.f32 %v3231, %v3480
      %v3539 = vadd.f32 %v3232, %v3485
      %v3540 = vadd.f32 %v3233, %v3490
      %v3541 = vadd.f32 %v3234, %v3495
      %v3542 = vadd.f32 %v3235, %v3500
      %v3543 = vadd.f32 %v3236, %v3505
      %v3544 = vadd.f32 %v3237, %v3510
      %v3545 = vadd.f32 %v3238, %v3515
      %v3546 = vadd.f32 %v3239, %v3520
      %s3547 = sadd.s32 0, 48
      %s3548 = scalar_lea.vmem [#allocation2], %s3547
      %v3549 = vld [vmem:[%s3548] sm:$0xff]
      %v3550 = vld [vmem:[%s3548 + $0x8] sm:$0xff]
      %v3551 = vld [vmem:[%s3548 + $0x10] sm:$0xff]
      %v3552 = vld [vmem:[%s3548 + $0x18] sm:$0xff]
      %v3553 = vld [vmem:[%s3548 + $0x20] sm:$0xff]
      %v3554 = vld [vmem:[%s3548 + $0x28] sm:$0xff]
      %v3555 = vld [vmem:[%s3548 + $0x30] sm:$0xff]
      %v3556 = vld [vmem:[%s3548 + $0x38] sm:$0xff]
      %v3557 = vld [vmem:[%s3548 + $0x40] sm:$0xff]
      %v3558 = vld [vmem:[%s3548 + $0x48] sm:$0xff]
      %v3559 = vld [vmem:[%s3548 + $0x50] sm:$0xff]
      %v3560 = vld [vmem:[%s3548 + $0x58] sm:$0xff]
      %v3561 = vld [vmem:[%s3548 + $0x60] sm:$0xff]
      %v3562 = vld [vmem:[%s3548 + $0x68] sm:$0xff]
      %v3563 = vld [vmem:[%s3548 + $0x70] sm:$0xff]
      %v3564 = vld [vmem:[%s3548 + $0x78] sm:$0xff]
      %v3565 = vld [vmem:[%s3548 + $0x80] sm:$0xff]
      %v3566 = vld [vmem:[%s3548 + $0x88] sm:$0xff]
      %v3567 = vld [vmem:[%s3548 + $0x90] sm:$0xff]
      %v3568 = vld [vmem:[%s3548 + $0x98] sm:$0xff]
      %v3569 = vld [vmem:[%s3548 + $0xa0] sm:$0xff]
      %v3570 = vld [vmem:[%s3548 + $0xa8] sm:$0xff]
      %v3571 = vld [vmem:[%s3548 + $0xb0] sm:$0xff]
      %v3572 = vld [vmem:[%s3548 + $0xb8] sm:$0xff]
      %v3573 = vld [vmem:[%s3548 + $0xc0] sm:$0xff]
      %v3574 = vld [vmem:[%s3548 + $0xc8] sm:$0xff]
      %v3600 = vrot.slane %v3549, 7
      %v3601 = vrot.slane %v3550, 7
      %v3602 = vsel %vm2033, %v3600, %v3601
      %v3603 = vrot.slane %v3551, 7
      %v3604 = vsel %vm2033, %v3601, %v3603
      %v3605 = vrot.slane %v3552, 7
      %v3606 = vsel %vm2033, %v3603, %v3605
      %v3607 = vrot.slane %v3553, 7
      %v3608 = vsel %vm2033, %v3605, %v3607
      %v3609 = vrot.slane %v3554, 7
      %v3610 = vsel %vm2033, %v3607, %v3609
      %v3611 = vrot.slane %v3555, 7
      %v3612 = vsel %vm2033, %v3609, %v3611
      %v3613 = vrot.slane %v3556, 7
      %v3614 = vsel %vm2033, %v3611, %v3613
      %v3615 = vrot.slane %v3557, 7
      %v3616 = vsel %vm2033, %v3613, %v3615
      %v3617 = vrot.slane %v3558, 7
      %v3618 = vsel %vm2033, %v3615, %v3617
      %v3619 = vrot.slane %v3559, 7
      %v3620 = vsel %vm2033, %v3617, %v3619
      %v3621 = vrot.slane %v3560, 7
      %v3622 = vsel %vm2033, %v3619, %v3621
      %v3623 = vrot.slane %v3561, 7
      %v3624 = vsel %vm2033, %v3621, %v3623
      %v3625 = vrot.slane %v3562, 7
      %v3626 = vsel %vm2033, %v3623, %v3625
      %v3627 = vrot.slane %v3563, 7
      %v3628 = vsel %vm2033, %v3625, %v3627
      %v3629 = vrot.slane %v3564, 7
      %v3630 = vsel %vm2033, %v3627, %v3629
      %v3631 = vrot.slane %v3565, 7
      %v3632 = vsel %vm2033, %v3629, %v3631
      %v3633 = vrot.slane %v3566, 7
      %v3634 = vsel %vm2033, %v3631, %v3633
      %v3635 = vrot.slane %v3567, 7
      %v3636 = vsel %vm2033, %v3633, %v3635
      %v3637 = vrot.slane %v3568, 7
      %v3638 = vsel %vm2033, %v3635, %v3637
      %v3639 = vrot.slane %v3569, 7
      %v3640 = vsel %vm2033, %v3637, %v3639
      %v3641 = vrot.slane %v3570, 7
      %v3642 = vsel %vm2033, %v3639, %v3641
      %v3643 = vrot.slane %v3571, 7
      %v3644 = vsel %vm2033, %v3641, %v3643
      %v3645 = vrot.slane %v3572, 7
      %v3646 = vsel %vm2033, %v3643, %v3645
      %v3647 = vrot.slane %v3573, 7
      %v3648 = vsel %vm2033, %v3645, %v3647
      %v3649 = vsel %vm225, %v3602, 0
      %v3651 = vsel %vm225, %v3604, 0
      %v3653 = vsel %vm225, %v3606, 0
      %v3655 = vsel %vm225, %v3608, 0
      %v3657 = vsel %vm225, %v3610, 0
      %v3659 = vsel %vm225, %v3612, 0
      %v3661 = vsel %vm225, %v3614, 0
      %v3663 = vsel %vm225, %v3616, 0
      %v3665 = vsel %vm225, %v3618, 0
      %v3667 = vsel %vm225, %v3620, 0
      %v3669 = vsel %vm225, %v3622, 0
      %v3671 = vsel %vm225, %v3624, 0
      %v3673 = vsel %vm225, %v3626, 0
      %v3675 = vsel %vm225, %v3628, 0
      %v3677 = vsel %vm225, %v3630, 0
      %v3679 = vsel %vm225, %v3632, 0
      %v3681 = vsel %vm225, %v3634, 0
      %v3683 = vsel %vm225, %v3636, 0
      %v3685 = vsel %vm225, %v3638, 0
      %v3687 = vsel %vm225, %v3640, 0
      %v3689 = vsel %vm225, %v3642, 0
      %v3691 = vsel %vm225, %v3644, 0
      %v3693 = vsel %vm225, %v3646, 0
      %v3695 = vsel %vm225, %v3648, 0
      %3697 = vmatprep.subr.mxu0 0.0
      %3698 = vmatpush1.msra.mxu0 %v1744
      %3699 = vmatprep.subr.mxu0 0.0
      %3700 = vmatpush1.msra.mxu0 0.0
      %3701 = vmatprep.subr.mxu0 0.0
      %3702 = vmatpush1.msra.mxu0 0.0
      %3703 = vmatprep.subr.mxu0 0.0
      %3704 = vmatpush1.msra.mxu0 0.0
      %3705 = vmatprep.subr.mxu0 0.0
      %3706 = vmatpush1.msra.mxu0 0.0
      %3707 = vmatprep.subr.mxu0 0.0
      %3708 = vmatpush1.msra.mxu0 0.0
      %3709 = vmatprep.subr.mxu0 0.0
      %3710 = vmatpush1.msra.mxu0 0.0
      %3711 = vmatprep.subr.mxu0 0.0
      %3712 = vmatpush1.msra.mxu0 0.0
      %3713 = vmatprep.subr.mxu0 0.0
      %3714 = vmatpush1.msra.mxu0 0.0
      %3715 = vmatprep.subr.mxu0 0.0
      %3716 = vmatpush1.msra.mxu0 0.0
      %3717 = vmatprep.subr.mxu0 0.0
      %3718 = vmatpush1.msra.mxu0 0.0
      %3719 = vmatprep.subr.mxu0 0.0
      %3720 = vmatpush1.msra.mxu0 0.0
      %3721 = vmatprep.subr.mxu0 0.0
      %3722 = vmatpush1.msra.mxu0 0.0
      %3723 = vmatprep.subr.mxu0 0.0
      %3724 = vmatpush1.msra.mxu0 0.0
      %3725 = vmatprep.subr.mxu0 0.0
      %3726 = vmatpush1.msra.mxu0 0.0
      %3727 = vmatprep.subr.mxu0 0.0
      %3728 = vmatpush1.msra.mxu0 0.0
      %3729 = vmatprep.subr.mxu0 0.0
      %3730 = vmatpush1.msra.mxu0 0.0
      %3731 = vmatprep.subr.mxu0 0.0
      %3732 = vmatpush1.msra.mxu0 0.0
      %3733 = vmatprep.subr.mxu0 0.0
      %3734 = vmatpush1.msra.mxu0 0.0
      %3735 = vmatprep.subr.mxu0 0.0
      %3736 = vmatpush1.msra.mxu0 0.0
      %3737 = vmatprep.subr.mxu0 0.0
      %3738 = vmatpush1.msra.mxu0 0.0
      %3739 = vmatprep.subr.mxu0 0.0
      %3740 = vmatpush1.msra.mxu0 0.0
      %3741 = vmatprep.subr.mxu0 0.0
      %3742 = vmatpush1.msra.mxu0 0.0
      %3743 = vmatprep.subr.mxu0 0.0
      %3744 = vmatpush1.msra.mxu0 0.0
      %3745 = vmatprep.subr.mxu0 0.0
      %3746 = vmatpush1.msra.mxu0 0.0
      %3747 = vmatprep.subr.mxu0 0.0
      %3748 = vmatpush1.msra.mxu0 0.0
      %3749 = vmatprep.subr.mxu0 0.0
      %3750 = vmatpush1.msra.mxu0 0.0
      %3751 = vmatprep.subr.mxu0 0.0
      %3752 = vmatpush1.msra.mxu0 0.0
      %3753 = vmatprep.subr.mxu0 0.0
      %3754 = vmatpush1.msra.mxu0 0.0
      %3755 = vmatprep.subr.mxu0 0.0
      %3756 = vmatpush1.msra.mxu0 0.0
      %3757 = vmatprep.subr.mxu0 0.0
      %3758 = vmatpush1.msra.mxu0 0.0
      %3759 = vmatprep.subr.mxu0 0.0
      %3760 = vmatpush1.msra.mxu0 0.0
      %3761 = vmatprep.mubr.f32.mxu0 0.0
      %3762 = vmatmul.mubr.f32.gmra.mrb[0].mxu0 %v3649
      %v3763 = vpop.f32.mrb[0].mxu0
      %v3764 = vadd.f32 0.0, %v3763
      %v3765 = vpop.f32.mrb[0].mxu0
      %3766 = vmatprep.mubr.f32.mxu0 0.0
      %3767 = vmatmul.mubr.f32.gmra.mrb[0].mxu0 %v3651
      %v3768 = vpop.f32.mrb[0].mxu0
      %v3769 = vadd.f32 0.0, %v3768
      %v3770 = vpop.f32.mrb[0].mxu0
      %3771 = vmatprep.mubr.f32.mxu0 0.0
      %3772 = vmatmul.mubr.f32.gmra.mrb[0].mxu0 %v3653
      %v3773 = vpop.f32.mrb[0].mxu0
      %v3774 = vadd.f32 0.0, %v3773
      %v3775 = vpop.f32.mrb[0].mxu0
      %3776 = vmatprep.mubr.f32.mxu0 0.0
      %3777 = vmatmul.mubr.f32.gmra.mrb[0].mxu0 %v3655
      %v3778 = vpop.f32.mrb[0].mxu0
      %v3779 = vadd.f32 0.0, %v3778
      %v3780 = vpop.f32.mrb[0].mxu0
      %3781 = vmatprep.mubr.f32.mxu0 0.0
      %3782 = vmatmul.mubr.f32.gmra.mrb[0].mxu0 %v3657
      %v3783 = vpop.f32.mrb[0].mxu0
      %v3784 = vadd.f32 0.0, %v3783
      %v3785 = vpop.f32.mrb[0].mxu0
      %3786 = vmatprep.mubr.f32.mxu0 0.0
      %3787 = vmatmul.mubr.f32.gmra.mrb[0].mxu0 %v3659
      %v3788 = vpop.f32.mrb[0].mxu0
      %v3789 = vadd.f32 0.0, %v3788
      %v3790 = vpop.f32.mrb[0].mxu0
      %3791 = vmatprep.mubr.f32.mxu0 0.0
      %3792 = vmatmul.mubr.f32.gmra.mrb[0].mxu0 %v3661
      %v3793 = vpop.f32.mrb[0].mxu0
      %v3794 = vadd.f32 0.0, %v3793
      %v3795 = vpop.f32.mrb[0].mxu0
      %3796 = vmatprep.mubr.f32.mxu0 0.0
      %3797 = vmatmul.mubr.f32.gmra.mrb[0].mxu0 %v3663
      %v3798 = vpop.f32.mrb[0].mxu0
      %v3799 = vadd.f32 0.0, %v3798
      %v3800 = vpop.f32.mrb[0].mxu0
      %3801 = vmatprep.mubr.f32.mxu0 0.0
      %3802 = vmatmul.mubr.f32.gmra.mrb[0].mxu0 %v3665
      %v3803 = vpop.f32.mrb[0].mxu0
      %v3804 = vadd.f32 0.0, %v3803
      %v3805 = vpop.f32.mrb[0].mxu0
      %3806 = vmatprep.mubr.f32.mxu0 0.0
      %3807 = vmatmul.mubr.f32.gmra.mrb[0].mxu0 %v3667
      %v3808 = vpop.f32.mrb[0].mxu0
      %v3809 = vadd.f32 0.0, %v3808
      %v3810 = vpop.f32.mrb[0].mxu0
      %3811 = vmatprep.mubr.f32.mxu0 0.0
      %3812 = vmatmul.mubr.f32.gmra.mrb[0].mxu0 %v3669
      %v3813 = vpop.f32.mrb[0].mxu0
      %v3814 = vadd.f32 0.0, %v3813
      %v3815 = vpop.f32.mrb[0].mxu0
      %3816 = vmatprep.mubr.f32.mxu0 0.0
      %3817 = vmatmul.mubr.f32.gmra.mrb[0].mxu0 %v3671
      %v3818 = vpop.f32.mrb[0].mxu0
      %v3819 = vadd.f32 0.0, %v3818
      %v3820 = vpop.f32.mrb[0].mxu0
      %3821 = vmatprep.mubr.f32.mxu0 0.0
      %3822 = vmatmul.mubr.f32.gmra.mrb[0].mxu0 %v3673
      %v3823 = vpop.f32.mrb[0].mxu0
      %v3824 = vadd.f32 0.0, %v3823
      %v3825 = vpop.f32.mrb[0].mxu0
      %3826 = vmatprep.mubr.f32.mxu0 0.0
      %3827 = vmatmul.mubr.f32.gmra.mrb[0].mxu0 %v3675
      %v3828 = vpop.f32.mrb[0].mxu0
      %v3829 = vadd.f32 0.0, %v3828
      %v3830 = vpop.f32.mrb[0].mxu0
      %3831 = vmatprep.mubr.f32.mxu0 0.0
      %3832 = vmatmul.mubr.f32.gmra.mrb[0].mxu0 %v3677
      %v3833 = vpop.f32.mrb[0].mxu0
      %v3834 = vadd.f32 0.0, %v3833
      %v3835 = vpop.f32.mrb[0].mxu0
      %3836 = vmatprep.mubr.f32.mxu0 0.0
      %3837 = vmatmul.mubr.f32.gmra.mrb[0].mxu0 %v3679
      %v3838 = vpop.f32.mrb[0].mxu0
      %v3839 = vadd.f32 0.0, %v3838
      %v3840 = vpop.f32.mrb[0].mxu0
      %3841 = vmatprep.mubr.f32.mxu0 0.0
      %3842 = vmatmul.mubr.f32.gmra.mrb[0].mxu0 %v3681
      %v3843 = vpop.f32.mrb[0].mxu0
      %v3844 = vadd.f32 0.0, %v3843
      %v3845 = vpop.f32.mrb[0].mxu0
      %3846 = vmatprep.mubr.f32.mxu0 0.0
      %3847 = vmatmul.mubr.f32.gmra.mrb[0].mxu0 %v3683
      %v3848 = vpop.f32.mrb[0].mxu0
      %v3849 = vadd.f32 0.0, %v3848
      %v3850 = vpop.f32.mrb[0].mxu0
      %3851 = vmatprep.mubr.f32.mxu0 0.0
      %3852 = vmatmul.mubr.f32.gmra.mrb[0].mxu0 %v3685
      %v3853 = vpop.f32.mrb[0].mxu0
      %v3854 = vadd.f32 0.0, %v3853
      %v3855 = vpop.f32.mrb[0].mxu0
      %3856 = vmatprep.mubr.f32.mxu0 0.0
      %3857 = vmatmul.mubr.f32.gmra.mrb[0].mxu0 %v3687
      %v3858 = vpop.f32.mrb[0].mxu0
      %v3859 = vadd.f32 0.0, %v3858
      %v3860 = vpop.f32.mrb[0].mxu0
      %3861 = vmatprep.mubr.f32.mxu0 0.0
      %3862 = vmatmul.mubr.f32.gmra.mrb[0].mxu0 %v3689
      %v3863 = vpop.f32.mrb[0].mxu0
      %v3864 = vadd.f32 0.0, %v3863
      %v3865 = vpop.f32.mrb[0].mxu0
      %3866 = vmatprep.mubr.f32.mxu0 0.0
      %3867 = vmatmul.mubr.f32.gmra.mrb[0].mxu0 %v3691
      %v3868 = vpop.f32.mrb[0].mxu0
      %v3869 = vadd.f32 0.0, %v3868
      %v3870 = vpop.f32.mrb[0].mxu0
      %3871 = vmatprep.mubr.f32.mxu0 0.0
      %3872 = vmatmul.mubr.f32.gmra.mrb[0].mxu0 %v3693
      %v3873 = vpop.f32.mrb[0].mxu0
      %v3874 = vadd.f32 0.0, %v3873
      %v3875 = vpop.f32.mrb[0].mxu0
      %3876 = vmatprep.mubr.f32.mxu0 0.0
      %3877 = vmatmul.mubr.f32.gmra.mrb[0].mxu0 %v3695
      %v3878 = vpop.f32.mrb[0].mxu0
      %v3879 = vadd.f32 0.0, %v3878
      %v3880 = vpop.f32.mrb[0].mxu0
      %3881 = vdwg.mxu0
      %v3882 = vadd.f32 %v3523, %v3764
      %v3883 = vadd.f32 %v3524, %v3769
      %v3884 = vadd.f32 %v3525, %v3774
      %v3885 = vadd.f32 %v3526, %v3779
      %v3886 = vadd.f32 %v3527, %v3784
      %v3887 = vadd.f32 %v3528, %v3789
      %v3888 = vadd.f32 %v3529, %v3794
      %v3889 = vadd.f32 %v3530, %v3799
      %v3890 = vadd.f32 %v3531, %v3804
      %v3891 = vadd.f32 %v3532, %v3809
      %v3892 = vadd.f32 %v3533, %v3814
      %v3893 = vadd.f32 %v3534, %v3819
      %v3894 = vadd.f32 %v3535, %v3824
      %v3895 = vadd.f32 %v3536, %v3829
      %v3896 = vadd.f32 %v3537, %v3834
      %v3897 = vadd.f32 %v3538, %v3839
      %v3898 = vadd.f32 %v3539, %v3844
      %v3899 = vadd.f32 %v3540, %v3849
      %v3900 = vadd.f32 %v3541, %v3854
      %v3901 = vadd.f32 %v3542, %v3859
      %v3902 = vadd.f32 %v3543, %v3864
      %v3903 = vadd.f32 %v3544, %v3869
      %v3904 = vadd.f32 %v3545, %v3874
      %v3905 = vadd.f32 %v3546, %v3879
      %v3906 = vsel %vm225, %v3550, 0
      %v3908 = vsel %vm225, %v3551, 0
      %v3910 = vsel %vm225, %v3552, 0
      %v3912 = vsel %vm225, %v3553, 0
      %v3914 = vsel %vm225, %v3554, 0
      %v3916 = vsel %vm225, %v3555, 0
      %v3918 = vsel %vm225, %v3556, 0
      %v3920 = vsel %vm225, %v3557, 0
      %v3922 = vsel %vm225, %v3558, 0
      %v3924 = vsel %vm225, %v3559, 0
      %v3926 = vsel %vm225, %v3560, 0
      %v3928 = vsel %vm225, %v3561, 0
      %v3930 = vsel %vm225, %v3562, 0
      %v3932 = vsel %vm225, %v3563, 0
      %v3934 = vsel %vm225, %v3564, 0
      %v3936 = vsel %vm225, %v3565, 0
      %v3938 = vsel %vm225, %v3566, 0
      %v3940 = vsel %vm225, %v3567, 0
      %v3942 = vsel %vm225, %v3568, 0
      %v3944 = vsel %vm225, %v3569, 0
      %v3946 = vsel %vm225, %v3570, 0
      %v3948 = vsel %vm225, %v3571, 0
      %v3950 = vsel %vm225, %v3572, 0
      %v3952 = vsel %vm225, %v3573, 0
      %3954 = vmatprep.subr.mxu0 0.0
      %3955 = vmatpush1.msra.mxu0 %v1746
      %3956 = vmatprep.subr.mxu0 0.0
      %3957 = vmatpush1.msra.mxu0 0.0
      %3958 = vmatprep.subr.mxu0 0.0
      %3959 = vmatpush1.msra.mxu0 0.0
      %3960 = vmatprep.subr.mxu0 0.0
      %3961 = vmatpush1.msra.mxu0 0.0
      %3962 = vmatprep.subr.mxu0 0.0
      %3963 = vmatpush1.msra.mxu0 0.0
      %3964 = vmatprep.subr.mxu0 0.0
      %3965 = vmatpush1.msra.mxu0 0.0
      %3966 = vmatprep.subr.mxu0 0.0
      %3967 = vmatpush1.msra.mxu0 0.0
      %3968 = vmatprep.subr.mxu0 0.0
      %3969 = vmatpush1.msra.mxu0 0.0
      %3970 = vmatprep.subr.mxu0 0.0
      %3971 = vmatpush1.msra.mxu0 0.0
      %3972 = vmatprep.subr.mxu0 0.0
      %3973 = vmatpush1.msra.mxu0 0.0
      %3974 = vmatprep.subr.mxu0 0.0
      %3975 = vmatpush1.msra.mxu0 0.0
      %3976 = vmatprep.subr.mxu0 0.0
      %3977 = vmatpush1.msra.mxu0 0.0
      %3978 = vmatprep.subr.mxu0 0.0
      %3979 = vmatpush1.msra.mxu0 0.0
      %3980 = vmatprep.subr.mxu0 0.0
      %3981 = vmatpush1.msra.mxu0 0.0
      %3982 = vmatprep.subr.mxu0 0.0
      %3983 = vmatpush1.msra.mxu0 0.0
      %3984 = vmatprep.subr.mxu0 0.0
      %3985 = vmatpush1.msra.mxu0 0.0
      %3986 = vmatprep.subr.mxu0 0.0
      %3987 = vmatpush1.msra.mxu0 0.0
      %3988 = vmatprep.subr.mxu0 0.0
      %3989 = vmatpush1.msra.mxu0 0.0
      %3990 = vmatprep.subr.mxu0 0.0
      %3991 = vmatpush1.msra.mxu0 0.0
      %3992 = vmatprep.subr.mxu0 0.0
      %3993 = vmatpush1.msra.mxu0 0.0
      %3994 = vmatprep.subr.mxu0 0.0
      %3995 = vmatpush1.msra.mxu0 0.0
      %3996 = vmatprep.subr.mxu0 0.0
      %3997 = vmatpush1.msra.mxu0 0.0
      %3998 = vmatprep.subr.mxu0 0.0
      %3999 = vmatpush1.msra.mxu0 0.0
      %4000 = vmatprep.subr.mxu0 0.0
      %4001 = vmatpush1.msra.mxu0 0.0
      %4002 = vmatprep.subr.mxu0 0.0
      %4003 = vmatpush1.msra.mxu0 0.0
      %4004 = vmatprep.subr.mxu0 0.0
      %4005 = vmatpush1.msra.mxu0 0.0
      %4006 = vmatprep.subr.mxu0 0.0
      %4007 = vmatpush1.msra.mxu0 0.0
      %4008 = vmatprep.subr.mxu0 0.0
      %4009 = vmatpush1.msra.mxu0 0.0
      %4010 = vmatprep.subr.mxu0 0.0
      %4011 = vmatpush1.msra.mxu0 0.0
      %4012 = vmatprep.subr.mxu0 0.0
      %4013 = vmatpush1.msra.mxu0 0.0
      %4014 = vmatprep.subr.mxu0 0.0
      %4015 = vmatpush1.msra.mxu0 0.0
      %4016 = vmatprep.subr.mxu0 0.0
      %4017 = vmatpush1.msra.mxu0 0.0
      %4018 = vmatprep.mubr.f32.mxu0 0.0
      %4019 = vmatmul.mubr.f32.gmra.mrb[0].mxu0 %v3906
      %v4020 = vpop.f32.mrb[0].mxu0
      %v4021 = vadd.f32 0.0, %v4020
      %v4022 = vpop.f32.mrb[0].mxu0
      %4023 = vmatprep.mubr.f32.mxu0 0.0
      %4024 = vmatmul.mubr.f32.gmra.mrb[0].mxu0 %v3908
      %v4025 = vpop.f32.mrb[0].mxu0
      %v4026 = vadd.f32 0.0, %v4025
      %v4027 = vpop.f32.mrb[0].mxu0
      %4028 = vmatprep.mubr.f32.mxu0 0.0
      %4029 = vmatmul.mubr.f32.gmra.mrb[0].mxu0 %v3910
      %v4030 = vpop.f32.mrb[0].mxu0
      %v4031 = vadd.f32 0.0, %v4030
      %v4032 = vpop.f32.mrb[0].mxu0
      %4033 = vmatprep.mubr.f32.mxu0 0.0
      %4034 = vmatmul.mubr.f32.gmra.mrb[0].mxu0 %v3912
      %v4035 = vpop.f32.mrb[0].mxu0
      %v4036 = vadd.f32 0.0, %v4035
      %v4037 = vpop.f32.mrb[0].mxu0
      %4038 = vmatprep.mubr.f32.mxu0 0.0
      %4039 = vmatmul.mubr.f32.gmra.mrb[0].mxu0 %v3914
      %v4040 = vpop.f32.mrb[0].mxu0
      %v4041 = vadd.f32 0.0, %v4040
      %v4042 = vpop.f32.mrb[0].mxu0
      %4043 = vmatprep.mubr.f32.mxu0 0.0
      %4044 = vmatmul.mubr.f32.gmra.mrb[0].mxu0 %v3916
      %v4045 = vpop.f32.mrb[0].mxu0
      %v4046 = vadd.f32 0.0, %v4045
      %v4047 = vpop.f32.mrb[0].mxu0
      %4048 = vmatprep.mubr.f32.mxu0 0.0
      %4049 = vmatmul.mubr.f32.gmra.mrb[0].mxu0 %v3918
      %v4050 = vpop.f32.mrb[0].mxu0
      %v4051 = vadd.f32 0.0, %v4050
      %v4052 = vpop.f32.mrb[0].mxu0
      %4053 = vmatprep.mubr.f32.mxu0 0.0
      %4054 = vmatmul.mubr.f32.gmra.mrb[0].mxu0 %v3920
      %v4055 = vpop.f32.mrb[0].mxu0
      %v4056 = vadd.f32 0.0, %v4055
      %v4057 = vpop.f32.mrb[0].mxu0
      %4058 = vmatprep.mubr.f32.mxu0 0.0
      %4059 = vmatmul.mubr.f32.gmra.mrb[0].mxu0 %v3922
      %v4060 = vpop.f32.mrb[0].mxu0
      %v4061 = vadd.f32 0.0, %v4060
      %v4062 = vpop.f32.mrb[0].mxu0
      %4063 = vmatprep.mubr.f32.mxu0 0.0
      %4064 = vmatmul.mubr.f32.gmra.mrb[0].mxu0 %v3924
      %v4065 = vpop.f32.mrb[0].mxu0
      %v4066 = vadd.f32 0.0, %v4065
      %v4067 = vpop.f32.mrb[0].mxu0
      %4068 = vmatprep.mubr.f32.mxu0 0.0
      %4069 = vmatmul.mubr.f32.gmra.mrb[0].mxu0 %v3926
      %v4070 = vpop.f32.mrb[0].mxu0
      %v4071 = vadd.f32 0.0, %v4070
      %v4072 = vpop.f32.mrb[0].mxu0
      %4073 = vmatprep.mubr.f32.mxu0 0.0
      %4074 = vmatmul.mubr.f32.gmra.mrb[0].mxu0 %v3928
      %v4075 = vpop.f32.mrb[0].mxu0
      %v4076 = vadd.f32 0.0, %v4075
      %v4077 = vpop.f32.mrb[0].mxu0
      %4078 = vmatprep.mubr.f32.mxu0 0.0
      %4079 = vmatmul.mubr.f32.gmra.mrb[0].mxu0 %v3930
      %v4080 = vpop.f32.mrb[0].mxu0
      %v4081 = vadd.f32 0.0, %v4080
      %v4082 = vpop.f32.mrb[0].mxu0
      %4083 = vmatprep.mubr.f32.mxu0 0.0
      %4084 = vmatmul.mubr.f32.gmra.mrb[0].mxu0 %v3932
      %v4085 = vpop.f32.mrb[0].mxu0
      %v4086 = vadd.f32 0.0, %v4085
      %v4087 = vpop.f32.mrb[0].mxu0
      %4088 = vmatprep.mubr.f32.mxu0 0.0
      %4089 = vmatmul.mubr.f32.gmra.mrb[0].mxu0 %v3934
      %v4090 = vpop.f32.mrb[0].mxu0
      %v4091 = vadd.f32 0.0, %v4090
      %v4092 = vpop.f32.mrb[0].mxu0
      %4093 = vmatprep.mubr.f32.mxu0 0.0
      %4094 = vmatmul.mubr.f32.gmra.mrb[0].mxu0 %v3936
      %v4095 = vpop.f32.mrb[0].mxu0
      %v4096 = vadd.f32 0.0, %v4095
      %v4097 = vpop.f32.mrb[0].mxu0
      %4098 = vmatprep.mubr.f32.mxu0 0.0
      %4099 = vmatmul.mubr.f32.gmra.mrb[0].mxu0 %v3938
      %v4100 = vpop.f32.mrb[0].mxu0
      %v4101 = vadd.f32 0.0, %v4100
      %v4102 = vpop.f32.mrb[0].mxu0
      %4103 = vmatprep.mubr.f32.mxu0 0.0
      %4104 = vmatmul.mubr.f32.gmra.mrb[0].mxu0 %v3940
      %v4105 = vpop.f32.mrb[0].mxu0
      %v4106 = vadd.f32 0.0, %v4105
      %v4107 = vpop.f32.mrb[0].mxu0
      %4108 = vmatprep.mubr.f32.mxu0 0.0
      %4109 = vmatmul.mubr.f32.gmra.mrb[0].mxu0 %v3942
      %v4110 = vpop.f32.mrb[0].mxu0
      %v4111 = vadd.f32 0.0, %v4110
      %v4112 = vpop.f32.mrb[0].mxu0
      %4113 = vmatprep.mubr.f32.mxu0 0.0
      %4114 = vmatmul.mubr.f32.gmra.mrb[0].mxu0 %v3944
      %v4115 = vpop.f32.mrb[0].mxu0
      %v4116 = vadd.f32 0.0, %v4115
      %v4117 = vpop.f32.mrb[0].mxu0
      %4118 = vmatprep.mubr.f32.mxu0 0.0
      %4119 = vmatmul.mubr.f32.gmra.mrb[0].mxu0 %v3946
      %v4120 = vpop.f32.mrb[0].mxu0
      %v4121 = vadd.f32 0.0, %v4120
      %v4122 = vpop.f32.mrb[0].mxu0
      %4123 = vmatprep.mubr.f32.mxu0 0.0
      %4124 = vmatmul.mubr.f32.gmra.mrb[0].mxu0 %v3948
      %v4125 = vpop.f32.mrb[0].mxu0
      %v4126 = vadd.f32 0.0, %v4125
      %v4127 = vpop.f32.mrb[0].mxu0
      %4128 = vmatprep.mubr.f32.mxu0 0.0
      %4129 = vmatmul.mubr.f32.gmra.mrb[0].mxu0 %v3950
      %v4130 = vpop.f32.mrb[0].mxu0
      %v4131 = vadd.f32 0.0, %v4130
      %v4132 = vpop.f32.mrb[0].mxu0
      %4133 = vmatprep.mubr.f32.mxu0 0.0
      %4134 = vmatmul.mubr.f32.gmra.mrb[0].mxu0 %v3952
      %v4135 = vpop.f32.mrb[0].mxu0
      %v4136 = vadd.f32 0.0, %v4135
      %v4137 = vpop.f32.mrb[0].mxu0
      %4138 = vdwg.mxu0
      %v4139 = vadd.f32 %v3882, %v4021
      %v4140 = vadd.f32 %v3883, %v4026
      %v4141 = vadd.f32 %v3884, %v4031
      %v4142 = vadd.f32 %v3885, %v4036
      %v4143 = vadd.f32 %v3886, %v4041
      %v4144 = vadd.f32 %v3887, %v4046
      %v4145 = vadd.f32 %v3888, %v4051
      %v4146 = vadd.f32 %v3889, %v4056
      %v4147 = vadd.f32 %v3890, %v4061
      %v4148 = vadd.f32 %v3891, %v4066
      %v4149 = vadd.f32 %v3892, %v4071
      %v4150 = vadd.f32 %v3893, %v4076
      %v4151 = vadd.f32 %v3894, %v4081
      %v4152 = vadd.f32 %v3895, %v4086
      %v4153 = vadd.f32 %v3896, %v4091
      %v4154 = vadd.f32 %v3897, %v4096
      %v4155 = vadd.f32 %v3898, %v4101
      %v4156 = vadd.f32 %v3899, %v4106
      %v4157 = vadd.f32 %v3900, %v4111
      %v4158 = vadd.f32 %v3901, %v4116
      %v4159 = vadd.f32 %v3902, %v4121
      %v4160 = vadd.f32 %v3903, %v4126
      %v4161 = vadd.f32 %v3904, %v4131
      %v4162 = vadd.f32 %v3905, %v4136
      %v4164 = vrot.slane %v3550, 1
      %v4165 = vrot.slane %v3551, 1
      %v4166 = vsel %vm2317, %v4164, %v4165
      %v4167 = vrot.slane %v3552, 1
      %v4168 = vsel %vm2317, %v4165, %v4167
      %v4169 = vrot.slane %v3553, 1
      %v4170 = vsel %vm2317, %v4167, %v4169
      %v4171 = vrot.slane %v3554, 1
      %v4172 = vsel %vm2317, %v4169, %v4171
      %v4173 = vrot.slane %v3555, 1
      %v4174 = vsel %vm2317, %v4171, %v4173
      %v4175 = vrot.slane %v3556, 1
      %v4176 = vsel %vm2317, %v4173, %v4175
      %v4177 = vrot.slane %v3557, 1
      %v4178 = vsel %vm2317, %v4175, %v4177
      %v4179 = vrot.slane %v3558, 1
      %v4180 = vsel %vm2317, %v4177, %v4179
      %v4181 = vrot.slane %v3559, 1
      %v4182 = vsel %vm2317, %v4179, %v4181
      %v4183 = vrot.slane %v3560, 1
      %v4184 = vsel %vm2317, %v4181, %v4183
      %v4185 = vrot.slane %v3561, 1
      %v4186 = vsel %vm2317, %v4183, %v4185
      %v4187 = vrot.slane %v3562, 1
      %v4188 = vsel %vm2317, %v4185, %v4187
      %v4189 = vrot.slane %v3563, 1
      %v4190 = vsel %vm2317, %v4187, %v4189
      %v4191 = vrot.slane %v3564, 1
      %v4192 = vsel %vm2317, %v4189, %v4191
      %v4193 = vrot.slane %v3565, 1
      %v4194 = vsel %vm2317, %v4191, %v4193
      %v4195 = vrot.slane %v3566, 1
      %v4196 = vsel %vm2317, %v4193, %v4195
      %v4197 = vrot.slane %v3567, 1
      %v4198 = vsel %vm2317, %v4195, %v4197
      %v4199 = vrot.slane %v3568, 1
      %v4200 = vsel %vm2317, %v4197, %v4199
      %v4201 = vrot.slane %v3569, 1
      %v4202 = vsel %vm2317, %v4199, %v4201
      %v4203 = vrot.slane %v3570, 1
      %v4204 = vsel %vm2317, %v4201, %v4203
      %v4205 = vrot.slane %v3571, 1
      %v4206 = vsel %vm2317, %v4203, %v4205
      %v4207 = vrot.slane %v3572, 1
      %v4208 = vsel %vm2317, %v4205, %v4207
      %v4209 = vrot.slane %v3573, 1
      %v4210 = vsel %vm2317, %v4207, %v4209
      %v4211 = vrot.slane %v3574, 1
      %v4212 = vsel %vm2317, %v4209, %v4211
      %v4213 = vsel %vm225, %v4166, 0
      %v4215 = vsel %vm225, %v4168, 0
      %v4217 = vsel %vm225, %v4170, 0
      %v4219 = vsel %vm225, %v4172, 0
      %v4221 = vsel %vm225, %v4174, 0
      %v4223 = vsel %vm225, %v4176, 0
      %v4225 = vsel %vm225, %v4178, 0
      %v4227 = vsel %vm225, %v4180, 0
      %v4229 = vsel %vm225, %v4182, 0
      %v4231 = vsel %vm225, %v4184, 0
      %v4233 = vsel %vm225, %v4186, 0
      %v4235 = vsel %vm225, %v4188, 0
      %v4237 = vsel %vm225, %v4190, 0
      %v4239 = vsel %vm225, %v4192, 0
      %v4241 = vsel %vm225, %v4194, 0
      %v4243 = vsel %vm225, %v4196, 0
      %v4245 = vsel %vm225, %v4198, 0
      %v4247 = vsel %vm225, %v4200, 0
      %v4249 = vsel %vm225, %v4202, 0
      %v4251 = vsel %vm225, %v4204, 0
      %v4253 = vsel %vm225, %v4206, 0
      %v4255 = vsel %vm225, %v4208, 0
      %v4257 = vsel %vm225, %v4210, 0
      %v4259 = vsel %vm225, %v4212, 0
      %4261 = vmatprep.subr.mxu0 0.0
      %4262 = vmatpush1.msra.mxu0 %v1748
      %4263 = vmatprep.subr.mxu0 0.0
      %4264 = vmatpush1.msra.mxu0 0.0
      %4265 = vmatprep.subr.mxu0 0.0
      %4266 = vmatpush1.msra.mxu0 0.0
      %4267 = vmatprep.subr.mxu0 0.0
      %4268 = vmatpush1.msra.mxu0 0.0
      %4269 = vmatprep.subr.mxu0 0.0
      %4270 = vmatpush1.msra.mxu0 0.0
      %4271 = vmatprep.subr.mxu0 0.0
      %4272 = vmatpush1.msra.mxu0 0.0
      %4273 = vmatprep.subr.mxu0 0.0
      %4274 = vmatpush1.msra.mxu0 0.0
      %4275 = vmatprep.subr.mxu0 0.0
      %4276 = vmatpush1.msra.mxu0 0.0
      %4277 = vmatprep.subr.mxu0 0.0
      %4278 = vmatpush1.msra.mxu0 0.0
      %4279 = vmatprep.subr.mxu0 0.0
      %4280 = vmatpush1.msra.mxu0 0.0
      %4281 = vmatprep.subr.mxu0 0.0
      %4282 = vmatpush1.msra.mxu0 0.0
      %4283 = vmatprep.subr.mxu0 0.0
      %4284 = vmatpush1.msra.mxu0 0.0
      %4285 = vmatprep.subr.mxu0 0.0
      %4286 = vmatpush1.msra.mxu0 0.0
      %4287 = vmatprep.subr.mxu0 0.0
      %4288 = vmatpush1.msra.mxu0 0.0
      %4289 = vmatprep.subr.mxu0 0.0
      %4290 = vmatpush1.msra.mxu0 0.0
      %4291 = vmatprep.subr.mxu0 0.0
      %4292 = vmatpush1.msra.mxu0 0.0
      %4293 = vmatprep.subr.mxu0 0.0
      %4294 = vmatpush1.msra.mxu0 0.0
      %4295 = vmatprep.subr.mxu0 0.0
      %4296 = vmatpush1.msra.mxu0 0.0
      %4297 = vmatprep.subr.mxu0 0.0
      %4298 = vmatpush1.msra.mxu0 0.0
      %4299 = vmatprep.subr.mxu0 0.0
      %4300 = vmatpush1.msra.mxu0 0.0
      %4301 = vmatprep.subr.mxu0 0.0
      %4302 = vmatpush1.msra.mxu0 0.0
      %4303 = vmatprep.subr.mxu0 0.0
      %4304 = vmatpush1.msra.mxu0 0.0
      %4305 = vmatprep.subr.mxu0 0.0
      %4306 = vmatpush1.msra.mxu0 0.0
      %4307 = vmatprep.subr.mxu0 0.0
      %4308 = vmatpush1.msra.mxu0 0.0
      %4309 = vmatprep.subr.mxu0 0.0
      %4310 = vmatpush1.msra.mxu0 0.0
      %4311 = vmatprep.subr.mxu0 0.0
      %4312 = vmatpush1.msra.mxu0 0.0
      %4313 = vmatprep.subr.mxu0 0.0
      %4314 = vmatpush1.msra.mxu0 0.0
      %4315 = vmatprep.subr.mxu0 0.0
      %4316 = vmatpush1.msra.mxu0 0.0
      %4317 = vmatprep.subr.mxu0 0.0
      %4318 = vmatpush1.msra.mxu0 0.0
      %4319 = vmatprep.subr.mxu0 0.0
      %4320 = vmatpush1.msra.mxu0 0.0
      %4321 = vmatprep.subr.mxu0 0.0
      %4322 = vmatpush1.msra.mxu0 0.0
      %4323 = vmatprep.subr.mxu0 0.0
      %4324 = vmatpush1.msra.mxu0 0.0
      %4325 = vmatprep.mubr.f32.mxu0 0.0
      %4326 = vmatmul.mubr.f32.gmra.mrb[0].mxu0 %v4213
      %v4327 = vpop.f32.mrb[0].mxu0
      %v4328 = vadd.f32 0.0, %v4327
      %v4329 = vpop.f32.mrb[0].mxu0
      %4330 = vmatprep.mubr.f32.mxu0 0.0
      %4331 = vmatmul.mubr.f32.gmra.mrb[0].mxu0 %v4215
      %v4332 = vpop.f32.mrb[0].mxu0
      %v4333 = vadd.f32 0.0, %v4332
      %v4334 = vpop.f32.mrb[0].mxu0
      %4335 = vmatprep.mubr.f32.mxu0 0.0
      %4336 = vmatmul.mubr.f32.gmra.mrb[0].mxu0 %v4217
      %v4337 = vpop.f32.mrb[0].mxu0
      %v4338 = vadd.f32 0.0, %v4337
      %v4339 = vpop.f32.mrb[0].mxu0
      %4340 = vmatprep.mubr.f32.mxu0 0.0
      %4341 = vmatmul.mubr.f32.gmra.mrb[0].mxu0 %v4219
      %v4342 = vpop.f32.mrb[0].mxu0
      %v4343 = vadd.f32 0.0, %v4342
      %v4344 = vpop.f32.mrb[0].mxu0
      %4345 = vmatprep.mubr.f32.mxu0 0.0
      %4346 = vmatmul.mubr.f32.gmra.mrb[0].mxu0 %v4221
      %v4347 = vpop.f32.mrb[0].mxu0
      %v4348 = vadd.f32 0.0, %v4347
      %v4349 = vpop.f32.mrb[0].mxu0
      %4350 = vmatprep.mubr.f32.mxu0 0.0
      %4351 = vmatmul.mubr.f32.gmra.mrb[0].mxu0 %v4223
      %v4352 = vpop.f32.mrb[0].mxu0
      %v4353 = vadd.f32 0.0, %v4352
      %v4354 = vpop.f32.mrb[0].mxu0
      %4355 = vmatprep.mubr.f32.mxu0 0.0
      %4356 = vmatmul.mubr.f32.gmra.mrb[0].mxu0 %v4225
      %v4357 = vpop.f32.mrb[0].mxu0
      %v4358 = vadd.f32 0.0, %v4357
      %v4359 = vpop.f32.mrb[0].mxu0
      %4360 = vmatprep.mubr.f32.mxu0 0.0
      %4361 = vmatmul.mubr.f32.gmra.mrb[0].mxu0 %v4227
      %v4362 = vpop.f32.mrb[0].mxu0
      %v4363 = vadd.f32 0.0, %v4362
      %v4364 = vpop.f32.mrb[0].mxu0
      %4365 = vmatprep.mubr.f32.mxu0 0.0
      %4366 = vmatmul.mubr.f32.gmra.mrb[0].mxu0 %v4229
      %v4367 = vpop.f32.mrb[0].mxu0
      %v4368 = vadd.f32 0.0, %v4367
      %v4369 = vpop.f32.mrb[0].mxu0
      %4370 = vmatprep.mubr.f32.mxu0 0.0
      %4371 = vmatmul.mubr.f32.gmra.mrb[0].mxu0 %v4231
      %v4372 = vpop.f32.mrb[0].mxu0
      %v4373 = vadd.f32 0.0, %v4372
      %v4374 = vpop.f32.mrb[0].mxu0
      %4375 = vmatprep.mubr.f32.mxu0 0.0
      %4376 = vmatmul.mubr.f32.gmra.mrb[0].mxu0 %v4233
      %v4377 = vpop.f32.mrb[0].mxu0
      %v4378 = vadd.f32 0.0, %v4377
      %v4379 = vpop.f32.mrb[0].mxu0
      %4380 = vmatprep.mubr.f32.mxu0 0.0
      %4381 = vmatmul.mubr.f32.gmra.mrb[0].mxu0 %v4235
      %v4382 = vpop.f32.mrb[0].mxu0
      %v4383 = vadd.f32 0.0, %v4382
      %v4384 = vpop.f32.mrb[0].mxu0
      %4385 = vmatprep.mubr.f32.mxu0 0.0
      %4386 = vmatmul.mubr.f32.gmra.mrb[0].mxu0 %v4237
      %v4387 = vpop.f32.mrb[0].mxu0
      %v4388 = vadd.f32 0.0, %v4387
      %v4389 = vpop.f32.mrb[0].mxu0
      %4390 = vmatprep.mubr.f32.mxu0 0.0
      %4391 = vmatmul.mubr.f32.gmra.mrb[0].mxu0 %v4239
      %v4392 = vpop.f32.mrb[0].mxu0
      %v4393 = vadd.f32 0.0, %v4392
      %v4394 = vpop.f32.mrb[0].mxu0
      %4395 = vmatprep.mubr.f32.mxu0 0.0
      %4396 = vmatmul.mubr.f32.gmra.mrb[0].mxu0 %v4241
      %v4397 = vpop.f32.mrb[0].mxu0
      %v4398 = vadd.f32 0.0, %v4397
      %v4399 = vpop.f32.mrb[0].mxu0
      %4400 = vmatprep.mubr.f32.mxu0 0.0
      %4401 = vmatmul.mubr.f32.gmra.mrb[0].mxu0 %v4243
      %v4402 = vpop.f32.mrb[0].mxu0
      %v4403 = vadd.f32 0.0, %v4402
      %v4404 = vpop.f32.mrb[0].mxu0
      %4405 = vmatprep.mubr.f32.mxu0 0.0
      %4406 = vmatmul.mubr.f32.gmra.mrb[0].mxu0 %v4245
      %v4407 = vpop.f32.mrb[0].mxu0
      %v4408 = vadd.f32 0.0, %v4407
      %v4409 = vpop.f32.mrb[0].mxu0
      %4410 = vmatprep.mubr.f32.mxu0 0.0
      %4411 = vmatmul.mubr.f32.gmra.mrb[0].mxu0 %v4247
      %v4412 = vpop.f32.mrb[0].mxu0
      %v4413 = vadd.f32 0.0, %v4412
      %v4414 = vpop.f32.mrb[0].mxu0
      %4415 = vmatprep.mubr.f32.mxu0 0.0
      %4416 = vmatmul.mubr.f32.gmra.mrb[0].mxu0 %v4249
      %v4417 = vpop.f32.mrb[0].mxu0
      %v4418 = vadd.f32 0.0, %v4417
      %v4419 = vpop.f32.mrb[0].mxu0
      %4420 = vmatprep.mubr.f32.mxu0 0.0
      %4421 = vmatmul.mubr.f32.gmra.mrb[0].mxu0 %v4251
      %v4422 = vpop.f32.mrb[0].mxu0
      %v4423 = vadd.f32 0.0, %v4422
      %v4424 = vpop.f32.mrb[0].mxu0
      %4425 = vmatprep.mubr.f32.mxu0 0.0
      %4426 = vmatmul.mubr.f32.gmra.mrb[0].mxu0 %v4253
      %v4427 = vpop.f32.mrb[0].mxu0
      %v4428 = vadd.f32 0.0, %v4427
      %v4429 = vpop.f32.mrb[0].mxu0
      %4430 = vmatprep.mubr.f32.mxu0 0.0
      %4431 = vmatmul.mubr.f32.gmra.mrb[0].mxu0 %v4255
      %v4432 = vpop.f32.mrb[0].mxu0
      %v4433 = vadd.f32 0.0, %v4432
      %v4434 = vpop.f32.mrb[0].mxu0
      %4435 = vmatprep.mubr.f32.mxu0 0.0
      %4436 = vmatmul.mubr.f32.gmra.mrb[0].mxu0 %v4257
      %v4437 = vpop.f32.mrb[0].mxu0
      %v4438 = vadd.f32 0.0, %v4437
      %v4439 = vpop.f32.mrb[0].mxu0
      %4440 = vmatprep.mubr.f32.mxu0 0.0
      %4441 = vmatmul.mubr.f32.gmra.mrb[0].mxu0 %v4259
      %v4442 = vpop.f32.mrb[0].mxu0
      %v4443 = vadd.f32 0.0, %v4442
      %v4444 = vpop.f32.mrb[0].mxu0
      %4445 = vdwg.mxu0
      %v4446 = vadd.f32 %v4139, %v4328
      %v4447 = vadd.f32 %v4140, %v4333
      %v4448 = vadd.f32 %v4141, %v4338
      %v4449 = vadd.f32 %v4142, %v4343
      %v4450 = vadd.f32 %v4143, %v4348
      %v4451 = vadd.f32 %v4144, %v4353
      %v4452 = vadd.f32 %v4145, %v4358
      %v4453 = vadd.f32 %v4146, %v4363
      %v4454 = vadd.f32 %v4147, %v4368
      %v4455 = vadd.f32 %v4148, %v4373
      %v4456 = vadd.f32 %v4149, %v4378
      %v4457 = vadd.f32 %v4150, %v4383
      %v4458 = vadd.f32 %v4151, %v4388
      %v4459 = vadd.f32 %v4152, %v4393
      %v4460 = vadd.f32 %v4153, %v4398
      %v4461 = vadd.f32 %v4154, %v4403
      %v4462 = vadd.f32 %v4155, %v4408
      %v4463 = vadd.f32 %v4156, %v4413
      %v4464 = vadd.f32 %v4157, %v4418
      %v4465 = vadd.f32 %v4158, %v4423
      %v4466 = vadd.f32 %v4159, %v4428
      %v4467 = vadd.f32 %v4160, %v4433
      %v4468 = vadd.f32 %v4161, %v4438
      %v4469 = vadd.f32 %v4162, %v4443
      %v4470 = vlaneseq
      %v4471 = vshrl.u32 %v4470, 7
      %v4472 = vsub.s32 0, %v4471
      %v4473 = vrot.slane %v1730, %v4472
      %v4474 = vmul.f32 %v4446, %v4473
      %v4475 = vmul.f32 %v4447, %v4473
      %v4476 = vmul.f32 %v4448, %v4473
      %v4477 = vmul.f32 %v4449, %v4473
      %v4478 = vmul.f32 %v4450, %v4473
      %v4479 = vmul.f32 %v4451, %v4473
      %v4480 = vmul.f32 %v4452, %v4473
      %v4481 = vmul.f32 %v4453, %v4473
      %v4482 = vmul.f32 %v4454, %v4473
      %v4483 = vmul.f32 %v4455, %v4473
      %v4484 = vmul.f32 %v4456, %v4473
      %v4485 = vmul.f32 %v4457, %v4473
      %v4486 = vmul.f32 %v4458, %v4473
      %v4487 = vmul.f32 %v4459, %v4473
      %v4488 = vmul.f32 %v4460, %v4473
      %v4489 = vmul.f32 %v4461, %v4473
      %v4490 = vmul.f32 %v4462, %v4473
      %v4491 = vmul.f32 %v4463, %v4473
      %v4492 = vmul.f32 %v4464, %v4473
      %v4493 = vmul.f32 %v4465, %v4473
      %v4494 = vmul.f32 %v4466, %v4473
      %v4495 = vmul.f32 %v4467, %v4473
      %v4496 = vmul.f32 %v4468, %v4473
      %v4497 = vmul.f32 %v4469, %v4473
      %v4498 = vlaneseq
      %v4499 = vshrl.u32 %v4498, 7
      %v4500 = vsub.s32 0, %v4499
      %v4501 = vrot.slane %v1731, %v4500
      %v4502 = vadd.f32 %v4474, %v4501
      %v4503 = vadd.f32 %v4475, %v4501
      %v4504 = vadd.f32 %v4476, %v4501
      %v4505 = vadd.f32 %v4477, %v4501
      %v4506 = vadd.f32 %v4478, %v4501
      %v4507 = vadd.f32 %v4479, %v4501
      %v4508 = vadd.f32 %v4480, %v4501
      %v4509 = vadd.f32 %v4481, %v4501
      %v4510 = vadd.f32 %v4482, %v4501
      %v4511 = vadd.f32 %v4483, %v4501
      %v4512 = vadd.f32 %v4484, %v4501
      %v4513 = vadd.f32 %v4485, %v4501
      %v4514 = vadd.f32 %v4486, %v4501
      %v4515 = vadd.f32 %v4487, %v4501
      %v4516 = vadd.f32 %v4488, %v4501
      %v4517 = vadd.f32 %v4489, %v4501
      %v4518 = vadd.f32 %v4490, %v4501
      %v4519 = vadd.f32 %v4491, %v4501
      %v4520 = vadd.f32 %v4492, %v4501
      %v4521 = vadd.f32 %v4493, %v4501
      %v4522 = vadd.f32 %v4494, %v4501
      %v4523 = vadd.f32 %v4495, %v4501
      %v4524 = vadd.f32 %v4496, %v4501
      %v4525 = vadd.f32 %v4497, %v4501
      %v4526 = vmul.f32 %v4502, 0.5
      %v4527 = vmul.f32 %v4503, 0.5
      %v4528 = vmul.f32 %v4504, 0.5
      %v4529 = vmul.f32 %v4505, 0.5
      %v4530 = vmul.f32 %v4506, 0.5
      %v4531 = vmul.f32 %v4507, 0.5
      %v4532 = vmul.f32 %v4508, 0.5
      %v4533 = vmul.f32 %v4509, 0.5
      %v4534 = vmul.f32 %v4510, 0.5
      %v4535 = vmul.f32 %v4511, 0.5
      %v4536 = vmul.f32 %v4512, 0.5
      %v4537 = vmul.f32 %v4513, 0.5
      %v4538 = vmul.f32 %v4514, 0.5
      %v4539 = vmul.f32 %v4515, 0.5
      %v4540 = vmul.f32 %v4516, 0.5
      %v4541 = vmul.f32 %v4517, 0.5
      %v4542 = vmul.f32 %v4518, 0.5
      %v4543 = vmul.f32 %v4519, 0.5
      %v4544 = vmul.f32 %v4520, 0.5
      %v4545 = vmul.f32 %v4521, 0.5
      %v4546 = vmul.f32 %v4522, 0.5
      %v4547 = vmul.f32 %v4523, 0.5
      %v4548 = vmul.f32 %v4524, 0.5
      %v4549 = vmul.f32 %v4525, 0.5
      %v4550 = vmul.f32 %v4502, 0.70710677
      %v4551 = vmul.f32 %v4503, 0.70710677
      %v4552 = vmul.f32 %v4504, 0.70710677
      %v4553 = vmul.f32 %v4505, 0.70710677
      %v4554 = vmul.f32 %v4506, 0.70710677
      %v4555 = vmul.f32 %v4507, 0.70710677
      %v4556 = vmul.f32 %v4508, 0.70710677
      %v4557 = vmul.f32 %v4509, 0.70710677
      %v4558 = vmul.f32 %v4510, 0.70710677
      %v4559 = vmul.f32 %v4511, 0.70710677
      %v4560 = vmul.f32 %v4512, 0.70710677
      %v4561 = vmul.f32 %v4513, 0.70710677
      %v4562 = vmul.f32 %v4514, 0.70710677
      %v4563 = vmul.f32 %v4515, 0.70710677
      %v4564 = vmul.f32 %v4516, 0.70710677
      %v4565 = vmul.f32 %v4517, 0.70710677
      %v4566 = vmul.f32 %v4518, 0.70710677
      %v4567 = vmul.f32 %v4519, 0.70710677
      %v4568 = vmul.f32 %v4520, 0.70710677
      %v4569 = vmul.f32 %v4521, 0.70710677
      %v4570 = vmul.f32 %v4522, 0.70710677
      %v4571 = vmul.f32 %v4523, 0.70710677
      %v4572 = vmul.f32 %v4524, 0.70710677
      %v4573 = vmul.f32 %v4525, 0.70710677
      %v4574 = verf.f32.pop %v4550
      %v4575 = verf.f32.pop %v4551
      %v4576 = verf.f32.pop %v4552
      %v4577 = verf.f32.pop %v4553
      %v4578 = verf.f32.pop %v4554
      %v4579 = verf.f32.pop %v4555
      %v4580 = verf.f32.pop %v4556
      %v4581 = verf.f32.pop %v4557
      %v4582 = verf.f32.pop %v4558
      %v4583 = verf.f32.pop %v4559
      %v4584 = verf.f32.pop %v4560
      %v4585 = verf.f32.pop %v4561
      %v4586 = verf.f32.pop %v4562
      %v4587 = verf.f32.pop %v4563
      %v4588 = verf.f32.pop %v4564
      %v4589 = verf.f32.pop %v4565
      %v4590 = verf.f32.pop %v4566
      %v4591 = verf.f32.pop %v4567
      %v4592 = verf.f32.pop %v4568
      %v4593 = verf.f32.pop %v4569
      %v4594 = verf.f32.pop %v4570
      %v4595 = verf.f32.pop %v4571
      %v4596 = verf.f32.pop %v4572
      %v4597 = verf.f32.pop %v4573
      %v4598 = vadd.f32 %v4574, 1.0
      %v4599 = vadd.f32 %v4575, 1.0
      %v4600 = vadd.f32 %v4576, 1.0
      %v4601 = vadd.f32 %v4577, 1.0
      %v4602 = vadd.f32 %v4578, 1.0
      %v4603 = vadd.f32 %v4579, 1.0
      %v4604 = vadd.f32 %v4580, 1.0
      %v4605 = vadd.f32 %v4581, 1.0
      %v4606 = vadd.f32 %v4582, 1.0
      %v4607 = vadd.f32 %v4583, 1.0
      %v4608 = vadd.f32 %v4584, 1.0
      %v4609 = vadd.f32 %v4585, 1.0
      %v4610 = vadd.f32 %v4586, 1.0
      %v4611 = vadd.f32 %v4587, 1.0
      %v4612 = vadd.f32 %v4588, 1.0
      %v4613 = vadd.f32 %v4589, 1.0
      %v4614 = vadd.f32 %v4590, 1.0
      %v4615 = vadd.f32 %v4591, 1.0
      %v4616 = vadd.f32 %v4592, 1.0
      %v4617 = vadd.f32 %v4593, 1.0
      %v4618 = vadd.f32 %v4594, 1.0
      %v4619 = vadd.f32 %v4595, 1.0
      %v4620 = vadd.f32 %v4596, 1.0
      %v4621 = vadd.f32 %v4597, 1.0
      %v4622 = vmul.f32 %v4526, %v4598
      %v4623 = vmul.f32 %v4527, %v4599
      %v4624 = vmul.f32 %v4528, %v4600
      %v4625 = vmul.f32 %v4529, %v4601
      %v4626 = vmul.f32 %v4530, %v4602
      %v4627 = vmul.f32 %v4531, %v4603
      %v4628 = vmul.f32 %v4532, %v4604
      %v4629 = vmul.f32 %v4533, %v4605
      %v4630 = vmul.f32 %v4534, %v4606
      %v4631 = vmul.f32 %v4535, %v4607
      %v4632 = vmul.f32 %v4536, %v4608
      %v4633 = vmul.f32 %v4537, %v4609
      %v4634 = vmul.f32 %v4538, %v4610
      %v4635 = vmul.f32 %v4539, %v4611
      %v4636 = vmul.f32 %v4540, %v4612
      %v4637 = vmul.f32 %v4541, %v4613
      %v4638 = vmul.f32 %v4542, %v4614
      %v4639 = vmul.f32 %v4543, %v4615
      %v4640 = vmul.f32 %v4544, %v4616
      %v4641 = vmul.f32 %v4545, %v4617
      %v4642 = vmul.f32 %v4546, %v4618
      %v4643 = vmul.f32 %v4547, %v4619
      %v4644 = vmul.f32 %v4548, %v4620
      %v4645 = vmul.f32 %v4549, %v4621
      %4646 = vst.msk [vmem:[%s224] sm:$0xff] %vm225, %v4622
      %4647 = vst.msk [vmem:[%s224 + $0x8] sm:$0xff] %vm225, %v4623
      %4648 = vst.msk [vmem:[%s224 + $0x10] sm:$0xff] %vm225, %v4624
      %4649 = vst.msk [vmem:[%s224 + $0x18] sm:$0xff] %vm225, %v4625
      %4650 = vst.msk [vmem:[%s224 + $0x20] sm:$0xff] %vm225, %v4626
      %4651 = vst.msk [vmem:[%s224 + $0x28] sm:$0xff] %vm225, %v4627
      %4652 = vst.msk [vmem:[%s224 + $0x30] sm:$0xff] %vm225, %v4628
      %4653 = vst.msk [vmem:[%s224 + $0x38] sm:$0xff] %vm225, %v4629
      %4654 = vst.msk [vmem:[%s224 + $0x40] sm:$0xff] %vm225, %v4630
      %4655 = vst.msk [vmem:[%s224 + $0x48] sm:$0xff] %vm225, %v4631
      %4656 = vst.msk [vmem:[%s224 + $0x50] sm:$0xff] %vm225, %v4632
      %4657 = vst.msk [vmem:[%s224 + $0x58] sm:$0xff] %vm225, %v4633
      %4658 = vst.msk [vmem:[%s224 + $0x60] sm:$0xff] %vm225, %v4634
      %4659 = vst.msk [vmem:[%s224 + $0x68] sm:$0xff] %vm225, %v4635
      %4660 = vst.msk [vmem:[%s224 + $0x70] sm:$0xff] %vm225, %v4636
      %4661 = vst.msk [vmem:[%s224 + $0x78] sm:$0xff] %vm225, %v4637
      %4662 = vst.msk [vmem:[%s224 + $0x80] sm:$0xff] %vm225, %v4638
      %4663 = vst.msk [vmem:[%s224 + $0x88] sm:$0xff] %vm225, %v4639
      %4664 = vst.msk [vmem:[%s224 + $0x90] sm:$0xff] %vm225, %v4640
      %4665 = vst.msk [vmem:[%s224 + $0x98] sm:$0xff] %vm225, %v4641
      %4666 = vst.msk [vmem:[%s224 + $0xa0] sm:$0xff] %vm225, %v4642
      %4667 = vst.msk [vmem:[%s224 + $0xa8] sm:$0xff] %vm225, %v4643
      %4668 = vst.msk [vmem:[%s224 + $0xb0] sm:$0xff] %vm225, %v4644
      %4669 = vst.msk [vmem:[%s224 + $0xb8] sm:$0xff] %vm225, %v4645
      %s4670 = scalar_lea.vmem [#allocation2], 192
      %v4671 = vld [vmem:[%s4670] sm:$0xff]
      %v4672 = vld [vmem:[%s4670 + $0x8] sm:$0xff]
      %v4673 = vld [vmem:[%s4670 + $0x10] sm:$0xff]
      %v4674 = vld [vmem:[%s4670 + $0x18] sm:$0xff]
      %v4675 = vld [vmem:[%s4670 + $0x20] sm:$0xff]
      %v4676 = vld [vmem:[%s4670 + $0x28] sm:$0xff]
      %v4677 = vld [vmem:[%s4670 + $0x30] sm:$0xff]
      %v4678 = vld [vmem:[%s4670 + $0x38] sm:$0xff]
      %v4679 = vld [vmem:[%s4670 + $0x40] sm:$0xff]
      %v4680 = vld [vmem:[%s4670 + $0x48] sm:$0xff]
      %v4681 = vld [vmem:[%s4670 + $0x50] sm:$0xff]
      %v4682 = vld [vmem:[%s4670 + $0x58] sm:$0xff]
      %v4683 = vld [vmem:[%s4670 + $0x60] sm:$0xff]
      %v4684 = vld [vmem:[%s4670 + $0x68] sm:$0xff]
      %v4685 = vld [vmem:[%s4670 + $0x70] sm:$0xff]
      %v4686 = vld [vmem:[%s4670 + $0x78] sm:$0xff]
      %v4687 = vld [vmem:[%s4670 + $0x80] sm:$0xff]
      %v4688 = vld [vmem:[%s4670 + $0x88] sm:$0xff]
      %v4689 = vld [vmem:[%s4670 + $0x90] sm:$0xff]
      %v4690 = vld [vmem:[%s4670 + $0x98] sm:$0xff]
      %v4691 = vld [vmem:[%s4670 + $0xa0] sm:$0xff]
      %v4692 = vld [vmem:[%s4670 + $0xa8] sm:$0xff]
      %v4693 = vld [vmem:[%s4670 + $0xb0] sm:$0xff]
      %v4694 = vld [vmem:[%s4670 + $0xb8] sm:$0xff]
      %v4695 = vld [vmem:[%s4670 + $0xc0] sm:$0xff]
      %v4696 = vld [vmem:[%s4670 + $0xc8] sm:$0xff]
      %v4698 = vsel %vm225, %v4672, 0
      %v4701 = vsel %vm225, %v4673, 0
      %v4704 = vsel %vm225, %v4674, 0
      %v4707 = vsel %vm225, %v4675, 0
      %v4710 = vsel %vm225, %v4676, 0
      %v4713 = vsel %vm225, %v4677, 0
      %v4716 = vsel %vm225, %v4678, 0
      %v4719 = vsel %vm225, %v4679, 0
      %v4722 = vsel %vm225, %v4680, 0
      %v4725 = vsel %vm225, %v4681, 0
      %v4728 = vsel %vm225, %v4682, 0
      %v4731 = vsel %vm225, %v4683, 0
      %v4734 = vsel %vm225, %v4684, 0
      %v4737 = vsel %vm225, %v4685, 0
      %v4740 = vsel %vm225, %v4686, 0
      %v4743 = vsel %vm225, %v4687, 0
      %v4746 = vsel %vm225, %v4688, 0
      %v4749 = vsel %vm225, %v4689, 0
      %v4752 = vsel %vm225, %v4690, 0
      %v4755 = vsel %vm225, %v4691, 0
      %v4758 = vsel %vm225, %v4692, 0
      %v4761 = vsel %vm225, %v4693, 0
      %v4764 = vsel %vm225, %v4694, 0
      %v4767 = vsel %vm225, %v4695, 0
      %4769 = vmatprep.subr.mxu0 0.0
      %4770 = vmatpush1.msra.mxu0 %v1734
      %4771 = vmatprep.subr.mxu0 0.0
      %4772 = vmatpush1.msra.mxu0 0.0
      %4773 = vmatprep.subr.mxu0 0.0
      %4774 = vmatpush1.msra.mxu0 0.0
      %4775 = vmatprep.subr.mxu0 0.0
      %4776 = vmatpush1.msra.mxu0 0.0
      %4777 = vmatprep.subr.mxu0 0.0
      %4778 = vmatpush1.msra.mxu0 0.0
      %4779 = vmatprep.subr.mxu0 0.0
      %4780 = vmatpush1.msra.mxu0 0.0
      %4781 = vmatprep.subr.mxu0 0.0
      %4782 = vmatpush1.msra.mxu0 0.0
      %4783 = vmatprep.subr.mxu0 0.0
      %4784 = vmatpush1.msra.mxu0 0.0
      %4785 = vmatprep.subr.mxu0 0.0
      %4786 = vmatpush1.msra.mxu0 0.0
      %4787 = vmatprep.subr.mxu0 0.0
      %4788 = vmatpush1.msra.mxu0 0.0
      %4789 = vmatprep.subr.mxu0 0.0
      %4790 = vmatpush1.msra.mxu0 0.0
      %4791 = vmatprep.subr.mxu0 0.0
      %4792 = vmatpush1.msra.mxu0 0.0
      %4793 = vmatprep.subr.mxu0 0.0
      %4794 = vmatpush1.msra.mxu0 0.0
      %4795 = vmatprep.subr.mxu0 0.0
      %4796 = vmatpush1.msra.mxu0 0.0
      %4797 = vmatprep.subr.mxu0 0.0
      %4798 = vmatpush1.msra.mxu0 0.0
      %4799 = vmatprep.subr.mxu0 0.0
      %4800 = vmatpush1.msra.mxu0 0.0
      %4801 = vmatprep.subr.mxu0 0.0
      %4802 = vmatpush1.msra.mxu0 0.0
      %4803 = vmatprep.subr.mxu0 0.0
      %4804 = vmatpush1.msra.mxu0 0.0
      %4805 = vmatprep.subr.mxu0 0.0
      %4806 = vmatpush1.msra.mxu0 0.0
      %4807 = vmatprep.subr.mxu0 0.0
      %4808 = vmatpush1.msra.mxu0 0.0
      %4809 = vmatprep.subr.mxu0 0.0
      %4810 = vmatpush1.msra.mxu0 0.0
      %4811 = vmatprep.subr.mxu0 0.0
      %4812 = vmatpush1.msra.mxu0 0.0
      %4813 = vmatprep.subr.mxu0 0.0
      %4814 = vmatpush1.msra.mxu0 0.0
      %4815 = vmatprep.subr.mxu0 0.0
      %4816 = vmatpush1.msra.mxu0 0.0
      %4817 = vmatprep.subr.mxu0 0.0
      %4818 = vmatpush1.msra.mxu0 0.0
      %4819 = vmatprep.subr.mxu0 0.0
      %4820 = vmatpush1.msra.mxu0 0.0
      %4821 = vmatprep.subr.mxu0 0.0
      %4822 = vmatpush1.msra.mxu0 0.0
      %4823 = vmatprep.subr.mxu0 0.0
      %4824 = vmatpush1.msra.mxu0 0.0
      %4825 = vmatprep.subr.mxu0 0.0
      %4826 = vmatpush1.msra.mxu0 0.0
      %4827 = vmatprep.subr.mxu0 0.0
      %4828 = vmatpush1.msra.mxu0 0.0
      %4829 = vmatprep.subr.mxu0 0.0
      %4830 = vmatpush1.msra.mxu0 0.0
      %4831 = vmatprep.subr.mxu0 0.0
      %4832 = vmatpush1.msra.mxu0 0.0
      %4833 = vmatprep.mubr.f32.mxu0 0.0
      %4834 = vmatmul.mubr.f32.gmra.mrb[0].mxu0 %v4698
      %v4835 = vpop.f32.mrb[0].mxu0
      %v4836 = vadd.f32 0.0, %v4835
      %v4837 = vpop.f32.mrb[0].mxu0
      %4838 = vmatprep.mubr.f32.mxu0 0.0
      %4839 = vmatmul.mubr.f32.gmra.mrb[0].mxu0 %v4701
      %v4840 = vpop.f32.mrb[0].mxu0
      %v4841 = vadd.f32 0.0, %v4840
      %v4842 = vpop.f32.mrb[0].mxu0
      %4843 = vmatprep.mubr.f32.mxu0 0.0
      %4844 = vmatmul.mubr.f32.gmra.mrb[0].mxu0 %v4704
      %v4845 = vpop.f32.mrb[0].mxu0
      %v4846 = vadd.f32 0.0, %v4845
      %v4847 = vpop.f32.mrb[0].mxu0
      %4848 = vmatprep.mubr.f32.mxu0 0.0
      %4849 = vmatmul.mubr.f32.gmra.mrb[0].mxu0 %v4707
      %v4850 = vpop.f32.mrb[0].mxu0
      %v4851 = vadd.f32 0.0, %v4850
      %v4852 = vpop.f32.mrb[0].mxu0
      %4853 = vmatprep.mubr.f32.mxu0 0.0
      %4854 = vmatmul.mubr.f32.gmra.mrb[0].mxu0 %v4710
      %v4855 = vpop.f32.mrb[0].mxu0
      %v4856 = vadd.f32 0.0, %v4855
      %v4857 = vpop.f32.mrb[0].mxu0
      %4858 = vmatprep.mubr.f32.mxu0 0.0
      %4859 = vmatmul.mubr.f32.gmra.mrb[0].mxu0 %v4713
      %v4860 = vpop.f32.mrb[0].mxu0
      %v4861 = vadd.f32 0.0, %v4860
      %v4862 = vpop.f32.mrb[0].mxu0
      %4863 = vmatprep.mubr.f32.mxu0 0.0
      %4864 = vmatmul.mubr.f32.gmra.mrb[0].mxu0 %v4716
      %v4865 = vpop.f32.mrb[0].mxu0
      %v4866 = vadd.f32 0.0, %v4865
      %v4867 = vpop.f32.mrb[0].mxu0
      %4868 = vmatprep.mubr.f32.mxu0 0.0
      %4869 = vmatmul.mubr.f32.gmra.mrb[0].mxu0 %v4719
      %v4870 = vpop.f32.mrb[0].mxu0
      %v4871 = vadd.f32 0.0, %v4870
      %v4872 = vpop.f32.mrb[0].mxu0
      %4873 = vmatprep.mubr.f32.mxu0 0.0
      %4874 = vmatmul.mubr.f32.gmra.mrb[0].mxu0 %v4722
      %v4875 = vpop.f32.mrb[0].mxu0
      %v4876 = vadd.f32 0.0, %v4875
      %v4877 = vpop.f32.mrb[0].mxu0
      %4878 = vmatprep.mubr.f32.mxu0 0.0
      %4879 = vmatmul.mubr.f32.gmra.mrb[0].mxu0 %v4725
      %v4880 = vpop.f32.mrb[0].mxu0
      %v4881 = vadd.f32 0.0, %v4880
      %v4882 = vpop.f32.mrb[0].mxu0
      %4883 = vmatprep.mubr.f32.mxu0 0.0
      %4884 = vmatmul.mubr.f32.gmra.mrb[0].mxu0 %v4728
      %v4885 = vpop.f32.mrb[0].mxu0
      %v4886 = vadd.f32 0.0, %v4885
      %v4887 = vpop.f32.mrb[0].mxu0
      %4888 = vmatprep.mubr.f32.mxu0 0.0
      %4889 = vmatmul.mubr.f32.gmra.mrb[0].mxu0 %v4731
      %v4890 = vpop.f32.mrb[0].mxu0
      %v4891 = vadd.f32 0.0, %v4890
      %v4892 = vpop.f32.mrb[0].mxu0
      %4893 = vmatprep.mubr.f32.mxu0 0.0
      %4894 = vmatmul.mubr.f32.gmra.mrb[0].mxu0 %v4734
      %v4895 = vpop.f32.mrb[0].mxu0
      %v4896 = vadd.f32 0.0, %v4895
      %v4897 = vpop.f32.mrb[0].mxu0
      %4898 = vmatprep.mubr.f32.mxu0 0.0
      %4899 = vmatmul.mubr.f32.gmra.mrb[0].mxu0 %v4737
      %v4900 = vpop.f32.mrb[0].mxu0
      %v4901 = vadd.f32 0.0, %v4900
      %v4902 = vpop.f32.mrb[0].mxu0
      %4903 = vmatprep.mubr.f32.mxu0 0.0
      %4904 = vmatmul.mubr.f32.gmra.mrb[0].mxu0 %v4740
      %v4905 = vpop.f32.mrb[0].mxu0
      %v4906 = vadd.f32 0.0, %v4905
      %v4907 = vpop.f32.mrb[0].mxu0
      %4908 = vmatprep.mubr.f32.mxu0 0.0
      %4909 = vmatmul.mubr.f32.gmra.mrb[0].mxu0 %v4743
      %v4910 = vpop.f32.mrb[0].mxu0
      %v4911 = vadd.f32 0.0, %v4910
      %v4912 = vpop.f32.mrb[0].mxu0
      %4913 = vmatprep.mubr.f32.mxu0 0.0
      %4914 = vmatmul.mubr.f32.gmra.mrb[0].mxu0 %v4746
      %v4915 = vpop.f32.mrb[0].mxu0
      %v4916 = vadd.f32 0.0, %v4915
      %v4917 = vpop.f32.mrb[0].mxu0
      %4918 = vmatprep.mubr.f32.mxu0 0.0
      %4919 = vmatmul.mubr.f32.gmra.mrb[0].mxu0 %v4749
      %v4920 = vpop.f32.mrb[0].mxu0
      %v4921 = vadd.f32 0.0, %v4920
      %v4922 = vpop.f32.mrb[0].mxu0
      %4923 = vmatprep.mubr.f32.mxu0 0.0
      %4924 = vmatmul.mubr.f32.gmra.mrb[0].mxu0 %v4752
      %v4925 = vpop.f32.mrb[0].mxu0
      %v4926 = vadd.f32 0.0, %v4925
      %v4927 = vpop.f32.mrb[0].mxu0
      %4928 = vmatprep.mubr.f32.mxu0 0.0
      %4929 = vmatmul.mubr.f32.gmra.mrb[0].mxu0 %v4755
      %v4930 = vpop.f32.mrb[0].mxu0
      %v4931 = vadd.f32 0.0, %v4930
      %v4932 = vpop.f32.mrb[0].mxu0
      %4933 = vmatprep.mubr.f32.mxu0 0.0
      %4934 = vmatmul.mubr.f32.gmra.mrb[0].mxu0 %v4758
      %v4935 = vpop.f32.mrb[0].mxu0
      %v4936 = vadd.f32 0.0, %v4935
      %v4937 = vpop.f32.mrb[0].mxu0
      %4938 = vmatprep.mubr.f32.mxu0 0.0
      %4939 = vmatmul.mubr.f32.gmra.mrb[0].mxu0 %v4761
      %v4940 = vpop.f32.mrb[0].mxu0
      %v4941 = vadd.f32 0.0, %v4940
      %v4942 = vpop.f32.mrb[0].mxu0
      %4943 = vmatprep.mubr.f32.mxu0 0.0
      %4944 = vmatmul.mubr.f32.gmra.mrb[0].mxu0 %v4764
      %v4945 = vpop.f32.mrb[0].mxu0
      %v4946 = vadd.f32 0.0, %v4945
      %v4947 = vpop.f32.mrb[0].mxu0
      %4948 = vmatprep.mubr.f32.mxu0 0.0
      %4949 = vmatmul.mubr.f32.gmra.mrb[0].mxu0 %v4767
      %v4950 = vpop.f32.mrb[0].mxu0
      %v4951 = vadd.f32 0.0, %v4950
      %v4952 = vpop.f32.mrb[0].mxu0
      %4953 = vdwg.mxu0
      %v4955 = vrot.slane %v4671, 7
      %v4956 = vrot.slane %v4672, 7
      %v4957 = vsel %vm2033, %v4955, %v4956
      %v4958 = vrot.slane %v4673, 7
      %v4959 = vsel %vm2033, %v4956, %v4958
      %v4960 = vrot.slane %v4674, 7
      %v4961 = vsel %vm2033, %v4958, %v4960
      %v4962 = vrot.slane %v4675, 7
      %v4963 = vsel %vm2033, %v4960, %v4962
      %v4964 = vrot.slane %v4676, 7
      %v4965 = vsel %vm2033, %v4962, %v4964
      %v4966 = vrot.slane %v4677, 7
      %v4967 = vsel %vm2033, %v4964, %v4966
      %v4968 = vrot.slane %v4678, 7
      %v4969 = vsel %vm2033, %v4966, %v4968
      %v4970 = vrot.slane %v4679, 7
      %v4971 = vsel %vm2033, %v4968, %v4970
      %v4972 = vrot.slane %v4680, 7
      %v4973 = vsel %vm2033, %v4970, %v4972
      %v4974 = vrot.slane %v4681, 7
      %v4975 = vsel %vm2033, %v4972, %v4974
      %v4976 = vrot.slane %v4682, 7
      %v4977 = vsel %vm2033, %v4974, %v4976
      %v4978 = vrot.slane %v4683, 7
      %v4979 = vsel %vm2033, %v4976, %v4978
      %v4980 = vrot.slane %v4684, 7
      %v4981 = vsel %vm2033, %v4978, %v4980
      %v4982 = vrot.slane %v4685, 7
      %v4983 = vsel %vm2033, %v4980, %v4982
      %v4984 = vrot.slane %v4686, 7
      %v4985 = vsel %vm2033, %v4982, %v4984
      %v4986 = vrot.slane %v4687, 7
      %v4987 = vsel %vm2033, %v4984, %v4986
      %v4988 = vrot.slane %v4688, 7
      %v4989 = vsel %vm2033, %v4986, %v4988
      %v4990 = vrot.slane %v4689, 7
      %v4991 = vsel %vm2033, %v4988, %v4990
      %v4992 = vrot.slane %v4690, 7
      %v4993 = vsel %vm2033, %v4990, %v4992
      %v4994 = vrot.slane %v4691, 7
      %v4995 = vsel %vm2033, %v4992, %v4994
      %v4996 = vrot.slane %v4692, 7
      %v4997 = vsel %vm2033, %v4994, %v4996
      %v4998 = vrot.slane %v4693, 7
      %v4999 = vsel %vm2033, %v4996, %v4998
      %v5000 = vrot.slane %v4694, 7
      %v5001 = vsel %vm2033, %v4998, %v5000
      %v5002 = vrot.slane %v4695, 7
      %v5003 = vsel %vm2033, %v5000, %v5002
      %v5004 = vsel %vm225, %v4957, 0
      %v5006 = vsel %vm225, %v4959, 0
      %v5008 = vsel %vm225, %v4961, 0
      %v5010 = vsel %vm225, %v4963, 0
      %v5012 = vsel %vm225, %v4965, 0
      %v5014 = vsel %vm225, %v4967, 0
      %v5016 = vsel %vm225, %v4969, 0
      %v5018 = vsel %vm225, %v4971, 0
      %v5020 = vsel %vm225, %v4973, 0
      %v5022 = vsel %vm225, %v4975, 0
      %v5024 = vsel %vm225, %v4977, 0
      %v5026 = vsel %vm225, %v4979, 0
      %v5028 = vsel %vm225, %v4981, 0
      %v5030 = vsel %vm225, %v4983, 0
      %v5032 = vsel %vm225, %v4985, 0
      %v5034 = vsel %vm225, %v4987, 0
      %v5036 = vsel %vm225, %v4989, 0
      %v5038 = vsel %vm225, %v4991, 0
      %v5040 = vsel %vm225, %v4993, 0
      %v5042 = vsel %vm225, %v4995, 0
      %v5044 = vsel %vm225, %v4997, 0
      %v5046 = vsel %vm225, %v4999, 0
      %v5048 = vsel %vm225, %v5001, 0
      %v5050 = vsel %vm225, %v5003, 0
      %5052 = vmatprep.subr.mxu0 0.0
      %5053 = vmatpush1.msra.mxu0 %v1732
      %5054 = vmatprep.subr.mxu0 0.0
      %5055 = vmatpush1.msra.mxu0 0.0
      %5056 = vmatprep.subr.mxu0 0.0
      %5057 = vmatpush1.msra.mxu0 0.0
      %5058 = vmatprep.subr.mxu0 0.0
      %5059 = vmatpush1.msra.mxu0 0.0
      %5060 = vmatprep.subr.mxu0 0.0
      %5061 = vmatpush1.msra.mxu0 0.0
      %5062 = vmatprep.subr.mxu0 0.0
      %5063 = vmatpush1.msra.mxu0 0.0
      %5064 = vmatprep.subr.mxu0 0.0
      %5065 = vmatpush1.msra.mxu0 0.0
      %5066 = vmatprep.subr.mxu0 0.0
      %5067 = vmatpush1.msra.mxu0 0.0
      %5068 = vmatprep.subr.mxu0 0.0
      %5069 = vmatpush1.msra.mxu0 0.0
      %5070 = vmatprep.subr.mxu0 0.0
      %5071 = vmatpush1.msra.mxu0 0.0
      %5072 = vmatprep.subr.mxu0 0.0
      %5073 = vmatpush1.msra.mxu0 0.0
      %5074 = vmatprep.subr.mxu0 0.0
      %5075 = vmatpush1.msra.mxu0 0.0
      %5076 = vmatprep.subr.mxu0 0.0
      %5077 = vmatpush1.msra.mxu0 0.0
      %5078 = vmatprep.subr.mxu0 0.0
      %5079 = vmatpush1.msra.mxu0 0.0
      %5080 = vmatprep.subr.mxu0 0.0
      %5081 = vmatpush1.msra.mxu0 0.0
      %5082 = vmatprep.subr.mxu0 0.0
      %5083 = vmatpush1.msra.mxu0 0.0
      %5084 = vmatprep.subr.mxu0 0.0
      %5085 = vmatpush1.msra.mxu0 0.0
      %5086 = vmatprep.subr.mxu0 0.0
      %5087 = vmatpush1.msra.mxu0 0.0
      %5088 = vmatprep.subr.mxu0 0.0
      %5089 = vmatpush1.msra.mxu0 0.0
      %5090 = vmatprep.subr.mxu0 0.0
      %5091 = vmatpush1.msra.mxu0 0.0
      %5092 = vmatprep.subr.mxu0 0.0
      %5093 = vmatpush1.msra.mxu0 0.0
      %5094 = vmatprep.subr.mxu0 0.0
      %5095 = vmatpush1.msra.mxu0 0.0
      %5096 = vmatprep.subr.mxu0 0.0
      %5097 = vmatpush1.msra.mxu0 0.0
      %5098 = vmatprep.subr.mxu0 0.0
      %5099 = vmatpush1.msra.mxu0 0.0
      %5100 = vmatprep.subr.mxu0 0.0
      %5101 = vmatpush1.msra.mxu0 0.0
      %5102 = vmatprep.subr.mxu0 0.0
      %5103 = vmatpush1.msra.mxu0 0.0
      %5104 = vmatprep.subr.mxu0 0.0
      %5105 = vmatpush1.msra.mxu0 0.0
      %5106 = vmatprep.subr.mxu0 0.0
      %5107 = vmatpush1.msra.mxu0 0.0
      %5108 = vmatprep.subr.mxu0 0.0
      %5109 = vmatpush1.msra.mxu0 0.0
      %5110 = vmatprep.subr.mxu0 0.0
      %5111 = vmatpush1.msra.mxu0 0.0
      %5112 = vmatprep.subr.mxu0 0.0
      %5113 = vmatpush1.msra.mxu0 0.0
      %5114 = vmatprep.subr.mxu0 0.0
      %5115 = vmatpush1.msra.mxu0 0.0
      %5116 = vmatprep.mubr.f32.mxu0 0.0
      %5117 = vmatmul.mubr.f32.gmra.mrb[0].mxu0 %v5004
      %v5118 = vpop.f32.mrb[0].mxu0
      %v5119 = vadd.f32 %v4836, %v5118
      %v5120 = vpop.f32.mrb[0].mxu0
      %5121 = vmatprep.mubr.f32.mxu0 0.0
      %5122 = vmatmul.mubr.f32.gmra.mrb[0].mxu0 %v5006
      %v5123 = vpop.f32.mrb[0].mxu0
      %v5124 = vadd.f32 %v4841, %v5123
      %v5125 = vpop.f32.mrb[0].mxu0
      %5126 = vmatprep.mubr.f32.mxu0 0.0
      %5127 = vmatmul.mubr.f32.gmra.mrb[0].mxu0 %v5008
      %v5128 = vpop.f32.mrb[0].mxu0
      %v5129 = vadd.f32 %v4846, %v5128
      %v5130 = vpop.f32.mrb[0].mxu0
      %5131 = vmatprep.mubr.f32.mxu0 0.0
      %5132 = vmatmul.mubr.f32.gmra.mrb[0].mxu0 %v5010
      %v5133 = vpop.f32.mrb[0].mxu0
      %v5134 = vadd.f32 %v4851, %v5133
      %v5135 = vpop.f32.mrb[0].mxu0
      %5136 = vmatprep.mubr.f32.mxu0 0.0
      %5137 = vmatmul.mubr.f32.gmra.mrb[0].mxu0 %v5012
      %v5138 = vpop.f32.mrb[0].mxu0
      %v5139 = vadd.f32 %v4856, %v5138
      %v5140 = vpop.f32.mrb[0].mxu0
      %5141 = vmatprep.mubr.f32.mxu0 0.0
      %5142 = vmatmul.mubr.f32.gmra.mrb[0].mxu0 %v5014
      %v5143 = vpop.f32.mrb[0].mxu0
      %v5144 = vadd.f32 %v4861, %v5143
      %v5145 = vpop.f32.mrb[0].mxu0
      %5146 = vmatprep.mubr.f32.mxu0 0.0
      %5147 = vmatmul.mubr.f32.gmra.mrb[0].mxu0 %v5016
      %v5148 = vpop.f32.mrb[0].mxu0
      %v5149 = vadd.f32 %v4866, %v5148
      %v5150 = vpop.f32.mrb[0].mxu0
      %5151 = vmatprep.mubr.f32.mxu0 0.0
      %5152 = vmatmul.mubr.f32.gmra.mrb[0].mxu0 %v5018
      %v5153 = vpop.f32.mrb[0].mxu0
      %v5154 = vadd.f32 %v4871, %v5153
      %v5155 = vpop.f32.mrb[0].mxu0
      %5156 = vmatprep.mubr.f32.mxu0 0.0
      %5157 = vmatmul.mubr.f32.gmra.mrb[0].mxu0 %v5020
      %v5158 = vpop.f32.mrb[0].mxu0
      %v5159 = vadd.f32 %v4876, %v5158
      %v5160 = vpop.f32.mrb[0].mxu0
      %5161 = vmatprep.mubr.f32.mxu0 0.0
      %5162 = vmatmul.mubr.f32.gmra.mrb[0].mxu0 %v5022
      %v5163 = vpop.f32.mrb[0].mxu0
      %v5164 = vadd.f32 %v4881, %v5163
      %v5165 = vpop.f32.mrb[0].mxu0
      %5166 = vmatprep.mubr.f32.mxu0 0.0
      %5167 = vmatmul.mubr.f32.gmra.mrb[0].mxu0 %v5024
      %v5168 = vpop.f32.mrb[0].mxu0
      %v5169 = vadd.f32 %v4886, %v5168
      %v5170 = vpop.f32.mrb[0].mxu0
      %5171 = vmatprep.mubr.f32.mxu0 0.0
      %5172 = vmatmul.mubr.f32.gmra.mrb[0].mxu0 %v5026
      %v5173 = vpop.f32.mrb[0].mxu0
      %v5174 = vadd.f32 %v4891, %v5173
      %v5175 = vpop.f32.mrb[0].mxu0
      %5176 = vmatprep.mubr.f32.mxu0 0.0
      %5177 = vmatmul.mubr.f32.gmra.mrb[0].mxu0 %v5028
      %v5178 = vpop.f32.mrb[0].mxu0
      %v5179 = vadd.f32 %v4896, %v5178
      %v5180 = vpop.f32.mrb[0].mxu0
      %5181 = vmatprep.mubr.f32.mxu0 0.0
      %5182 = vmatmul.mubr.f32.gmra.mrb[0].mxu0 %v5030
      %v5183 = vpop.f32.mrb[0].mxu0
      %v5184 = vadd.f32 %v4901, %v5183
      %v5185 = vpop.f32.mrb[0].mxu0
      %5186 = vmatprep.mubr.f32.mxu0 0.0
      %5187 = vmatmul.mubr.f32.gmra.mrb[0].mxu0 %v5032
      %v5188 = vpop.f32.mrb[0].mxu0
      %v5189 = vadd.f32 %v4906, %v5188
      %v5190 = vpop.f32.mrb[0].mxu0
      %5191 = vmatprep.mubr.f32.mxu0 0.0
      %5192 = vmatmul.mubr.f32.gmra.mrb[0].mxu0 %v5034
      %v5193 = vpop.f32.mrb[0].mxu0
      %v5194 = vadd.f32 %v4911, %v5193
      %v5195 = vpop.f32.mrb[0].mxu0
      %5196 = vmatprep.mubr.f32.mxu0 0.0
      %5197 = vmatmul.mubr.f32.gmra.mrb[0].mxu0 %v5036
      %v5198 = vpop.f32.mrb[0].mxu0
      %v5199 = vadd.f32 %v4916, %v5198
      %v5200 = vpop.f32.mrb[0].mxu0
      %5201 = vmatprep.mubr.f32.mxu0 0.0
      %5202 = vmatmul.mubr.f32.gmra.mrb[0].mxu0 %v5038
      %v5203 = vpop.f32.mrb[0].mxu0
      %v5204 = vadd.f32 %v4921, %v5203
      %v5205 = vpop.f32.mrb[0].mxu0
      %5206 = vmatprep.mubr.f32.mxu0 0.0
      %5207 = vmatmul.mubr.f32.gmra.mrb[0].mxu0 %v5040
      %v5208 = vpop.f32.mrb[0].mxu0
      %v5209 = vadd.f32 %v4926, %v5208
      %v5210 = vpop.f32.mrb[0].mxu0
      %5211 = vmatprep.mubr.f32.mxu0 0.0
      %5212 = vmatmul.mubr.f32.gmra.mrb[0].mxu0 %v5042
      %v5213 = vpop.f32.mrb[0].mxu0
      %v5214 = vadd.f32 %v4931, %v5213
      %v5215 = vpop.f32.mrb[0].mxu0
      %5216 = vmatprep.mubr.f32.mxu0 0.0
      %5217 = vmatmul.mubr.f32.gmra.mrb[0].mxu0 %v5044
      %v5218 = vpop.f32.mrb[0].mxu0
      %v5219 = vadd.f32 %v4936, %v5218
      %v5220 = vpop.f32.mrb[0].mxu0
      %5221 = vmatprep.mubr.f32.mxu0 0.0
      %5222 = vmatmul.mubr.f32.gmra.mrb[0].mxu0 %v5046
      %v5223 = vpop.f32.mrb[0].mxu0
      %v5224 = vadd.f32 %v4941, %v5223
      %v5225 = vpop.f32.mrb[0].mxu0
      %5226 = vmatprep.mubr.f32.mxu0 0.0
      %5227 = vmatmul.mubr.f32.gmra.mrb[0].mxu0 %v5048
      %v5228 = vpop.f32.mrb[0].mxu0
      %v5229 = vadd.f32 %v4946, %v5228
      %v5230 = vpop.f32.mrb[0].mxu0
      %5231 = vmatprep.mubr.f32.mxu0 0.0
      %5232 = vmatmul.mubr.f32.gmra.mrb[0].mxu0 %v5050
      %v5233 = vpop.f32.mrb[0].mxu0
      %v5234 = vadd.f32 %v4951, %v5233
      %v5235 = vpop.f32.mrb[0].mxu0
      %5236 = vdwg.mxu0
      %v5238 = vrot.slane %v4672, 1
      %v5239 = vrot.slane %v4673, 1
      %v5240 = vsel %vm2317, %v5238, %v5239
      %v5241 = vrot.slane %v4674, 1
      %v5242 = vsel %vm2317, %v5239, %v5241
      %v5243 = vrot.slane %v4675, 1
      %v5244 = vsel %vm2317, %v5241, %v5243
      %v5245 = vrot.slane %v4676, 1
      %v5246 = vsel %vm2317, %v5243, %v5245
      %v5247 = vrot.slane %v4677, 1
      %v5248 = vsel %vm2317, %v5245, %v5247
      %v5249 = vrot.slane %v4678, 1
      %v5250 = vsel %vm2317, %v5247, %v5249
      %v5251 = vrot.slane %v4679, 1
      %v5252 = vsel %vm2317, %v5249, %v5251
      %v5253 = vrot.slane %v4680, 1
      %v5254 = vsel %vm2317, %v5251, %v5253
      %v5255 = vrot.slane %v4681, 1
      %v5256 = vsel %vm2317, %v5253, %v5255
      %v5257 = vrot.slane %v4682, 1
      %v5258 = vsel %vm2317, %v5255, %v5257
      %v5259 = vrot.slane %v4683, 1
      %v5260 = vsel %vm2317, %v5257, %v5259
      %v5261 = vrot.slane %v4684, 1
      %v5262 = vsel %vm2317, %v5259, %v5261
      %v5263 = vrot.slane %v4685, 1
      %v5264 = vsel %vm2317, %v5261, %v5263
      %v5265 = vrot.slane %v4686, 1
      %v5266 = vsel %vm2317, %v5263, %v5265
      %v5267 = vrot.slane %v4687, 1
      %v5268 = vsel %vm2317, %v5265, %v5267
      %v5269 = vrot.slane %v4688, 1
      %v5270 = vsel %vm2317, %v5267, %v5269
      %v5271 = vrot.slane %v4689, 1
      %v5272 = vsel %vm2317, %v5269, %v5271
      %v5273 = vrot.slane %v4690, 1
      %v5274 = vsel %vm2317, %v5271, %v5273
      %v5275 = vrot.slane %v4691, 1
      %v5276 = vsel %vm2317, %v5273, %v5275
      %v5277 = vrot.slane %v4692, 1
      %v5278 = vsel %vm2317, %v5275, %v5277
      %v5279 = vrot.slane %v4693, 1
      %v5280 = vsel %vm2317, %v5277, %v5279
      %v5281 = vrot.slane %v4694, 1
      %v5282 = vsel %vm2317, %v5279, %v5281
      %v5283 = vrot.slane %v4695, 1
      %v5284 = vsel %vm2317, %v5281, %v5283
      %v5285 = vrot.slane %v4696, 1
      %v5286 = vsel %vm2317, %v5283, %v5285
      %v5287 = vsel %vm225, %v5240, 0
      %v5289 = vsel %vm225, %v5242, 0
      %v5291 = vsel %vm225, %v5244, 0
      %v5293 = vsel %vm225, %v5246, 0
      %v5295 = vsel %vm225, %v5248, 0
      %v5297 = vsel %vm225, %v5250, 0
      %v5299 = vsel %vm225, %v5252, 0
      %v5301 = vsel %vm225, %v5254, 0
      %v5303 = vsel %vm225, %v5256, 0
      %v5305 = vsel %vm225, %v5258, 0
      %v5307 = vsel %vm225, %v5260, 0
      %v5309 = vsel %vm225, %v5262, 0
      %v5311 = vsel %vm225, %v5264, 0
      %v5313 = vsel %vm225, %v5266, 0
      %v5315 = vsel %vm225, %v5268, 0
      %v5317 = vsel %vm225, %v5270, 0
      %v5319 = vsel %vm225, %v5272, 0
      %v5321 = vsel %vm225, %v5274, 0
      %v5323 = vsel %vm225, %v5276, 0
      %v5325 = vsel %vm225, %v5278, 0
      %v5327 = vsel %vm225, %v5280, 0
      %v5329 = vsel %vm225, %v5282, 0
      %v5331 = vsel %vm225, %v5284, 0
      %v5333 = vsel %vm225, %v5286, 0
      %5335 = vmatprep.subr.mxu0 0.0
      %5336 = vmatpush1.msra.mxu0 %v1736
      %5337 = vmatprep.subr.mxu0 0.0
      %5338 = vmatpush1.msra.mxu0 0.0
      %5339 = vmatprep.subr.mxu0 0.0
      %5340 = vmatpush1.msra.mxu0 0.0
      %5341 = vmatprep.subr.mxu0 0.0
      %5342 = vmatpush1.msra.mxu0 0.0
      %5343 = vmatprep.subr.mxu0 0.0
      %5344 = vmatpush1.msra.mxu0 0.0
      %5345 = vmatprep.subr.mxu0 0.0
      %5346 = vmatpush1.msra.mxu0 0.0
      %5347 = vmatprep.subr.mxu0 0.0
      %5348 = vmatpush1.msra.mxu0 0.0
      %5349 = vmatprep.subr.mxu0 0.0
      %5350 = vmatpush1.msra.mxu0 0.0
      %5351 = vmatprep.subr.mxu0 0.0
      %5352 = vmatpush1.msra.mxu0 0.0
      %5353 = vmatprep.subr.mxu0 0.0
      %5354 = vmatpush1.msra.mxu0 0.0
      %5355 = vmatprep.subr.mxu0 0.0
      %5356 = vmatpush1.msra.mxu0 0.0
      %5357 = vmatprep.subr.mxu0 0.0
      %5358 = vmatpush1.msra.mxu0 0.0
      %5359 = vmatprep.subr.mxu0 0.0
      %5360 = vmatpush1.msra.mxu0 0.0
      %5361 = vmatprep.subr.mxu0 0.0
      %5362 = vmatpush1.msra.mxu0 0.0
      %5363 = vmatprep.subr.mxu0 0.0
      %5364 = vmatpush1.msra.mxu0 0.0
      %5365 = vmatprep.subr.mxu0 0.0
      %5366 = vmatpush1.msra.mxu0 0.0
      %5367 = vmatprep.subr.mxu0 0.0
      %5368 = vmatpush1.msra.mxu0 0.0
      %5369 = vmatprep.subr.mxu0 0.0
      %5370 = vmatpush1.msra.mxu0 0.0
      %5371 = vmatprep.subr.mxu0 0.0
      %5372 = vmatpush1.msra.mxu0 0.0
      %5373 = vmatprep.subr.mxu0 0.0
      %5374 = vmatpush1.msra.mxu0 0.0
      %5375 = vmatprep.subr.mxu0 0.0
      %5376 = vmatpush1.msra.mxu0 0.0
      %5377 = vmatprep.subr.mxu0 0.0
      %5378 = vmatpush1.msra.mxu0 0.0
      %5379 = vmatprep.subr.mxu0 0.0
      %5380 = vmatpush1.msra.mxu0 0.0
      %5381 = vmatprep.subr.mxu0 0.0
      %5382 = vmatpush1.msra.mxu0 0.0
      %5383 = vmatprep.subr.mxu0 0.0
      %5384 = vmatpush1.msra.mxu0 0.0
      %5385 = vmatprep.subr.mxu0 0.0
      %5386 = vmatpush1.msra.mxu0 0.0
      %5387 = vmatprep.subr.mxu0 0.0
      %5388 = vmatpush1.msra.mxu0 0.0
      %5389 = vmatprep.subr.mxu0 0.0
      %5390 = vmatpush1.msra.mxu0 0.0
      %5391 = vmatprep.subr.mxu0 0.0
      %5392 = vmatpush1.msra.mxu0 0.0
      %5393 = vmatprep.subr.mxu0 0.0
      %5394 = vmatpush1.msra.mxu0 0.0
      %5395 = vmatprep.subr.mxu0 0.0
      %5396 = vmatpush1.msra.mxu0 0.0
      %5397 = vmatprep.subr.mxu0 0.0
      %5398 = vmatpush1.msra.mxu0 0.0
      %5399 = vmatprep.mubr.f32.mxu0 0.0
      %5400 = vmatmul.mubr.f32.gmra.mrb[0].mxu0 %v5287
      %v5401 = vpop.f32.mrb[0].mxu0
      %v5402 = vadd.f32 0.0, %v5401
      %v5403 = vpop.f32.mrb[0].mxu0
      %5404 = vmatprep.mubr.f32.mxu0 0.0
      %5405 = vmatmul.mubr.f32.gmra.mrb[0].mxu0 %v5289
      %v5406 = vpop.f32.mrb[0].mxu0
      %v5407 = vadd.f32 0.0, %v5406
      %v5408 = vpop.f32.mrb[0].mxu0
      %5409 = vmatprep.mubr.f32.mxu0 0.0
      %5410 = vmatmul.mubr.f32.gmra.mrb[0].mxu0 %v5291
      %v5411 = vpop.f32.mrb[0].mxu0
      %v5412 = vadd.f32 0.0, %v5411
      %v5413 = vpop.f32.mrb[0].mxu0
      %5414 = vmatprep.mubr.f32.mxu0 0.0
      %5415 = vmatmul.mubr.f32.gmra.mrb[0].mxu0 %v5293
      %v5416 = vpop.f32.mrb[0].mxu0
      %v5417 = vadd.f32 0.0, %v5416
      %v5418 = vpop.f32.mrb[0].mxu0
      %5419 = vmatprep.mubr.f32.mxu0 0.0
      %5420 = vmatmul.mubr.f32.gmra.mrb[0].mxu0 %v5295
      %v5421 = vpop.f32.mrb[0].mxu0
      %v5422 = vadd.f32 0.0, %v5421
      %v5423 = vpop.f32.mrb[0].mxu0
      %5424 = vmatprep.mubr.f32.mxu0 0.0
      %5425 = vmatmul.mubr.f32.gmra.mrb[0].mxu0 %v5297
      %v5426 = vpop.f32.mrb[0].mxu0
      %v5427 = vadd.f32 0.0, %v5426
      %v5428 = vpop.f32.mrb[0].mxu0
      %5429 = vmatprep.mubr.f32.mxu0 0.0
      %5430 = vmatmul.mubr.f32.gmra.mrb[0].mxu0 %v5299
      %v5431 = vpop.f32.mrb[0].mxu0
      %v5432 = vadd.f32 0.0, %v5431
      %v5433 = vpop.f32.mrb[0].mxu0
      %5434 = vmatprep.mubr.f32.mxu0 0.0
      %5435 = vmatmul.mubr.f32.gmra.mrb[0].mxu0 %v5301
      %v5436 = vpop.f32.mrb[0].mxu0
      %v5437 = vadd.f32 0.0, %v5436
      %v5438 = vpop.f32.mrb[0].mxu0
      %5439 = vmatprep.mubr.f32.mxu0 0.0
      %5440 = vmatmul.mubr.f32.gmra.mrb[0].mxu0 %v5303
      %v5441 = vpop.f32.mrb[0].mxu0
      %v5442 = vadd.f32 0.0, %v5441
      %v5443 = vpop.f32.mrb[0].mxu0
      %5444 = vmatprep.mubr.f32.mxu0 0.0
      %5445 = vmatmul.mubr.f32.gmra.mrb[0].mxu0 %v5305
      %v5446 = vpop.f32.mrb[0].mxu0
      %v5447 = vadd.f32 0.0, %v5446
      %v5448 = vpop.f32.mrb[0].mxu0
      %5449 = vmatprep.mubr.f32.mxu0 0.0
      %5450 = vmatmul.mubr.f32.gmra.mrb[0].mxu0 %v5307
      %v5451 = vpop.f32.mrb[0].mxu0
      %v5452 = vadd.f32 0.0, %v5451
      %v5453 = vpop.f32.mrb[0].mxu0
      %5454 = vmatprep.mubr.f32.mxu0 0.0
      %5455 = vmatmul.mubr.f32.gmra.mrb[0].mxu0 %v5309
      %v5456 = vpop.f32.mrb[0].mxu0
      %v5457 = vadd.f32 0.0, %v5456
      %v5458 = vpop.f32.mrb[0].mxu0
      %5459 = vmatprep.mubr.f32.mxu0 0.0
      %5460 = vmatmul.mubr.f32.gmra.mrb[0].mxu0 %v5311
      %v5461 = vpop.f32.mrb[0].mxu0
      %v5462 = vadd.f32 0.0, %v5461
      %v5463 = vpop.f32.mrb[0].mxu0
      %5464 = vmatprep.mubr.f32.mxu0 0.0
      %5465 = vmatmul.mubr.f32.gmra.mrb[0].mxu0 %v5313
      %v5466 = vpop.f32.mrb[0].mxu0
      %v5467 = vadd.f32 0.0, %v5466
      %v5468 = vpop.f32.mrb[0].mxu0
      %5469 = vmatprep.mubr.f32.mxu0 0.0
      %5470 = vmatmul.mubr.f32.gmra.mrb[0].mxu0 %v5315
      %v5471 = vpop.f32.mrb[0].mxu0
      %v5472 = vadd.f32 0.0, %v5471
      %v5473 = vpop.f32.mrb[0].mxu0
      %5474 = vmatprep.mubr.f32.mxu0 0.0
      %5475 = vmatmul.mubr.f32.gmra.mrb[0].mxu0 %v5317
      %v5476 = vpop.f32.mrb[0].mxu0
      %v5477 = vadd.f32 0.0, %v5476
      %v5478 = vpop.f32.mrb[0].mxu0
      %5479 = vmatprep.mubr.f32.mxu0 0.0
      %5480 = vmatmul.mubr.f32.gmra.mrb[0].mxu0 %v5319
      %v5481 = vpop.f32.mrb[0].mxu0
      %v5482 = vadd.f32 0.0, %v5481
      %v5483 = vpop.f32.mrb[0].mxu0
      %5484 = vmatprep.mubr.f32.mxu0 0.0
      %5485 = vmatmul.mubr.f32.gmra.mrb[0].mxu0 %v5321
      %v5486 = vpop.f32.mrb[0].mxu0
      %v5487 = vadd.f32 0.0, %v5486
      %v5488 = vpop.f32.mrb[0].mxu0
      %5489 = vmatprep.mubr.f32.mxu0 0.0
      %5490 = vmatmul.mubr.f32.gmra.mrb[0].mxu0 %v5323
      %v5491 = vpop.f32.mrb[0].mxu0
      %v5492 = vadd.f32 0.0, %v5491
      %v5493 = vpop.f32.mrb[0].mxu0
      %5494 = vmatprep.mubr.f32.mxu0 0.0
      %5495 = vmatmul.mubr.f32.gmra.mrb[0].mxu0 %v5325
      %v5496 = vpop.f32.mrb[0].mxu0
      %v5497 = vadd.f32 0.0, %v5496
      %v5498 = vpop.f32.mrb[0].mxu0
      %5499 = vmatprep.mubr.f32.mxu0 0.0
      %5500 = vmatmul.mubr.f32.gmra.mrb[0].mxu0 %v5327
      %v5501 = vpop.f32.mrb[0].mxu0
      %v5502 = vadd.f32 0.0, %v5501
      %v5503 = vpop.f32.mrb[0].mxu0
      %5504 = vmatprep.mubr.f32.mxu0 0.0
      %5505 = vmatmul.mubr.f32.gmra.mrb[0].mxu0 %v5329
      %v5506 = vpop.f32.mrb[0].mxu0
      %v5507 = vadd.f32 0.0, %v5506
      %v5508 = vpop.f32.mrb[0].mxu0
      %5509 = vmatprep.mubr.f32.mxu0 0.0
      %5510 = vmatmul.mubr.f32.gmra.mrb[0].mxu0 %v5331
      %v5511 = vpop.f32.mrb[0].mxu0
      %v5512 = vadd.f32 0.0, %v5511
      %v5513 = vpop.f32.mrb[0].mxu0
      %5514 = vmatprep.mubr.f32.mxu0 0.0
      %5515 = vmatmul.mubr.f32.gmra.mrb[0].mxu0 %v5333
      %v5516 = vpop.f32.mrb[0].mxu0
      %v5517 = vadd.f32 0.0, %v5516
      %v5518 = vpop.f32.mrb[0].mxu0
      %5519 = vdwg.mxu0
      %v5520 = vadd.f32 %v5119, %v5402
      %v5521 = vadd.f32 %v5124, %v5407
      %v5522 = vadd.f32 %v5129, %v5412
      %v5523 = vadd.f32 %v5134, %v5417
      %v5524 = vadd.f32 %v5139, %v5422
      %v5525 = vadd.f32 %v5144, %v5427
      %v5526 = vadd.f32 %v5149, %v5432
      %v5527 = vadd.f32 %v5154, %v5437
      %v5528 = vadd.f32 %v5159, %v5442
      %v5529 = vadd.f32 %v5164, %v5447
      %v5530 = vadd.f32 %v5169, %v5452
      %v5531 = vadd.f32 %v5174, %v5457
      %v5532 = vadd.f32 %v5179, %v5462
      %v5533 = vadd.f32 %v5184, %v5467
      %v5534 = vadd.f32 %v5189, %v5472
      %v5535 = vadd.f32 %v5194, %v5477
      %v5536 = vadd.f32 %v5199, %v5482
      %v5537 = vadd.f32 %v5204, %v5487
      %v5538 = vadd.f32 %v5209, %v5492
      %v5539 = vadd.f32 %v5214, %v5497
      %v5540 = vadd.f32 %v5219, %v5502
      %v5541 = vadd.f32 %v5224, %v5507
      %v5542 = vadd.f32 %v5229, %v5512
      %v5543 = vadd.f32 %v5234, %v5517
      %s5544 = sadd.s32 192, 24
      %s5545 = scalar_lea.vmem [#allocation2], %s5544
      %v5546 = vld [vmem:[%s5545] sm:$0xff]
      %v5547 = vld [vmem:[%s5545 + $0x8] sm:$0xff]
      %v5548 = vld [vmem:[%s5545 + $0x10] sm:$0xff]
      %v5549 = vld [vmem:[%s5545 + $0x18] sm:$0xff]
      %v5550 = vld [vmem:[%s5545 + $0x20] sm:$0xff]
      %v5551 = vld [vmem:[%s5545 + $0x28] sm:$0xff]
      %v5552 = vld [vmem:[%s5545 + $0x30] sm:$0xff]
      %v5553 = vld [vmem:[%s5545 + $0x38] sm:$0xff]
      %v5554 = vld [vmem:[%s5545 + $0x40] sm:$0xff]
      %v5555 = vld [vmem:[%s5545 + $0x48] sm:$0xff]
      %v5556 = vld [vmem:[%s5545 + $0x50] sm:$0xff]
      %v5557 = vld [vmem:[%s5545 + $0x58] sm:$0xff]
      %v5558 = vld [vmem:[%s5545 + $0x60] sm:$0xff]
      %v5559 = vld [vmem:[%s5545 + $0x68] sm:$0xff]
      %v5560 = vld [vmem:[%s5545 + $0x70] sm:$0xff]
      %v5561 = vld [vmem:[%s5545 + $0x78] sm:$0xff]
      %v5562 = vld [vmem:[%s5545 + $0x80] sm:$0xff]
      %v5563 = vld [vmem:[%s5545 + $0x88] sm:$0xff]
      %v5564 = vld [vmem:[%s5545 + $0x90] sm:$0xff]
      %v5565 = vld [vmem:[%s5545 + $0x98] sm:$0xff]
      %v5566 = vld [vmem:[%s5545 + $0xa0] sm:$0xff]
      %v5567 = vld [vmem:[%s5545 + $0xa8] sm:$0xff]
      %v5568 = vld [vmem:[%s5545 + $0xb0] sm:$0xff]
      %v5569 = vld [vmem:[%s5545 + $0xb8] sm:$0xff]
      %v5570 = vld [vmem:[%s5545 + $0xc0] sm:$0xff]
      %v5571 = vld [vmem:[%s5545 + $0xc8] sm:$0xff]
      %v5597 = vrot.slane %v5546, 7
      %v5598 = vrot.slane %v5547, 7
      %v5599 = vsel %vm2033, %v5597, %v5598
      %v5600 = vrot.slane %v5548, 7
      %v5601 = vsel %vm2033, %v5598, %v5600
      %v5602 = vrot.slane %v5549, 7
      %v5603 = vsel %vm2033, %v5600, %v5602
      %v5604 = vrot.slane %v5550, 7
      %v5605 = vsel %vm2033, %v5602, %v5604
      %v5606 = vrot.slane %v5551, 7
      %v5607 = vsel %vm2033, %v5604, %v5606
      %v5608 = vrot.slane %v5552, 7
      %v5609 = vsel %vm2033, %v5606, %v5608
      %v5610 = vrot.slane %v5553, 7
      %v5611 = vsel %vm2033, %v5608, %v5610
      %v5612 = vrot.slane %v5554, 7
      %v5613 = vsel %vm2033, %v5610, %v5612
      %v5614 = vrot.slane %v5555, 7
      %v5615 = vsel %vm2033, %v5612, %v5614
      %v5616 = vrot.slane %v5556, 7
      %v5617 = vsel %vm2033, %v5614, %v5616
      %v5618 = vrot.slane %v5557, 7
      %v5619 = vsel %vm2033, %v5616, %v5618
      %v5620 = vrot.slane %v5558, 7
      %v5621 = vsel %vm2033, %v5618, %v5620
      %v5622 = vrot.slane %v5559, 7
      %v5623 = vsel %vm2033, %v5620, %v5622
      %v5624 = vrot.slane %v5560, 7
      %v5625 = vsel %vm2033, %v5622, %v5624
      %v5626 = vrot.slane %v5561, 7
      %v5627 = vsel %vm2033, %v5624, %v5626
      %v5628 = vrot.slane %v5562, 7
      %v5629 = vsel %vm2033, %v5626, %v5628
      %v5630 = vrot.slane %v5563, 7
      %v5631 = vsel %vm2033, %v5628, %v5630
      %v5632 = vrot.slane %v5564, 7
      %v5633 = vsel %vm2033, %v5630, %v5632
      %v5634 = vrot.slane %v5565, 7
      %v5635 = vsel %vm2033, %v5632, %v5634
      %v5636 = vrot.slane %v5566, 7
      %v5637 = vsel %vm2033, %v5634, %v5636
      %v5638 = vrot.slane %v5567, 7
      %v5639 = vsel %vm2033, %v5636, %v5638
      %v5640 = vrot.slane %v5568, 7
      %v5641 = vsel %vm2033, %v5638, %v5640
      %v5642 = vrot.slane %v5569, 7
      %v5643 = vsel %vm2033, %v5640, %v5642
      %v5644 = vrot.slane %v5570, 7
      %v5645 = vsel %vm2033, %v5642, %v5644
      %v5646 = vsel %vm225, %v5599, 0
      %v5648 = vsel %vm225, %v5601, 0
      %v5650 = vsel %vm225, %v5603, 0
      %v5652 = vsel %vm225, %v5605, 0
      %v5654 = vsel %vm225, %v5607, 0
      %v5656 = vsel %vm225, %v5609, 0
      %v5658 = vsel %vm225, %v5611, 0
      %v5660 = vsel %vm225, %v5613, 0
      %v5662 = vsel %vm225, %v5615, 0
      %v5664 = vsel %vm225, %v5617, 0
      %v5666 = vsel %vm225, %v5619, 0
      %v5668 = vsel %vm225, %v5621, 0
      %v5670 = vsel %vm225, %v5623, 0
      %v5672 = vsel %vm225, %v5625, 0
      %v5674 = vsel %vm225, %v5627, 0
      %v5676 = vsel %vm225, %v5629, 0
      %v5678 = vsel %vm225, %v5631, 0
      %v5680 = vsel %vm225, %v5633, 0
      %v5682 = vsel %vm225, %v5635, 0
      %v5684 = vsel %vm225, %v5637, 0
      %v5686 = vsel %vm225, %v5639, 0
      %v5688 = vsel %vm225, %v5641, 0
      %v5690 = vsel %vm225, %v5643, 0
      %v5692 = vsel %vm225, %v5645, 0
      %5694 = vmatprep.subr.mxu0 0.0
      %5695 = vmatpush1.msra.mxu0 %v1738
      %5696 = vmatprep.subr.mxu0 0.0
      %5697 = vmatpush1.msra.mxu0 0.0
      %5698 = vmatprep.subr.mxu0 0.0
      %5699 = vmatpush1.msra.mxu0 0.0
      %5700 = vmatprep.subr.mxu0 0.0
      %5701 = vmatpush1.msra.mxu0 0.0
      %5702 = vmatprep.subr.mxu0 0.0
      %5703 = vmatpush1.msra.mxu0 0.0
      %5704 = vmatprep.subr.mxu0 0.0
      %5705 = vmatpush1.msra.mxu0 0.0
      %5706 = vmatprep.subr.mxu0 0.0
      %5707 = vmatpush1.msra.mxu0 0.0
      %5708 = vmatprep.subr.mxu0 0.0
      %5709 = vmatpush1.msra.mxu0 0.0
      %5710 = vmatprep.subr.mxu0 0.0
      %5711 = vmatpush1.msra.mxu0 0.0
      %5712 = vmatprep.subr.mxu0 0.0
      %5713 = vmatpush1.msra.mxu0 0.0
      %5714 = vmatprep.subr.mxu0 0.0
      %5715 = vmatpush1.msra.mxu0 0.0
      %5716 = vmatprep.subr.mxu0 0.0
      %5717 = vmatpush1.msra.mxu0 0.0
      %5718 = vmatprep.subr.mxu0 0.0
      %5719 = vmatpush1.msra.mxu0 0.0
      %5720 = vmatprep.subr.mxu0 0.0
      %5721 = vmatpush1.msra.mxu0 0.0
      %5722 = vmatprep.subr.mxu0 0.0
      %5723 = vmatpush1.msra.mxu0 0.0
      %5724 = vmatprep.subr.mxu0 0.0
      %5725 = vmatpush1.msra.mxu0 0.0
      %5726 = vmatprep.subr.mxu0 0.0
      %5727 = vmatpush1.msra.mxu0 0.0
      %5728 = vmatprep.subr.mxu0 0.0
      %5729 = vmatpush1.msra.mxu0 0.0
      %5730 = vmatprep.subr.mxu0 0.0
      %5731 = vmatpush1.msra.mxu0 0.0
      %5732 = vmatprep.subr.mxu0 0.0
      %5733 = vmatpush1.msra.mxu0 0.0
      %5734 = vmatprep.subr.mxu0 0.0
      %5735 = vmatpush1.msra.mxu0 0.0
      %5736 = vmatprep.subr.mxu0 0.0
      %5737 = vmatpush1.msra.mxu0 0.0
      %5738 = vmatprep.subr.mxu0 0.0
      %5739 = vmatpush1.msra.mxu0 0.0
      %5740 = vmatprep.subr.mxu0 0.0
      %5741 = vmatpush1.msra.mxu0 0.0
      %5742 = vmatprep.subr.mxu0 0.0
      %5743 = vmatpush1.msra.mxu0 0.0
      %5744 = vmatprep.subr.mxu0 0.0
      %5745 = vmatpush1.msra.mxu0 0.0
      %5746 = vmatprep.subr.mxu0 0.0
      %5747 = vmatpush1.msra.mxu0 0.0
      %5748 = vmatprep.subr.mxu0 0.0
      %5749 = vmatpush1.msra.mxu0 0.0
      %5750 = vmatprep.subr.mxu0 0.0
      %5751 = vmatpush1.msra.mxu0 0.0
      %5752 = vmatprep.subr.mxu0 0.0
      %5753 = vmatpush1.msra.mxu0 0.0
      %5754 = vmatprep.subr.mxu0 0.0
      %5755 = vmatpush1.msra.mxu0 0.0
      %5756 = vmatprep.subr.mxu0 0.0
      %5757 = vmatpush1.msra.mxu0 0.0
      %5758 = vmatprep.mubr.f32.mxu0 0.0
      %5759 = vmatmul.mubr.f32.gmra.mrb[0].mxu0 %v5646
      %v5760 = vpop.f32.mrb[0].mxu0
      %v5761 = vadd.f32 0.0, %v5760
      %v5762 = vpop.f32.mrb[0].mxu0
      %5763 = vmatprep.mubr.f32.mxu0 0.0
      %5764 = vmatmul.mubr.f32.gmra.mrb[0].mxu0 %v5648
      %v5765 = vpop.f32.mrb[0].mxu0
      %v5766 = vadd.f32 0.0, %v5765
      %v5767 = vpop.f32.mrb[0].mxu0
      %5768 = vmatprep.mubr.f32.mxu0 0.0
      %5769 = vmatmul.mubr.f32.gmra.mrb[0].mxu0 %v5650
      %v5770 = vpop.f32.mrb[0].mxu0
      %v5771 = vadd.f32 0.0, %v5770
      %v5772 = vpop.f32.mrb[0].mxu0
      %5773 = vmatprep.mubr.f32.mxu0 0.0
      %5774 = vmatmul.mubr.f32.gmra.mrb[0].mxu0 %v5652
      %v5775 = vpop.f32.mrb[0].mxu0
      %v5776 = vadd.f32 0.0, %v5775
      %v5777 = vpop.f32.mrb[0].mxu0
      %5778 = vmatprep.mubr.f32.mxu0 0.0
      %5779 = vmatmul.mubr.f32.gmra.mrb[0].mxu0 %v5654
      %v5780 = vpop.f32.mrb[0].mxu0
      %v5781 = vadd.f32 0.0, %v5780
      %v5782 = vpop.f32.mrb[0].mxu0
      %5783 = vmatprep.mubr.f32.mxu0 0.0
      %5784 = vmatmul.mubr.f32.gmra.mrb[0].mxu0 %v5656
      %v5785 = vpop.f32.mrb[0].mxu0
      %v5786 = vadd.f32 0.0, %v5785
      %v5787 = vpop.f32.mrb[0].mxu0
      %5788 = vmatprep.mubr.f32.mxu0 0.0
      %5789 = vmatmul.mubr.f32.gmra.mrb[0].mxu0 %v5658
      %v5790 = vpop.f32.mrb[0].mxu0
      %v5791 = vadd.f32 0.0, %v5790
      %v5792 = vpop.f32.mrb[0].mxu0
      %5793 = vmatprep.mubr.f32.mxu0 0.0
      %5794 = vmatmul.mubr.f32.gmra.mrb[0].mxu0 %v5660
      %v5795 = vpop.f32.mrb[0].mxu0
      %v5796 = vadd.f32 0.0, %v5795
      %v5797 = vpop.f32.mrb[0].mxu0
      %5798 = vmatprep.mubr.f32.mxu0 0.0
      %5799 = vmatmul.mubr.f32.gmra.mrb[0].mxu0 %v5662
      %v5800 = vpop.f32.mrb[0].mxu0
      %v5801 = vadd.f32 0.0, %v5800
      %v5802 = vpop.f32.mrb[0].mxu0
      %5803 = vmatprep.mubr.f32.mxu0 0.0
      %5804 = vmatmul.mubr.f32.gmra.mrb[0].mxu0 %v5664
      %v5805 = vpop.f32.mrb[0].mxu0
      %v5806 = vadd.f32 0.0, %v5805
      %v5807 = vpop.f32.mrb[0].mxu0
      %5808 = vmatprep.mubr.f32.mxu0 0.0
      %5809 = vmatmul.mubr.f32.gmra.mrb[0].mxu0 %v5666
      %v5810 = vpop.f32.mrb[0].mxu0
      %v5811 = vadd.f32 0.0, %v5810
      %v5812 = vpop.f32.mrb[0].mxu0
      %5813 = vmatprep.mubr.f32.mxu0 0.0
      %5814 = vmatmul.mubr.f32.gmra.mrb[0].mxu0 %v5668
      %v5815 = vpop.f32.mrb[0].mxu0
      %v5816 = vadd.f32 0.0, %v5815
      %v5817 = vpop.f32.mrb[0].mxu0
      %5818 = vmatprep.mubr.f32.mxu0 0.0
      %5819 = vmatmul.mubr.f32.gmra.mrb[0].mxu0 %v5670
      %v5820 = vpop.f32.mrb[0].mxu0
      %v5821 = vadd.f32 0.0, %v5820
      %v5822 = vpop.f32.mrb[0].mxu0
      %5823 = vmatprep.mubr.f32.mxu0 0.0
      %5824 = vmatmul.mubr.f32.gmra.mrb[0].mxu0 %v5672
      %v5825 = vpop.f32.mrb[0].mxu0
      %v5826 = vadd.f32 0.0, %v5825
      %v5827 = vpop.f32.mrb[0].mxu0
      %5828 = vmatprep.mubr.f32.mxu0 0.0
      %5829 = vmatmul.mubr.f32.gmra.mrb[0].mxu0 %v5674
      %v5830 = vpop.f32.mrb[0].mxu0
      %v5831 = vadd.f32 0.0, %v5830
      %v5832 = vpop.f32.mrb[0].mxu0
      %5833 = vmatprep.mubr.f32.mxu0 0.0
      %5834 = vmatmul.mubr.f32.gmra.mrb[0].mxu0 %v5676
      %v5835 = vpop.f32.mrb[0].mxu0
      %v5836 = vadd.f32 0.0, %v5835
      %v5837 = vpop.f32.mrb[0].mxu0
      %5838 = vmatprep.mubr.f32.mxu0 0.0
      %5839 = vmatmul.mubr.f32.gmra.mrb[0].mxu0 %v5678
      %v5840 = vpop.f32.mrb[0].mxu0
      %v5841 = vadd.f32 0.0, %v5840
      %v5842 = vpop.f32.mrb[0].mxu0
      %5843 = vmatprep.mubr.f32.mxu0 0.0
      %5844 = vmatmul.mubr.f32.gmra.mrb[0].mxu0 %v5680
      %v5845 = vpop.f32.mrb[0].mxu0
      %v5846 = vadd.f32 0.0, %v5845
      %v5847 = vpop.f32.mrb[0].mxu0
      %5848 = vmatprep.mubr.f32.mxu0 0.0
      %5849 = vmatmul.mubr.f32.gmra.mrb[0].mxu0 %v5682
      %v5850 = vpop.f32.mrb[0].mxu0
      %v5851 = vadd.f32 0.0, %v5850
      %v5852 = vpop.f32.mrb[0].mxu0
      %5853 = vmatprep.mubr.f32.mxu0 0.0
      %5854 = vmatmul.mubr.f32.gmra.mrb[0].mxu0 %v5684
      %v5855 = vpop.f32.mrb[0].mxu0
      %v5856 = vadd.f32 0.0, %v5855
      %v5857 = vpop.f32.mrb[0].mxu0
      %5858 = vmatprep.mubr.f32.mxu0 0.0
      %5859 = vmatmul.mubr.f32.gmra.mrb[0].mxu0 %v5686
      %v5860 = vpop.f32.mrb[0].mxu0
      %v5861 = vadd.f32 0.0, %v5860
      %v5862 = vpop.f32.mrb[0].mxu0
      %5863 = vmatprep.mubr.f32.mxu0 0.0
      %5864 = vmatmul.mubr.f32.gmra.mrb[0].mxu0 %v5688
      %v5865 = vpop.f32.mrb[0].mxu0
      %v5866 = vadd.f32 0.0, %v5865
      %v5867 = vpop.f32.mrb[0].mxu0
      %5868 = vmatprep.mubr.f32.mxu0 0.0
      %5869 = vmatmul.mubr.f32.gmra.mrb[0].mxu0 %v5690
      %v5870 = vpop.f32.mrb[0].mxu0
      %v5871 = vadd.f32 0.0, %v5870
      %v5872 = vpop.f32.mrb[0].mxu0
      %5873 = vmatprep.mubr.f32.mxu0 0.0
      %5874 = vmatmul.mubr.f32.gmra.mrb[0].mxu0 %v5692
      %v5875 = vpop.f32.mrb[0].mxu0
      %v5876 = vadd.f32 0.0, %v5875
      %v5877 = vpop.f32.mrb[0].mxu0
      %5878 = vdwg.mxu0
      %v5879 = vadd.f32 %v5520, %v5761
      %v5880 = vadd.f32 %v5521, %v5766
      %v5881 = vadd.f32 %v5522, %v5771
      %v5882 = vadd.f32 %v5523, %v5776
      %v5883 = vadd.f32 %v5524, %v5781
      %v5884 = vadd.f32 %v5525, %v5786
      %v5885 = vadd.f32 %v5526, %v5791
      %v5886 = vadd.f32 %v5527, %v5796
      %v5887 = vadd.f32 %v5528, %v5801
      %v5888 = vadd.f32 %v5529, %v5806
      %v5889 = vadd.f32 %v5530, %v5811
      %v5890 = vadd.f32 %v5531, %v5816
      %v5891 = vadd.f32 %v5532, %v5821
      %v5892 = vadd.f32 %v5533, %v5826
      %v5893 = vadd.f32 %v5534, %v5831
      %v5894 = vadd.f32 %v5535, %v5836
      %v5895 = vadd.f32 %v5536, %v5841
      %v5896 = vadd.f32 %v5537, %v5846
      %v5897 = vadd.f32 %v5538, %v5851
      %v5898 = vadd.f32 %v5539, %v5856
      %v5899 = vadd.f32 %v5540, %v5861
      %v5900 = vadd.f32 %v5541, %v5866
      %v5901 = vadd.f32 %v5542, %v5871
      %v5902 = vadd.f32 %v5543, %v5876
      %v5903 = vsel %vm225, %v5547, 0
      %v5905 = vsel %vm225, %v5548, 0
      %v5907 = vsel %vm225, %v5549, 0
      %v5909 = vsel %vm225, %v5550, 0
      %v5911 = vsel %vm225, %v5551, 0
      %v5913 = vsel %vm225, %v5552, 0
      %v5915 = vsel %vm225, %v5553, 0
      %v5917 = vsel %vm225, %v5554, 0
      %v5919 = vsel %vm225, %v5555, 0
      %v5921 = vsel %vm225, %v5556, 0
      %v5923 = vsel %vm225, %v5557, 0
      %v5925 = vsel %vm225, %v5558, 0
      %v5927 = vsel %vm225, %v5559, 0
      %v5929 = vsel %vm225, %v5560, 0
      %v5931 = vsel %vm225, %v5561, 0
      %v5933 = vsel %vm225, %v5562, 0
      %v5935 = vsel %vm225, %v5563, 0
      %v5937 = vsel %vm225, %v5564, 0
      %v5939 = vsel %vm225, %v5565, 0
      %v5941 = vsel %vm225, %v5566, 0
      %v5943 = vsel %vm225, %v5567, 0
      %v5945 = vsel %vm225, %v5568, 0
      %v5947 = vsel %vm225, %v5569, 0
      %v5949 = vsel %vm225, %v5570, 0
      %5951 = vmatprep.subr.mxu0 0.0
      %5952 = vmatpush1.msra.mxu0 %v1740
      %5953 = vmatprep.subr.mxu0 0.0
      %5954 = vmatpush1.msra.mxu0 0.0
      %5955 = vmatprep.subr.mxu0 0.0
      %5956 = vmatpush1.msra.mxu0 0.0
      %5957 = vmatprep.subr.mxu0 0.0
      %5958 = vmatpush1.msra.mxu0 0.0
      %5959 = vmatprep.subr.mxu0 0.0
      %5960 = vmatpush1.msra.mxu0 0.0
      %5961 = vmatprep.subr.mxu0 0.0
      %5962 = vmatpush1.msra.mxu0 0.0
      %5963 = vmatprep.subr.mxu0 0.0
      %5964 = vmatpush1.msra.mxu0 0.0
      %5965 = vmatprep.subr.mxu0 0.0
      %5966 = vmatpush1.msra.mxu0 0.0
      %5967 = vmatprep.subr.mxu0 0.0
      %5968 = vmatpush1.msra.mxu0 0.0
      %5969 = vmatprep.subr.mxu0 0.0
      %5970 = vmatpush1.msra.mxu0 0.0
      %5971 = vmatprep.subr.mxu0 0.0
      %5972 = vmatpush1.msra.mxu0 0.0
      %5973 = vmatprep.subr.mxu0 0.0
      %5974 = vmatpush1.msra.mxu0 0.0
      %5975 = vmatprep.subr.mxu0 0.0
      %5976 = vmatpush1.msra.mxu0 0.0
      %5977 = vmatprep.subr.mxu0 0.0
      %5978 = vmatpush1.msra.mxu0 0.0
      %5979 = vmatprep.subr.mxu0 0.0
      %5980 = vmatpush1.msra.mxu0 0.0
      %5981 = vmatprep.subr.mxu0 0.0
      %5982 = vmatpush1.msra.mxu0 0.0
      %5983 = vmatprep.subr.mxu0 0.0
      %5984 = vmatpush1.msra.mxu0 0.0
      %5985 = vmatprep.subr.mxu0 0.0
      %5986 = vmatpush1.msra.mxu0 0.0
      %5987 = vmatprep.subr.mxu0 0.0
      %5988 = vmatpush1.msra.mxu0 0.0
      %5989 = vmatprep.subr.mxu0 0.0
      %5990 = vmatpush1.msra.mxu0 0.0
      %5991 = vmatprep.subr.mxu0 0.0
      %5992 = vmatpush1.msra.mxu0 0.0
      %5993 = vmatprep.subr.mxu0 0.0
      %5994 = vmatpush1.msra.mxu0 0.0
      %5995 = vmatprep.subr.mxu0 0.0
      %5996 = vmatpush1.msra.mxu0 0.0
      %5997 = vmatprep.subr.mxu0 0.0
      %5998 = vmatpush1.msra.mxu0 0.0
      %5999 = vmatprep.subr.mxu0 0.0
      %6000 = vmatpush1.msra.mxu0 0.0
      %6001 = vmatprep.subr.mxu0 0.0
      %6002 = vmatpush1.msra.mxu0 0.0
      %6003 = vmatprep.subr.mxu0 0.0
      %6004 = vmatpush1.msra.mxu0 0.0
      %6005 = vmatprep.subr.mxu0 0.0
      %6006 = vmatpush1.msra.mxu0 0.0
      %6007 = vmatprep.subr.mxu0 0.0
      %6008 = vmatpush1.msra.mxu0 0.0
      %6009 = vmatprep.subr.mxu0 0.0
      %6010 = vmatpush1.msra.mxu0 0.0
      %6011 = vmatprep.subr.mxu0 0.0
      %6012 = vmatpush1.msra.mxu0 0.0
      %6013 = vmatprep.subr.mxu0 0.0
      %6014 = vmatpush1.msra.mxu0 0.0
      %6015 = vmatprep.mubr.f32.mxu0 0.0
      %6016 = vmatmul.mubr.f32.gmra.mrb[0].mxu0 %v5903
      %v6017 = vpop.f32.mrb[0].mxu0
      %v6018 = vadd.f32 0.0, %v6017
      %v6019 = vpop.f32.mrb[0].mxu0
      %6020 = vmatprep.mubr.f32.mxu0 0.0
      %6021 = vmatmul.mubr.f32.gmra.mrb[0].mxu0 %v5905
      %v6022 = vpop.f32.mrb[0].mxu0
      %v6023 = vadd.f32 0.0, %v6022
      %v6024 = vpop.f32.mrb[0].mxu0
      %6025 = vmatprep.mubr.f32.mxu0 0.0
      %6026 = vmatmul.mubr.f32.gmra.mrb[0].mxu0 %v5907
      %v6027 = vpop.f32.mrb[0].mxu0
      %v6028 = vadd.f32 0.0, %v6027
      %v6029 = vpop.f32.mrb[0].mxu0
      %6030 = vmatprep.mubr.f32.mxu0 0.0
      %6031 = vmatmul.mubr.f32.gmra.mrb[0].mxu0 %v5909
      %v6032 = vpop.f32.mrb[0].mxu0
      %v6033 = vadd.f32 0.0, %v6032
      %v6034 = vpop.f32.mrb[0].mxu0
      %6035 = vmatprep.mubr.f32.mxu0 0.0
      %6036 = vmatmul.mubr.f32.gmra.mrb[0].mxu0 %v5911
      %v6037 = vpop.f32.mrb[0].mxu0
      %v6038 = vadd.f32 0.0, %v6037
      %v6039 = vpop.f32.mrb[0].mxu0
      %6040 = vmatprep.mubr.f32.mxu0 0.0
      %6041 = vmatmul.mubr.f32.gmra.mrb[0].mxu0 %v5913
      %v6042 = vpop.f32.mrb[0].mxu0
      %v6043 = vadd.f32 0.0, %v6042
      %v6044 = vpop.f32.mrb[0].mxu0
      %6045 = vmatprep.mubr.f32.mxu0 0.0
      %6046 = vmatmul.mubr.f32.gmra.mrb[0].mxu0 %v5915
      %v6047 = vpop.f32.mrb[0].mxu0
      %v6048 = vadd.f32 0.0, %v6047
      %v6049 = vpop.f32.mrb[0].mxu0
      %6050 = vmatprep.mubr.f32.mxu0 0.0
      %6051 = vmatmul.mubr.f32.gmra.mrb[0].mxu0 %v5917
      %v6052 = vpop.f32.mrb[0].mxu0
      %v6053 = vadd.f32 0.0, %v6052
      %v6054 = vpop.f32.mrb[0].mxu0
      %6055 = vmatprep.mubr.f32.mxu0 0.0
      %6056 = vmatmul.mubr.f32.gmra.mrb[0].mxu0 %v5919
      %v6057 = vpop.f32.mrb[0].mxu0
      %v6058 = vadd.f32 0.0, %v6057
      %v6059 = vpop.f32.mrb[0].mxu0
      %6060 = vmatprep.mubr.f32.mxu0 0.0
      %6061 = vmatmul.mubr.f32.gmra.mrb[0].mxu0 %v5921
      %v6062 = vpop.f32.mrb[0].mxu0
      %v6063 = vadd.f32 0.0, %v6062
      %v6064 = vpop.f32.mrb[0].mxu0
      %6065 = vmatprep.mubr.f32.mxu0 0.0
      %6066 = vmatmul.mubr.f32.gmra.mrb[0].mxu0 %v5923
      %v6067 = vpop.f32.mrb[0].mxu0
      %v6068 = vadd.f32 0.0, %v6067
      %v6069 = vpop.f32.mrb[0].mxu0
      %6070 = vmatprep.mubr.f32.mxu0 0.0
      %6071 = vmatmul.mubr.f32.gmra.mrb[0].mxu0 %v5925
      %v6072 = vpop.f32.mrb[0].mxu0
      %v6073 = vadd.f32 0.0, %v6072
      %v6074 = vpop.f32.mrb[0].mxu0
      %6075 = vmatprep.mubr.f32.mxu0 0.0
      %6076 = vmatmul.mubr.f32.gmra.mrb[0].mxu0 %v5927
      %v6077 = vpop.f32.mrb[0].mxu0
      %v6078 = vadd.f32 0.0, %v6077
      %v6079 = vpop.f32.mrb[0].mxu0
      %6080 = vmatprep.mubr.f32.mxu0 0.0
      %6081 = vmatmul.mubr.f32.gmra.mrb[0].mxu0 %v5929
      %v6082 = vpop.f32.mrb[0].mxu0
      %v6083 = vadd.f32 0.0, %v6082
      %v6084 = vpop.f32.mrb[0].mxu0
      %6085 = vmatprep.mubr.f32.mxu0 0.0
      %6086 = vmatmul.mubr.f32.gmra.mrb[0].mxu0 %v5931
      %v6087 = vpop.f32.mrb[0].mxu0
      %v6088 = vadd.f32 0.0, %v6087
      %v6089 = vpop.f32.mrb[0].mxu0
      %6090 = vmatprep.mubr.f32.mxu0 0.0
      %6091 = vmatmul.mubr.f32.gmra.mrb[0].mxu0 %v5933
      %v6092 = vpop.f32.mrb[0].mxu0
      %v6093 = vadd.f32 0.0, %v6092
      %v6094 = vpop.f32.mrb[0].mxu0
      %6095 = vmatprep.mubr.f32.mxu0 0.0
      %6096 = vmatmul.mubr.f32.gmra.mrb[0].mxu0 %v5935
      %v6097 = vpop.f32.mrb[0].mxu0
      %v6098 = vadd.f32 0.0, %v6097
      %v6099 = vpop.f32.mrb[0].mxu0
      %6100 = vmatprep.mubr.f32.mxu0 0.0
      %6101 = vmatmul.mubr.f32.gmra.mrb[0].mxu0 %v5937
      %v6102 = vpop.f32.mrb[0].mxu0
      %v6103 = vadd.f32 0.0, %v6102
      %v6104 = vpop.f32.mrb[0].mxu0
      %6105 = vmatprep.mubr.f32.mxu0 0.0
      %6106 = vmatmul.mubr.f32.gmra.mrb[0].mxu0 %v5939
      %v6107 = vpop.f32.mrb[0].mxu0
      %v6108 = vadd.f32 0.0, %v6107
      %v6109 = vpop.f32.mrb[0].mxu0
      %6110 = vmatprep.mubr.f32.mxu0 0.0
      %6111 = vmatmul.mubr.f32.gmra.mrb[0].mxu0 %v5941
      %v6112 = vpop.f32.mrb[0].mxu0
      %v6113 = vadd.f32 0.0, %v6112
      %v6114 = vpop.f32.mrb[0].mxu0
      %6115 = vmatprep.mubr.f32.mxu0 0.0
      %6116 = vmatmul.mubr.f32.gmra.mrb[0].mxu0 %v5943
      %v6117 = vpop.f32.mrb[0].mxu0
      %v6118 = vadd.f32 0.0, %v6117
      %v6119 = vpop.f32.mrb[0].mxu0
      %6120 = vmatprep.mubr.f32.mxu0 0.0
      %6121 = vmatmul.mubr.f32.gmra.mrb[0].mxu0 %v5945
      %v6122 = vpop.f32.mrb[0].mxu0
      %v6123 = vadd.f32 0.0, %v6122
      %v6124 = vpop.f32.mrb[0].mxu0
      %6125 = vmatprep.mubr.f32.mxu0 0.0
      %6126 = vmatmul.mubr.f32.gmra.mrb[0].mxu0 %v5947
      %v6127 = vpop.f32.mrb[0].mxu0
      %v6128 = vadd.f32 0.0, %v6127
      %v6129 = vpop.f32.mrb[0].mxu0
      %6130 = vmatprep.mubr.f32.mxu0 0.0
      %6131 = vmatmul.mubr.f32.gmra.mrb[0].mxu0 %v5949
      %v6132 = vpop.f32.mrb[0].mxu0
      %v6133 = vadd.f32 0.0, %v6132
      %v6134 = vpop.f32.mrb[0].mxu0
      %6135 = vdwg.mxu0
      %v6136 = vadd.f32 %v5879, %v6018
      %v6137 = vadd.f32 %v5880, %v6023
      %v6138 = vadd.f32 %v5881, %v6028
      %v6139 = vadd.f32 %v5882, %v6033
      %v6140 = vadd.f32 %v5883, %v6038
      %v6141 = vadd.f32 %v5884, %v6043
      %v6142 = vadd.f32 %v5885, %v6048
      %v6143 = vadd.f32 %v5886, %v6053
      %v6144 = vadd.f32 %v5887, %v6058
      %v6145 = vadd.f32 %v5888, %v6063
      %v6146 = vadd.f32 %v5889, %v6068
      %v6147 = vadd.f32 %v5890, %v6073
      %v6148 = vadd.f32 %v5891, %v6078
      %v6149 = vadd.f32 %v5892, %v6083
      %v6150 = vadd.f32 %v5893, %v6088
      %v6151 = vadd.f32 %v5894, %v6093
      %v6152 = vadd.f32 %v5895, %v6098
      %v6153 = vadd.f32 %v5896, %v6103
      %v6154 = vadd.f32 %v5897, %v6108
      %v6155 = vadd.f32 %v5898, %v6113
      %v6156 = vadd.f32 %v5899, %v6118
      %v6157 = vadd.f32 %v5900, %v6123
      %v6158 = vadd.f32 %v5901, %v6128
      %v6159 = vadd.f32 %v5902, %v6133
      %v6161 = vrot.slane %v5547, 1
      %v6162 = vrot.slane %v5548, 1
      %v6163 = vsel %vm2317, %v6161, %v6162
      %v6164 = vrot.slane %v5549, 1
      %v6165 = vsel %vm2317, %v6162, %v6164
      %v6166 = vrot.slane %v5550, 1
      %v6167 = vsel %vm2317, %v6164, %v6166
      %v6168 = vrot.slane %v5551, 1
      %v6169 = vsel %vm2317, %v6166, %v6168
      %v6170 = vrot.slane %v5552, 1
      %v6171 = vsel %vm2317, %v6168, %v6170
      %v6172 = vrot.slane %v5553, 1
      %v6173 = vsel %vm2317, %v6170, %v6172
      %v6174 = vrot.slane %v5554, 1
      %v6175 = vsel %vm2317, %v6172, %v6174
      %v6176 = vrot.slane %v5555, 1
      %v6177 = vsel %vm2317, %v6174, %v6176
      %v6178 = vrot.slane %v5556, 1
      %v6179 = vsel %vm2317, %v6176, %v6178
      %v6180 = vrot.slane %v5557, 1
      %v6181 = vsel %vm2317, %v6178, %v6180
      %v6182 = vrot.slane %v5558, 1
      %v6183 = vsel %vm2317, %v6180, %v6182
      %v6184 = vrot.slane %v5559, 1
      %v6185 = vsel %vm2317, %v6182, %v6184
      %v6186 = vrot.slane %v5560, 1
      %v6187 = vsel %vm2317, %v6184, %v6186
      %v6188 = vrot.slane %v5561, 1
      %v6189 = vsel %vm2317, %v6186, %v6188
      %v6190 = vrot.slane %v5562, 1
      %v6191 = vsel %vm2317, %v6188, %v6190
      %v6192 = vrot.slane %v5563, 1
      %v6193 = vsel %vm2317, %v6190, %v6192
      %v6194 = vrot.slane %v5564, 1
      %v6195 = vsel %vm2317, %v6192, %v6194
      %v6196 = vrot.slane %v5565, 1
      %v6197 = vsel %vm2317, %v6194, %v6196
      %v6198 = vrot.slane %v5566, 1
      %v6199 = vsel %vm2317, %v6196, %v6198
      %v6200 = vrot.slane %v5567, 1
      %v6201 = vsel %vm2317, %v6198, %v6200
      %v6202 = vrot.slane %v5568, 1
      %v6203 = vsel %vm2317, %v6200, %v6202
      %v6204 = vrot.slane %v5569, 1
      %v6205 = vsel %vm2317, %v6202, %v6204
      %v6206 = vrot.slane %v5570, 1
      %v6207 = vsel %vm2317, %v6204, %v6206
      %v6208 = vrot.slane %v5571, 1
      %v6209 = vsel %vm2317, %v6206, %v6208
      %v6210 = vsel %vm225, %v6163, 0
      %v6212 = vsel %vm225, %v6165, 0
      %v6214 = vsel %vm225, %v6167, 0
      %v6216 = vsel %vm225, %v6169, 0
      %v6218 = vsel %vm225, %v6171, 0
      %v6220 = vsel %vm225, %v6173, 0
      %v6222 = vsel %vm225, %v6175, 0
      %v6224 = vsel %vm225, %v6177, 0
      %v6226 = vsel %vm225, %v6179, 0
      %v6228 = vsel %vm225, %v6181, 0
      %v6230 = vsel %vm225, %v6183, 0
      %v6232 = vsel %vm225, %v6185, 0
      %v6234 = vsel %vm225, %v6187, 0
      %v6236 = vsel %vm225, %v6189, 0
      %v6238 = vsel %vm225, %v6191, 0
      %v6240 = vsel %vm225, %v6193, 0
      %v6242 = vsel %vm225, %v6195, 0
      %v6244 = vsel %vm225, %v6197, 0
      %v6246 = vsel %vm225, %v6199, 0
      %v6248 = vsel %vm225, %v6201, 0
      %v6250 = vsel %vm225, %v6203, 0
      %v6252 = vsel %vm225, %v6205, 0
      %v6254 = vsel %vm225, %v6207, 0
      %v6256 = vsel %vm225, %v6209, 0
      %6258 = vmatprep.subr.mxu0 0.0
      %6259 = vmatpush1.msra.mxu0 %v1742
      %6260 = vmatprep.subr.mxu0 0.0
      %6261 = vmatpush1.msra.mxu0 0.0
      %6262 = vmatprep.subr.mxu0 0.0
      %6263 = vmatpush1.msra.mxu0 0.0
      %6264 = vmatprep.subr.mxu0 0.0
      %6265 = vmatpush1.msra.mxu0 0.0
      %6266 = vmatprep.subr.mxu0 0.0
      %6267 = vmatpush1.msra.mxu0 0.0
      %6268 = vmatprep.subr.mxu0 0.0
      %6269 = vmatpush1.msra.mxu0 0.0
      %6270 = vmatprep.subr.mxu0 0.0
      %6271 = vmatpush1.msra.mxu0 0.0
      %6272 = vmatprep.subr.mxu0 0.0
      %6273 = vmatpush1.msra.mxu0 0.0
      %6274 = vmatprep.subr.mxu0 0.0
      %6275 = vmatpush1.msra.mxu0 0.0
      %6276 = vmatprep.subr.mxu0 0.0
      %6277 = vmatpush1.msra.mxu0 0.0
      %6278 = vmatprep.subr.mxu0 0.0
      %6279 = vmatpush1.msra.mxu0 0.0
      %6280 = vmatprep.subr.mxu0 0.0
      %6281 = vmatpush1.msra.mxu0 0.0
      %6282 = vmatprep.subr.mxu0 0.0
      %6283 = vmatpush1.msra.mxu0 0.0
      %6284 = vmatprep.subr.mxu0 0.0
      %6285 = vmatpush1.msra.mxu0 0.0
      %6286 = vmatprep.subr.mxu0 0.0
      %6287 = vmatpush1.msra.mxu0 0.0
      %6288 = vmatprep.subr.mxu0 0.0
      %6289 = vmatpush1.msra.mxu0 0.0
      %6290 = vmatprep.subr.mxu0 0.0
      %6291 = vmatpush1.msra.mxu0 0.0
      %6292 = vmatprep.subr.mxu0 0.0
      %6293 = vmatpush1.msra.mxu0 0.0
      %6294 = vmatprep.subr.mxu0 0.0
      %6295 = vmatpush1.msra.mxu0 0.0
      %6296 = vmatprep.subr.mxu0 0.0
      %6297 = vmatpush1.msra.mxu0 0.0
      %6298 = vmatprep.subr.mxu0 0.0
      %6299 = vmatpush1.msra.mxu0 0.0
      %6300 = vmatprep.subr.mxu0 0.0
      %6301 = vmatpush1.msra.mxu0 0.0
      %6302 = vmatprep.subr.mxu0 0.0
      %6303 = vmatpush1.msra.mxu0 0.0
      %6304 = vmatprep.subr.mxu0 0.0
      %6305 = vmatpush1.msra.mxu0 0.0
      %6306 = vmatprep.subr.mxu0 0.0
      %6307 = vmatpush1.msra.mxu0 0.0
      %6308 = vmatprep.subr.mxu0 0.0
      %6309 = vmatpush1.msra.mxu0 0.0
      %6310 = vmatprep.subr.mxu0 0.0
      %6311 = vmatpush1.msra.mxu0 0.0
      %6312 = vmatprep.subr.mxu0 0.0
      %6313 = vmatpush1.msra.mxu0 0.0
      %6314 = vmatprep.subr.mxu0 0.0
      %6315 = vmatpush1.msra.mxu0 0.0
      %6316 = vmatprep.subr.mxu0 0.0
      %6317 = vmatpush1.msra.mxu0 0.0
      %6318 = vmatprep.subr.mxu0 0.0
      %6319 = vmatpush1.msra.mxu0 0.0
      %6320 = vmatprep.subr.mxu0 0.0
      %6321 = vmatpush1.msra.mxu0 0.0
      %6322 = vmatprep.mubr.f32.mxu0 0.0
      %6323 = vmatmul.mubr.f32.gmra.mrb[0].mxu0 %v6210
      %v6324 = vpop.f32.mrb[0].mxu0
      %v6325 = vadd.f32 0.0, %v6324
      %v6326 = vpop.f32.mrb[0].mxu0
      %6327 = vmatprep.mubr.f32.mxu0 0.0
      %6328 = vmatmul.mubr.f32.gmra.mrb[0].mxu0 %v6212
      %v6329 = vpop.f32.mrb[0].mxu0
      %v6330 = vadd.f32 0.0, %v6329
      %v6331 = vpop.f32.mrb[0].mxu0
      %6332 = vmatprep.mubr.f32.mxu0 0.0
      %6333 = vmatmul.mubr.f32.gmra.mrb[0].mxu0 %v6214
      %v6334 = vpop.f32.mrb[0].mxu0
      %v6335 = vadd.f32 0.0, %v6334
      %v6336 = vpop.f32.mrb[0].mxu0
      %6337 = vmatprep.mubr.f32.mxu0 0.0
      %6338 = vmatmul.mubr.f32.gmra.mrb[0].mxu0 %v6216
      %v6339 = vpop.f32.mrb[0].mxu0
      %v6340 = vadd.f32 0.0, %v6339
      %v6341 = vpop.f32.mrb[0].mxu0
      %6342 = vmatprep.mubr.f32.mxu0 0.0
      %6343 = vmatmul.mubr.f32.gmra.mrb[0].mxu0 %v6218
      %v6344 = vpop.f32.mrb[0].mxu0
      %v6345 = vadd.f32 0.0, %v6344
      %v6346 = vpop.f32.mrb[0].mxu0
      %6347 = vmatprep.mubr.f32.mxu0 0.0
      %6348 = vmatmul.mubr.f32.gmra.mrb[0].mxu0 %v6220
      %v6349 = vpop.f32.mrb[0].mxu0
      %v6350 = vadd.f32 0.0, %v6349
      %v6351 = vpop.f32.mrb[0].mxu0
      %6352 = vmatprep.mubr.f32.mxu0 0.0
      %6353 = vmatmul.mubr.f32.gmra.mrb[0].mxu0 %v6222
      %v6354 = vpop.f32.mrb[0].mxu0
      %v6355 = vadd.f32 0.0, %v6354
      %v6356 = vpop.f32.mrb[0].mxu0
      %6357 = vmatprep.mubr.f32.mxu0 0.0
      %6358 = vmatmul.mubr.f32.gmra.mrb[0].mxu0 %v6224
      %v6359 = vpop.f32.mrb[0].mxu0
      %v6360 = vadd.f32 0.0, %v6359
      %v6361 = vpop.f32.mrb[0].mxu0
      %6362 = vmatprep.mubr.f32.mxu0 0.0
      %6363 = vmatmul.mubr.f32.gmra.mrb[0].mxu0 %v6226
      %v6364 = vpop.f32.mrb[0].mxu0
      %v6365 = vadd.f32 0.0, %v6364
      %v6366 = vpop.f32.mrb[0].mxu0
      %6367 = vmatprep.mubr.f32.mxu0 0.0
      %6368 = vmatmul.mubr.f32.gmra.mrb[0].mxu0 %v6228
      %v6369 = vpop.f32.mrb[0].mxu0
      %v6370 = vadd.f32 0.0, %v6369
      %v6371 = vpop.f32.mrb[0].mxu0
      %6372 = vmatprep.mubr.f32.mxu0 0.0
      %6373 = vmatmul.mubr.f32.gmra.mrb[0].mxu0 %v6230
      %v6374 = vpop.f32.mrb[0].mxu0
      %v6375 = vadd.f32 0.0, %v6374
      %v6376 = vpop.f32.mrb[0].mxu0
      %6377 = vmatprep.mubr.f32.mxu0 0.0
      %6378 = vmatmul.mubr.f32.gmra.mrb[0].mxu0 %v6232
      %v6379 = vpop.f32.mrb[0].mxu0
      %v6380 = vadd.f32 0.0, %v6379
      %v6381 = vpop.f32.mrb[0].mxu0
      %6382 = vmatprep.mubr.f32.mxu0 0.0
      %6383 = vmatmul.mubr.f32.gmra.mrb[0].mxu0 %v6234
      %v6384 = vpop.f32.mrb[0].mxu0
      %v6385 = vadd.f32 0.0, %v6384
      %v6386 = vpop.f32.mrb[0].mxu0
      %6387 = vmatprep.mubr.f32.mxu0 0.0
      %6388 = vmatmul.mubr.f32.gmra.mrb[0].mxu0 %v6236
      %v6389 = vpop.f32.mrb[0].mxu0
      %v6390 = vadd.f32 0.0, %v6389
      %v6391 = vpop.f32.mrb[0].mxu0
      %6392 = vmatprep.mubr.f32.mxu0 0.0
      %6393 = vmatmul.mubr.f32.gmra.mrb[0].mxu0 %v6238
      %v6394 = vpop.f32.mrb[0].mxu0
      %v6395 = vadd.f32 0.0, %v6394
      %v6396 = vpop.f32.mrb[0].mxu0
      %6397 = vmatprep.mubr.f32.mxu0 0.0
      %6398 = vmatmul.mubr.f32.gmra.mrb[0].mxu0 %v6240
      %v6399 = vpop.f32.mrb[0].mxu0
      %v6400 = vadd.f32 0.0, %v6399
      %v6401 = vpop.f32.mrb[0].mxu0
      %6402 = vmatprep.mubr.f32.mxu0 0.0
      %6403 = vmatmul.mubr.f32.gmra.mrb[0].mxu0 %v6242
      %v6404 = vpop.f32.mrb[0].mxu0
      %v6405 = vadd.f32 0.0, %v6404
      %v6406 = vpop.f32.mrb[0].mxu0
      %6407 = vmatprep.mubr.f32.mxu0 0.0
      %6408 = vmatmul.mubr.f32.gmra.mrb[0].mxu0 %v6244
      %v6409 = vpop.f32.mrb[0].mxu0
      %v6410 = vadd.f32 0.0, %v6409
      %v6411 = vpop.f32.mrb[0].mxu0
      %6412 = vmatprep.mubr.f32.mxu0 0.0
      %6413 = vmatmul.mubr.f32.gmra.mrb[0].mxu0 %v6246
      %v6414 = vpop.f32.mrb[0].mxu0
      %v6415 = vadd.f32 0.0, %v6414
      %v6416 = vpop.f32.mrb[0].mxu0
      %6417 = vmatprep.mubr.f32.mxu0 0.0
      %6418 = vmatmul.mubr.f32.gmra.mrb[0].mxu0 %v6248
      %v6419 = vpop.f32.mrb[0].mxu0
      %v6420 = vadd.f32 0.0, %v6419
      %v6421 = vpop.f32.mrb[0].mxu0
      %6422 = vmatprep.mubr.f32.mxu0 0.0
      %6423 = vmatmul.mubr.f32.gmra.mrb[0].mxu0 %v6250
      %v6424 = vpop.f32.mrb[0].mxu0
      %v6425 = vadd.f32 0.0, %v6424
      %v6426 = vpop.f32.mrb[0].mxu0
      %6427 = vmatprep.mubr.f32.mxu0 0.0
      %6428 = vmatmul.mubr.f32.gmra.mrb[0].mxu0 %v6252
      %v6429 = vpop.f32.mrb[0].mxu0
      %v6430 = vadd.f32 0.0, %v6429
      %v6431 = vpop.f32.mrb[0].mxu0
      %6432 = vmatprep.mubr.f32.mxu0 0.0
      %6433 = vmatmul.mubr.f32.gmra.mrb[0].mxu0 %v6254
      %v6434 = vpop.f32.mrb[0].mxu0
      %v6435 = vadd.f32 0.0, %v6434
      %v6436 = vpop.f32.mrb[0].mxu0
      %6437 = vmatprep.mubr.f32.mxu0 0.0
      %6438 = vmatmul.mubr.f32.gmra.mrb[0].mxu0 %v6256
      %v6439 = vpop.f32.mrb[0].mxu0
      %v6440 = vadd.f32 0.0, %v6439
      %v6441 = vpop.f32.mrb[0].mxu0
      %6442 = vdwg.mxu0
      %v6443 = vadd.f32 %v6136, %v6325
      %v6444 = vadd.f32 %v6137, %v6330
      %v6445 = vadd.f32 %v6138, %v6335
      %v6446 = vadd.f32 %v6139, %v6340
      %v6447 = vadd.f32 %v6140, %v6345
      %v6448 = vadd.f32 %v6141, %v6350
      %v6449 = vadd.f32 %v6142, %v6355
      %v6450 = vadd.f32 %v6143, %v6360
      %v6451 = vadd.f32 %v6144, %v6365
      %v6452 = vadd.f32 %v6145, %v6370
      %v6453 = vadd.f32 %v6146, %v6375
      %v6454 = vadd.f32 %v6147, %v6380
      %v6455 = vadd.f32 %v6148, %v6385
      %v6456 = vadd.f32 %v6149, %v6390
      %v6457 = vadd.f32 %v6150, %v6395
      %v6458 = vadd.f32 %v6151, %v6400
      %v6459 = vadd.f32 %v6152, %v6405
      %v6460 = vadd.f32 %v6153, %v6410
      %v6461 = vadd.f32 %v6154, %v6415
      %v6462 = vadd.f32 %v6155, %v6420
      %v6463 = vadd.f32 %v6156, %v6425
      %v6464 = vadd.f32 %v6157, %v6430
      %v6465 = vadd.f32 %v6158, %v6435
      %v6466 = vadd.f32 %v6159, %v6440
      %s6467 = sadd.s32 192, 48
      %s6468 = scalar_lea.vmem [#allocation2], %s6467
      %v6469 = vld [vmem:[%s6468] sm:$0xff]
      %v6470 = vld [vmem:[%s6468 + $0x8] sm:$0xff]
      %v6471 = vld [vmem:[%s6468 + $0x10] sm:$0xff]
      %v6472 = vld [vmem:[%s6468 + $0x18] sm:$0xff]
      %v6473 = vld [vmem:[%s6468 + $0x20] sm:$0xff]
      %v6474 = vld [vmem:[%s6468 + $0x28] sm:$0xff]
      %v6475 = vld [vmem:[%s6468 + $0x30] sm:$0xff]
      %v6476 = vld [vmem:[%s6468 + $0x38] sm:$0xff]
      %v6477 = vld [vmem:[%s6468 + $0x40] sm:$0xff]
      %v6478 = vld [vmem:[%s6468 + $0x48] sm:$0xff]
      %v6479 = vld [vmem:[%s6468 + $0x50] sm:$0xff]
      %v6480 = vld [vmem:[%s6468 + $0x58] sm:$0xff]
      %v6481 = vld [vmem:[%s6468 + $0x60] sm:$0xff]
      %v6482 = vld [vmem:[%s6468 + $0x68] sm:$0xff]
      %v6483 = vld [vmem:[%s6468 + $0x70] sm:$0xff]
      %v6484 = vld [vmem:[%s6468 + $0x78] sm:$0xff]
      %v6485 = vld [vmem:[%s6468 + $0x80] sm:$0xff]
      %v6486 = vld [vmem:[%s6468 + $0x88] sm:$0xff]
      %v6487 = vld [vmem:[%s6468 + $0x90] sm:$0xff]
      %v6488 = vld [vmem:[%s6468 + $0x98] sm:$0xff]
      %v6489 = vld [vmem:[%s6468 + $0xa0] sm:$0xff]
      %v6490 = vld [vmem:[%s6468 + $0xa8] sm:$0xff]
      %v6491 = vld [vmem:[%s6468 + $0xb0] sm:$0xff]
      %v6492 = vld [vmem:[%s6468 + $0xb8] sm:$0xff]
      %v6493 = vld [vmem:[%s6468 + $0xc0] sm:$0xff]
      %v6494 = vld [vmem:[%s6468 + $0xc8] sm:$0xff]
      %v6520 = vrot.slane %v6469, 7
      %v6521 = vrot.slane %v6470, 7
      %v6522 = vsel %vm2033, %v6520, %v6521
      %v6523 = vrot.slane %v6471, 7
      %v6524 = vsel %vm2033, %v6521, %v6523
      %v6525 = vrot.slane %v6472, 7
      %v6526 = vsel %vm2033, %v6523, %v6525
      %v6527 = vrot.slane %v6473, 7
      %v6528 = vsel %vm2033, %v6525, %v6527
      %v6529 = vrot.slane %v6474, 7
      %v6530 = vsel %vm2033, %v6527, %v6529
      %v6531 = vrot.slane %v6475, 7
      %v6532 = vsel %vm2033, %v6529, %v6531
      %v6533 = vrot.slane %v6476, 7
      %v6534 = vsel %vm2033, %v6531, %v6533
      %v6535 = vrot.slane %v6477, 7
      %v6536 = vsel %vm2033, %v6533, %v6535
      %v6537 = vrot.slane %v6478, 7
      %v6538 = vsel %vm2033, %v6535, %v6537
      %v6539 = vrot.slane %v6479, 7
      %v6540 = vsel %vm2033, %v6537, %v6539
      %v6541 = vrot.slane %v6480, 7
      %v6542 = vsel %vm2033, %v6539, %v6541
      %v6543 = vrot.slane %v6481, 7
      %v6544 = vsel %vm2033, %v6541, %v6543
      %v6545 = vrot.slane %v6482, 7
      %v6546 = vsel %vm2033, %v6543, %v6545
      %v6547 = vrot.slane %v6483, 7
      %v6548 = vsel %vm2033, %v6545, %v6547
      %v6549 = vrot.slane %v6484, 7
      %v6550 = vsel %vm2033, %v6547, %v6549
      %v6551 = vrot.slane %v6485, 7
      %v6552 = vsel %vm2033, %v6549, %v6551
      %v6553 = vrot.slane %v6486, 7
      %v6554 = vsel %vm2033, %v6551, %v6553
      %v6555 = vrot.slane %v6487, 7
      %v6556 = vsel %vm2033, %v6553, %v6555
      %v6557 = vrot.slane %v6488, 7
      %v6558 = vsel %vm2033, %v6555, %v6557
      %v6559 = vrot.slane %v6489, 7
      %v6560 = vsel %vm2033, %v6557, %v6559
      %v6561 = vrot.slane %v6490, 7
      %v6562 = vsel %vm2033, %v6559, %v6561
      %v6563 = vrot.slane %v6491, 7
      %v6564 = vsel %vm2033, %v6561, %v6563
      %v6565 = vrot.slane %v6492, 7
      %v6566 = vsel %vm2033, %v6563, %v6565
      %v6567 = vrot.slane %v6493, 7
      %v6568 = vsel %vm2033, %v6565, %v6567
      %v6569 = vsel %vm225, %v6522, 0
      %v6571 = vsel %vm225, %v6524, 0
      %v6573 = vsel %vm225, %v6526, 0
      %v6575 = vsel %vm225, %v6528, 0
      %v6577 = vsel %vm225, %v6530, 0
      %v6579 = vsel %vm225, %v6532, 0
      %v6581 = vsel %vm225, %v6534, 0
      %v6583 = vsel %vm225, %v6536, 0
      %v6585 = vsel %vm225, %v6538, 0
      %v6587 = vsel %vm225, %v6540, 0
      %v6589 = vsel %vm225, %v6542, 0
      %v6591 = vsel %vm225, %v6544, 0
      %v6593 = vsel %vm225, %v6546, 0
      %v6595 = vsel %vm225, %v6548, 0
      %v6597 = vsel %vm225, %v6550, 0
      %v6599 = vsel %vm225, %v6552, 0
      %v6601 = vsel %vm225, %v6554, 0
      %v6603 = vsel %vm225, %v6556, 0
      %v6605 = vsel %vm225, %v6558, 0
      %v6607 = vsel %vm225, %v6560, 0
      %v6609 = vsel %vm225, %v6562, 0
      %v6611 = vsel %vm225, %v6564, 0
      %v6613 = vsel %vm225, %v6566, 0
      %v6615 = vsel %vm225, %v6568, 0
      %6617 = vmatprep.subr.mxu0 0.0
      %6618 = vmatpush1.msra.mxu0 %v1744
      %6619 = vmatprep.subr.mxu0 0.0
      %6620 = vmatpush1.msra.mxu0 0.0
      %6621 = vmatprep.subr.mxu0 0.0
      %6622 = vmatpush1.msra.mxu0 0.0
      %6623 = vmatprep.subr.mxu0 0.0
      %6624 = vmatpush1.msra.mxu0 0.0
      %6625 = vmatprep.subr.mxu0 0.0
      %6626 = vmatpush1.msra.mxu0 0.0
      %6627 = vmatprep.subr.mxu0 0.0
      %6628 = vmatpush1.msra.mxu0 0.0
      %6629 = vmatprep.subr.mxu0 0.0
      %6630 = vmatpush1.msra.mxu0 0.0
      %6631 = vmatprep.subr.mxu0 0.0
      %6632 = vmatpush1.msra.mxu0 0.0
      %6633 = vmatprep.subr.mxu0 0.0
      %6634 = vmatpush1.msra.mxu0 0.0
      %6635 = vmatprep.subr.mxu0 0.0
      %6636 = vmatpush1.msra.mxu0 0.0
      %6637 = vmatprep.subr.mxu0 0.0
      %6638 = vmatpush1.msra.mxu0 0.0
      %6639 = vmatprep.subr.mxu0 0.0
      %6640 = vmatpush1.msra.mxu0 0.0
      %6641 = vmatprep.subr.mxu0 0.0
      %6642 = vmatpush1.msra.mxu0 0.0
      %6643 = vmatprep.subr.mxu0 0.0
      %6644 = vmatpush1.msra.mxu0 0.0
      %6645 = vmatprep.subr.mxu0 0.0
      %6646 = vmatpush1.msra.mxu0 0.0
      %6647 = vmatprep.subr.mxu0 0.0
      %6648 = vmatpush1.msra.mxu0 0.0
      %6649 = vmatprep.subr.mxu0 0.0
      %6650 = vmatpush1.msra.mxu0 0.0
      %6651 = vmatprep.subr.mxu0 0.0
      %6652 = vmatpush1.msra.mxu0 0.0
      %6653 = vmatprep.subr.mxu0 0.0
      %6654 = vmatpush1.msra.mxu0 0.0
      %6655 = vmatprep.subr.mxu0 0.0
      %6656 = vmatpush1.msra.mxu0 0.0
      %6657 = vmatprep.subr.mxu0 0.0
      %6658 = vmatpush1.msra.mxu0 0.0
      %6659 = vmatprep.subr.mxu0 0.0
      %6660 = vmatpush1.msra.mxu0 0.0
      %6661 = vmatprep.subr.mxu0 0.0
      %6662 = vmatpush1.msra.mxu0 0.0
      %6663 = vmatprep.subr.mxu0 0.0
      %6664 = vmatpush1.msra.mxu0 0.0
      %6665 = vmatprep.subr.mxu0 0.0
      %6666 = vmatpush1.msra.mxu0 0.0
      %6667 = vmatprep.subr.mxu0 0.0
      %6668 = vmatpush1.msra.mxu0 0.0
      %6669 = vmatprep.subr.mxu0 0.0
      %6670 = vmatpush1.msra.mxu0 0.0
      %6671 = vmatprep.subr.mxu0 0.0
      %6672 = vmatpush1.msra.mxu0 0.0
      %6673 = vmatprep.subr.mxu0 0.0
      %6674 = vmatpush1.msra.mxu0 0.0
      %6675 = vmatprep.subr.mxu0 0.0
      %6676 = vmatpush1.msra.mxu0 0.0
      %6677 = vmatprep.subr.mxu0 0.0
      %6678 = vmatpush1.msra.mxu0 0.0
      %6679 = vmatprep.subr.mxu0 0.0
      %6680 = vmatpush1.msra.mxu0 0.0
      %6681 = vmatprep.mubr.f32.mxu0 0.0
      %6682 = vmatmul.mubr.f32.gmra.mrb[0].mxu0 %v6569
      %v6683 = vpop.f32.mrb[0].mxu0
      %v6684 = vadd.f32 0.0, %v6683
      %v6685 = vpop.f32.mrb[0].mxu0
      %6686 = vmatprep.mubr.f32.mxu0 0.0
      %6687 = vmatmul.mubr.f32.gmra.mrb[0].mxu0 %v6571
      %v6688 = vpop.f32.mrb[0].mxu0
      %v6689 = vadd.f32 0.0, %v6688
      %v6690 = vpop.f32.mrb[0].mxu0
      %6691 = vmatprep.mubr.f32.mxu0 0.0
      %6692 = vmatmul.mubr.f32.gmra.mrb[0].mxu0 %v6573
      %v6693 = vpop.f32.mrb[0].mxu0
      %v6694 = vadd.f32 0.0, %v6693
      %v6695 = vpop.f32.mrb[0].mxu0
      %6696 = vmatprep.mubr.f32.mxu0 0.0
      %6697 = vmatmul.mubr.f32.gmra.mrb[0].mxu0 %v6575
      %v6698 = vpop.f32.mrb[0].mxu0
      %v6699 = vadd.f32 0.0, %v6698
      %v6700 = vpop.f32.mrb[0].mxu0
      %6701 = vmatprep.mubr.f32.mxu0 0.0
      %6702 = vmatmul.mubr.f32.gmra.mrb[0].mxu0 %v6577
      %v6703 = vpop.f32.mrb[0].mxu0
      %v6704 = vadd.f32 0.0, %v6703
      %v6705 = vpop.f32.mrb[0].mxu0
      %6706 = vmatprep.mubr.f32.mxu0 0.0
      %6707 = vmatmul.mubr.f32.gmra.mrb[0].mxu0 %v6579
      %v6708 = vpop.f32.mrb[0].mxu0
      %v6709 = vadd.f32 0.0, %v6708
      %v6710 = vpop.f32.mrb[0].mxu0
      %6711 = vmatprep.mubr.f32.mxu0 0.0
      %6712 = vmatmul.mubr.f32.gmra.mrb[0].mxu0 %v6581
      %v6713 = vpop.f32.mrb[0].mxu0
      %v6714 = vadd.f32 0.0, %v6713
      %v6715 = vpop.f32.mrb[0].mxu0
      %6716 = vmatprep.mubr.f32.mxu0 0.0
      %6717 = vmatmul.mubr.f32.gmra.mrb[0].mxu0 %v6583
      %v6718 = vpop.f32.mrb[0].mxu0
      %v6719 = vadd.f32 0.0, %v6718
      %v6720 = vpop.f32.mrb[0].mxu0
      %6721 = vmatprep.mubr.f32.mxu0 0.0
      %6722 = vmatmul.mubr.f32.gmra.mrb[0].mxu0 %v6585
      %v6723 = vpop.f32.mrb[0].mxu0
      %v6724 = vadd.f32 0.0, %v6723
      %v6725 = vpop.f32.mrb[0].mxu0
      %6726 = vmatprep.mubr.f32.mxu0 0.0
      %6727 = vmatmul.mubr.f32.gmra.mrb[0].mxu0 %v6587
      %v6728 = vpop.f32.mrb[0].mxu0
      %v6729 = vadd.f32 0.0, %v6728
      %v6730 = vpop.f32.mrb[0].mxu0
      %6731 = vmatprep.mubr.f32.mxu0 0.0
      %6732 = vmatmul.mubr.f32.gmra.mrb[0].mxu0 %v6589
      %v6733 = vpop.f32.mrb[0].mxu0
      %v6734 = vadd.f32 0.0, %v6733
      %v6735 = vpop.f32.mrb[0].mxu0
      %6736 = vmatprep.mubr.f32.mxu0 0.0
      %6737 = vmatmul.mubr.f32.gmra.mrb[0].mxu0 %v6591
      %v6738 = vpop.f32.mrb[0].mxu0
      %v6739 = vadd.f32 0.0, %v6738
      %v6740 = vpop.f32.mrb[0].mxu0
      %6741 = vmatprep.mubr.f32.mxu0 0.0
      %6742 = vmatmul.mubr.f32.gmra.mrb[0].mxu0 %v6593
      %v6743 = vpop.f32.mrb[0].mxu0
      %v6744 = vadd.f32 0.0, %v6743
      %v6745 = vpop.f32.mrb[0].mxu0
      %6746 = vmatprep.mubr.f32.mxu0 0.0
      %6747 = vmatmul.mubr.f32.gmra.mrb[0].mxu0 %v6595
      %v6748 = vpop.f32.mrb[0].mxu0
      %v6749 = vadd.f32 0.0, %v6748
      %v6750 = vpop.f32.mrb[0].mxu0
      %6751 = vmatprep.mubr.f32.mxu0 0.0
      %6752 = vmatmul.mubr.f32.gmra.mrb[0].mxu0 %v6597
      %v6753 = vpop.f32.mrb[0].mxu0
      %v6754 = vadd.f32 0.0, %v6753
      %v6755 = vpop.f32.mrb[0].mxu0
      %6756 = vmatprep.mubr.f32.mxu0 0.0
      %6757 = vmatmul.mubr.f32.gmra.mrb[0].mxu0 %v6599
      %v6758 = vpop.f32.mrb[0].mxu0
      %v6759 = vadd.f32 0.0, %v6758
      %v6760 = vpop.f32.mrb[0].mxu0
      %6761 = vmatprep.mubr.f32.mxu0 0.0
      %6762 = vmatmul.mubr.f32.gmra.mrb[0].mxu0 %v6601
      %v6763 = vpop.f32.mrb[0].mxu0
      %v6764 = vadd.f32 0.0, %v6763
      %v6765 = vpop.f32.mrb[0].mxu0
      %6766 = vmatprep.mubr.f32.mxu0 0.0
      %6767 = vmatmul.mubr.f32.gmra.mrb[0].mxu0 %v6603
      %v6768 = vpop.f32.mrb[0].mxu0
      %v6769 = vadd.f32 0.0, %v6768
      %v6770 = vpop.f32.mrb[0].mxu0
      %6771 = vmatprep.mubr.f32.mxu0 0.0
      %6772 = vmatmul.mubr.f32.gmra.mrb[0].mxu0 %v6605
      %v6773 = vpop.f32.mrb[0].mxu0
      %v6774 = vadd.f32 0.0, %v6773
      %v6775 = vpop.f32.mrb[0].mxu0
      %6776 = vmatprep.mubr.f32.mxu0 0.0
      %6777 = vmatmul.mubr.f32.gmra.mrb[0].mxu0 %v6607
      %v6778 = vpop.f32.mrb[0].mxu0
      %v6779 = vadd.f32 0.0, %v6778
      %v6780 = vpop.f32.mrb[0].mxu0
      %6781 = vmatprep.mubr.f32.mxu0 0.0
      %6782 = vmatmul.mubr.f32.gmra.mrb[0].mxu0 %v6609
      %v6783 = vpop.f32.mrb[0].mxu0
      %v6784 = vadd.f32 0.0, %v6783
      %v6785 = vpop.f32.mrb[0].mxu0
      %6786 = vmatprep.mubr.f32.mxu0 0.0
      %6787 = vmatmul.mubr.f32.gmra.mrb[0].mxu0 %v6611
      %v6788 = vpop.f32.mrb[0].mxu0
      %v6789 = vadd.f32 0.0, %v6788
      %v6790 = vpop.f32.mrb[0].mxu0
      %6791 = vmatprep.mubr.f32.mxu0 0.0
      %6792 = vmatmul.mubr.f32.gmra.mrb[0].mxu0 %v6613
      %v6793 = vpop.f32.mrb[0].mxu0
      %v6794 = vadd.f32 0.0, %v6793
      %v6795 = vpop.f32.mrb[0].mxu0
      %6796 = vmatprep.mubr.f32.mxu0 0.0
      %6797 = vmatmul.mubr.f32.gmra.mrb[0].mxu0 %v6615
      %v6798 = vpop.f32.mrb[0].mxu0
      %v6799 = vadd.f32 0.0, %v6798
      %v6800 = vpop.f32.mrb[0].mxu0
      %6801 = vdwg.mxu0
      %v6802 = vadd.f32 %v6443, %v6684
      %v6803 = vadd.f32 %v6444, %v6689
      %v6804 = vadd.f32 %v6445, %v6694
      %v6805 = vadd.f32 %v6446, %v6699
      %v6806 = vadd.f32 %v6447, %v6704
      %v6807 = vadd.f32 %v6448, %v6709
      %v6808 = vadd.f32 %v6449, %v6714
      %v6809 = vadd.f32 %v6450, %v6719
      %v6810 = vadd.f32 %v6451, %v6724
      %v6811 = vadd.f32 %v6452, %v6729
      %v6812 = vadd.f32 %v6453, %v6734
      %v6813 = vadd.f32 %v6454, %v6739
      %v6814 = vadd.f32 %v6455, %v6744
      %v6815 = vadd.f32 %v6456, %v6749
      %v6816 = vadd.f32 %v6457, %v6754
      %v6817 = vadd.f32 %v6458, %v6759
      %v6818 = vadd.f32 %v6459, %v6764
      %v6819 = vadd.f32 %v6460, %v6769
      %v6820 = vadd.f32 %v6461, %v6774
      %v6821 = vadd.f32 %v6462, %v6779
      %v6822 = vadd.f32 %v6463, %v6784
      %v6823 = vadd.f32 %v6464, %v6789
      %v6824 = vadd.f32 %v6465, %v6794
      %v6825 = vadd.f32 %v6466, %v6799
      %v6826 = vsel %vm225, %v6470, 0
      %v6828 = vsel %vm225, %v6471, 0
      %v6830 = vsel %vm225, %v6472, 0
      %v6832 = vsel %vm225, %v6473, 0
      %v6834 = vsel %vm225, %v6474, 0
      %v6836 = vsel %vm225, %v6475, 0
      %v6838 = vsel %vm225, %v6476, 0
      %v6840 = vsel %vm225, %v6477, 0
      %v6842 = vsel %vm225, %v6478, 0
      %v6844 = vsel %vm225, %v6479, 0
      %v6846 = vsel %vm225, %v6480, 0
      %v6848 = vsel %vm225, %v6481, 0
      %v6850 = vsel %vm225, %v6482, 0
      %v6852 = vsel %vm225, %v6483, 0
      %v6854 = vsel %vm225, %v6484, 0
      %v6856 = vsel %vm225, %v6485, 0
      %v6858 = vsel %vm225, %v6486, 0
      %v6860 = vsel %vm225, %v6487, 0
      %v6862 = vsel %vm225, %v6488, 0
      %v6864 = vsel %vm225, %v6489, 0
      %v6866 = vsel %vm225, %v6490, 0
      %v6868 = vsel %vm225, %v6491, 0
      %v6870 = vsel %vm225, %v6492, 0
      %v6872 = vsel %vm225, %v6493, 0
      %6874 = vmatprep.subr.mxu0 0.0
      %6875 = vmatpush1.msra.mxu0 %v1746
      %6876 = vmatprep.subr.mxu0 0.0
      %6877 = vmatpush1.msra.mxu0 0.0
      %6878 = vmatprep.subr.mxu0 0.0
      %6879 = vmatpush1.msra.mxu0 0.0
      %6880 = vmatprep.subr.mxu0 0.0
      %6881 = vmatpush1.msra.mxu0 0.0
      %6882 = vmatprep.subr.mxu0 0.0
      %6883 = vmatpush1.msra.mxu0 0.0
      %6884 = vmatprep.subr.mxu0 0.0
      %6885 = vmatpush1.msra.mxu0 0.0
      %6886 = vmatprep.subr.mxu0 0.0
      %6887 = vmatpush1.msra.mxu0 0.0
      %6888 = vmatprep.subr.mxu0 0.0
      %6889 = vmatpush1.msra.mxu0 0.0
      %6890 = vmatprep.subr.mxu0 0.0
      %6891 = vmatpush1.msra.mxu0 0.0
      %6892 = vmatprep.subr.mxu0 0.0
      %6893 = vmatpush1.msra.mxu0 0.0
      %6894 = vmatprep.subr.mxu0 0.0
      %6895 = vmatpush1.msra.mxu0 0.0
      %6896 = vmatprep.subr.mxu0 0.0
      %6897 = vmatpush1.msra.mxu0 0.0
      %6898 = vmatprep.subr.mxu0 0.0
      %6899 = vmatpush1.msra.mxu0 0.0
      %6900 = vmatprep.subr.mxu0 0.0
      %6901 = vmatpush1.msra.mxu0 0.0
      %6902 = vmatprep.subr.mxu0 0.0
      %6903 = vmatpush1.msra.mxu0 0.0
      %6904 = vmatprep.subr.mxu0 0.0
      %6905 = vmatpush1.msra.mxu0 0.0
      %6906 = vmatprep.subr.mxu0 0.0
      %6907 = vmatpush1.msra.mxu0 0.0
      %6908 = vmatprep.subr.mxu0 0.0
      %6909 = vmatpush1.msra.mxu0 0.0
      %6910 = vmatprep.subr.mxu0 0.0
      %6911 = vmatpush1.msra.mxu0 0.0
      %6912 = vmatprep.subr.mxu0 0.0
      %6913 = vmatpush1.msra.mxu0 0.0
      %6914 = vmatprep.subr.mxu0 0.0
      %6915 = vmatpush1.msra.mxu0 0.0
      %6916 = vmatprep.subr.mxu0 0.0
      %6917 = vmatpush1.msra.mxu0 0.0
      %6918 = vmatprep.subr.mxu0 0.0
      %6919 = vmatpush1.msra.mxu0 0.0
      %6920 = vmatprep.subr.mxu0 0.0
      %6921 = vmatpush1.msra.mxu0 0.0
      %6922 = vmatprep.subr.mxu0 0.0
      %6923 = vmatpush1.msra.mxu0 0.0
      %6924 = vmatprep.subr.mxu0 0.0
      %6925 = vmatpush1.msra.mxu0 0.0
      %6926 = vmatprep.subr.mxu0 0.0
      %6927 = vmatpush1.msra.mxu0 0.0
      %6928 = vmatprep.subr.mxu0 0.0
      %6929 = vmatpush1.msra.mxu0 0.0
      %6930 = vmatprep.subr.mxu0 0.0
      %6931 = vmatpush1.msra.mxu0 0.0
      %6932 = vmatprep.subr.mxu0 0.0
      %6933 = vmatpush1.msra.mxu0 0.0
      %6934 = vmatprep.subr.mxu0 0.0
      %6935 = vmatpush1.msra.mxu0 0.0
      %6936 = vmatprep.subr.mxu0 0.0
      %6937 = vmatpush1.msra.mxu0 0.0
      %6938 = vmatprep.mubr.f32.mxu0 0.0
      %6939 = vmatmul.mubr.f32.gmra.mrb[0].mxu0 %v6826
      %v6940 = vpop.f32.mrb[0].mxu0
      %v6941 = vadd.f32 0.0, %v6940
      %v6942 = vpop.f32.mrb[0].mxu0
      %6943 = vmatprep.mubr.f32.mxu0 0.0
      %6944 = vmatmul.mubr.f32.gmra.mrb[0].mxu0 %v6828
      %v6945 = vpop.f32.mrb[0].mxu0
      %v6946 = vadd.f32 0.0, %v6945
      %v6947 = vpop.f32.mrb[0].mxu0
      %6948 = vmatprep.mubr.f32.mxu0 0.0
      %6949 = vmatmul.mubr.f32.gmra.mrb[0].mxu0 %v6830
      %v6950 = vpop.f32.mrb[0].mxu0
      %v6951 = vadd.f32 0.0, %v6950
      %v6952 = vpop.f32.mrb[0].mxu0
      %6953 = vmatprep.mubr.f32.mxu0 0.0
      %6954 = vmatmul.mubr.f32.gmra.mrb[0].mxu0 %v6832
      %v6955 = vpop.f32.mrb[0].mxu0
      %v6956 = vadd.f32 0.0, %v6955
      %v6957 = vpop.f32.mrb[0].mxu0
      %6958 = vmatprep.mubr.f32.mxu0 0.0
      %6959 = vmatmul.mubr.f32.gmra.mrb[0].mxu0 %v6834
      %v6960 = vpop.f32.mrb[0].mxu0
      %v6961 = vadd.f32 0.0, %v6960
      %v6962 = vpop.f32.mrb[0].mxu0
      %6963 = vmatprep.mubr.f32.mxu0 0.0
      %6964 = vmatmul.mubr.f32.gmra.mrb[0].mxu0 %v6836
      %v6965 = vpop.f32.mrb[0].mxu0
      %v6966 = vadd.f32 0.0, %v6965
      %v6967 = vpop.f32.mrb[0].mxu0
      %6968 = vmatprep.mubr.f32.mxu0 0.0
      %6969 = vmatmul.mubr.f32.gmra.mrb[0].mxu0 %v6838
      %v6970 = vpop.f32.mrb[0].mxu0
      %v6971 = vadd.f32 0.0, %v6970
      %v6972 = vpop.f32.mrb[0].mxu0
      %6973 = vmatprep.mubr.f32.mxu0 0.0
      %6974 = vmatmul.mubr.f32.gmra.mrb[0].mxu0 %v6840
      %v6975 = vpop.f32.mrb[0].mxu0
      %v6976 = vadd.f32 0.0, %v6975
      %v6977 = vpop.f32.mrb[0].mxu0
      %6978 = vmatprep.mubr.f32.mxu0 0.0
      %6979 = vmatmul.mubr.f32.gmra.mrb[0].mxu0 %v6842
      %v6980 = vpop.f32.mrb[0].mxu0
      %v6981 = vadd.f32 0.0, %v6980
      %v6982 = vpop.f32.mrb[0].mxu0
      %6983 = vmatprep.mubr.f32.mxu0 0.0
      %6984 = vmatmul.mubr.f32.gmra.mrb[0].mxu0 %v6844
      %v6985 = vpop.f32.mrb[0].mxu0
      %v6986 = vadd.f32 0.0, %v6985
      %v6987 = vpop.f32.mrb[0].mxu0
      %6988 = vmatprep.mubr.f32.mxu0 0.0
      %6989 = vmatmul.mubr.f32.gmra.mrb[0].mxu0 %v6846
      %v6990 = vpop.f32.mrb[0].mxu0
      %v6991 = vadd.f32 0.0, %v6990
      %v6992 = vpop.f32.mrb[0].mxu0
      %6993 = vmatprep.mubr.f32.mxu0 0.0
      %6994 = vmatmul.mubr.f32.gmra.mrb[0].mxu0 %v6848
      %v6995 = vpop.f32.mrb[0].mxu0
      %v6996 = vadd.f32 0.0, %v6995
      %v6997 = vpop.f32.mrb[0].mxu0
      %6998 = vmatprep.mubr.f32.mxu0 0.0
      %6999 = vmatmul.mubr.f32.gmra.mrb[0].mxu0 %v6850
      %v7000 = vpop.f32.mrb[0].mxu0
      %v7001 = vadd.f32 0.0, %v7000
      %v7002 = vpop.f32.mrb[0].mxu0
      %7003 = vmatprep.mubr.f32.mxu0 0.0
      %7004 = vmatmul.mubr.f32.gmra.mrb[0].mxu0 %v6852
      %v7005 = vpop.f32.mrb[0].mxu0
      %v7006 = vadd.f32 0.0, %v7005
      %v7007 = vpop.f32.mrb[0].mxu0
      %7008 = vmatprep.mubr.f32.mxu0 0.0
      %7009 = vmatmul.mubr.f32.gmra.mrb[0].mxu0 %v6854
      %v7010 = vpop.f32.mrb[0].mxu0
      %v7011 = vadd.f32 0.0, %v7010
      %v7012 = vpop.f32.mrb[0].mxu0
      %7013 = vmatprep.mubr.f32.mxu0 0.0
      %7014 = vmatmul.mubr.f32.gmra.mrb[0].mxu0 %v6856
      %v7015 = vpop.f32.mrb[0].mxu0
      %v7016 = vadd.f32 0.0, %v7015
      %v7017 = vpop.f32.mrb[0].mxu0
      %7018 = vmatprep.mubr.f32.mxu0 0.0
      %7019 = vmatmul.mubr.f32.gmra.mrb[0].mxu0 %v6858
      %v7020 = vpop.f32.mrb[0].mxu0
      %v7021 = vadd.f32 0.0, %v7020
      %v7022 = vpop.f32.mrb[0].mxu0
      %7023 = vmatprep.mubr.f32.mxu0 0.0
      %7024 = vmatmul.mubr.f32.gmra.mrb[0].mxu0 %v6860
      %v7025 = vpop.f32.mrb[0].mxu0
      %v7026 = vadd.f32 0.0, %v7025
      %v7027 = vpop.f32.mrb[0].mxu0
      %7028 = vmatprep.mubr.f32.mxu0 0.0
      %7029 = vmatmul.mubr.f32.gmra.mrb[0].mxu0 %v6862
      %v7030 = vpop.f32.mrb[0].mxu0
      %v7031 = vadd.f32 0.0, %v7030
      %v7032 = vpop.f32.mrb[0].mxu0
      %7033 = vmatprep.mubr.f32.mxu0 0.0
      %7034 = vmatmul.mubr.f32.gmra.mrb[0].mxu0 %v6864
      %v7035 = vpop.f32.mrb[0].mxu0
      %v7036 = vadd.f32 0.0, %v7035
      %v7037 = vpop.f32.mrb[0].mxu0
      %7038 = vmatprep.mubr.f32.mxu0 0.0
      %7039 = vmatmul.mubr.f32.gmra.mrb[0].mxu0 %v6866
      %v7040 = vpop.f32.mrb[0].mxu0
      %v7041 = vadd.f32 0.0, %v7040
      %v7042 = vpop.f32.mrb[0].mxu0
      %7043 = vmatprep.mubr.f32.mxu0 0.0
      %7044 = vmatmul.mubr.f32.gmra.mrb[0].mxu0 %v6868
      %v7045 = vpop.f32.mrb[0].mxu0
      %v7046 = vadd.f32 0.0, %v7045
      %v7047 = vpop.f32.mrb[0].mxu0
      %7048 = vmatprep.mubr.f32.mxu0 0.0
      %7049 = vmatmul.mubr.f32.gmra.mrb[0].mxu0 %v6870
      %v7050 = vpop.f32.mrb[0].mxu0
      %v7051 = vadd.f32 0.0, %v7050
      %v7052 = vpop.f32.mrb[0].mxu0
      %7053 = vmatprep.mubr.f32.mxu0 0.0
      %7054 = vmatmul.mubr.f32.gmra.mrb[0].mxu0 %v6872
      %v7055 = vpop.f32.mrb[0].mxu0
      %v7056 = vadd.f32 0.0, %v7055
      %v7057 = vpop.f32.mrb[0].mxu0
      %7058 = vdwg.mxu0
      %v7059 = vadd.f32 %v6802, %v6941
      %v7060 = vadd.f32 %v6803, %v6946
      %v7061 = vadd.f32 %v6804, %v6951
      %v7062 = vadd.f32 %v6805, %v6956
      %v7063 = vadd.f32 %v6806, %v6961
      %v7064 = vadd.f32 %v6807, %v6966
      %v7065 = vadd.f32 %v6808, %v6971
      %v7066 = vadd.f32 %v6809, %v6976
      %v7067 = vadd.f32 %v6810, %v6981
      %v7068 = vadd.f32 %v6811, %v6986
      %v7069 = vadd.f32 %v6812, %v6991
      %v7070 = vadd.f32 %v6813, %v6996
      %v7071 = vadd.f32 %v6814, %v7001
      %v7072 = vadd.f32 %v6815, %v7006
      %v7073 = vadd.f32 %v6816, %v7011
      %v7074 = vadd.f32 %v6817, %v7016
      %v7075 = vadd.f32 %v6818, %v7021
      %v7076 = vadd.f32 %v6819, %v7026
      %v7077 = vadd.f32 %v6820, %v7031
      %v7078 = vadd.f32 %v6821, %v7036
      %v7079 = vadd.f32 %v6822, %v7041
      %v7080 = vadd.f32 %v6823, %v7046
      %v7081 = vadd.f32 %v6824, %v7051
      %v7082 = vadd.f32 %v6825, %v7056
      %v7084 = vrot.slane %v6470, 1
      %v7085 = vrot.slane %v6471, 1
      %v7086 = vsel %vm2317, %v7084, %v7085
      %v7087 = vrot.slane %v6472, 1
      %v7088 = vsel %vm2317, %v7085, %v7087
      %v7089 = vrot.slane %v6473, 1
      %v7090 = vsel %vm2317, %v7087, %v7089
      %v7091 = vrot.slane %v6474, 1
      %v7092 = vsel %vm2317, %v7089, %v7091
      %v7093 = vrot.slane %v6475, 1
      %v7094 = vsel %vm2317, %v7091, %v7093
      %v7095 = vrot.slane %v6476, 1
      %v7096 = vsel %vm2317, %v7093, %v7095
      %v7097 = vrot.slane %v6477, 1
      %v7098 = vsel %vm2317, %v7095, %v7097
      %v7099 = vrot.slane %v6478, 1
      %v7100 = vsel %vm2317, %v7097, %v7099
      %v7101 = vrot.slane %v6479, 1
      %v7102 = vsel %vm2317, %v7099, %v7101
      %v7103 = vrot.slane %v6480, 1
      %v7104 = vsel %vm2317, %v7101, %v7103
      %v7105 = vrot.slane %v6481, 1
      %v7106 = vsel %vm2317, %v7103, %v7105
      %v7107 = vrot.slane %v6482, 1
      %v7108 = vsel %vm2317, %v7105, %v7107
      %v7109 = vrot.slane %v6483, 1
      %v7110 = vsel %vm2317, %v7107, %v7109
      %v7111 = vrot.slane %v6484, 1
      %v7112 = vsel %vm2317, %v7109, %v7111
      %v7113 = vrot.slane %v6485, 1
      %v7114 = vsel %vm2317, %v7111, %v7113
      %v7115 = vrot.slane %v6486, 1
      %v7116 = vsel %vm2317, %v7113, %v7115
      %v7117 = vrot.slane %v6487, 1
      %v7118 = vsel %vm2317, %v7115, %v7117
      %v7119 = vrot.slane %v6488, 1
      %v7120 = vsel %vm2317, %v7117, %v7119
      %v7121 = vrot.slane %v6489, 1
      %v7122 = vsel %vm2317, %v7119, %v7121
      %v7123 = vrot.slane %v6490, 1
      %v7124 = vsel %vm2317, %v7121, %v7123
      %v7125 = vrot.slane %v6491, 1
      %v7126 = vsel %vm2317, %v7123, %v7125
      %v7127 = vrot.slane %v6492, 1
      %v7128 = vsel %vm2317, %v7125, %v7127
      %v7129 = vrot.slane %v6493, 1
      %v7130 = vsel %vm2317, %v7127, %v7129
      %v7131 = vrot.slane %v6494, 1
      %v7132 = vsel %vm2317, %v7129, %v7131
      %v7133 = vsel %vm225, %v7086, 0
      %v7135 = vsel %vm225, %v7088, 0
      %v7137 = vsel %vm225, %v7090, 0
      %v7139 = vsel %vm225, %v7092, 0
      %v7141 = vsel %vm225, %v7094, 0
      %v7143 = vsel %vm225, %v7096, 0
      %v7145 = vsel %vm225, %v7098, 0
      %v7147 = vsel %vm225, %v7100, 0
      %v7149 = vsel %vm225, %v7102, 0
      %v7151 = vsel %vm225, %v7104, 0
      %v7153 = vsel %vm225, %v7106, 0
      %v7155 = vsel %vm225, %v7108, 0
      %v7157 = vsel %vm225, %v7110, 0
      %v7159 = vsel %vm225, %v7112, 0
      %v7161 = vsel %vm225, %v7114, 0
      %v7163 = vsel %vm225, %v7116, 0
      %v7165 = vsel %vm225, %v7118, 0
      %v7167 = vsel %vm225, %v7120, 0
      %v7169 = vsel %vm225, %v7122, 0
      %v7171 = vsel %vm225, %v7124, 0
      %v7173 = vsel %vm225, %v7126, 0
      %v7175 = vsel %vm225, %v7128, 0
      %v7177 = vsel %vm225, %v7130, 0
      %v7179 = vsel %vm225, %v7132, 0
      %7181 = vmatprep.subr.mxu0 0.0
      %7182 = vmatpush1.msra.mxu0 %v1748
      %7183 = vmatprep.subr.mxu0 0.0
      %7184 = vmatpush1.msra.mxu0 0.0
      %7185 = vmatprep.subr.mxu0 0.0
      %7186 = vmatpush1.msra.mxu0 0.0
      %7187 = vmatprep.subr.mxu0 0.0
      %7188 = vmatpush1.msra.mxu0 0.0
      %7189 = vmatprep.subr.mxu0 0.0
      %7190 = vmatpush1.msra.mxu0 0.0
      %7191 = vmatprep.subr.mxu0 0.0
      %7192 = vmatpush1.msra.mxu0 0.0
      %7193 = vmatprep.subr.mxu0 0.0
      %7194 = vmatpush1.msra.mxu0 0.0
      %7195 = vmatprep.subr.mxu0 0.0
      %7196 = vmatpush1.msra.mxu0 0.0
      %7197 = vmatprep.subr.mxu0 0.0
      %7198 = vmatpush1.msra.mxu0 0.0
      %7199 = vmatprep.subr.mxu0 0.0
      %7200 = vmatpush1.msra.mxu0 0.0
      %7201 = vmatprep.subr.mxu0 0.0
      %7202 = vmatpush1.msra.mxu0 0.0
      %7203 = vmatprep.subr.mxu0 0.0
      %7204 = vmatpush1.msra.mxu0 0.0
      %7205 = vmatprep.subr.mxu0 0.0
      %7206 = vmatpush1.msra.mxu0 0.0
      %7207 = vmatprep.subr.mxu0 0.0
      %7208 = vmatpush1.msra.mxu0 0.0
      %7209 = vmatprep.subr.mxu0 0.0
      %7210 = vmatpush1.msra.mxu0 0.0
      %7211 = vmatprep.subr.mxu0 0.0
      %7212 = vmatpush1.msra.mxu0 0.0
      %7213 = vmatprep.subr.mxu0 0.0
      %7214 = vmatpush1.msra.mxu0 0.0
      %7215 = vmatprep.subr.mxu0 0.0
      %7216 = vmatpush1.msra.mxu0 0.0
      %7217 = vmatprep.subr.mxu0 0.0
      %7218 = vmatpush1.msra.mxu0 0.0
      %7219 = vmatprep.subr.mxu0 0.0
      %7220 = vmatpush1.msra.mxu0 0.0
      %7221 = vmatprep.subr.mxu0 0.0
      %7222 = vmatpush1.msra.mxu0 0.0
      %7223 = vmatprep.subr.mxu0 0.0
      %7224 = vmatpush1.msra.mxu0 0.0
      %7225 = vmatprep.subr.mxu0 0.0
      %7226 = vmatpush1.msra.mxu0 0.0
      %7227 = vmatprep.subr.mxu0 0.0
      %7228 = vmatpush1.msra.mxu0 0.0
      %7229 = vmatprep.subr.mxu0 0.0
      %7230 = vmatpush1.msra.mxu0 0.0
      %7231 = vmatprep.subr.mxu0 0.0
      %7232 = vmatpush1.msra.mxu0 0.0
      %7233 = vmatprep.subr.mxu0 0.0
      %7234 = vmatpush1.msra.mxu0 0.0
      %7235 = vmatprep.subr.mxu0 0.0
      %7236 = vmatpush1.msra.mxu0 0.0
      %7237 = vmatprep.subr.mxu0 0.0
      %7238 = vmatpush1.msra.mxu0 0.0
      %7239 = vmatprep.subr.mxu0 0.0
      %7240 = vmatpush1.msra.mxu0 0.0
      %7241 = vmatprep.subr.mxu0 0.0
      %7242 = vmatpush1.msra.mxu0 0.0
      %7243 = vmatprep.subr.mxu0 0.0
      %7244 = vmatpush1.msra.mxu0 0.0
      %7245 = vmatprep.mubr.f32.mxu0 0.0
      %7246 = vmatmul.mubr.f32.gmra.mrb[0].mxu0 %v7133
      %v7247 = vpop.f32.mrb[0].mxu0
      %v7248 = vadd.f32 0.0, %v7247
      %v7249 = vpop.f32.mrb[0].mxu0
      %7250 = vmatprep.mubr.f32.mxu0 0.0
      %7251 = vmatmul.mubr.f32.gmra.mrb[0].mxu0 %v7135
      %v7252 = vpop.f32.mrb[0].mxu0
      %v7253 = vadd.f32 0.0, %v7252
      %v7254 = vpop.f32.mrb[0].mxu0
      %7255 = vmatprep.mubr.f32.mxu0 0.0
      %7256 = vmatmul.mubr.f32.gmra.mrb[0].mxu0 %v7137
      %v7257 = vpop.f32.mrb[0].mxu0
      %v7258 = vadd.f32 0.0, %v7257
      %v7259 = vpop.f32.mrb[0].mxu0
      %7260 = vmatprep.mubr.f32.mxu0 0.0
      %7261 = vmatmul.mubr.f32.gmra.mrb[0].mxu0 %v7139
      %v7262 = vpop.f32.mrb[0].mxu0
      %v7263 = vadd.f32 0.0, %v7262
      %v7264 = vpop.f32.mrb[0].mxu0
      %7265 = vmatprep.mubr.f32.mxu0 0.0
      %7266 = vmatmul.mubr.f32.gmra.mrb[0].mxu0 %v7141
      %v7267 = vpop.f32.mrb[0].mxu0
      %v7268 = vadd.f32 0.0, %v7267
      %v7269 = vpop.f32.mrb[0].mxu0
      %7270 = vmatprep.mubr.f32.mxu0 0.0
      %7271 = vmatmul.mubr.f32.gmra.mrb[0].mxu0 %v7143
      %v7272 = vpop.f32.mrb[0].mxu0
      %v7273 = vadd.f32 0.0, %v7272
      %v7274 = vpop.f32.mrb[0].mxu0
      %7275 = vmatprep.mubr.f32.mxu0 0.0
      %7276 = vmatmul.mubr.f32.gmra.mrb[0].mxu0 %v7145
      %v7277 = vpop.f32.mrb[0].mxu0
      %v7278 = vadd.f32 0.0, %v7277
      %v7279 = vpop.f32.mrb[0].mxu0
      %7280 = vmatprep.mubr.f32.mxu0 0.0
      %7281 = vmatmul.mubr.f32.gmra.mrb[0].mxu0 %v7147
      %v7282 = vpop.f32.mrb[0].mxu0
      %v7283 = vadd.f32 0.0, %v7282
      %v7284 = vpop.f32.mrb[0].mxu0
      %7285 = vmatprep.mubr.f32.mxu0 0.0
      %7286 = vmatmul.mubr.f32.gmra.mrb[0].mxu0 %v7149
      %v7287 = vpop.f32.mrb[0].mxu0
      %v7288 = vadd.f32 0.0, %v7287
      %v7289 = vpop.f32.mrb[0].mxu0
      %7290 = vmatprep.mubr.f32.mxu0 0.0
      %7291 = vmatmul.mubr.f32.gmra.mrb[0].mxu0 %v7151
      %v7292 = vpop.f32.mrb[0].mxu0
      %v7293 = vadd.f32 0.0, %v7292
      %v7294 = vpop.f32.mrb[0].mxu0
      %7295 = vmatprep.mubr.f32.mxu0 0.0
      %7296 = vmatmul.mubr.f32.gmra.mrb[0].mxu0 %v7153
      %v7297 = vpop.f32.mrb[0].mxu0
      %v7298 = vadd.f32 0.0, %v7297
      %v7299 = vpop.f32.mrb[0].mxu0
      %7300 = vmatprep.mubr.f32.mxu0 0.0
      %7301 = vmatmul.mubr.f32.gmra.mrb[0].mxu0 %v7155
      %v7302 = vpop.f32.mrb[0].mxu0
      %v7303 = vadd.f32 0.0, %v7302
      %v7304 = vpop.f32.mrb[0].mxu0
      %7305 = vmatprep.mubr.f32.mxu0 0.0
      %7306 = vmatmul.mubr.f32.gmra.mrb[0].mxu0 %v7157
      %v7307 = vpop.f32.mrb[0].mxu0
      %v7308 = vadd.f32 0.0, %v7307
      %v7309 = vpop.f32.mrb[0].mxu0
      %7310 = vmatprep.mubr.f32.mxu0 0.0
      %7311 = vmatmul.mubr.f32.gmra.mrb[0].mxu0 %v7159
      %v7312 = vpop.f32.mrb[0].mxu0
      %v7313 = vadd.f32 0.0, %v7312
      %v7314 = vpop.f32.mrb[0].mxu0
      %7315 = vmatprep.mubr.f32.mxu0 0.0
      %7316 = vmatmul.mubr.f32.gmra.mrb[0].mxu0 %v7161
      %v7317 = vpop.f32.mrb[0].mxu0
      %v7318 = vadd.f32 0.0, %v7317
      %v7319 = vpop.f32.mrb[0].mxu0
      %7320 = vmatprep.mubr.f32.mxu0 0.0
      %7321 = vmatmul.mubr.f32.gmra.mrb[0].mxu0 %v7163
      %v7322 = vpop.f32.mrb[0].mxu0
      %v7323 = vadd.f32 0.0, %v7322
      %v7324 = vpop.f32.mrb[0].mxu0
      %7325 = vmatprep.mubr.f32.mxu0 0.0
      %7326 = vmatmul.mubr.f32.gmra.mrb[0].mxu0 %v7165
      %v7327 = vpop.f32.mrb[0].mxu0
      %v7328 = vadd.f32 0.0, %v7327
      %v7329 = vpop.f32.mrb[0].mxu0
      %7330 = vmatprep.mubr.f32.mxu0 0.0
      %7331 = vmatmul.mubr.f32.gmra.mrb[0].mxu0 %v7167
      %v7332 = vpop.f32.mrb[0].mxu0
      %v7333 = vadd.f32 0.0, %v7332
      %v7334 = vpop.f32.mrb[0].mxu0
      %7335 = vmatprep.mubr.f32.mxu0 0.0
      %7336 = vmatmul.mubr.f32.gmra.mrb[0].mxu0 %v7169
      %v7337 = vpop.f32.mrb[0].mxu0
      %v7338 = vadd.f32 0.0, %v7337
      %v7339 = vpop.f32.mrb[0].mxu0
      %7340 = vmatprep.mubr.f32.mxu0 0.0
      %7341 = vmatmul.mubr.f32.gmra.mrb[0].mxu0 %v7171
      %v7342 = vpop.f32.mrb[0].mxu0
      %v7343 = vadd.f32 0.0, %v7342
      %v7344 = vpop.f32.mrb[0].mxu0
      %7345 = vmatprep.mubr.f32.mxu0 0.0
      %7346 = vmatmul.mubr.f32.gmra.mrb[0].mxu0 %v7173
      %v7347 = vpop.f32.mrb[0].mxu0
      %v7348 = vadd.f32 0.0, %v7347
      %v7349 = vpop.f32.mrb[0].mxu0
      %7350 = vmatprep.mubr.f32.mxu0 0.0
      %7351 = vmatmul.mubr.f32.gmra.mrb[0].mxu0 %v7175
      %v7352 = vpop.f32.mrb[0].mxu0
      %v7353 = vadd.f32 0.0, %v7352
      %v7354 = vpop.f32.mrb[0].mxu0
      %7355 = vmatprep.mubr.f32.mxu0 0.0
      %7356 = vmatmul.mubr.f32.gmra.mrb[0].mxu0 %v7177
      %v7357 = vpop.f32.mrb[0].mxu0
      %v7358 = vadd.f32 0.0, %v7357
      %v7359 = vpop.f32.mrb[0].mxu0
      %7360 = vmatprep.mubr.f32.mxu0 0.0
      %7361 = vmatmul.mubr.f32.gmra.mrb[0].mxu0 %v7179
      %v7362 = vpop.f32.mrb[0].mxu0
      %v7363 = vadd.f32 0.0, %v7362
      %v7364 = vpop.f32.mrb[0].mxu0
      %7365 = vdwg.mxu0
      %v7366 = vadd.f32 %v7059, %v7248
      %v7367 = vadd.f32 %v7060, %v7253
      %v7368 = vadd.f32 %v7061, %v7258
      %v7369 = vadd.f32 %v7062, %v7263
      %v7370 = vadd.f32 %v7063, %v7268
      %v7371 = vadd.f32 %v7064, %v7273
      %v7372 = vadd.f32 %v7065, %v7278
      %v7373 = vadd.f32 %v7066, %v7283
      %v7374 = vadd.f32 %v7067, %v7288
      %v7375 = vadd.f32 %v7068, %v7293
      %v7376 = vadd.f32 %v7069, %v7298
      %v7377 = vadd.f32 %v7070, %v7303
      %v7378 = vadd.f32 %v7071, %v7308
      %v7379 = vadd.f32 %v7072, %v7313
      %v7380 = vadd.f32 %v7073, %v7318
      %v7381 = vadd.f32 %v7074, %v7323
      %v7382 = vadd.f32 %v7075, %v7328
      %v7383 = vadd.f32 %v7076, %v7333
      %v7384 = vadd.f32 %v7077, %v7338
      %v7385 = vadd.f32 %v7078, %v7343
      %v7386 = vadd.f32 %v7079, %v7348
      %v7387 = vadd.f32 %v7080, %v7353
      %v7388 = vadd.f32 %v7081, %v7358
      %v7389 = vadd.f32 %v7082, %v7363
      %v7390 = vmul.f32 %v7366, %v4473
      %v7391 = vmul.f32 %v7367, %v4473
      %v7392 = vmul.f32 %v7368, %v4473
      %v7393 = vmul.f32 %v7369, %v4473
      %v7394 = vmul.f32 %v7370, %v4473
      %v7395 = vmul.f32 %v7371, %v4473
      %v7396 = vmul.f32 %v7372, %v4473
      %v7397 = vmul.f32 %v7373, %v4473
      %v7398 = vmul.f32 %v7374, %v4473
      %v7399 = vmul.f32 %v7375, %v4473
      %v7400 = vmul.f32 %v7376, %v4473
      %v7401 = vmul.f32 %v7377, %v4473
      %v7402 = vmul.f32 %v7378, %v4473
      %v7403 = vmul.f32 %v7379, %v4473
      %v7404 = vmul.f32 %v7380, %v4473
      %v7405 = vmul.f32 %v7381, %v4473
      %v7406 = vmul.f32 %v7382, %v4473
      %v7407 = vmul.f32 %v7383, %v4473
      %v7408 = vmul.f32 %v7384, %v4473
      %v7409 = vmul.f32 %v7385, %v4473
      %v7410 = vmul.f32 %v7386, %v4473
      %v7411 = vmul.f32 %v7387, %v4473
      %v7412 = vmul.f32 %v7388, %v4473
      %v7413 = vmul.f32 %v7389, %v4473
      %v7414 = vadd.f32 %v7390, %v4501
      %v7415 = vadd.f32 %v7391, %v4501
      %v7416 = vadd.f32 %v7392, %v4501
      %v7417 = vadd.f32 %v7393, %v4501
      %v7418 = vadd.f32 %v7394, %v4501
      %v7419 = vadd.f32 %v7395, %v4501
      %v7420 = vadd.f32 %v7396, %v4501
      %v7421 = vadd.f32 %v7397, %v4501
      %v7422 = vadd.f32 %v7398, %v4501
      %v7423 = vadd.f32 %v7399, %v4501
      %v7424 = vadd.f32 %v7400, %v4501
      %v7425 = vadd.f32 %v7401, %v4501
      %v7426 = vadd.f32 %v7402, %v4501
      %v7427 = vadd.f32 %v7403, %v4501
      %v7428 = vadd.f32 %v7404, %v4501
      %v7429 = vadd.f32 %v7405, %v4501
      %v7430 = vadd.f32 %v7406, %v4501
      %v7431 = vadd.f32 %v7407, %v4501
      %v7432 = vadd.f32 %v7408, %v4501
      %v7433 = vadd.f32 %v7409, %v4501
      %v7434 = vadd.f32 %v7410, %v4501
      %v7435 = vadd.f32 %v7411, %v4501
      %v7436 = vadd.f32 %v7412, %v4501
      %v7437 = vadd.f32 %v7413, %v4501
      %v7438 = vmul.f32 %v7414, 0.5
      %v7439 = vmul.f32 %v7415, 0.5
      %v7440 = vmul.f32 %v7416, 0.5
      %v7441 = vmul.f32 %v7417, 0.5
      %v7442 = vmul.f32 %v7418, 0.5
      %v7443 = vmul.f32 %v7419, 0.5
      %v7444 = vmul.f32 %v7420, 0.5
      %v7445 = vmul.f32 %v7421, 0.5
      %v7446 = vmul.f32 %v7422, 0.5
      %v7447 = vmul.f32 %v7423, 0.5
      %v7448 = vmul.f32 %v7424, 0.5
      %v7449 = vmul.f32 %v7425, 0.5
      %v7450 = vmul.f32 %v7426, 0.5
      %v7451 = vmul.f32 %v7427, 0.5
      %v7452 = vmul.f32 %v7428, 0.5
      %v7453 = vmul.f32 %v7429, 0.5
      %v7454 = vmul.f32 %v7430, 0.5
      %v7455 = vmul.f32 %v7431, 0.5
      %v7456 = vmul.f32 %v7432, 0.5
      %v7457 = vmul.f32 %v7433, 0.5
      %v7458 = vmul.f32 %v7434, 0.5
      %v7459 = vmul.f32 %v7435, 0.5
      %v7460 = vmul.f32 %v7436, 0.5
      %v7461 = vmul.f32 %v7437, 0.5
      %v7462 = vmul.f32 %v7414, 0.70710677
      %v7463 = vmul.f32 %v7415, 0.70710677
      %v7464 = vmul.f32 %v7416, 0.70710677
      %v7465 = vmul.f32 %v7417, 0.70710677
      %v7466 = vmul.f32 %v7418, 0.70710677
      %v7467 = vmul.f32 %v7419, 0.70710677
      %v7468 = vmul.f32 %v7420, 0.70710677
      %v7469 = vmul.f32 %v7421, 0.70710677
      %v7470 = vmul.f32 %v7422, 0.70710677
      %v7471 = vmul.f32 %v7423, 0.70710677
      %v7472 = vmul.f32 %v7424, 0.70710677
      %v7473 = vmul.f32 %v7425, 0.70710677
      %v7474 = vmul.f32 %v7426, 0.70710677
      %v7475 = vmul.f32 %v7427, 0.70710677
      %v7476 = vmul.f32 %v7428, 0.70710677
      %v7477 = vmul.f32 %v7429, 0.70710677
      %v7478 = vmul.f32 %v7430, 0.70710677
      %v7479 = vmul.f32 %v7431, 0.70710677
      %v7480 = vmul.f32 %v7432, 0.70710677
      %v7481 = vmul.f32 %v7433, 0.70710677
      %v7482 = vmul.f32 %v7434, 0.70710677
      %v7483 = vmul.f32 %v7435, 0.70710677
      %v7484 = vmul.f32 %v7436, 0.70710677
      %v7485 = vmul.f32 %v7437, 0.70710677
      %v7486 = verf.f32.pop %v7462
      %v7487 = verf.f32.pop %v7463
      %v7488 = verf.f32.pop %v7464
      %v7489 = verf.f32.pop %v7465
      %v7490 = verf.f32.pop %v7466
      %v7491 = verf.f32.pop %v7467
      %v7492 = verf.f32.pop %v7468
      %v7493 = verf.f32.pop %v7469
      %v7494 = verf.f32.pop %v7470
      %v7495 = verf.f32.pop %v7471
      %v7496 = verf.f32.pop %v7472
      %v7497 = verf.f32.pop %v7473
      %v7498 = verf.f32.pop %v7474
      %v7499 = verf.f32.pop %v7475
      %v7500 = verf.f32.pop %v7476
      %v7501 = verf.f32.pop %v7477
      %v7502 = verf.f32.pop %v7478
      %v7503 = verf.f32.pop %v7479
      %v7504 = verf.f32.pop %v7480
      %v7505 = verf.f32.pop %v7481
      %v7506 = verf.f32.pop %v7482
      %v7507 = verf.f32.pop %v7483
      %v7508 = verf.f32.pop %v7484
      %v7509 = verf.f32.pop %v7485
      %v7510 = vadd.f32 %v7486, 1.0
      %v7511 = vadd.f32 %v7487, 1.0
      %v7512 = vadd.f32 %v7488, 1.0
      %v7513 = vadd.f32 %v7489, 1.0
      %v7514 = vadd.f32 %v7490, 1.0
      %v7515 = vadd.f32 %v7491, 1.0
      %v7516 = vadd.f32 %v7492, 1.0
      %v7517 = vadd.f32 %v7493, 1.0
      %v7518 = vadd.f32 %v7494, 1.0
      %v7519 = vadd.f32 %v7495, 1.0
      %v7520 = vadd.f32 %v7496, 1.0
      %v7521 = vadd.f32 %v7497, 1.0
      %v7522 = vadd.f32 %v7498, 1.0
      %v7523 = vadd.f32 %v7499, 1.0
      %v7524 = vadd.f32 %v7500, 1.0
      %v7525 = vadd.f32 %v7501, 1.0
      %v7526 = vadd.f32 %v7502, 1.0
      %v7527 = vadd.f32 %v7503, 1.0
      %v7528 = vadd.f32 %v7504, 1.0
      %v7529 = vadd.f32 %v7505, 1.0
      %v7530 = vadd.f32 %v7506, 1.0
      %v7531 = vadd.f32 %v7507, 1.0
      %v7532 = vadd.f32 %v7508, 1.0
      %v7533 = vadd.f32 %v7509, 1.0
      %v7534 = vmul.f32 %v7438, %v7510
      %v7535 = vmul.f32 %v7439, %v7511
      %v7536 = vmul.f32 %v7440, %v7512
      %v7537 = vmul.f32 %v7441, %v7513
      %v7538 = vmul.f32 %v7442, %v7514
      %v7539 = vmul.f32 %v7443, %v7515
      %v7540 = vmul.f32 %v7444, %v7516
      %v7541 = vmul.f32 %v7445, %v7517
      %v7542 = vmul.f32 %v7446, %v7518
      %v7543 = vmul.f32 %v7447, %v7519
      %v7544 = vmul.f32 %v7448, %v7520
      %v7545 = vmul.f32 %v7449, %v7521
      %v7546 = vmul.f32 %v7450, %v7522
      %v7547 = vmul.f32 %v7451, %v7523
      %v7548 = vmul.f32 %v7452, %v7524
      %v7549 = vmul.f32 %v7453, %v7525
      %v7550 = vmul.f32 %v7454, %v7526
      %v7551 = vmul.f32 %v7455, %v7527
      %v7552 = vmul.f32 %v7456, %v7528
      %v7553 = vmul.f32 %v7457, %v7529
      %v7554 = vmul.f32 %v7458, %v7530
      %v7555 = vmul.f32 %v7459, %v7531
      %v7556 = vmul.f32 %v7460, %v7532
      %v7557 = vmul.f32 %v7461, %v7533
      %s7558 = scalar_lea.vmem %s224, 192
      %7559 = vst.msk [vmem:[%s7558] sm:$0xff] %vm225, %v7534
      %7560 = vst.msk [vmem:[%s7558 + $0x8] sm:$0xff] %vm225, %v7535
      %7561 = vst.msk [vmem:[%s7558 + $0x10] sm:$0xff] %vm225, %v7536
      %7562 = vst.msk [vmem:[%s7558 + $0x18] sm:$0xff] %vm225, %v7537
      %7563 = vst.msk [vmem:[%s7558 + $0x20] sm:$0xff] %vm225, %v7538
      %7564 = vst.msk [vmem:[%s7558 + $0x28] sm:$0xff] %vm225, %v7539
      %7565 = vst.msk [vmem:[%s7558 + $0x30] sm:$0xff] %vm225, %v7540
      %7566 = vst.msk [vmem:[%s7558 + $0x38] sm:$0xff] %vm225, %v7541
      %7567 = vst.msk [vmem:[%s7558 + $0x40] sm:$0xff] %vm225, %v7542
      %7568 = vst.msk [vmem:[%s7558 + $0x48] sm:$0xff] %vm225, %v7543
      %7569 = vst.msk [vmem:[%s7558 + $0x50] sm:$0xff] %vm225, %v7544
      %7570 = vst.msk [vmem:[%s7558 + $0x58] sm:$0xff] %vm225, %v7545
      %7571 = vst.msk [vmem:[%s7558 + $0x60] sm:$0xff] %vm225, %v7546
      %7572 = vst.msk [vmem:[%s7558 + $0x68] sm:$0xff] %vm225, %v7547
      %7573 = vst.msk [vmem:[%s7558 + $0x70] sm:$0xff] %vm225, %v7548
      %7574 = vst.msk [vmem:[%s7558 + $0x78] sm:$0xff] %vm225, %v7549
      %7575 = vst.msk [vmem:[%s7558 + $0x80] sm:$0xff] %vm225, %v7550
      %7576 = vst.msk [vmem:[%s7558 + $0x88] sm:$0xff] %vm225, %v7551
      %7577 = vst.msk [vmem:[%s7558 + $0x90] sm:$0xff] %vm225, %v7552
      %7578 = vst.msk [vmem:[%s7558 + $0x98] sm:$0xff] %vm225, %v7553
      %7579 = vst.msk [vmem:[%s7558 + $0xa0] sm:$0xff] %vm225, %v7554
      %7580 = vst.msk [vmem:[%s7558 + $0xa8] sm:$0xff] %vm225, %v7555
      %7581 = vst.msk [vmem:[%s7558 + $0xb0] sm:$0xff] %vm225, %v7556
      %7582 = vst.msk [vmem:[%s7558 + $0xb8] sm:$0xff] %vm225, %v7557
      %p7583 = scmp.lt.s32.totalorder %s16, 1
      %s7584 = scalar_select %p7583, %s16, 1
      %s7585 = smul.addr %s7584, 48
      %s7586 = smul.addr %s7585, 8
      %s7587 = scalar_lea.vmem %s5, %s7586
      // Predicated region
      $region41: #{tpu_custom_call.1} parent=39 // pred_check
        %p7588 = pneg %p144
      $region42: #{tpu_custom_call.1} parent=39 // pred_check_branch
        %7590 = sbr.rel (%p7588) target = $region44
      $region43: #{tpu_custom_call.1} parent=39 // pred_region
        _
      $region44: #{tpu_custom_call.1} parent=39 // pred_fallthru
        _
    $region40: #{tpu_custom_call.1} parent=5 // pred_fallthru
      _
    %p7591 = scmp.le.s32.totalorder 2, %s11
    // Predicated region
    $region45: #{tpu_custom_call.1} parent=5 // pred_check
      %p7592 = pneg %p7591
    $region46: #{tpu_custom_call.1} parent=5 // pred_check_branch
      %7594 = sbr.rel (%p7592) target = $region48
    $region47: #{tpu_custom_call.1} parent=5 // pred_region
      %s7595 = ssub.s32 %s11, 2
      // Predicated region
      $region49: #{tpu_custom_call.1} parent=47 // pred_check
        %p7596 = pneg %p150
      $region50: #{tpu_custom_call.1} parent=47 // pred_check_branch
        %7598 = sbr.rel (%p7596) target = $region52
      $region51: #{tpu_custom_call.1} parent=47 // pred_region
        %p7599 = scmp.lt.s32.totalorder %s17, 1
        %s7600 = scalar_select %p7599, %s17, 1
        %s7601 = smul.addr %s7600, 48
        %s7602 = smul.addr %s7601, 8
        %s7603 = scalar_lea.vmem %s5, %s7602
      $region52: #{tpu_custom_call.1} parent=47 // pred_fallthru
        _
    $region48: #{tpu_custom_call.1} parent=5 // pred_fallthru
      _
  $region6: #{tpu_custom_call.1} parent=0 // loop_footer
    %s15 = sadd.s32 1, %s11
  $region7: #{tpu_custom_call.1} parent=0 // loop_footer_branch
    %10 = sbr.rel target = $region3
  $region8: #{tpu_custom_call.1} parent=0 // loop_exit
    _

</llo_original>
